<compile_context>
chip_gen: v7x
topology: tpu7x:2x2x1
jax: 0.10.0
libtpu: 0.0.40
codegen_flags: <defaults>
</compile_context>

<pallas_src>
import functools
import math

import jax
import jax.numpy as jnp
from jax.experimental import pallas as pl
from jax.experimental.pallas import tpu as pltpu

_GUARD_ROWS = 8  # rows past the DMA'd slab read only by taps of discarded columns


def _round_up(x, m):
    return ((x + m - 1) // m) * m


@functools.lru_cache(maxsize=None)
def _vmem_limit_bytes():
    """Generation-aware scoped-VMEM limit: ~3/4 of physical, capped at 100 MiB.

    v5e/v6e (128 MiB physical) -> 96 MiB; v7x (64 MiB per TC) -> 48 MiB.
    """
    try:
        cap = int(pltpu.get_tpu_info().vmem_capacity_bytes)
    except Exception:  # conservative fallback if the query is unavailable
        cap = 64 * 1024 * 1024
    return min(cap * 3 // 4, 100 * 1024 * 1024)


@functools.lru_cache(maxsize=None)
def _tile_config():
    big = _vmem_limit_bytes() > 80 * 1024 * 1024      # v5e / v6e
    tm = 1024 if big else 512                          # 1x1 GEMM row tile
    target_rows = 2048 if big else 1024                # 3x3 band rows (th * wpa)
    lhs_budget = (8 if big else 4) * 1024 * 1024       # merged-im2col scratch cap
    return tm, target_rows, lhs_budget


def _pick_th(h, wpa, target_rows):
    """Row-tile height for the 3x3 kernel; always a divisor of h (no bottom pad)."""
    th_max = max(1, min(h, target_rows // wpa))
    for th in range(th_max, 0, -1):
        if h % th == 0:
            return th
    return 1


def _silu(y):
    # y * sigmoid(y); exp and the approximate reciprocal both ride the EUP slot.
    return y * pl.reciprocal(1.0 + jnp.exp(-y), approx=True)


# ---------------------------------------------------------------------------
# 1x1 conv (+BN+SiLU) kernels: single lane-dense output tile, weights resident.
# ---------------------------------------------------------------------------
def _pw_kernel(x_ref, w_ref, s_ref, b_ref, o_ref):
    acc = jnp.dot(x_ref[...], w_ref[...], preferred_element_type=jnp.float32)
    o_ref[...] = _silu(acc * s_ref[...] + b_ref[...]).astype(o_ref.dtype)


def _pw_cat2_kernel(a_ref, c_ref, wa_ref, wc_ref, s_ref, b_ref, o_ref):
    # concat(a, c) @ W  expressed as a split GEMM (concat never materialized).
    acc = jnp.dot(a_ref[...], wa_ref[...], preferred_element_type=jnp.float32)
    acc = acc + jnp.dot(c_ref[...], wc_ref[...], preferred_element_type=jnp.float32)
    o_ref[...] = _silu(acc * s_ref[...] + b_ref[...]).astype(o_ref.dtype)


def _pw_cat2_res_kernel(a_ref, r_ref, c_ref, wa_ref, wc_ref, s_ref, b_ref, o_ref):
    # Residual add fused into the GEMM lhs (VALU work hidden under the MXU).
    lhs = a_ref[...] + r_ref[...]
    acc = jnp.dot(lhs, wa_ref[...], preferred_element_type=jnp.float32)
    acc = acc + jnp.dot(c_ref[...], wc_ref[...], preferred_element_type=jnp.float32)
    o_ref[...] = _silu(acc * s_ref[...] + b_ref[...]).astype(o_ref.dtype)


def _pw_call(kernel, lhs_list, w_list, scale, bias):
    """Fused pointwise-conv GEMM.

    All lhs are NHWC bf16 with 128-padded channels; weights are (cink, cp) bf16;
    returns NHWC bf16 with 128-padded channels (no channel slice -> lane-dense
    stores, dense K for the next conv).
    """
    n, h, w_, _ = lhs_list[0].shape
    cp = w_list[0].shape[1]
    m = n * h * w_

    tm_cfg, _, _ = _tile_config()
    # Keep >= 2 row tiles when possible so the parallel grid feeds both v7x TCs.
    tm = min(tm_cfg, max(256, _round_up((m + 1) // 2, 256)))
    mp = tm * pl.cdiv(m, tm)

    flats = []
    for a in lhs_list:
        am = a.reshape(m, a.shape[-1])
        if mp != m:
            am = jnp.pad(am, ((0, mp - m), (0, 0)))
        flats.append(am)

    in_specs = (
        [pl.BlockSpec((tm, a.shape[1]), lambda i: (i, 0)) for a in flats]
        + [pl.BlockSpec(wm.shape, lambda i: (0, 0)) for wm in w_list]   # resident
        + [pl.BlockSpec((1, cp), lambda i: (0, 0)),
           pl.BlockSpec((1, cp), lambda i: (0, 0))]
    )

    out = pl.pallas_call(
        kernel,
        out_shape=jax.ShapeDtypeStruct((mp, cp), jnp.bfloat16),
        grid_spec=pltpu.PrefetchScalarGridSpec(
            num_scalar_prefetch=0,
            grid=(mp // tm,),
            in_specs=in_specs,
            out_specs=pl.BlockSpec((tm, cp), lambda i: (i, 0)),
        ),
        compiler_params=pltpu.CompilerParams(
            dimension_semantics=("parallel",),
            vmem_limit_bytes=_vmem_limit_bytes()),
    )(*flats, *w_list, scale, bias)

    if mp != m:
        out = out[:m]
    return out.reshape(n, h, w_, cp)


def conv1x1(x_nhwc, p):
    return _pw_call(_pw_kernel, [x_nhwc], [p["w"]], p["scale"], p["bias"])


def conv3_fused(a, c, p, residual=None):
    """CSP head conv3: silu(bn(concat(a_res, c) @ W)) as a split GEMM, with the
    optional residual (a_res = a + residual) folded into the same kernel."""
    if residual is None:
        return _pw_call(_pw_cat2_kernel, [a, c], [p["wa"], p["wb"]],
                        p["scale"], p["bias"])
    return _pw_call(_pw_cat2_res_kernel, [a, residual, c],
                    [p["wa"], p["wb"]], p["scale"], p["bias"])


# ---------------------------------------------------------------------------
# 3x3 conv (stride 1, pad 1) + BN + SiLU:
#   double-buffered halo-band DMA + one merged (K = 9*cin) GEMM per band.
# ---------------------------------------------------------------------------
def _conv3x3_kernel(x_hbm, w_ref, s_ref, b_ref, o_ref,
                    slab_ref, lhs_ref, sem_ref, *, th, wpa, hp2):
    ni = pl.program_id(0)
    hi = pl.program_id(1)
    nh = pl.num_programs(1)
    slab_rows = (th + 2) * wpa
    acc_rows = th * wpa
    cinp = slab_ref.shape[-1]
    slot = hi % 2

    def band_copy(h_idx, s):
        base = (ni * hp2 + h_idx * th) * wpa
        return pltpu.make_async_copy(
            x_hbm.at[pl.ds(base, slab_rows), :],
            slab_ref.at[s, 0:slab_rows, :],
            sem_ref.at[s],
        )

    @pl.when(hi == 0)
    def _():
        # Guard rows past the DMA'd band are read only by taps whose outputs
        # land in the discarded right-pad columns; keep them deterministic.
        slab_ref[:, slab_rows:, :] = jnp.zeros(
            (2, _GUARD_ROWS, cinp), slab_ref.dtype)
        band_copy(0, 0).start()                      # prime slot 0

    @pl.when(hi + 1 < nh)
    def _():
        band_copy(hi + 1, 1 - slot).start()          # prefetch next band

    band_copy(hi, slot).wait()

    # Merged im2col: one K = 9*cinp MXU pass instead of nine K = cinp passes
    # with an f32 accumulator read-modify-write per tap.
    for t in range(9):
        ky, kx = divmod(t, 3)
        start = ky * wpa + kx                        # static; ky*wpa is 8-aligned
        lhs_ref[:, t * cinp:(t + 1) * cinp] = (
            slab_ref[slot, start:start + acc_rows, :])

    acc = jnp.dot(lhs_ref[...], w_ref[...], preferred_element_type=jnp.float32)
    y = acc * s_ref[...] + b_ref[...]
    o_ref[...] = _silu(y).astype(o_ref.dtype)


def conv3x3(x_nhwc, p):
    n, h, w_, cinp = x_nhwc.shape
    wt, s, b = p["w"], p["scale"], p["bias"]          # (9*cinp, cp), (1, cp), (1, cp)
    cp = wt.shape[-1]
    assert wt.shape[0] == 9 * cinp, (wt.shape, cinp)

    _, target_rows, lhs_budget = _tile_config()
    wpa = _round_up(w_ + 2, 8)                        # sublane-aligned padded width
    rows_cap = max(wpa, lhs_budget // (9 * cinp * 2))
    th = _pick_th(h, wpa, min(target_rows, rows_cap))
    ht = h // th
    hp2 = h + 2
    acc_rows = th * wpa
    slab_rows = (th + 2) * wpa

    # Zero halo: 1 row top/bottom, 1 col left, (wpa - 1 - w_) cols right.
    xp = jnp.pad(x_nhwc, ((0, 0), (1, 1), (1, wpa - 1 - w_), (0, 0)))
    x2d = xp.reshape(n * hp2 * wpa, cinp)             # free reshape, stays in HBM

    kernel = functools.partial(_conv3x3_kernel, th=th, wpa=wpa, hp2=hp2)
    out2d = pl.pallas_call(
        kernel,
        out_shape=jax.ShapeDtypeStruct((n * h * wpa, cp), jnp.bfloat16),
        grid_spec=pltpu.PrefetchScalarGridSpec(
            num_scalar_prefetch=0,
            grid=(n, ht),
            in_specs=[
                pl.BlockSpec(memory_space=pl.ANY),                # x stays in HBM
                pl.BlockSpec((9 * cinp, cp), lambda ni, hi: (0, 0)),   # resident
                pl.BlockSpec((1, cp), lambda ni, hi: (0, 0)),
                pl.BlockSpec((1, cp), lambda ni, hi: (0, 0)),
            ],
            out_specs=pl.BlockSpec((acc_rows, cp),
                                   lambda ni, hi: (ni * ht + hi, 0)),
            scratch_shapes=[
                pltpu.VMEM((2, slab_rows + _GUARD_ROWS, cinp), jnp.bfloat16),
                pltpu.VMEM((acc_rows, 9 * cinp), jnp.bfloat16),
                pltpu.SemaphoreType.DMA((2,)),
            ],
        ),
        compiler_params=pltpu.CompilerParams(
            dimension_semantics=("parallel", "arbitrary"),
            vmem_limit_bytes=_vmem_limit_bytes()),
    )(x2d, wt, s, b)

    # Rows are (n, h, wpa): drop the right-pad columns, keep padded channels.
    return out2d.reshape(n, h, wpa, cp)[:, :, :w_, :]


# ---------------------------------------------------------------------------
# Parameter init / BN folding (done once, outside the jitted forward)
# ---------------------------------------------------------------------------
def _init_base_conv(key, cin, cout, ksize):
    k1, k2, k3, k4, k5 = jax.random.split(key, 5)
    fan_in = cin * ksize * ksize
    return {
        "w": jax.random.normal(k1, (cout, cin, ksize, ksize), jnp.float32) / math.sqrt(fan_in),
        "gamma": 1.0 + 0.1 * jax.random.normal(k2, (cout,), jnp.float32),
        "beta": 0.1 * jax.random.normal(k3, (cout,), jnp.float32),
        "mean": 0.1 * jax.random.normal(k4, (cout,), jnp.float32),
        "var": jnp.abs(jax.random.normal(k5, (cout,), jnp.float32)) + 0.5,
    }


def init_csp_params(key, cin, cout, n=1, expansion=0.5):
    hidden = int(cout * expansion)
    keys = jax.random.split(key, 3 + 2 * n)
    return {
        "conv1": _init_base_conv(keys[0], cin, hidden, 1),
        "conv2": _init_base_conv(keys[1], cin, hidden, 1),
        "conv3": _init_base_conv(keys[2], 2 * hidden, cout, 1),
        "m": [{"conv1": _init_base_conv(keys[3 + 2 * i], hidden, hidden, 1),
               "conv2": _init_base_conv(keys[4 + 2 * i], hidden, hidden, 3)}
              for i in range(n)],
    }


def _fold_bn(p, eps=1e-5):
    scale = p["gamma"] / jnp.sqrt(p["var"] + eps)
    bias = p["beta"] - p["mean"] * scale
    return scale, bias


def _fold_base_conv(p, eps=1e-5):
    """Fold BN (inference) into the conv and pad to MXU-friendly shapes:
    K (=cin) padded to the producer's 128-padded channel count (dense GEMM K),
    N (=cout) padded to a 128 multiple (lane-dense stores, kept between convs)."""
    w = p["w"]
    cout, cin, kh, kw = w.shape
    scale, bias = _fold_bn(p, eps)
    cinp = _round_up(cin, 128)
    cp = _round_up(cout, 128)
    if kh == 1:
        wm = w.reshape(cout, cin).T                                    # (cin, cout)
        wm = jnp.pad(wm, ((0, cinp - cin), (0, cp - cout)))
    else:
        wm = jnp.transpose(w, (2, 3, 1, 0)).reshape(kh * kw, cin, cout)
        wm = jnp.pad(wm, ((0, 0), (0, cinp - cin), (0, cp - cout)))
        wm = wm.reshape(kh * kw * cinp, cp)           # tap-major K, matches kernel
    s = jnp.pad(scale, (0, cp - cout)).reshape(1, cp).astype(jnp.float32)
    b = jnp.pad(bias, (0, cp - cout)).reshape(1, cp).astype(jnp.float32)
    return {"w": wm.astype(jnp.bfloat16), "scale": s, "bias": b,
            "cout": int(cout), "cin": int(cin)}


def _fold_conv3_split(p, hidden, eps=1e-5):
    """conv3 consumes concat(x1, x2); split its weight so the concat is never
    materialized: out = x1 @ wa + x2 @ wb."""
    w = p["w"][:, :, 0, 0]                            # (cout, 2*hidden)
    cout = w.shape[0]
    scale, bias = _fold_bn(p, eps)
    chp = _round_up(hidden, 128)
    cp = _round_up(cout, 128)
    wa = jnp.pad(w[:, :hidden].T, ((0, chp - hidden), (0, cp - cout)))
    wb = jnp.pad(w[:, hidden:].T, ((0, chp - hidden), (0, cp - cout)))
    s = jnp.pad(scale, (0, cp - cout)).reshape(1, cp).astype(jnp.float32)
    b = jnp.pad(bias, (0, cp - cout)).reshape(1, cp).astype(jnp.float32)
    return {"wa": wa.astype(jnp.bfloat16), "wb": wb.astype(jnp.bfloat16),
            "scale": s, "bias": b, "cout": int(cout)}


def fold_csp_params(raw, eps=1e-5):
    hidden = int(raw["conv1"]["w"].shape[0])
    return {
        "conv1": _fold_base_conv(raw["conv1"], eps),
        "conv2": _fold_base_conv(raw["conv2"], eps),
        "conv3": _fold_conv3_split(raw["conv3"], hidden, eps),
        "m": [{"conv1": _fold_base_conv(blk["conv1"], eps),
               "conv2": _fold_base_conv(blk["conv2"], eps)} for blk in raw["m"]],
    }


# ---------------------------------------------------------------------------
# CSPLayer forward (kernel path) and pure-JAX reference
# ---------------------------------------------------------------------------
def csp_layer_forward(x_nchw, fp, *, shortcut=True):
    n, cin, h, w_ = x_nchw.shape
    cinp = _round_up(cin, 128)
    # NCHW -> NHWC, bf16, channel-pad once so every GEMM K is dense.
    x = jnp.transpose(x_nchw, (0, 2, 3, 1)).astype(jnp.bfloat16)
    if cinp != cin:
        x = jnp.pad(x, ((0, 0), (0, 0), (0, 0), (0, cinp - cin)))

    x1 = conv1x1(x, fp["conv1"])
    x2 = conv1x1(x, fp["conv2"])

    res, pending = x1, None
    for blk in fp["m"]:
        if pending is not None:                       # materialize all but the last add
            res = res + pending if shortcut else pending
            pending = None
        y1 = conv1x1(res, blk["conv1"])
        pending = conv3x3(y1, blk["conv2"])

    # conv3 over concat(x1_final, x2) as a split GEMM, with the last residual
    # add fused into the same kernel (concat/add never hit HBM).
    if pending is None:
        out = conv3_fused(res, x2, fp["conv3"])
    elif shortcut:
        out = conv3_fused(pending, x2, fp["conv3"], residual=res)
    else:
        out = conv3_fused(pending, x2, fp["conv3"])

    cout = fp["conv3"]["cout"]
    out = out[..., :cout]
    return jnp.transpose(out, (0, 3, 1, 2)).astype(x_nchw.dtype)


def _ref_base_conv(x_nhwc, p, eps=1e-5):
    w = p["w"].astype(jnp.bfloat16)
    k = p["w"].shape[-1]
    pad = (k - 1) // 2
    y = jax.lax.conv_general_dilated(
        x_nhwc, w, window_strides=(1, 1), padding=((pad, pad), (pad, pad)),
        dimension_numbers=("NHWC", "OIHW", "NHWC"),
        preferred_element_type=jnp.float32)
    scale, bias = _fold_bn(p, eps)
    y = y * scale + bias
    y = y * jax.nn.sigmoid(y)
    return y.astype(jnp.bfloat16)


def ref_csp_forward(x_nchw, raw, *, shortcut=True):
    x = jnp.transpose(x_nchw, (0, 2, 3, 1)).astype(jnp.bfloat16)
    x1 = _ref_base_conv(x, raw["conv1"])
    x2 = _ref_base_conv(x, raw["conv2"])
    for blk in raw["m"]:
        y = _ref_base_conv(x1, blk["conv1"])
        y = _ref_base_conv(y, blk["conv2"])
        x1 = x1 + y if shortcut else y
    out = jnp.concatenate([x1, x2], axis=-1)
    out = _ref_base_conv(out, raw["conv3"])
    return jnp.transpose(out, (0, 3, 1, 2)).astype(x_nchw.dtype)


if __name__ == "__main__":
    def run_case(name, N, CIN, H, W, COUT, NB, shortcut, seed):
        key = jax.random.PRNGKey(seed)
        kx, kp = jax.random.split(key)
        x = jax.random.normal(kx, (N, CIN, H, W), dtype=jnp.float32)
        raw = init_csp_params(kp, CIN, COUT, n=NB, expansion=0.5)
        folded = fold_csp_params(raw)

        fwd = jax.jit(functools.partial(csp_layer_forward, fp=folded,
                                        shortcut=shortcut))
        out = jax.block_until_ready(fwd(x))

        ref = ref_csp_forward(x, raw, shortcut=shortcut)
        assert out.shape == (N, COUT, H, W), (name, out.shape)
        assert bool(jnp.all(jnp.isfinite(out))), f"{name}: non-finite output"
        max_err = float(jnp.max(jnp.abs(out - ref)))
        assert bool(jnp.allclose(out, ref, atol=5e-2, rtol=5e-2)), \
            f"{name}: mismatch vs reference (max_abs_err={max_err})"

    # CSPLayer(in_channels=4, out_channels=32, n=1, shortcut=True, expansion=0.5)
    run_case("small", N=2, CIN=4, H=16, W=16, COUT=32, NB=1, shortcut=True, seed=0)
    # Larger case: exercises the double-buffered halo DMA (ht > 1), n=2
    # bottlenecks, and non-trivial channel padding.
    run_case("medium", N=2, CIN=48, H=48, W=48, COUT=96, NB=2, shortcut=True, seed=1)

    print("KERNEL_OK")
</pallas_src>

<mosaic_0001>
module attributes {stable_mosaic.version = 11 : i64} {
  func.func @_pw_kernel(%arg0: i32, %arg1: memref<256x128xbf16, #tpu.memory_space<vmem>>, %arg2: memref<128x128xbf16, #tpu.memory_space<vmem>>, %arg3: memref<1x128xf32, #tpu.memory_space<vmem>>, %arg4: memref<1x128xf32, #tpu.memory_space<vmem>>, %arg5: memref<256x128xbf16, #tpu.memory_space<vmem>>) attributes {dimension_semantics = [#tpu.dimension_semantics<parallel>], iteration_bounds = array<i64: 2>, scalar_prefetch = 0 : i64, scratch_operands = 0 : i64, tpu.core_type = #tpu.core_type<tc>, window_params = [{transform_indices = @transform_0, window_bounds = array<i64: 256, 128>}, {pipeline_mode = #tpu.pipeline_mode<synchronous>, transform_indices = @transform_1, window_bounds = array<i64: 128, 128>}, {pipeline_mode = #tpu.pipeline_mode<synchronous>, transform_indices = @transform_2, window_bounds = array<i64: 1, 128>}, {pipeline_mode = #tpu.pipeline_mode<synchronous>, transform_indices = @transform_3, window_bounds = array<i64: 1, 128>}, {transform_indices = @transform_4, window_bounds = array<i64: 256, 128>}]} {
    %c0 = arith.constant 0 : index
    %c0_0 = arith.constant 0 : index
    %0 = vector.load %arg1[%c0, %c0_0] : memref<256x128xbf16, #tpu.memory_space<vmem>>, vector<256x128xbf16>
    %c0_1 = arith.constant 0 : index
    %c0_2 = arith.constant 0 : index
    %1 = vector.load %arg2[%c0_1, %c0_2] : memref<128x128xbf16, #tpu.memory_space<vmem>>, vector<128x128xbf16>
    %cst = arith.constant dense<0.000000e+00> : vector<256x128xf32>
    %2 = tpu.matmul %0, %1, %cst {dimension_numbers = #tpu.dot_dimension_numbers<[1], [0], [0], [1], [0, 0, 1, 1], [], []>} : vector<256x128xbf16>, vector<128x128xbf16>, vector<256x128xf32> -> vector<256x128xf32>
    %c0_3 = arith.constant 0 : index
    %c0_4 = arith.constant 0 : index
    %3 = vector.load %arg3[%c0_3, %c0_4] : memref<1x128xf32, #tpu.memory_space<vmem>>, vector<1x128xf32>
    %4 = vector.broadcast %3 : vector<1x128xf32> to vector<256x128xf32>
    %5 = arith.mulf %2, %4 : vector<256x128xf32>
    %c0_5 = arith.constant 0 : index
    %c0_6 = arith.constant 0 : index
    %6 = vector.load %arg4[%c0_5, %c0_6] : memref<1x128xf32, #tpu.memory_space<vmem>>, vector<1x128xf32>
    %7 = vector.broadcast %6 : vector<1x128xf32> to vector<256x128xf32>
    %8 = arith.addf %5, %7 : vector<256x128xf32>
    %cst_7 = arith.constant 0.000000e+00 : f32
    %9 = vector.broadcast %cst_7 : f32 to vector<256x128xf32>
    %10 = arith.subf %9, %8 : vector<256x128xf32>
    %11 = math.exp %10 : vector<256x128xf32>
    %cst_8 = arith.constant 1.000000e+00 : f32
    %12 = vector.broadcast %cst_8 : f32 to vector<256x128xf32>
    %13 = arith.addf %12, %11 : vector<256x128xf32>
    %14 = tpu.reciprocal %13 {approx = true} : vector<256x128xf32> -> vector<256x128xf32>
    %15 = arith.mulf %8, %14 : vector<256x128xf32>
    %16 = arith.truncf %15 : vector<256x128xf32> to vector<256x128xbf16>
    %c0_9 = arith.constant 0 : index
    %c0_10 = arith.constant 0 : index
    %17 = vector.load %arg5[%c0_9, %c0_10] : memref<256x128xbf16, #tpu.memory_space<vmem>>, vector<256x128xbf16>
    tpu.vector_store %arg5[%c0_9, %c0_10], %16 {strides = array<i32>} : memref<256x128xbf16, #tpu.memory_space<vmem>>, vector<256x128xbf16>,
    return
  }
  func.func @transform_0(%arg0: i32) -> (i32, i32) {
    %c0_i32 = arith.constant 0 : i32
    %c0_i32_0 = arith.constant 0 : i32
    return %arg0, %c0_i32 : i32, i32
  }
  func.func @transform_1(%arg0: i32) -> (i32, i32) {
    %c0_i32 = arith.constant 0 : i32
    %c0_i32_0 = arith.constant 0 : i32
    %c0_i32_1 = arith.constant 0 : i32
    return %c0_i32, %c0_i32_0 : i32, i32
  }
  func.func @transform_2(%arg0: i32) -> (i32, i32) {
    %c0_i32 = arith.constant 0 : i32
    %c0_i32_0 = arith.constant 0 : i32
    %c0_i32_1 = arith.constant 0 : i32
    return %c0_i32, %c0_i32_0 : i32, i32
  }
  func.func @transform_3(%arg0: i32) -> (i32, i32) {
    %c0_i32 = arith.constant 0 : i32
    %c0_i32_0 = arith.constant 0 : i32
    %c0_i32_1 = arith.constant 0 : i32
    return %c0_i32, %c0_i32_0 : i32, i32
  }
  func.func @transform_4(%arg0: i32) -> (i32, i32) {
    %c0_i32 = arith.constant 0 : i32
    %c0_i32_0 = arith.constant 0 : i32
    return %arg0, %c0_i32 : i32, i32
  }
}

module attributes {stable_mosaic.version = 11 : i64} {
  func.func @_conv3x3_kernel(%arg0: i32, %arg1: i32, %arg2: memref<864x128xbf16, #tpu.memory_space<any>>, %arg3: memref<1152x128xbf16, #tpu.memory_space<vmem>>, %arg4: memref<1x128xf32, #tpu.memory_space<vmem>>, %arg5: memref<1x128xf32, #tpu.memory_space<vmem>>, %arg6: memref<384x128xbf16, #tpu.memory_space<vmem>>, %arg7: memref<2x440x128xbf16, #tpu.memory_space<vmem>>, %arg8: memref<384x1152xbf16, #tpu.memory_space<vmem>>, %arg9: memref<2x!tpu.dma_semaphore, #tpu.memory_space<semaphore_mem>>) attributes {dimension_semantics = [#tpu.dimension_semantics<parallel>, #tpu.dimension_semantics<arbitrary>], iteration_bounds = array<i64: 2, 1>, scalar_prefetch = 0 : i64, scratch_operands = 3 : i64, tpu.core_type = #tpu.core_type<tc>, window_params = [{}, {pipeline_mode = #tpu.pipeline_mode<synchronous>, transform_indices = @transform_1, window_bounds = array<i64: 1152, 128>}, {pipeline_mode = #tpu.pipeline_mode<synchronous>, transform_indices = @transform_2, window_bounds = array<i64: 1, 128>}, {pipeline_mode = #tpu.pipeline_mode<synchronous>, transform_indices = @transform_3, window_bounds = array<i64: 1, 128>}, {transform_indices = @transform_4, window_bounds = array<i64: 384, 128>}]} {
    %c2_i32 = arith.constant 2 : i32
    %c0_i32 = arith.constant 0 : i32
    %0 = arith.cmpi eq, %c2_i32, %c0_i32 : i32
    %c1_i32 = arith.constant 1 : i32
    %1 = arith.select %0, %c1_i32, %c2_i32 : i32
    %2 = arith.remsi %arg1, %1 : i32
    %c0_i32_0 = arith.constant 0 : i32
    %3 = arith.cmpi ne, %2, %c0_i32_0 : i32
    %c0_i32_1 = arith.constant 0 : i32
    %4 = arith.cmpi slt, %2, %c0_i32_1 : i32
    %c0_i32_2 = arith.constant 0 : i32
    %5 = arith.cmpi slt, %1, %c0_i32_2 : i32
    %6 = arith.xori %4, %5 : i1
    %7 = arith.andi %6, %3 : i1
    %8 = arith.addi %2, %1 : i32
    %9 = arith.select %7, %8, %2 : i32
    %c0_i32_3 = arith.constant 0 : i32
    %10 = arith.cmpi eq, %arg1, %c0_i32_3 : i32
    %11 = arith.extui %10 : i1 to i32
    %c0_i32_4 = arith.constant 0 : i32
    %12 = arith.cmpi ne, %11, %c0_i32_4 : i32
    scf.if %12 {
      %cst_42 = arith.constant 0.000000e+00 : bf16
      %80 = vector.broadcast %cst_42 : bf16 to vector<2x8x128xbf16>
      %c0_43 = arith.constant 0 : index
      %c432 = arith.constant 432 : index
      %c0_44 = arith.constant 0 : index
      %81 = vector.load %arg7[%c0_43, %c432, %c0_44] : memref<2x440x128xbf16, #tpu.memory_space<vmem>>, vector<2x8x128xbf16>
      tpu.vector_store %arg7[%c0_43, %c432, %c0_44], %80 {strides = array<i32>} : memref<2x440x128xbf16, #tpu.memory_space<vmem>>, vector<2x8x128xbf16>,
      %c18_i32_45 = arith.constant 18 : i32
      %82 = arith.muli %arg0, %c18_i32_45 : i32
      %c0_i32_46 = arith.constant 0 : i32
      %83 = arith.addi %82, %c0_i32_46 : i32
      %c24_i32_47 = arith.constant 24 : i32
      %84 = arith.muli %83, %c24_i32_47 : i32
      %c0_i32_48 = arith.constant 0 : i32
      %c0_i32_49 = arith.constant 0 : i32
      %c0_i32_50 = arith.constant 0 : i32
      %85 = tpu.memref_slice %arg2[%84, %c0_i32_50] : memref<864x128xbf16, #tpu.memory_space<any>> -> memref<432x128xbf16, #tpu.memory_space<any>>
      %c0_i32_51 = arith.constant 0 : i32
      %c0_i32_52 = arith.constant 0 : i32
      %86 = tpu.memref_slice %arg7[%c0_i32_48, %c0_i32_51, %c0_i32_52] : memref<2x440x128xbf16, #tpu.memory_space<vmem>> -> memref<1x432x128xbf16, #tpu.memory_space<vmem>>
      %87 = tpu.memref_squeeze %86 : memref<1x432x128xbf16, #tpu.memory_space<vmem>> -> memref<432x128xbf16, #tpu.memory_space<vmem>>
      %88 = tpu.memref_slice %arg9[%c0_i32_49] : memref<2x!tpu.dma_semaphore, #tpu.memory_space<semaphore_mem>> -> memref<1x!tpu.dma_semaphore, #tpu.memory_space<semaphore_mem>>
      %89 = tpu.memref_squeeze %88 : memref<1x!tpu.dma_semaphore, #tpu.memory_space<semaphore_mem>> -> memref<!tpu.dma_semaphore, #tpu.memory_space<semaphore_mem>>
      tpu.enqueue_dma source(%85 : memref<432x128xbf16, #tpu.memory_space<any>>) target(%87 : memref<432x128xbf16, #tpu.memory_space<vmem>>) target_semaphore(%89 : memref<!tpu.dma_semaphore, #tpu.memory_space<semaphore_mem>>)
    } else {
    }
    %c1_i32_5 = arith.constant 1 : i32
    %13 = arith.addi %arg1, %c1_i32_5 : i32
    %c1_i32_6 = arith.constant 1 : i32
    %14 = arith.cmpi slt, %13, %c1_i32_6 : i32
    %15 = arith.extui %14 : i1 to i32
    %c0_i32_7 = arith.constant 0 : i32
    %16 = arith.cmpi ne, %15, %c0_i32_7 : i32
    scf.if %16 {
      %c1_i32_42 = arith.constant 1 : i32
      %80 = arith.addi %arg1, %c1_i32_42 : i32
      %c1_i32_43 = arith.constant 1 : i32
      %81 = arith.subi %c1_i32_43, %9 : i32
      %c18_i32_44 = arith.constant 18 : i32
      %82 = arith.muli %arg0, %c18_i32_44 : i32
      %c16_i32_45 = arith.constant 16 : i32
      %83 = arith.muli %80, %c16_i32_45 : i32
      %84 = arith.addi %82, %83 : i32
      %c24_i32_46 = arith.constant 24 : i32
      %85 = arith.muli %84, %c24_i32_46 : i32
      %c0_i32_47 = arith.constant 0 : i32
      %86 = tpu.memref_slice %arg2[%85, %c0_i32_47] : memref<864x128xbf16, #tpu.memory_space<any>> -> memref<432x128xbf16, #tpu.memory_space<any>>
      %c0_i32_48 = arith.constant 0 : i32
      %c0_i32_49 = arith.constant 0 : i32
      %87 = tpu.memref_slice %arg7[%81, %c0_i32_48, %c0_i32_49] : memref<2x440x128xbf16, #tpu.memory_space<vmem>> -> memref<1x432x128xbf16, #tpu.memory_space<vmem>>
      %88 = tpu.memref_squeeze %87 : memref<1x432x128xbf16, #tpu.memory_space<vmem>> -> memref<432x128xbf16, #tpu.memory_space<vmem>>
      %89 = tpu.memref_slice %arg9[%81] : memref<2x!tpu.dma_semaphore, #tpu.memory_space<semaphore_mem>> -> memref<1x!tpu.dma_semaphore, #tpu.memory_space<semaphore_mem>>
      %90 = tpu.memref_squeeze %89 : memref<1x!tpu.dma_semaphore, #tpu.memory_space<semaphore_mem>> -> memref<!tpu.dma_semaphore, #tpu.memory_space<semaphore_mem>>
      tpu.enqueue_dma source(%86 : memref<432x128xbf16, #tpu.memory_space<any>>) target(%88 : memref<432x128xbf16, #tpu.memory_space<vmem>>) target_semaphore(%90 : memref<!tpu.dma_semaphore, #tpu.memory_space<semaphore_mem>>)
    } else {
    }
    %c18_i32 = arith.constant 18 : i32
    %17 = arith.muli %arg0, %c18_i32 : i32
    %c16_i32 = arith.constant 16 : i32
    %18 = arith.muli %arg1, %c16_i32 : i32
    %19 = arith.addi %17, %18 : i32
    %c24_i32 = arith.constant 24 : i32
    %20 = arith.muli %19, %c24_i32 : i32
    %c0_i32_8 = arith.constant 0 : i32
    %21 = tpu.memref_slice %arg2[%20, %c0_i32_8] : memref<864x128xbf16, #tpu.memory_space<any>> -> memref<432x128xbf16, #tpu.memory_space<any>>
    %c0_i32_9 = arith.constant 0 : i32
    %c0_i32_10 = arith.constant 0 : i32
    %22 = tpu.memref_slice %arg7[%9, %c0_i32_9, %c0_i32_10] : memref<2x440x128xbf16, #tpu.memory_space<vmem>> -> memref<1x432x128xbf16, #tpu.memory_space<vmem>>
    %23 = tpu.memref_squeeze %22 : memref<1x432x128xbf16, #tpu.memory_space<vmem>> -> memref<432x128xbf16, #tpu.memory_space<vmem>>
    %24 = tpu.memref_slice %arg9[%9] : memref<2x!tpu.dma_semaphore, #tpu.memory_space<semaphore_mem>> -> memref<1x!tpu.dma_semaphore, #tpu.memory_space<semaphore_mem>>
    %25 = tpu.memref_squeeze %24 : memref<1x!tpu.dma_semaphore, #tpu.memory_space<semaphore_mem>> -> memref<!tpu.dma_semaphore, #tpu.memory_space<semaphore_mem>>
    tpu.wait_dma2 semaphore(%25 : memref<!tpu.dma_semaphore, #tpu.memory_space<semaphore_mem>>) src(%21 : memref<432x128xbf16, #tpu.memory_space<any>>) dst(%23 : memref<432x128xbf16, #tpu.memory_space<vmem>>)
    %26 = arith.index_cast %9 : i32 to index
    %c0 = arith.constant 0 : index
    %c0_11 = arith.constant 0 : index
    %27 = vector.load %arg7[%26, %c0, %c0_11] : memref<2x440x128xbf16, #tpu.memory_space<vmem>>, vector<1x384x128xbf16>
    %28 = vector.shape_cast %27 : vector<1x384x128xbf16> to vector<384x128xbf16>
    %c0_12 = arith.constant 0 : index
    %c0_13 = arith.constant 0 : index
    %29 = vector.load %arg8[%c0_12, %c0_13] : memref<384x1152xbf16, #tpu.memory_space<vmem>>, vector<384x128xbf16>
    tpu.vector_store %arg8[%c0_12, %c0_13], %28 {strides = array<i32>} : memref<384x1152xbf16, #tpu.memory_space<vmem>>, vector<384x128xbf16>,
    %30 = arith.index_cast %9 : i32 to index
    %c1 = arith.constant 1 : index
    %c0_14 = arith.constant 0 : index
    %31 = vector.load %arg7[%30, %c1, %c0_14] : memref<2x440x128xbf16, #tpu.memory_space<vmem>>, vector<1x384x128xbf16>
    %32 = vector.shape_cast %31 : vector<1x384x128xbf16> to vector<384x128xbf16>
    %c0_15 = arith.constant 0 : index
    %c128 = arith.constant 128 : index
    %33 = vector.load %arg8[%c0_15, %c128] : memref<384x1152xbf16, #tpu.memory_space<vmem>>, vector<384x128xbf16>
    tpu.vector_store %arg8[%c0_15, %c128], %32 {strides = array<i32>} : memref<384x1152xbf16, #tpu.memory_space<vmem>>, vector<384x128xbf16>,
    %34 = arith.index_cast %9 : i32 to index
    %c2 = arith.constant 2 : index
    %c0_16 = arith.constant 0 : index
    %35 = vector.load %arg7[%34, %c2, %c0_16] : memref<2x440x128xbf16, #tpu.memory_space<vmem>>, vector<1x384x128xbf16>
    %36 = vector.shape_cast %35 : vector<1x384x128xbf16> to vector<384x128xbf16>
    %c0_17 = arith.constant 0 : index
    %c256 = arith.constant 256 : index
    %37 = vector.load %arg8[%c0_17, %c256] : memref<384x1152xbf16, #tpu.memory_space<vmem>>, vector<384x128xbf16>
    tpu.vector_store %arg8[%c0_17, %c256], %36 {strides = array<i32>} : memref<384x1152xbf16, #tpu.memory_space<vmem>>, vector<384x128xbf16>,
    %38 = arith.index_cast %9 : i32 to index
    %c24 = arith.constant 24 : index
    %c0_18 = arith.constant 0 : index
    %39 = vector.load %arg7[%38, %c24, %c0_18] : memref<2x440x128xbf16, #tpu.memory_space<vmem>>, vector<1x384x128xbf16>
    %40 = vector.shape_cast %39 : vector<1x384x128xbf16> to vector<384x128xbf16>
    %c0_19 = arith.constant 0 : index
    %c384 = arith.constant 384 : index
    %41 = vector.load %arg8[%c0_19, %c384] : memref<384x1152xbf16, #tpu.memory_space<vmem>>, vector<384x128xbf16>
    tpu.vector_store %arg8[%c0_19, %c384], %40 {strides = array<i32>} : memref<384x1152xbf16, #tpu.memory_space<vmem>>, vector<384x128xbf16>,
    %42 = arith.index_cast %9 : i32 to index
    %c25 = arith.constant 25 : index
    %c0_20 = arith.constant 0 : index
    %43 = vector.load %arg7[%42, %c25, %c0_20] : memref<2x440x128xbf16, #tpu.memory_space<vmem>>, vector<1x384x128xbf16>
    %44 = vector.shape_cast %43 : vector<1x384x128xbf16> to vector<384x128xbf16>
    %c0_21 = arith.constant 0 : index
    %c512 = arith.constant 512 : index
    %45 = vector.load %arg8[%c0_21, %c512] : memref<384x1152xbf16, #tpu.memory_space<vmem>>, vector<384x128xbf16>
    tpu.vector_store %arg8[%c0_21, %c512], %44 {strides = array<i32>} : memref<384x1152xbf16, #tpu.memory_space<vmem>>, vector<384x128xbf16>,
    %46 = arith.index_cast %9 : i32 to index
    %c26 = arith.constant 26 : index
    %c0_22 = arith.constant 0 : index
    %47 = vector.load %arg7[%46, %c26, %c0_22] : memref<2x440x128xbf16, #tpu.memory_space<vmem>>, vector<1x384x128xbf16>
    %48 = vector.shape_cast %47 : vector<1x384x128xbf16> to vector<384x128xbf16>
    %c0_23 = arith.constant 0 : index
    %c640 = arith.constant 640 : index
    %49 = vector.load %arg8[%c0_23, %c640] : memref<384x1152xbf16, #tpu.memory_space<vmem>>, vector<384x128xbf16>
    tpu.vector_store %arg8[%c0_23, %c640], %48 {strides = array<i32>} : memref<384x1152xbf16, #tpu.memory_space<vmem>>, vector<384x128xbf16>,
    %50 = arith.index_cast %9 : i32 to index
    %c48 = arith.constant 48 : index
    %c0_24 = arith.constant 0 : index
    %51 = vector.load %arg7[%50, %c48, %c0_24] : memref<2x440x128xbf16, #tpu.memory_space<vmem>>, vector<1x384x128xbf16>
    %52 = vector.shape_cast %51 : vector<1x384x128xbf16> to vector<384x128xbf16>
    %c0_25 = arith.constant 0 : index
    %c768 = arith.constant 768 : index
    %53 = vector.load %arg8[%c0_25, %c768] : memref<384x1152xbf16, #tpu.memory_space<vmem>>, vector<384x128xbf16>
    tpu.vector_store %arg8[%c0_25, %c768], %52 {strides = array<i32>} : memref<384x1152xbf16, #tpu.memory_space<vmem>>, vector<384x128xbf16>,
    %54 = arith.index_cast %9 : i32 to index
    %c49 = arith.constant 49 : index
    %c0_26 = arith.constant 0 : index
    %55 = vector.load %arg7[%54, %c49, %c0_26] : memref<2x440x128xbf16, #tpu.memory_space<vmem>>, vector<1x384x128xbf16>
    %56 = vector.shape_cast %55 : vector<1x384x128xbf16> to vector<384x128xbf16>
    %c0_27 = arith.constant 0 : index
    %c896 = arith.constant 896 : index
    %57 = vector.load %arg8[%c0_27, %c896] : memref<384x1152xbf16, #tpu.memory_space<vmem>>, vector<384x128xbf16>
    tpu.vector_store %arg8[%c0_27, %c896], %56 {strides = array<i32>} : memref<384x1152xbf16, #tpu.memory_space<vmem>>, vector<384x128xbf16>,
    %58 = arith.index_cast %9 : i32 to index
    %c50 = arith.constant 50 : index
    %c0_28 = arith.constant 0 : index
    %59 = vector.load %arg7[%58, %c50, %c0_28] : memref<2x440x128xbf16, #tpu.memory_space<vmem>>, vector<1x384x128xbf16>
    %60 = vector.shape_cast %59 : vector<1x384x128xbf16> to vector<384x128xbf16>
    %c0_29 = arith.constant 0 : index
    %c1024 = arith.constant 1024 : index
    %61 = vector.load %arg8[%c0_29, %c1024] : memref<384x1152xbf16, #tpu.memory_space<vmem>>, vector<384x128xbf16>
    tpu.vector_store %arg8[%c0_29, %c1024], %60 {strides = array<i32>} : memref<384x1152xbf16, #tpu.memory_space<vmem>>, vector<384x128xbf16>,
    %c0_30 = arith.constant 0 : index
    %c0_31 = arith.constant 0 : index
    %62 = vector.load %arg8[%c0_30, %c0_31] : memref<384x1152xbf16, #tpu.memory_space<vmem>>, vector<384x1152xbf16>
    %c0_32 = arith.constant 0 : index
    %c0_33 = arith.constant 0 : index
    %63 = vector.load %arg3[%c0_32, %c0_33] : memref<1152x128xbf16, #tpu.memory_space<vmem>>, vector<1152x128xbf16>
    %cst = arith.constant dense<0.000000e+00> : vector<384x128xf32>
    %64 = tpu.matmul %62, %63, %cst {dimension_numbers = #tpu.dot_dimension_numbers<[1], [0], [0], [1], [0, 0, 1, 1], [], []>} : vector<384x1152xbf16>, vector<1152x128xbf16>, vector<384x128xf32> -> vector<384x128xf32>
    %c0_34 = arith.constant 0 : index
    %c0_35 = arith.constant 0 : index
    %65 = vector.load %arg4[%c0_34, %c0_35] : memref<1x128xf32, #tpu.memory_space<vmem>>, vector<1x128xf32>
    %66 = vector.broadcast %65 : vector<1x128xf32> to vector<384x128xf32>
    %67 = arith.mulf %64, %66 : vector<384x128xf32>
    %c0_36 = arith.constant 0 : index
    %c0_37 = arith.constant 0 : index
    %68 = vector.load %arg5[%c0_36, %c0_37] : memref<1x128xf32, #tpu.memory_space<vmem>>, vector<1x128xf32>
    %69 = vector.broadcast %68 : vector<1x128xf32> to vector<384x128xf32>
    %70 = arith.addf %67, %69 : vector<384x128xf32>
    %cst_38 = arith.constant 0.000000e+00 : f32
    %71 = vector.broadcast %cst_38 : f32 to vector<384x128xf32>
    %72 = arith.subf %71, %70 : vector<384x128xf32>
    %73 = math.exp %72 : vector<384x128xf32>
    %cst_39 = arith.constant 1.000000e+00 : f32
    %74 = vector.broadcast %cst_39 : f32 to vector<384x128xf32>
    %75 = arith.addf %74, %73 : vector<384x128xf32>
    %76 = tpu.reciprocal %75 {approx = true} : vector<384x128xf32> -> vector<384x128xf32>
    %77 = arith.mulf %70, %76 : vector<384x128xf32>
    %78 = arith.truncf %77 : vector<384x128xf32> to vector<384x128xbf16>
    %c0_40 = arith.constant 0 : index
    %c0_41 = arith.constant 0 : index
    %79 = vector.load %arg6[%c0_40, %c0_41] : memref<384x128xbf16, #tpu.memory_space<vmem>>, vector<384x128xbf16>
    tpu.vector_store %arg6[%c0_40, %c0_41], %78 {strides = array<i32>} : memref<384x128xbf16, #tpu.memory_space<vmem>>, vector<384x128xbf16>,
    return
  }
  func.func @transform_1(%arg0: i32, %arg1: i32) -> (i32, i32) {
    %c0_i32 = arith.constant 0 : i32
    %c0_i32_0 = arith.constant 0 : i32
    %c0_i32_1 = arith.constant 0 : i32
    return %c0_i32, %c0_i32_0 : i32, i32
  }
  func.func @transform_2(%arg0: i32, %arg1: i32) -> (i32, i32) {
    %c0_i32 = arith.constant 0 : i32
    %c0_i32_0 = arith.constant 0 : i32
    %c0_i32_1 = arith.constant 0 : i32
    return %c0_i32, %c0_i32_0 : i32, i32
  }
  func.func @transform_3(%arg0: i32, %arg1: i32) -> (i32, i32) {
    %c0_i32 = arith.constant 0 : i32
    %c0_i32_0 = arith.constant 0 : i32
    %c0_i32_1 = arith.constant 0 : i32
    return %c0_i32, %c0_i32_0 : i32, i32
  }
  func.func @transform_4(%arg0: i32, %arg1: i32) -> (i32, i32) {
    %c1_i32 = arith.constant 1 : i32
    %0 = arith.muli %arg0, %c1_i32 : i32
    %1 = arith.addi %0, %arg1 : i32
    %c0_i32 = arith.constant 0 : i32
    %c0_i32_0 = arith.constant 0 : i32
    return %1, %c0_i32 : i32, i32
  }
}

module attributes {stable_mosaic.version = 11 : i64} {
  func.func @_pw_cat2_res_kernel(%arg0: i32, %arg1: memref<256x128xbf16, #tpu.memory_space<vmem>>, %arg2: memref<256x128xbf16, #tpu.memory_space<vmem>>, %arg3: memref<256x128xbf16, #tpu.memory_space<vmem>>, %arg4: memref<128x128xbf16, #tpu.memory_space<vmem>>, %arg5: memref<128x128xbf16, #tpu.memory_space<vmem>>, %arg6: memref<1x128xf32, #tpu.memory_space<vmem>>, %arg7: memref<1x128xf32, #tpu.memory_space<vmem>>, %arg8: memref<256x128xbf16, #tpu.memory_space<vmem>>) attributes {dimension_semantics = [#tpu.dimension_semantics<parallel>], iteration_bounds = array<i64: 2>, scalar_prefetch = 0 : i64, scratch_operands = 0 : i64, tpu.core_type = #tpu.core_type<tc>, window_params = [{transform_indices = @transform_0, window_bounds = array<i64: 256, 128>}, {transform_indices = @transform_1, window_bounds = array<i64: 256, 128>}, {transform_indices = @transform_2, window_bounds = array<i64: 256, 128>}, {pipeline_mode = #tpu.pipeline_mode<synchronous>, transform_indices = @transform_3, window_bounds = array<i64: 128, 128>}, {pipeline_mode = #tpu.pipeline_mode<synchronous>, transform_indices = @transform_4, window_bounds = array<i64: 128, 128>}, {pipeline_mode = #tpu.pipeline_mode<synchronous>, transform_indices = @transform_5, window_bounds = array<i64: 1, 128>}, {pipeline_mode = #tpu.pipeline_mode<synchronous>, transform_indices = @transform_6, window_bounds = array<i64: 1, 128>}, {transform_indices = @transform_7, window_bounds = array<i64: 256, 128>}]} {
    %c0 = arith.constant 0 : index
    %c0_0 = arith.constant 0 : index
    %0 = vector.load %arg1[%c0, %c0_0] : memref<256x128xbf16, #tpu.memory_space<vmem>>, vector<256x128xbf16>
    %c0_1 = arith.constant 0 : index
    %c0_2 = arith.constant 0 : index
    %1 = vector.load %arg2[%c0_1, %c0_2] : memref<256x128xbf16, #tpu.memory_space<vmem>>, vector<256x128xbf16>
    %2 = arith.addf %0, %1 : vector<256x128xbf16>
    %c0_3 = arith.constant 0 : index
    %c0_4 = arith.constant 0 : index
    %3 = vector.load %arg4[%c0_3, %c0_4] : memref<128x128xbf16, #tpu.memory_space<vmem>>, vector<128x128xbf16>
    %cst = arith.constant dense<0.000000e+00> : vector<256x128xf32>
    %4 = tpu.matmul %2, %3, %cst {dimension_numbers = #tpu.dot_dimension_numbers<[1], [0], [0], [1], [0, 0, 1, 1], [], []>} : vector<256x128xbf16>, vector<128x128xbf16>, vector<256x128xf32> -> vector<256x128xf32>
    %c0_5 = arith.constant 0 : index
    %c0_6 = arith.constant 0 : index
    %5 = vector.load %arg3[%c0_5, %c0_6] : memref<256x128xbf16, #tpu.memory_space<vmem>>, vector<256x128xbf16>
    %c0_7 = arith.constant 0 : index
    %c0_8 = arith.constant 0 : index
    %6 = vector.load %arg5[%c0_7, %c0_8] : memref<128x128xbf16, #tpu.memory_space<vmem>>, vector<128x128xbf16>
    %cst_9 = arith.constant dense<0.000000e+00> : vector<256x128xf32>
    %7 = tpu.matmul %5, %6, %cst_9 {dimension_numbers = #tpu.dot_dimension_numbers<[1], [0], [0], [1], [0, 0, 1, 1], [], []>} : vector<256x128xbf16>, vector<128x128xbf16>, vector<256x128xf32> -> vector<256x128xf32>
    %8 = arith.addf %4, %7 : vector<256x128xf32>
    %c0_10 = arith.constant 0 : index
    %c0_11 = arith.constant 0 : index
    %9 = vector.load %arg6[%c0_10, %c0_11] : memref<1x128xf32, #tpu.memory_space<vmem>>, vector<1x128xf32>
    %10 = vector.broadcast %9 : vector<1x128xf32> to vector<256x128xf32>
    %11 = arith.mulf %8, %10 : vector<256x128xf32>
    %c0_12 = arith.constant 0 : index
    %c0_13 = arith.constant 0 : index
    %12 = vector.load %arg7[%c0_12, %c0_13] : memref<1x128xf32, #tpu.memory_space<vmem>>, vector<1x128xf32>
    %13 = vector.broadcast %12 : vector<1x128xf32> to vector<256x128xf32>
    %14 = arith.addf %11, %13 : vector<256x128xf32>
    %cst_14 = arith.constant 0.000000e+00 : f32
    %15 = vector.broadcast %cst_14 : f32 to vector<256x128xf32>
    %16 = arith.subf %15, %14 : vector<256x128xf32>
    %17 = math.exp %16 : vector<256x128xf32>
    %cst_15 = arith.constant 1.000000e+00 : f32
    %18 = vector.broadcast %cst_15 : f32 to vector<256x128xf32>
    %19 = arith.addf %18, %17 : vector<256x128xf32>
    %20 = tpu.reciprocal %19 {approx = true} : vector<256x128xf32> -> vector<256x128xf32>
    %21 = arith.mulf %14, %20 : vector<256x128xf32>
    %22 = arith.truncf %21 : vector<256x128xf32> to vector<256x128xbf16>
    %c0_16 = arith.constant 0 : index
    %c0_17 = arith.constant 0 : index
    %23 = vector.load %arg8[%c0_16, %c0_17] : memref<256x128xbf16, #tpu.memory_space<vmem>>, vector<256x128xbf16>
    tpu.vector_store %arg8[%c0_16, %c0_17], %22 {strides = array<i32>} : memref<256x128xbf16, #tpu.memory_space<vmem>>, vector<256x128xbf16>,
    return
  }
  func.func @transform_0(%arg0: i32) -> (i32, i32) {
    %c0_i32 = arith.constant 0 : i32
    %c0_i32_0 = arith.constant 0 : i32
    return %arg0, %c0_i32 : i32, i32
  }
  func.func @transform_1(%arg0: i32) -> (i32, i32) {
    %c0_i32 = arith.constant 0 : i32
    %c0_i32_0 = arith.constant 0 : i32
    return %arg0, %c0_i32 : i32, i32
  }
  func.func @transform_2(%arg0: i32) -> (i32, i32) {
    %c0_i32 = arith.constant 0 : i32
    %c0_i32_0 = arith.constant 0 : i32
    return %arg0, %c0_i32 : i32, i32
  }
  func.func @transform_3(%arg0: i32) -> (i32, i32) {
    %c0_i32 = arith.constant 0 : i32
    %c0_i32_0 = arith.constant 0 : i32
    %c0_i32_1 = arith.constant 0 : i32
    return %c0_i32, %c0_i32_0 : i32, i32
  }
  func.func @transform_4(%arg0: i32) -> (i32, i32) {
    %c0_i32 = arith.constant 0 : i32
    %c0_i32_0 = arith.constant 0 : i32
    %c0_i32_1 = arith.constant 0 : i32
    return %c0_i32, %c0_i32_0 : i32, i32
  }
  func.func @transform_5(%arg0: i32) -> (i32, i32) {
    %c0_i32 = arith.constant 0 : i32
    %c0_i32_0 = arith.constant 0 : i32
    %c0_i32_1 = arith.constant 0 : i32
    return %c0_i32, %c0_i32_0 : i32, i32
  }
  func.func @transform_6(%arg0: i32) -> (i32, i32) {
    %c0_i32 = arith.constant 0 : i32
    %c0_i32_0 = arith.constant 0 : i32
    %c0_i32_1 = arith.constant 0 : i32
    return %c0_i32, %c0_i32_0 : i32, i32
  }
  func.func @transform_7(%arg0: i32) -> (i32, i32) {
    %c0_i32 = arith.constant 0 : i32
    %c0_i32_0 = arith.constant 0 : i32
    return %arg0, %c0_i32 : i32, i32
  }
}

</mosaic_0001>

<llo_original>
// kernel: csp_layer_forward.5
$region0: #{csp_layer_forward.5}
  #allocation0 [shape = 'u32[]', space=smem, size = 0x4, offset = 0x4, fixed_abs, tag = 'smem constant byte address 0x4 - core index']
  #allocation1 [shape = 'u32[144,128]{1,0:T(1,128)}', space=vmem, size = 0x12000, scoped, tag = 'internal scratch']
  %s0 = inlined_call_operand.vmem [shape: bf16[512,128], index: 0, kind: input, shape index: {}]
  %s1 = inlined_call_operand.vmem [shape: bf16[128,128], index: 1, kind: input, shape index: {}]
  %s2 = inlined_call_operand.vmem [shape: f32[1,128], index: 2, kind: input, shape index: {}]
  %s3 = inlined_call_operand.vmem [shape: f32[1,128], index: 3, kind: input, shape index: {}]
  %s4 = inlined_call_operand.vmem [shape: bf16[512,128], index: 4, kind: output, shape index: {}]
  %s5 = sld [smem:[#allocation0]]
  $region49: #{csp_layer_forward.5} parent=0
    _
  %s7 = ssub.s32 1, %s5
  %s8 = scalar_select 0, %s7, %s5
  loop: start=0, step=1, limit=4
  $region2: #{csp_layer_forward.5} parent=0 // loop_pre_header
    _
  $region3: #{csp_layer_forward.5} parent=0 // loop_header
    %s10 = sphi 0, %s14
    %p11 = scmp.ge.s32.totalorder %s10, 4
    %s20 = sphi 0, %s22
    %s23 = sphi 0, %s20
    %s24 = sphi 0, %s23
    %s40 = sphi 0, %s24
    %s44 = sphi 0, %s44
    %s46 = sphi 0, %s44
    %s47 = sphi 0, %s46
    %s61 = sphi 0, %s47
    %s65 = sphi 0, %s65
    %s67 = sphi 0, %s65
    %s68 = sphi 0, %s67
    %s82 = sphi 0, %s68
    %s86 = sphi 0, %s86
    %s88 = sphi 0, %s86
    %s89 = sphi 0, %s88
    %s103 = sphi 0, %s89
    %s109 = sphi 0, %s111
    %s112 = sphi 0, %s109
    %s113 = sphi 0, %s112
    %s129 = sphi 0, %s113
  $region4: #{csp_layer_forward.5} parent=0 // loop_header_branch
    %13 = sbr.rel (%p11) target = $region8
  $region5: #{csp_layer_forward.5} parent=0 // loop_body
    %s15 = ssub.s32 %s10, 1
    %s16 = ssub.s32 %s10, 2
    %s17 = sadd.s32 %s10, 1
    %s18 = ssub.s32 %s10, %s17
    %p19 = scmp.eq.s32.totalorder %s18, 0
    %s21 = sadd.s32 %s20, 1
    %s22 = scalar_select %p19, %s20, %s21
    %p25 = pneg %p19
    %p26 = scmp.eq.s32.totalorder %s10, 1
    %p27 = por %p25, %p26
    %p28 = scmp.ne.s32.totalorder %s20, %s23
    %p29 = scmp.eq.s32.totalorder %s10, 0
    %p30 = por %p28, %p29
    %p31 = scmp.ne.s32.totalorder %s20, %s23
    %p32 = scmp.eq.s32.totalorder %s15, 1
    %p33 = por %p31, %p32
    %p34 = scmp.ne.s32.totalorder %s23, %s24
    %p35 = scmp.eq.s32.totalorder %s15, 0
    %p36 = por %p34, %p35
    %p37 = scmp.ne.s32.totalorder %s23, %s24
    %p38 = scmp.eq.s32.totalorder %s16, 1
    %p39 = por %p37, %p38
    %p41 = scmp.ne.s32.totalorder %s24, %s40
    %p42 = scmp.eq.s32.totalorder %s16, 0
    %p43 = por %p41, %p42
    %s45 = sadd.s32 %s44, 1
    %p48 = scmp.eq.s32.totalorder %s10, 1
    %p49 = scmp.ne.s32.totalorder %s44, %s46
    %p50 = scmp.eq.s32.totalorder %s10, 0
    %p51 = por %p49, %p50
    %p52 = scmp.ne.s32.totalorder %s44, %s46
    %p53 = scmp.eq.s32.totalorder %s15, 1
    %p54 = por %p52, %p53
    %p55 = scmp.ne.s32.totalorder %s46, %s47
    %p56 = scmp.eq.s32.totalorder %s15, 0
    %p57 = por %p55, %p56
    %p58 = scmp.ne.s32.totalorder %s46, %s47
    %p59 = scmp.eq.s32.totalorder %s16, 1
    %p60 = por %p58, %p59
    %p62 = scmp.ne.s32.totalorder %s47, %s61
    %p63 = scmp.eq.s32.totalorder %s16, 0
    %p64 = por %p62, %p63
    %s66 = sadd.s32 %s65, 1
    %p69 = scmp.eq.s32.totalorder %s10, 1
    %p70 = scmp.ne.s32.totalorder %s65, %s67
    %p71 = scmp.eq.s32.totalorder %s10, 0
    %p72 = por %p70, %p71
    %p73 = scmp.ne.s32.totalorder %s65, %s67
    %p74 = scmp.eq.s32.totalorder %s15, 1
    %p75 = por %p73, %p74
    %p76 = scmp.ne.s32.totalorder %s67, %s68
    %p77 = scmp.eq.s32.totalorder %s15, 0
    %p78 = por %p76, %p77
    %p79 = scmp.ne.s32.totalorder %s67, %s68
    %p80 = scmp.eq.s32.totalorder %s16, 1
    %p81 = por %p79, %p80
    %p83 = scmp.ne.s32.totalorder %s68, %s82
    %p84 = scmp.eq.s32.totalorder %s16, 0
    %p85 = por %p83, %p84
    %s87 = sadd.s32 %s86, 1
    %p90 = scmp.eq.s32.totalorder %s10, 1
    %p91 = scmp.ne.s32.totalorder %s86, %s88
    %p92 = scmp.eq.s32.totalorder %s10, 0
    %p93 = por %p91, %p92
    %p94 = scmp.ne.s32.totalorder %s86, %s88
    %p95 = scmp.eq.s32.totalorder %s15, 1
    %p96 = por %p94, %p95
    %p97 = scmp.ne.s32.totalorder %s88, %s89
    %p98 = scmp.eq.s32.totalorder %s15, 0
    %p99 = por %p97, %p98
    %p100 = scmp.ne.s32.totalorder %s88, %s89
    %p101 = scmp.eq.s32.totalorder %s16, 1
    %p102 = por %p100, %p101
    %p104 = scmp.ne.s32.totalorder %s89, %s103
    %p105 = scmp.eq.s32.totalorder %s16, 0
    %p106 = por %p104, %p105
    %s107 = ssub.s32 %s10, %s17
    %p108 = scmp.eq.s32.totalorder %s107, 0
    %s110 = sadd.s32 %s109, 1
    %s111 = scalar_select %p108, %s109, %s110
    %p114 = pneg %p108
    %p115 = scmp.eq.s32.totalorder %s10, 1
    %p116 = por %p114, %p115
    %p117 = scmp.ne.s32.totalorder %s109, %s112
    %p118 = scmp.eq.s32.totalorder %s10, 0
    %p119 = por %p117, %p118
    %p120 = scmp.ne.s32.totalorder %s109, %s112
    %p121 = scmp.eq.s32.totalorder %s15, 1
    %p122 = por %p120, %p121
    %p123 = scmp.ne.s32.totalorder %s112, %s113
    %p124 = scmp.eq.s32.totalorder %s15, 0
    %p125 = por %p123, %p124
    %p126 = scmp.ne.s32.totalorder %s112, %s113
    %p127 = scmp.eq.s32.totalorder %s16, 1
    %p128 = por %p126, %p127
    %p130 = scmp.ne.s32.totalorder %s113, %s129
    %p131 = scmp.eq.s32.totalorder %s16, 0
    %p132 = por %p130, %p131
    %p133 = scmp.le.s32.totalorder 1, %s10
    %p134 = scmp.lt.s32.totalorder %s10, 3
    %p135 = pnand %p133, %p134
    %p136 = pneg %p135
    // Predicated region
    $region9: #{csp_layer_forward.5} parent=5 // pred_check
      _
    $region10: #{csp_layer_forward.5} parent=5 // pred_check_branch
      %138 = sbr.rel (%p135) target = $region12
    $region11: #{csp_layer_forward.5} parent=5 // pred_region
      %s139 = ssub.s32 %s10, 1
      // Predicated region
      $region13: #{csp_layer_forward.5} parent=11 // pred_check
        %p140 = pneg %p57
      $region14: #{csp_layer_forward.5} parent=11 // pred_check_branch
        %142 = sbr.rel (%p140) target = $region16
      $region15: #{csp_layer_forward.5} parent=11 // pred_region
        _
      $region16: #{csp_layer_forward.5} parent=11 // pred_fallthru
        _
      // Predicated region
      $region17: #{csp_layer_forward.5} parent=11 // pred_check
        %p143 = pneg %p78
      $region18: #{csp_layer_forward.5} parent=11 // pred_check_branch
        %145 = sbr.rel (%p143) target = $region20
      $region19: #{csp_layer_forward.5} parent=11 // pred_region
        _
      $region20: #{csp_layer_forward.5} parent=11 // pred_fallthru
        _
      // Predicated region
      $region21: #{csp_layer_forward.5} parent=11 // pred_check
        %p146 = pneg %p99
      $region22: #{csp_layer_forward.5} parent=11 // pred_check_branch
        %148 = sbr.rel (%p146) target = $region24
      $region23: #{csp_layer_forward.5} parent=11 // pred_region
        _
      $region24: #{csp_layer_forward.5} parent=11 // pred_fallthru
        _
    $region12: #{csp_layer_forward.5} parent=5 // pred_fallthru
      _
    %p149 = scmp.lt.s32.totalorder %s10, 2
    // Predicated region
    $region25: #{csp_layer_forward.5} parent=5 // pred_check
      %p150 = pneg %p149
    $region26: #{csp_layer_forward.5} parent=5 // pred_check_branch
      %152 = sbr.rel (%p150) target = $region28
    $region27: #{csp_layer_forward.5} parent=5 // pred_region
      // Predicated region
      $region29: #{csp_layer_forward.5} parent=27 // pred_check
        %p153 = pneg %p30
      $region30: #{csp_layer_forward.5} parent=27 // pred_check_branch
        %155 = sbr.rel (%p153) target = $region32
      $region31: #{csp_layer_forward.5} parent=27 // pred_region
        %s156 = smul.u32 32, %s10
        %p157 = scmp.lt.s32.totalorder %s156, 63
        %s158 = scalar_select %p157, %s156, 63
        %s159 = smul.addr %s158, 4
        %s160 = scalar_lea.vmem %s0, %s159
        %s161 = smul.u32 32, %s10
      $region32: #{csp_layer_forward.5} parent=27 // pred_fallthru
        _
    $region28: #{csp_layer_forward.5} parent=5 // pred_fallthru
      _
    %p162 = scmp.le.s32.totalorder 1, %s10
    %p163 = scmp.lt.s32.totalorder %s10, 3
    %p164 = pnand %p162, %p163
    %p165 = pneg %p164
    // Predicated region
    $region33: #{csp_layer_forward.5} parent=5 // pred_check
      _
    $region34: #{csp_layer_forward.5} parent=5 // pred_check_branch
      %167 = sbr.rel (%p164) target = $region36
    $region35: #{csp_layer_forward.5} parent=5 // pred_region
      %s168 = ssub.s32 %s10, 1
      %s169 = smul.u32 32, %s15
      %p170 = scmp.lt.s32.totalorder %s169, 63
      %s171 = scalar_select %p170, %s169, 63
      %s172 = smul.addr %s171, 4
      %s173 = scalar_lea.vmem %s0, %s172
      %p174 = pneg %p36
      %p175 = pneg %p33
      %p176 = pneg %p57
      %p177 = pneg %p54
      %p178 = pneg %p78
      %p179 = pneg %p75
      %p180 = pneg %p99
      %p181 = pneg %p96
      %p182 = pneg %p125
      %p183 = pneg %p122
      %s184 = smul.u32 32, %s15
      %p185 = scmp.lt.s32.totalorder %s184, 63
      %s186 = scalar_select %p185, %s184, 63
      %s187 = smul.addr %s186, 4
      %s188 = scalar_lea.vmem %s4, %s187
      %s189 = smul.u32 32, %s15
      %p190 = scmp.lt.s32.totalorder %s189, 63
      %s191 = scalar_select %p190, %s189, 63
      %s192 = smul.addr %s191, 4
      %s193 = scalar_lea.vmem %s0, %s192
      %s194 = smul.u32 32, %s15
      %s195 = smul.u32 32, %s15
      %p196 = scmp.lt.s32.totalorder %s195, 63
      %s197 = scalar_select %p196, %s195, 63
      %s198 = smul.addr %s197, 4
      %s199 = scalar_lea.vmem %s4, %s198
      %s200 = smul.u32 32, %s15
      %v202 = vld [vmem:[%s193] sm:$0xf]
      %v203 = vld [vmem:[%s193 + $0x4] sm:$0xf]
      %v204 = vld [vmem:[%s193 + $0x8] sm:$0xf]
      %v205 = vld [vmem:[%s193 + $0xc] sm:$0xf]
      %v206 = vld [vmem:[%s193 + $0x10] sm:$0xf]
      %v207 = vld [vmem:[%s193 + $0x14] sm:$0xf]
      %v208 = vld [vmem:[%s193 + $0x18] sm:$0xf]
      %v209 = vld [vmem:[%s193 + $0x1c] sm:$0xf]
      %v210 = vld [vmem:[%s193 + $0x20] sm:$0xf]
      %v211 = vld [vmem:[%s193 + $0x24] sm:$0xf]
      %v212 = vld [vmem:[%s193 + $0x28] sm:$0xf]
      %v213 = vld [vmem:[%s193 + $0x2c] sm:$0xf]
      %v214 = vld [vmem:[%s193 + $0x30] sm:$0xf]
      %v215 = vld [vmem:[%s193 + $0x34] sm:$0xf]
      %v216 = vld [vmem:[%s193 + $0x38] sm:$0xf]
      %v217 = vld [vmem:[%s193 + $0x3c] sm:$0xf]
      %v218 = vld [vmem:[%s193 + $0x40] sm:$0xf]
      %v219 = vld [vmem:[%s193 + $0x44] sm:$0xf]
      %v220 = vld [vmem:[%s193 + $0x48] sm:$0xf]
      %v221 = vld [vmem:[%s193 + $0x4c] sm:$0xf]
      %v222 = vld [vmem:[%s193 + $0x50] sm:$0xf]
      %v223 = vld [vmem:[%s193 + $0x54] sm:$0xf]
      %v224 = vld [vmem:[%s193 + $0x58] sm:$0xf]
      %v225 = vld [vmem:[%s193 + $0x5c] sm:$0xf]
      %v226 = vld [vmem:[%s193 + $0x60] sm:$0xf]
      %v227 = vld [vmem:[%s193 + $0x64] sm:$0xf]
      %v228 = vld [vmem:[%s193 + $0x68] sm:$0xf]
      %v229 = vld [vmem:[%s193 + $0x6c] sm:$0xf]
      %v230 = vld [vmem:[%s193 + $0x70] sm:$0xf]
      %v231 = vld [vmem:[%s193 + $0x74] sm:$0xf]
      %v232 = vld [vmem:[%s193 + $0x78] sm:$0xf]
      %v233 = vld [vmem:[%s193 + $0x7c] sm:$0xf]
      %v234 = vld [vmem:[%s1] sm:$0xf]
      %v235 = vld [vmem:[%s1 + $0x4] sm:$0xf]
      %v236 = vld [vmem:[%s1 + $0x8] sm:$0xf]
      %v237 = vld [vmem:[%s1 + $0xc] sm:$0xf]
      %v238 = vld [vmem:[%s1 + $0x10] sm:$0xf]
      %v239 = vld [vmem:[%s1 + $0x14] sm:$0xf]
      %v240 = vld [vmem:[%s1 + $0x18] sm:$0xf]
      %v241 = vld [vmem:[%s1 + $0x1c] sm:$0xf]
      %v242 = vld [vmem:[%s1 + $0x20] sm:$0xf]
      %v243 = vld [vmem:[%s1 + $0x24] sm:$0xf]
      %v244 = vld [vmem:[%s1 + $0x28] sm:$0xf]
      %v245 = vld [vmem:[%s1 + $0x2c] sm:$0xf]
      %v246 = vld [vmem:[%s1 + $0x30] sm:$0xf]
      %v247 = vld [vmem:[%s1 + $0x34] sm:$0xf]
      %v248 = vld [vmem:[%s1 + $0x38] sm:$0xf]
      %v249 = vld [vmem:[%s1 + $0x3c] sm:$0xf]
      %v282 = vunpack.c.l.b16 %v202
      %v283 = vunpack.c.l.b16 %v203
      %v284 = vunpack.c.l.b16 %v204
      %v285 = vunpack.c.l.b16 %v205
      %v286 = vunpack.c.l.b16 %v206
      %v287 = vunpack.c.l.b16 %v207
      %v288 = vunpack.c.l.b16 %v208
      %v289 = vunpack.c.l.b16 %v209
      %v290 = vunpack.c.l.b16 %v210
      %v291 = vunpack.c.l.b16 %v211
      %v292 = vunpack.c.l.b16 %v212
      %v293 = vunpack.c.l.b16 %v213
      %v294 = vunpack.c.l.b16 %v214
      %v295 = vunpack.c.l.b16 %v215
      %v296 = vunpack.c.l.b16 %v216
      %v297 = vunpack.c.l.b16 %v217
      %v298 = vunpack.c.l.b16 %v218
      %v299 = vunpack.c.l.b16 %v219
      %v300 = vunpack.c.l.b16 %v220
      %v301 = vunpack.c.l.b16 %v221
      %v302 = vunpack.c.l.b16 %v222
      %v303 = vunpack.c.l.b16 %v223
      %v304 = vunpack.c.l.b16 %v224
      %v305 = vunpack.c.l.b16 %v225
      %v306 = vunpack.c.l.b16 %v226
      %v307 = vunpack.c.l.b16 %v227
      %v308 = vunpack.c.l.b16 %v228
      %v309 = vunpack.c.l.b16 %v229
      %v310 = vunpack.c.l.b16 %v230
      %v311 = vunpack.c.l.b16 %v231
      %v312 = vunpack.c.l.b16 %v232
      %v313 = vunpack.c.l.b16 %v233
      %v314 = vpack.c.b16 %v283, %v282
      %v315 = vpack.c.b16 %v285, %v284
      %v316 = vpack.c.b16 %v287, %v286
      %v317 = vpack.c.b16 %v289, %v288
      %v318 = vpack.c.b16 %v291, %v290
      %v319 = vpack.c.b16 %v293, %v292
      %v320 = vpack.c.b16 %v295, %v294
      %v321 = vpack.c.b16 %v297, %v296
      %v322 = vpack.c.b16 %v299, %v298
      %v323 = vpack.c.b16 %v301, %v300
      %v324 = vpack.c.b16 %v303, %v302
      %v325 = vpack.c.b16 %v305, %v304
      %v326 = vpack.c.b16 %v307, %v306
      %v327 = vpack.c.b16 %v309, %v308
      %v328 = vpack.c.b16 %v311, %v310
      %v329 = vpack.c.b16 %v313, %v312
      %v362 = vunpack.c.l.b16 %v234
      %v363 = vunpack.c.l.b16 %v235
      %v364 = vunpack.c.l.b16 %v236
      %v365 = vunpack.c.l.b16 %v237
      %v366 = vunpack.c.l.b16 %v238
      %v367 = vunpack.c.l.b16 %v239
      %v368 = vunpack.c.l.b16 %v240
      %v369 = vunpack.c.l.b16 %v241
      %v370 = vunpack.c.l.b16 %v242
      %v371 = vunpack.c.l.b16 %v243
      %v372 = vunpack.c.l.b16 %v244
      %v373 = vunpack.c.l.b16 %v245
      %v374 = vunpack.c.l.b16 %v246
      %v375 = vunpack.c.l.b16 %v247
      %v376 = vunpack.c.l.b16 %v248
      %v377 = vunpack.c.l.b16 %v249
      %v378 = vpack.c.b16 %v363, %v362
      %v379 = vpack.c.b16 %v365, %v364
      %v380 = vpack.c.b16 %v367, %v366
      %v381 = vpack.c.b16 %v369, %v368
      %v382 = vpack.c.b16 %v371, %v370
      %v383 = vpack.c.b16 %v373, %v372
      %v384 = vpack.c.b16 %v375, %v374
      %v385 = vpack.c.b16 %v377, %v376
      %394 = vmatprep.subr.bf16.mxu0 0
      %395 = vmatpush1.bf16.msra.mxu0 %v378
      %396 = vmatprep.subr.bf16.mxu0 0
      %397 = vmatpush1.bf16.msra.mxu0 %v379
      %398 = vmatprep.subr.bf16.mxu0 0
      %399 = vmatpush1.bf16.msra.mxu0 %v380
      %400 = vmatprep.subr.bf16.mxu0 0
      %401 = vmatpush1.bf16.msra.mxu0 %v381
      %402 = vmatprep.subr.bf16.mxu0 0
      %403 = vmatpush1.bf16.msra.mxu0 %v382
      %404 = vmatprep.subr.bf16.mxu0 0
      %405 = vmatpush1.bf16.msra.mxu0 %v383
      %406 = vmatprep.subr.bf16.mxu0 0
      %407 = vmatpush1.bf16.msra.mxu0 %v384
      %408 = vmatprep.subr.bf16.mxu0 0
      %409 = vmatpush1.bf16.msra.mxu0 %v385
      %410 = vmatprep.subr.bf16.mxu0 0
      %411 = vmatpush1.bf16.msra.mxu0 0
      %412 = vmatprep.subr.bf16.mxu0 0
      %413 = vmatpush1.bf16.msra.mxu0 0
      %414 = vmatprep.subr.bf16.mxu0 0
      %415 = vmatpush1.bf16.msra.mxu0 0
      %416 = vmatprep.subr.bf16.mxu0 0
      %417 = vmatpush1.bf16.msra.mxu0 0
      %418 = vmatprep.subr.bf16.mxu0 0
      %419 = vmatpush1.bf16.msra.mxu0 0
      %420 = vmatprep.subr.bf16.mxu0 0
      %421 = vmatpush1.bf16.msra.mxu0 0
      %422 = vmatprep.subr.bf16.mxu0 0
      %423 = vmatpush1.bf16.msra.mxu0 0
      %424 = vmatprep.subr.bf16.mxu0 0
      %425 = vmatpush1.bf16.msra.mxu0 0
      %426 = vmatprep.mubr.bf16.mxu0 0
      %427 = vmatmul.mubr.bf16.gmra.mrb[0].mxu0 %v314
      %v428 = vpop.f32.mrb[0].mxu0
      %v429 = vadd.f32 0.0, %v428
      %v430 = vpop.f32.mrb[0].mxu0
      %v431 = vpop.f32.mrb[0].mxu0
      %v432 = vadd.f32 0.0, %v431
      %v433 = vpop.f32.mrb[0].mxu0
      %434 = vmatprep.mubr.bf16.mxu0 0
      %435 = vmatmul.mubr.bf16.gmra.mrb[0].mxu0 %v315
      %v436 = vpop.f32.mrb[0].mxu0
      %v437 = vadd.f32 0.0, %v436
      %v438 = vpop.f32.mrb[0].mxu0
      %v439 = vpop.f32.mrb[0].mxu0
      %v440 = vadd.f32 0.0, %v439
      %v441 = vpop.f32.mrb[0].mxu0
      %442 = vmatprep.mubr.bf16.mxu0 0
      %443 = vmatmul.mubr.bf16.gmra.mrb[0].mxu0 %v316
      %v444 = vpop.f32.mrb[0].mxu0
      %v445 = vadd.f32 0.0, %v444
      %v446 = vpop.f32.mrb[0].mxu0
      %v447 = vpop.f32.mrb[0].mxu0
      %v448 = vadd.f32 0.0, %v447
      %v449 = vpop.f32.mrb[0].mxu0
      %450 = vmatprep.mubr.bf16.mxu0 0
      %451 = vmatmul.mubr.bf16.gmra.mrb[0].mxu0 %v317
      %v452 = vpop.f32.mrb[0].mxu0
      %v453 = vadd.f32 0.0, %v452
      %v454 = vpop.f32.mrb[0].mxu0
      %v455 = vpop.f32.mrb[0].mxu0
      %v456 = vadd.f32 0.0, %v455
      %v457 = vpop.f32.mrb[0].mxu0
      %458 = vmatprep.mubr.bf16.mxu0 0
      %459 = vmatmul.mubr.bf16.gmra.mrb[0].mxu0 %v318
      %v460 = vpop.f32.mrb[0].mxu0
      %v461 = vadd.f32 0.0, %v460
      %v462 = vpop.f32.mrb[0].mxu0
      %v463 = vpop.f32.mrb[0].mxu0
      %v464 = vadd.f32 0.0, %v463
      %v465 = vpop.f32.mrb[0].mxu0
      %466 = vmatprep.mubr.bf16.mxu0 0
      %467 = vmatmul.mubr.bf16.gmra.mrb[0].mxu0 %v319
      %v468 = vpop.f32.mrb[0].mxu0
      %v469 = vadd.f32 0.0, %v468
      %v470 = vpop.f32.mrb[0].mxu0
      %v471 = vpop.f32.mrb[0].mxu0
      %v472 = vadd.f32 0.0, %v471
      %v473 = vpop.f32.mrb[0].mxu0
      %474 = vmatprep.mubr.bf16.mxu0 0
      %475 = vmatmul.mubr.bf16.gmra.mrb[0].mxu0 %v320
      %v476 = vpop.f32.mrb[0].mxu0
      %v477 = vadd.f32 0.0, %v476
      %v478 = vpop.f32.mrb[0].mxu0
      %v479 = vpop.f32.mrb[0].mxu0
      %v480 = vadd.f32 0.0, %v479
      %v481 = vpop.f32.mrb[0].mxu0
      %482 = vmatprep.mubr.bf16.mxu0 0
      %483 = vmatmul.mubr.bf16.gmra.mrb[0].mxu0 %v321
      %v484 = vpop.f32.mrb[0].mxu0
      %v485 = vadd.f32 0.0, %v484
      %v486 = vpop.f32.mrb[0].mxu0
      %v487 = vpop.f32.mrb[0].mxu0
      %v488 = vadd.f32 0.0, %v487
      %v489 = vpop.f32.mrb[0].mxu0
      %490 = vmatprep.mubr.bf16.mxu0 0
      %491 = vmatmul.mubr.bf16.gmra.mrb[0].mxu0 %v322
      %v492 = vpop.f32.mrb[0].mxu0
      %v493 = vadd.f32 0.0, %v492
      %v494 = vpop.f32.mrb[0].mxu0
      %v495 = vpop.f32.mrb[0].mxu0
      %v496 = vadd.f32 0.0, %v495
      %v497 = vpop.f32.mrb[0].mxu0
      %498 = vmatprep.mubr.bf16.mxu0 0
      %499 = vmatmul.mubr.bf16.gmra.mrb[0].mxu0 %v323
      %v500 = vpop.f32.mrb[0].mxu0
      %v501 = vadd.f32 0.0, %v500
      %v502 = vpop.f32.mrb[0].mxu0
      %v503 = vpop.f32.mrb[0].mxu0
      %v504 = vadd.f32 0.0, %v503
      %v505 = vpop.f32.mrb[0].mxu0
      %506 = vmatprep.mubr.bf16.mxu0 0
      %507 = vmatmul.mubr.bf16.gmra.mrb[0].mxu0 %v324
      %v508 = vpop.f32.mrb[0].mxu0
      %v509 = vadd.f32 0.0, %v508
      %v510 = vpop.f32.mrb[0].mxu0
      %v511 = vpop.f32.mrb[0].mxu0
      %v512 = vadd.f32 0.0, %v511
      %v513 = vpop.f32.mrb[0].mxu0
      %514 = vmatprep.mubr.bf16.mxu0 0
      %515 = vmatmul.mubr.bf16.gmra.mrb[0].mxu0 %v325
      %v516 = vpop.f32.mrb[0].mxu0
      %v517 = vadd.f32 0.0, %v516
      %v518 = vpop.f32.mrb[0].mxu0
      %v519 = vpop.f32.mrb[0].mxu0
      %v520 = vadd.f32 0.0, %v519
      %v521 = vpop.f32.mrb[0].mxu0
      %522 = vmatprep.mubr.bf16.mxu0 0
      %523 = vmatmul.mubr.bf16.gmra.mrb[0].mxu0 %v326
      %v524 = vpop.f32.mrb[0].mxu0
      %v525 = vadd.f32 0.0, %v524
      %v526 = vpop.f32.mrb[0].mxu0
      %v527 = vpop.f32.mrb[0].mxu0
      %v528 = vadd.f32 0.0, %v527
      %v529 = vpop.f32.mrb[0].mxu0
      %530 = vmatprep.mubr.bf16.mxu0 0
      %531 = vmatmul.mubr.bf16.gmra.mrb[0].mxu0 %v327
      %v532 = vpop.f32.mrb[0].mxu0
      %v533 = vadd.f32 0.0, %v532
      %v534 = vpop.f32.mrb[0].mxu0
      %v535 = vpop.f32.mrb[0].mxu0
      %v536 = vadd.f32 0.0, %v535
      %v537 = vpop.f32.mrb[0].mxu0
      %538 = vmatprep.mubr.bf16.mxu0 0
      %539 = vmatmul.mubr.bf16.gmra.mrb[0].mxu0 %v328
      %v540 = vpop.f32.mrb[0].mxu0
      %v541 = vadd.f32 0.0, %v540
      %v542 = vpop.f32.mrb[0].mxu0
      %v543 = vpop.f32.mrb[0].mxu0
      %v544 = vadd.f32 0.0, %v543
      %v545 = vpop.f32.mrb[0].mxu0
      %546 = vmatprep.mubr.bf16.mxu0 0
      %547 = vmatmul.mubr.bf16.gmra.mrb[0].mxu0 %v329
      %v548 = vpop.f32.mrb[0].mxu0
      %v549 = vadd.f32 0.0, %v548
      %v550 = vpop.f32.mrb[0].mxu0
      %v551 = vpop.f32.mrb[0].mxu0
      %v552 = vadd.f32 0.0, %v551
      %v553 = vpop.f32.mrb[0].mxu0
      %554 = vdwg.mxu0
      %v555 = vld [vmem:[%s2] sm:$0x1]
      %v557 = vlaneseq
      %v558 = vshrl.u32 %v557, 7
      %v559 = vsub.s32 0, %v558
      %v560 = vrot.slane %v555, %v559
      %v562 = vmul.f32 %v429, %v560
      %v563 = vmul.f32 %v432, %v560
      %v564 = vmul.f32 %v437, %v560
      %v565 = vmul.f32 %v440, %v560
      %v566 = vmul.f32 %v445, %v560
      %v567 = vmul.f32 %v448, %v560
      %v568 = vmul.f32 %v453, %v560
      %v569 = vmul.f32 %v456, %v560
      %v570 = vmul.f32 %v461, %v560
      %v571 = vmul.f32 %v464, %v560
      %v572 = vmul.f32 %v469, %v560
      %v573 = vmul.f32 %v472, %v560
      %v574 = vmul.f32 %v477, %v560
      %v575 = vmul.f32 %v480, %v560
      %v576 = vmul.f32 %v485, %v560
      %v577 = vmul.f32 %v488, %v560
      %v578 = vmul.f32 %v493, %v560
      %v579 = vmul.f32 %v496, %v560
      %v580 = vmul.f32 %v501, %v560
      %v581 = vmul.f32 %v504, %v560
      %v582 = vmul.f32 %v509, %v560
      %v583 = vmul.f32 %v512, %v560
      %v584 = vmul.f32 %v517, %v560
      %v585 = vmul.f32 %v520, %v560
      %v586 = vmul.f32 %v525, %v560
      %v587 = vmul.f32 %v528, %v560
      %v588 = vmul.f32 %v533, %v560
      %v589 = vmul.f32 %v536, %v560
      %v590 = vmul.f32 %v541, %v560
      %v591 = vmul.f32 %v544, %v560
      %v592 = vmul.f32 %v549, %v560
      %v593 = vmul.f32 %v552, %v560
      %v594 = vld [vmem:[%s3] sm:$0x1]
      %v596 = vlaneseq
      %v597 = vshrl.u32 %v596, 7
      %v598 = vsub.s32 0, %v597
      %v599 = vrot.slane %v594, %v598
      %v601 = vadd.f32 %v562, %v599
      %v602 = vadd.f32 %v563, %v599
      %v603 = vadd.f32 %v564, %v599
      %v604 = vadd.f32 %v565, %v599
      %v605 = vadd.f32 %v566, %v599
      %v606 = vadd.f32 %v567, %v599
      %v607 = vadd.f32 %v568, %v599
      %v608 = vadd.f32 %v569, %v599
      %v609 = vadd.f32 %v570, %v599
      %v610 = vadd.f32 %v571, %v599
      %v611 = vadd.f32 %v572, %v599
      %v612 = vadd.f32 %v573, %v599
      %v613 = vadd.f32 %v574, %v599
      %v614 = vadd.f32 %v575, %v599
      %v615 = vadd.f32 %v576, %v599
      %v616 = vadd.f32 %v577, %v599
      %v617 = vadd.f32 %v578, %v599
      %v618 = vadd.f32 %v579, %v599
      %v619 = vadd.f32 %v580, %v599
      %v620 = vadd.f32 %v581, %v599
      %v621 = vadd.f32 %v582, %v599
      %v622 = vadd.f32 %v583, %v599
      %v623 = vadd.f32 %v584, %v599
      %v624 = vadd.f32 %v585, %v599
      %v625 = vadd.f32 %v586, %v599
      %v626 = vadd.f32 %v587, %v599
      %v627 = vadd.f32 %v588, %v599
      %v628 = vadd.f32 %v589, %v599
      %v629 = vadd.f32 %v590, %v599
      %v630 = vadd.f32 %v591, %v599
      %v631 = vadd.f32 %v592, %v599
      %v632 = vadd.f32 %v593, %v599
      %v633 = vsub.f32 0.0, %v601
      %v634 = vsub.f32 0.0, %v602
      %v635 = vsub.f32 0.0, %v603
      %v636 = vsub.f32 0.0, %v604
      %v637 = vsub.f32 0.0, %v605
      %v638 = vsub.f32 0.0, %v606
      %v639 = vsub.f32 0.0, %v607
      %v640 = vsub.f32 0.0, %v608
      %v641 = vsub.f32 0.0, %v609
      %v642 = vsub.f32 0.0, %v610
      %v643 = vsub.f32 0.0, %v611
      %v644 = vsub.f32 0.0, %v612
      %v645 = vsub.f32 0.0, %v613
      %v646 = vsub.f32 0.0, %v614
      %v647 = vsub.f32 0.0, %v615
      %v648 = vsub.f32 0.0, %v616
      %v649 = vsub.f32 0.0, %v617
      %v650 = vsub.f32 0.0, %v618
      %v651 = vsub.f32 0.0, %v619
      %v652 = vsub.f32 0.0, %v620
      %v653 = vsub.f32 0.0, %v621
      %v654 = vsub.f32 0.0, %v622
      %v655 = vsub.f32 0.0, %v623
      %v656 = vsub.f32 0.0, %v624
      %v657 = vsub.f32 0.0, %v625
      %v658 = vsub.f32 0.0, %v626
      %v659 = vsub.f32 0.0, %v627
      %v660 = vsub.f32 0.0, %v628
      %v661 = vsub.f32 0.0, %v629
      %v662 = vsub.f32 0.0, %v630
      %v663 = vsub.f32 0.0, %v631
      %v664 = vsub.f32 0.0, %v632
      %v665 = vmul.f32 %v633, 1.442695
      %v666 = vpow.pop %v665
      %v667 = vmul.f32 %v634, 1.442695
      %v668 = vpow.pop %v667
      %v669 = vmul.f32 %v635, 1.442695
      %v670 = vpow.pop %v669
      %v671 = vmul.f32 %v636, 1.442695
      %v672 = vpow.pop %v671
      %v673 = vmul.f32 %v637, 1.442695
      %v674 = vpow.pop %v673
      %v675 = vmul.f32 %v638, 1.442695
      %v676 = vpow.pop %v675
      %v677 = vmul.f32 %v639, 1.442695
      %v678 = vpow.pop %v677
      %v679 = vmul.f32 %v640, 1.442695
      %v680 = vpow.pop %v679
      %v681 = vmul.f32 %v641, 1.442695
      %v682 = vpow.pop %v681
      %v683 = vmul.f32 %v642, 1.442695
      %v684 = vpow.pop %v683
      %v685 = vmul.f32 %v643, 1.442695
      %v686 = vpow.pop %v685
      %v687 = vmul.f32 %v644, 1.442695
      %v688 = vpow.pop %v687
      %v689 = vmul.f32 %v645, 1.442695
      %v690 = vpow.pop %v689
      %v691 = vmul.f32 %v646, 1.442695
      %v692 = vpow.pop %v691
      %v693 = vmul.f32 %v647, 1.442695
      %v694 = vpow.pop %v693
      %v695 = vmul.f32 %v648, 1.442695
      %v696 = vpow.pop %v695
      %v697 = vmul.f32 %v649, 1.442695
      %v698 = vpow.pop %v697
      %v699 = vmul.f32 %v650, 1.442695
      %v700 = vpow.pop %v699
      %v701 = vmul.f32 %v651, 1.442695
      %v702 = vpow.pop %v701
      %v703 = vmul.f32 %v652, 1.442695
      %v704 = vpow.pop %v703
      %v705 = vmul.f32 %v653, 1.442695
      %v706 = vpow.pop %v705
      %v707 = vmul.f32 %v654, 1.442695
      %v708 = vpow.pop %v707
      %v709 = vmul.f32 %v655, 1.442695
      %v710 = vpow.pop %v709
      %v711 = vmul.f32 %v656, 1.442695
      %v712 = vpow.pop %v711
      %v713 = vmul.f32 %v657, 1.442695
      %v714 = vpow.pop %v713
      %v715 = vmul.f32 %v658, 1.442695
      %v716 = vpow.pop %v715
      %v717 = vmul.f32 %v659, 1.442695
      %v718 = vpow.pop %v717
      %v719 = vmul.f32 %v660, 1.442695
      %v720 = vpow.pop %v719
      %v721 = vmul.f32 %v661, 1.442695
      %v722 = vpow.pop %v721
      %v723 = vmul.f32 %v662, 1.442695
      %v724 = vpow.pop %v723
      %v725 = vmul.f32 %v663, 1.442695
      %v726 = vpow.pop %v725
      %v727 = vmul.f32 %v664, 1.442695
      %v728 = vpow.pop %v727
      %v729 = vadd.f32 %v666, 1.0
      %v730 = vadd.f32 %v668, 1.0
      %v731 = vadd.f32 %v670, 1.0
      %v732 = vadd.f32 %v672, 1.0
      %v733 = vadd.f32 %v674, 1.0
      %v734 = vadd.f32 %v676, 1.0
      %v735 = vadd.f32 %v678, 1.0
      %v736 = vadd.f32 %v680, 1.0
      %v737 = vadd.f32 %v682, 1.0
      %v738 = vadd.f32 %v684, 1.0
      %v739 = vadd.f32 %v686, 1.0
      %v740 = vadd.f32 %v688, 1.0
      %v741 = vadd.f32 %v690, 1.0
      %v742 = vadd.f32 %v692, 1.0
      %v743 = vadd.f32 %v694, 1.0
      %v744 = vadd.f32 %v696, 1.0
      %v745 = vadd.f32 %v698, 1.0
      %v746 = vadd.f32 %v700, 1.0
      %v747 = vadd.f32 %v702, 1.0
      %v748 = vadd.f32 %v704, 1.0
      %v749 = vadd.f32 %v706, 1.0
      %v750 = vadd.f32 %v708, 1.0
      %v751 = vadd.f32 %v710, 1.0
      %v752 = vadd.f32 %v712, 1.0
      %v753 = vadd.f32 %v714, 1.0
      %v754 = vadd.f32 %v716, 1.0
      %v755 = vadd.f32 %v718, 1.0
      %v756 = vadd.f32 %v720, 1.0
      %v757 = vadd.f32 %v722, 1.0
      %v758 = vadd.f32 %v724, 1.0
      %v759 = vadd.f32 %v726, 1.0
      %v760 = vadd.f32 %v728, 1.0
      %v761 = vrcp.pop %v729
      %v762 = vrcp.pop %v730
      %v763 = vrcp.pop %v731
      %v764 = vrcp.pop %v732
      %v765 = vrcp.pop %v733
      %v766 = vrcp.pop %v734
      %v767 = vrcp.pop %v735
      %v768 = vrcp.pop %v736
      %v769 = vrcp.pop %v737
      %v770 = vrcp.pop %v738
      %v771 = vrcp.pop %v739
      %v772 = vrcp.pop %v740
      %v773 = vrcp.pop %v741
      %v774 = vrcp.pop %v742
      %v775 = vrcp.pop %v743
      %v776 = vrcp.pop %v744
      %v777 = vrcp.pop %v745
      %v778 = vrcp.pop %v746
      %v779 = vrcp.pop %v747
      %v780 = vrcp.pop %v748
      %v781 = vrcp.pop %v749
      %v782 = vrcp.pop %v750
      %v783 = vrcp.pop %v751
      %v784 = vrcp.pop %v752
      %v785 = vrcp.pop %v753
      %v786 = vrcp.pop %v754
      %v787 = vrcp.pop %v755
      %v788 = vrcp.pop %v756
      %v789 = vrcp.pop %v757
      %v790 = vrcp.pop %v758
      %v791 = vrcp.pop %v759
      %v792 = vrcp.pop %v760
      %v793 = vmul.f32 %v601, %v761
      %v794 = vmul.f32 %v602, %v762
      %v795 = vmul.f32 %v603, %v763
      %v796 = vmul.f32 %v604, %v764
      %v797 = vmul.f32 %v605, %v765
      %v798 = vmul.f32 %v606, %v766
      %v799 = vmul.f32 %v607, %v767
      %v800 = vmul.f32 %v608, %v768
      %v801 = vmul.f32 %v609, %v769
      %v802 = vmul.f32 %v610, %v770
      %v803 = vmul.f32 %v611, %v771
      %v804 = vmul.f32 %v612, %v772
      %v805 = vmul.f32 %v613, %v773
      %v806 = vmul.f32 %v614, %v774
      %v807 = vmul.f32 %v615, %v775
      %v808 = vmul.f32 %v616, %v776
      %v809 = vmul.f32 %v617, %v777
      %v810 = vmul.f32 %v618, %v778
      %v811 = vmul.f32 %v619, %v779
      %v812 = vmul.f32 %v620, %v780
      %v813 = vmul.f32 %v621, %v781
      %v814 = vmul.f32 %v622, %v782
      %v815 = vmul.f32 %v623, %v783
      %v816 = vmul.f32 %v624, %v784
      %v817 = vmul.f32 %v625, %v785
      %v818 = vmul.f32 %v626, %v786
      %v819 = vmul.f32 %v627, %v787
      %v820 = vmul.f32 %v628, %v788
      %v821 = vmul.f32 %v629, %v789
      %v822 = vmul.f32 %v630, %v790
      %v823 = vmul.f32 %v631, %v791
      %v824 = vmul.f32 %v632, %v792
      %v825 = vpack.c.bf16 %v794, %v793
      %v826 = vpack.c.bf16 %v796, %v795
      %v827 = vpack.c.bf16 %v798, %v797
      %v828 = vpack.c.bf16 %v800, %v799
      %v829 = vpack.c.bf16 %v802, %v801
      %v830 = vpack.c.bf16 %v804, %v803
      %v831 = vpack.c.bf16 %v806, %v805
      %v832 = vpack.c.bf16 %v808, %v807
      %v833 = vpack.c.bf16 %v810, %v809
      %v834 = vpack.c.bf16 %v812, %v811
      %v835 = vpack.c.bf16 %v814, %v813
      %v836 = vpack.c.bf16 %v816, %v815
      %v837 = vpack.c.bf16 %v818, %v817
      %v838 = vpack.c.bf16 %v820, %v819
      %v839 = vpack.c.bf16 %v822, %v821
      %v840 = vpack.c.bf16 %v824, %v823
      %v857 = vunpack.c.l.b16 %v825
      %v858 = vunpack.c.h.b16 %v825
      %v859 = vunpack.c.l.b16 %v826
      %v860 = vunpack.c.h.b16 %v826
      %v861 = vunpack.c.l.b16 %v827
      %v862 = vunpack.c.h.b16 %v827
      %v863 = vunpack.c.l.b16 %v828
      %v864 = vunpack.c.h.b16 %v828
      %v865 = vunpack.c.l.b16 %v829
      %v866 = vunpack.c.h.b16 %v829
      %v867 = vunpack.c.l.b16 %v830
      %v868 = vunpack.c.h.b16 %v830
      %v869 = vunpack.c.l.b16 %v831
      %v870 = vunpack.c.h.b16 %v831
      %v871 = vunpack.c.l.b16 %v832
      %v872 = vunpack.c.h.b16 %v832
      %v873 = vunpack.c.l.b16 %v833
      %v874 = vunpack.c.h.b16 %v833
      %v875 = vunpack.c.l.b16 %v834
      %v876 = vunpack.c.h.b16 %v834
      %v877 = vunpack.c.l.b16 %v835
      %v878 = vunpack.c.h.b16 %v835
      %v879 = vunpack.c.l.b16 %v836
      %v880 = vunpack.c.h.b16 %v836
      %v881 = vunpack.c.l.b16 %v837
      %v882 = vunpack.c.h.b16 %v837
      %v883 = vunpack.c.l.b16 %v838
      %v884 = vunpack.c.h.b16 %v838
      %v885 = vunpack.c.l.b16 %v839
      %v886 = vunpack.c.h.b16 %v839
      %v887 = vunpack.c.l.b16 %v840
      %v888 = vunpack.c.h.b16 %v840
      %v889 = vpack.c.b16 %v857, %v857
      %v890 = vpack.c.b16 %v858, %v858
      %v891 = vpack.c.b16 %v859, %v859
      %v892 = vpack.c.b16 %v860, %v860
      %v893 = vpack.c.b16 %v861, %v861
      %v894 = vpack.c.b16 %v862, %v862
      %v895 = vpack.c.b16 %v863, %v863
      %v896 = vpack.c.b16 %v864, %v864
      %v897 = vpack.c.b16 %v865, %v865
      %v898 = vpack.c.b16 %v866, %v866
      %v899 = vpack.c.b16 %v867, %v867
      %v900 = vpack.c.b16 %v868, %v868
      %v901 = vpack.c.b16 %v869, %v869
      %v902 = vpack.c.b16 %v870, %v870
      %v903 = vpack.c.b16 %v871, %v871
      %v904 = vpack.c.b16 %v872, %v872
      %v905 = vpack.c.b16 %v873, %v873
      %v906 = vpack.c.b16 %v874, %v874
      %v907 = vpack.c.b16 %v875, %v875
      %v908 = vpack.c.b16 %v876, %v876
      %v909 = vpack.c.b16 %v877, %v877
      %v910 = vpack.c.b16 %v878, %v878
      %v911 = vpack.c.b16 %v879, %v879
      %v912 = vpack.c.b16 %v880, %v880
      %v913 = vpack.c.b16 %v881, %v881
      %v914 = vpack.c.b16 %v882, %v882
      %v915 = vpack.c.b16 %v883, %v883
      %v916 = vpack.c.b16 %v884, %v884
      %v917 = vpack.c.b16 %v885, %v885
      %v918 = vpack.c.b16 %v886, %v886
      %v919 = vpack.c.b16 %v887, %v887
      %v920 = vpack.c.b16 %v888, %v888
      %953 = vst [vmem:[%s199] sm:$0xf] %v889
      %954 = vst [vmem:[%s199 + $0x4] sm:$0xf] %v890
      %955 = vst [vmem:[%s199 + $0x8] sm:$0xf] %v891
      %956 = vst [vmem:[%s199 + $0xc] sm:$0xf] %v892
      %957 = vst [vmem:[%s199 + $0x10] sm:$0xf] %v893
      %958 = vst [vmem:[%s199 + $0x14] sm:$0xf] %v894
      %959 = vst [vmem:[%s199 + $0x18] sm:$0xf] %v895
      %960 = vst [vmem:[%s199 + $0x1c] sm:$0xf] %v896
      %961 = vst [vmem:[%s199 + $0x20] sm:$0xf] %v897
      %962 = vst [vmem:[%s199 + $0x24] sm:$0xf] %v898
      %963 = vst [vmem:[%s199 + $0x28] sm:$0xf] %v899
      %964 = vst [vmem:[%s199 + $0x2c] sm:$0xf] %v900
      %965 = vst [vmem:[%s199 + $0x30] sm:$0xf] %v901
      %966 = vst [vmem:[%s199 + $0x34] sm:$0xf] %v902
      %967 = vst [vmem:[%s199 + $0x38] sm:$0xf] %v903
      %968 = vst [vmem:[%s199 + $0x3c] sm:$0xf] %v904
      %969 = vst [vmem:[%s199 + $0x40] sm:$0xf] %v905
      %970 = vst [vmem:[%s199 + $0x44] sm:$0xf] %v906
      %971 = vst [vmem:[%s199 + $0x48] sm:$0xf] %v907
      %972 = vst [vmem:[%s199 + $0x4c] sm:$0xf] %v908
      %973 = vst [vmem:[%s199 + $0x50] sm:$0xf] %v909
      %974 = vst [vmem:[%s199 + $0x54] sm:$0xf] %v910
      %975 = vst [vmem:[%s199 + $0x58] sm:$0xf] %v911
      %976 = vst [vmem:[%s199 + $0x5c] sm:$0xf] %v912
      %977 = vst [vmem:[%s199 + $0x60] sm:$0xf] %v913
      %978 = vst [vmem:[%s199 + $0x64] sm:$0xf] %v914
      %979 = vst [vmem:[%s199 + $0x68] sm:$0xf] %v915
      %980 = vst [vmem:[%s199 + $0x6c] sm:$0xf] %v916
      %981 = vst [vmem:[%s199 + $0x70] sm:$0xf] %v917
      %982 = vst [vmem:[%s199 + $0x74] sm:$0xf] %v918
      %983 = vst [vmem:[%s199 + $0x78] sm:$0xf] %v919
      %984 = vst [vmem:[%s199 + $0x7c] sm:$0xf] %v920
      %s985 = smul.u32 32, %s15
      %p986 = scmp.lt.s32.totalorder %s985, 63
      %s987 = scalar_select %p986, %s985, 63
      %s988 = smul.addr %s987, 4
      %s989 = scalar_lea.vmem %s4, %s988
      // Predicated region
      $region37: #{csp_layer_forward.5} parent=35 // pred_check
        %p990 = pneg %p122
      $region38: #{csp_layer_forward.5} parent=35 // pred_check_branch
        %992 = sbr.rel (%p990) target = $region40
      $region39: #{csp_layer_forward.5} parent=35 // pred_region
        %s993 = smul.u32 32, %s15
      $region40: #{csp_layer_forward.5} parent=35 // pred_fallthru
        _
    $region36: #{csp_layer_forward.5} parent=5 // pred_fallthru
      _
    %p994 = scmp.le.s32.totalorder 2, %s10
    // Predicated region
    $region41: #{csp_layer_forward.5} parent=5 // pred_check
      %p995 = pneg %p994
    $region42: #{csp_layer_forward.5} parent=5 // pred_check_branch
      %997 = sbr.rel (%p995) target = $region44
    $region43: #{csp_layer_forward.5} parent=5 // pred_region
      %s998 = ssub.s32 %s10, 2
      // Predicated region
      $region45: #{csp_layer_forward.5} parent=43 // pred_check
        %p999 = pneg %p128
      $region46: #{csp_layer_forward.5} parent=43 // pred_check_branch
        %1001 = sbr.rel (%p999) target = $region48
      $region47: #{csp_layer_forward.5} parent=43 // pred_region
        %s1002 = smul.u32 32, %s16
        %p1003 = scmp.lt.s32.totalorder %s1002, 63
        %s1004 = scalar_select %p1003, %s1002, 63
        %s1005 = smul.addr %s1004, 4
        %s1006 = scalar_lea.vmem %s4, %s1005
      $region48: #{csp_layer_forward.5} parent=43 // pred_fallthru
        _
    $region44: #{csp_layer_forward.5} parent=5 // pred_fallthru
      _
  $region6: #{csp_layer_forward.5} parent=0 // loop_footer
    %s14 = sadd.s32 1, %s10
  $region7: #{csp_layer_forward.5} parent=0 // loop_footer_branch
    %9 = sbr.rel target = $region3
  $region8: #{csp_layer_forward.5} parent=0 // loop_exit
    _

// kernel: csp_layer_forward.9
$region0: #{csp_layer_forward.9}
  #allocation0 [shape = 'u32[]', space=smem, size = 0x4, offset = 0x4, fixed_abs, tag = 'smem constant byte address 0x4 - core index']
  #allocation1 [shape = 'u32[144,128]{1,0:T(1,128)}', space=vmem, size = 0x12000, scoped, tag = 'internal scratch']
  %s0 = inlined_call_operand.vmem [shape: bf16[512,128], index: 0, kind: input, shape index: {}]
  %s1 = inlined_call_operand.vmem [shape: bf16[512,128], index: 1, kind: input, shape index: {}]
  %s2 = inlined_call_operand.vmem [shape: bf16[512,128], index: 2, kind: input, shape index: {}]
  %s3 = inlined_call_operand.vmem [shape: bf16[128,128], index: 3, kind: input, shape index: {}]
  %s4 = inlined_call_operand.vmem [shape: bf16[128,128], index: 4, kind: input, shape index: {}]
  %s5 = inlined_call_operand.vmem [shape: f32[1,128], index: 5, kind: input, shape index: {}]
  %s6 = inlined_call_operand.vmem [shape: f32[1,128], index: 6, kind: input, shape index: {}]
  %s7 = inlined_call_operand.vmem [shape: bf16[512,128], index: 7, kind: output, shape index: {}]
  %s8 = sld [smem:[#allocation0]]
  $region61: #{csp_layer_forward.9} parent=0
    _
  %s10 = ssub.s32 1, %s8
  %s11 = scalar_select 0, %s10, %s8
  loop: start=0, step=1, limit=4
  $region2: #{csp_layer_forward.9} parent=0 // loop_pre_header
    _
  $region3: #{csp_layer_forward.9} parent=0 // loop_header
    %s13 = sphi 0, %s17
    %p14 = scmp.ge.s32.totalorder %s13, 4
    %s23 = sphi 0, %s25
    %s26 = sphi 0, %s23
    %s27 = sphi 0, %s26
    %s43 = sphi 0, %s27
    %s49 = sphi 0, %s51
    %s52 = sphi 0, %s49
    %s53 = sphi 0, %s52
    %s69 = sphi 0, %s53
    %s75 = sphi 0, %s77
    %s78 = sphi 0, %s75
    %s79 = sphi 0, %s78
    %s95 = sphi 0, %s79
    %s99 = sphi 0, %s99
    %s101 = sphi 0, %s99
    %s102 = sphi 0, %s101
    %s116 = sphi 0, %s102
    %s120 = sphi 0, %s120
    %s122 = sphi 0, %s120
    %s123 = sphi 0, %s122
    %s137 = sphi 0, %s123
    %s141 = sphi 0, %s141
    %s143 = sphi 0, %s141
    %s144 = sphi 0, %s143
    %s158 = sphi 0, %s144
    %s162 = sphi 0, %s162
    %s164 = sphi 0, %s162
    %s165 = sphi 0, %s164
    %s179 = sphi 0, %s165
    %s185 = sphi 0, %s187
    %s188 = sphi 0, %s185
    %s189 = sphi 0, %s188
    %s205 = sphi 0, %s189
  $region4: #{csp_layer_forward.9} parent=0 // loop_header_branch
    %16 = sbr.rel (%p14) target = $region8
  $region5: #{csp_layer_forward.9} parent=0 // loop_body
    %s18 = ssub.s32 %s13, 1
    %s19 = ssub.s32 %s13, 2
    %s20 = sadd.s32 %s13, 1
    %s21 = ssub.s32 %s13, %s20
    %p22 = scmp.eq.s32.totalorder %s21, 0
    %s24 = sadd.s32 %s23, 1
    %s25 = scalar_select %p22, %s23, %s24
    %p28 = pneg %p22
    %p29 = scmp.eq.s32.totalorder %s13, 1
    %p30 = por %p28, %p29
    %p31 = scmp.ne.s32.totalorder %s23, %s26
    %p32 = scmp.eq.s32.totalorder %s13, 0
    %p33 = por %p31, %p32
    %p34 = scmp.ne.s32.totalorder %s23, %s26
    %p35 = scmp.eq.s32.totalorder %s18, 1
    %p36 = por %p34, %p35
    %p37 = scmp.ne.s32.totalorder %s26, %s27
    %p38 = scmp.eq.s32.totalorder %s18, 0
    %p39 = por %p37, %p38
    %p40 = scmp.ne.s32.totalorder %s26, %s27
    %p41 = scmp.eq.s32.totalorder %s19, 1
    %p42 = por %p40, %p41
    %p44 = scmp.ne.s32.totalorder %s27, %s43
    %p45 = scmp.eq.s32.totalorder %s19, 0
    %p46 = por %p44, %p45
    %s47 = ssub.s32 %s13, %s20
    %p48 = scmp.eq.s32.totalorder %s47, 0
    %s50 = sadd.s32 %s49, 1
    %s51 = scalar_select %p48, %s49, %s50
    %p54 = pneg %p48
    %p55 = scmp.eq.s32.totalorder %s13, 1
    %p56 = por %p54, %p55
    %p57 = scmp.ne.s32.totalorder %s49, %s52
    %p58 = scmp.eq.s32.totalorder %s13, 0
    %p59 = por %p57, %p58
    %p60 = scmp.ne.s32.totalorder %s49, %s52
    %p61 = scmp.eq.s32.totalorder %s18, 1
    %p62 = por %p60, %p61
    %p63 = scmp.ne.s32.totalorder %s52, %s53
    %p64 = scmp.eq.s32.totalorder %s18, 0
    %p65 = por %p63, %p64
    %p66 = scmp.ne.s32.totalorder %s52, %s53
    %p67 = scmp.eq.s32.totalorder %s19, 1
    %p68 = por %p66, %p67
    %p70 = scmp.ne.s32.totalorder %s53, %s69
    %p71 = scmp.eq.s32.totalorder %s19, 0
    %p72 = por %p70, %p71
    %s73 = ssub.s32 %s13, %s20
    %p74 = scmp.eq.s32.totalorder %s73, 0
    %s76 = sadd.s32 %s75, 1
    %s77 = scalar_select %p74, %s75, %s76
    %p80 = pneg %p74
    %p81 = scmp.eq.s32.totalorder %s13, 1
    %p82 = por %p80, %p81
    %p83 = scmp.ne.s32.totalorder %s75, %s78
    %p84 = scmp.eq.s32.totalorder %s13, 0
    %p85 = por %p83, %p84
    %p86 = scmp.ne.s32.totalorder %s75, %s78
    %p87 = scmp.eq.s32.totalorder %s18, 1
    %p88 = por %p86, %p87
    %p89 = scmp.ne.s32.totalorder %s78, %s79
    %p90 = scmp.eq.s32.totalorder %s18, 0
    %p91 = por %p89, %p90
    %p92 = scmp.ne.s32.totalorder %s78, %s79
    %p93 = scmp.eq.s32.totalorder %s19, 1
    %p94 = por %p92, %p93
    %p96 = scmp.ne.s32.totalorder %s79, %s95
    %p97 = scmp.eq.s32.totalorder %s19, 0
    %p98 = por %p96, %p97
    %s100 = sadd.s32 %s99, 1
    %p103 = scmp.eq.s32.totalorder %s13, 1
    %p104 = scmp.ne.s32.totalorder %s99, %s101
    %p105 = scmp.eq.s32.totalorder %s13, 0
    %p106 = por %p104, %p105
    %p107 = scmp.ne.s32.totalorder %s99, %s101
    %p108 = scmp.eq.s32.totalorder %s18, 1
    %p109 = por %p107, %p108
    %p110 = scmp.ne.s32.totalorder %s101, %s102
    %p111 = scmp.eq.s32.totalorder %s18, 0
    %p112 = por %p110, %p111
    %p113 = scmp.ne.s32.totalorder %s101, %s102
    %p114 = scmp.eq.s32.totalorder %s19, 1
    %p115 = por %p113, %p114
    %p117 = scmp.ne.s32.totalorder %s102, %s116
    %p118 = scmp.eq.s32.totalorder %s19, 0
    %p119 = por %p117, %p118
    %s121 = sadd.s32 %s120, 1
    %p124 = scmp.eq.s32.totalorder %s13, 1
    %p125 = scmp.ne.s32.totalorder %s120, %s122
    %p126 = scmp.eq.s32.totalorder %s13, 0
    %p127 = por %p125, %p126
    %p128 = scmp.ne.s32.totalorder %s120, %s122
    %p129 = scmp.eq.s32.totalorder %s18, 1
    %p130 = por %p128, %p129
    %p131 = scmp.ne.s32.totalorder %s122, %s123
    %p132 = scmp.eq.s32.totalorder %s18, 0
    %p133 = por %p131, %p132
    %p134 = scmp.ne.s32.totalorder %s122, %s123
    %p135 = scmp.eq.s32.totalorder %s19, 1
    %p136 = por %p134, %p135
    %p138 = scmp.ne.s32.totalorder %s123, %s137
    %p139 = scmp.eq.s32.totalorder %s19, 0
    %p140 = por %p138, %p139
    %s142 = sadd.s32 %s141, 1
    %p145 = scmp.eq.s32.totalorder %s13, 1
    %p146 = scmp.ne.s32.totalorder %s141, %s143
    %p147 = scmp.eq.s32.totalorder %s13, 0
    %p148 = por %p146, %p147
    %p149 = scmp.ne.s32.totalorder %s141, %s143
    %p150 = scmp.eq.s32.totalorder %s18, 1
    %p151 = por %p149, %p150
    %p152 = scmp.ne.s32.totalorder %s143, %s144
    %p153 = scmp.eq.s32.totalorder %s18, 0
    %p154 = por %p152, %p153
    %p155 = scmp.ne.s32.totalorder %s143, %s144
    %p156 = scmp.eq.s32.totalorder %s19, 1
    %p157 = por %p155, %p156
    %p159 = scmp.ne.s32.totalorder %s144, %s158
    %p160 = scmp.eq.s32.totalorder %s19, 0
    %p161 = por %p159, %p160
    %s163 = sadd.s32 %s162, 1
    %p166 = scmp.eq.s32.totalorder %s13, 1
    %p167 = scmp.ne.s32.totalorder %s162, %s164
    %p168 = scmp.eq.s32.totalorder %s13, 0
    %p169 = por %p167, %p168
    %p170 = scmp.ne.s32.totalorder %s162, %s164
    %p171 = scmp.eq.s32.totalorder %s18, 1
    %p172 = por %p170, %p171
    %p173 = scmp.ne.s32.totalorder %s164, %s165
    %p174 = scmp.eq.s32.totalorder %s18, 0
    %p175 = por %p173, %p174
    %p176 = scmp.ne.s32.totalorder %s164, %s165
    %p177 = scmp.eq.s32.totalorder %s19, 1
    %p178 = por %p176, %p177
    %p180 = scmp.ne.s32.totalorder %s165, %s179
    %p181 = scmp.eq.s32.totalorder %s19, 0
    %p182 = por %p180, %p181
    %s183 = ssub.s32 %s13, %s20
    %p184 = scmp.eq.s32.totalorder %s183, 0
    %s186 = sadd.s32 %s185, 1
    %s187 = scalar_select %p184, %s185, %s186
    %p190 = pneg %p184
    %p191 = scmp.eq.s32.totalorder %s13, 1
    %p192 = por %p190, %p191
    %p193 = scmp.ne.s32.totalorder %s185, %s188
    %p194 = scmp.eq.s32.totalorder %s13, 0
    %p195 = por %p193, %p194
    %p196 = scmp.ne.s32.totalorder %s185, %s188
    %p197 = scmp.eq.s32.totalorder %s18, 1
    %p198 = por %p196, %p197
    %p199 = scmp.ne.s32.totalorder %s188, %s189
    %p200 = scmp.eq.s32.totalorder %s18, 0
    %p201 = por %p199, %p200
    %p202 = scmp.ne.s32.totalorder %s188, %s189
    %p203 = scmp.eq.s32.totalorder %s19, 1
    %p204 = por %p202, %p203
    %p206 = scmp.ne.s32.totalorder %s189, %s205
    %p207 = scmp.eq.s32.totalorder %s19, 0
    %p208 = por %p206, %p207
    %p209 = scmp.le.s32.totalorder 1, %s13
    %p210 = scmp.lt.s32.totalorder %s13, 3
    %p211 = pnand %p209, %p210
    %p212 = pneg %p211
    // Predicated region
    $region9: #{csp_layer_forward.9} parent=5 // pred_check
      _
    $region10: #{csp_layer_forward.9} parent=5 // pred_check_branch
      %214 = sbr.rel (%p211) target = $region12
    $region11: #{csp_layer_forward.9} parent=5 // pred_region
      %s215 = ssub.s32 %s13, 1
      // Predicated region
      $region13: #{csp_layer_forward.9} parent=11 // pred_check
        %p216 = pneg %p112
      $region14: #{csp_layer_forward.9} parent=11 // pred_check_branch
        %218 = sbr.rel (%p216) target = $region16
      $region15: #{csp_layer_forward.9} parent=11 // pred_region
        _
      $region16: #{csp_layer_forward.9} parent=11 // pred_fallthru
        _
      // Predicated region
      $region17: #{csp_layer_forward.9} parent=11 // pred_check
        %p219 = pneg %p133
      $region18: #{csp_layer_forward.9} parent=11 // pred_check_branch
        %221 = sbr.rel (%p219) target = $region20
      $region19: #{csp_layer_forward.9} parent=11 // pred_region
        _
      $region20: #{csp_layer_forward.9} parent=11 // pred_fallthru
        _
      // Predicated region
      $region21: #{csp_layer_forward.9} parent=11 // pred_check
        %p222 = pneg %p154
      $region22: #{csp_layer_forward.9} parent=11 // pred_check_branch
        %224 = sbr.rel (%p222) target = $region24
      $region23: #{csp_layer_forward.9} parent=11 // pred_region
        _
      $region24: #{csp_layer_forward.9} parent=11 // pred_fallthru
        _
      // Predicated region
      $region25: #{csp_layer_forward.9} parent=11 // pred_check
        %p225 = pneg %p175
      $region26: #{csp_layer_forward.9} parent=11 // pred_check_branch
        %227 = sbr.rel (%p225) target = $region28
      $region27: #{csp_layer_forward.9} parent=11 // pred_region
        _
      $region28: #{csp_layer_forward.9} parent=11 // pred_fallthru
        _
    $region12: #{csp_layer_forward.9} parent=5 // pred_fallthru
      _
    %p228 = scmp.lt.s32.totalorder %s13, 2
    // Predicated region
    $region29: #{csp_layer_forward.9} parent=5 // pred_check
      %p229 = pneg %p228
    $region30: #{csp_layer_forward.9} parent=5 // pred_check_branch
      %231 = sbr.rel (%p229) target = $region32
    $region31: #{csp_layer_forward.9} parent=5 // pred_region
      // Predicated region
      $region33: #{csp_layer_forward.9} parent=31 // pred_check
        %p232 = pneg %p33
      $region34: #{csp_layer_forward.9} parent=31 // pred_check_branch
        %234 = sbr.rel (%p232) target = $region36
      $region35: #{csp_layer_forward.9} parent=31 // pred_region
        %s235 = smul.u32 32, %s13
        %p236 = scmp.lt.s32.totalorder %s235, 63
        %s237 = scalar_select %p236, %s235, 63
        %s238 = smul.addr %s237, 4
        %s239 = scalar_lea.vmem %s0, %s238
        %s240 = smul.u32 32, %s13
      $region36: #{csp_layer_forward.9} parent=31 // pred_fallthru
        _
      // Predicated region
      $region37: #{csp_layer_forward.9} parent=31 // pred_check
        %p241 = pneg %p59
      $region38: #{csp_layer_forward.9} parent=31 // pred_check_branch
        %243 = sbr.rel (%p241) target = $region40
      $region39: #{csp_layer_forward.9} parent=31 // pred_region
        %s244 = smul.u32 32, %s13
        %p245 = scmp.lt.s32.totalorder %s244, 63
        %s246 = scalar_select %p245, %s244, 63
        %s247 = smul.addr %s246, 4
        %s248 = scalar_lea.vmem %s1, %s247
        %s249 = smul.u32 32, %s13
      $region40: #{csp_layer_forward.9} parent=31 // pred_fallthru
        _
      // Predicated region
      $region41: #{csp_layer_forward.9} parent=31 // pred_check
        %p250 = pneg %p85
      $region42: #{csp_layer_forward.9} parent=31 // pred_check_branch
        %252 = sbr.rel (%p250) target = $region44
      $region43: #{csp_layer_forward.9} parent=31 // pred_region
        %s253 = smul.u32 32, %s13
        %p254 = scmp.lt.s32.totalorder %s253, 63
        %s255 = scalar_select %p254, %s253, 63
        %s256 = smul.addr %s255, 4
        %s257 = scalar_lea.vmem %s2, %s256
        %s258 = smul.u32 32, %s13
      $region44: #{csp_layer_forward.9} parent=31 // pred_fallthru
        _
    $region32: #{csp_layer_forward.9} parent=5 // pred_fallthru
      _
    %p259 = scmp.le.s32.totalorder 1, %s13
    %p260 = scmp.lt.s32.totalorder %s13, 3
    %p261 = pnand %p259, %p260
    %p262 = pneg %p261
    // Predicated region
    $region45: #{csp_layer_forward.9} parent=5 // pred_check
      _
    $region46: #{csp_layer_forward.9} parent=5 // pred_check_branch
      %264 = sbr.rel (%p261) target = $region48
    $region47: #{csp_layer_forward.9} parent=5 // pred_region
      %s265 = ssub.s32 %s13, 1
      %s266 = smul.u32 32, %s18
      %p267 = scmp.lt.s32.totalorder %s266, 63
      %s268 = scalar_select %p267, %s266, 63
      %s269 = smul.addr %s268, 4
      %s270 = scalar_lea.vmem %s0, %s269
      %p271 = pneg %p39
      %p272 = pneg %p36
      %s273 = smul.u32 32, %s18
      %p274 = scmp.lt.s32.totalorder %s273, 63
      %s275 = scalar_select %p274, %s273, 63
      %s276 = smul.addr %s275, 4
      %s277 = scalar_lea.vmem %s1, %s276
      %p278 = pneg %p65
      %p279 = pneg %p62
      %s280 = smul.u32 32, %s18
      %p281 = scmp.lt.s32.totalorder %s280, 63
      %s282 = scalar_select %p281, %s280, 63
      %s283 = smul.addr %s282, 4
      %s284 = scalar_lea.vmem %s2, %s283
      %p285 = pneg %p91
      %p286 = pneg %p88
      %p287 = pneg %p112
      %p288 = pneg %p109
      %p289 = pneg %p133
      %p290 = pneg %p130
      %p291 = pneg %p154
      %p292 = pneg %p151
      %p293 = pneg %p175
      %p294 = pneg %p172
      %p295 = pneg %p201
      %p296 = pneg %p198
      %s297 = smul.u32 32, %s18
      %p298 = scmp.lt.s32.totalorder %s297, 63
      %s299 = scalar_select %p298, %s297, 63
      %s300 = smul.addr %s299, 4
      %s301 = scalar_lea.vmem %s7, %s300
      %s302 = smul.u32 32, %s18
      %p303 = scmp.lt.s32.totalorder %s302, 63
      %s304 = scalar_select %p303, %s302, 63
      %s305 = smul.addr %s304, 4
      %s306 = scalar_lea.vmem %s0, %s305
      %s307 = smul.u32 32, %s18
      %s308 = smul.u32 32, %s18
      %p309 = scmp.lt.s32.totalorder %s308, 63
      %s310 = scalar_select %p309, %s308, 63
      %s311 = smul.addr %s310, 4
      %s312 = scalar_lea.vmem %s1, %s311
      %s313 = smul.u32 32, %s18
      %s314 = smul.u32 32, %s18
      %p315 = scmp.lt.s32.totalorder %s314, 63
      %s316 = scalar_select %p315, %s314, 63
      %s317 = smul.addr %s316, 4
      %s318 = scalar_lea.vmem %s2, %s317
      %s319 = smul.u32 32, %s18
      %s320 = smul.u32 32, %s18
      %p321 = scmp.lt.s32.totalorder %s320, 63
      %s322 = scalar_select %p321, %s320, 63
      %s323 = smul.addr %s322, 4
      %s324 = scalar_lea.vmem %s7, %s323
      %s325 = smul.u32 32, %s18
      %v327 = vld [vmem:[%s306] sm:$0xf]
      %v328 = vld [vmem:[%s306 + $0x4] sm:$0xf]
      %v329 = vld [vmem:[%s306 + $0x8] sm:$0xf]
      %v330 = vld [vmem:[%s306 + $0xc] sm:$0xf]
      %v331 = vld [vmem:[%s306 + $0x10] sm:$0xf]
      %v332 = vld [vmem:[%s306 + $0x14] sm:$0xf]
      %v333 = vld [vmem:[%s306 + $0x18] sm:$0xf]
      %v334 = vld [vmem:[%s306 + $0x1c] sm:$0xf]
      %v335 = vld [vmem:[%s306 + $0x20] sm:$0xf]
      %v336 = vld [vmem:[%s306 + $0x24] sm:$0xf]
      %v337 = vld [vmem:[%s306 + $0x28] sm:$0xf]
      %v338 = vld [vmem:[%s306 + $0x2c] sm:$0xf]
      %v339 = vld [vmem:[%s306 + $0x30] sm:$0xf]
      %v340 = vld [vmem:[%s306 + $0x34] sm:$0xf]
      %v341 = vld [vmem:[%s306 + $0x38] sm:$0xf]
      %v342 = vld [vmem:[%s306 + $0x3c] sm:$0xf]
      %v343 = vld [vmem:[%s306 + $0x40] sm:$0xf]
      %v344 = vld [vmem:[%s306 + $0x44] sm:$0xf]
      %v345 = vld [vmem:[%s306 + $0x48] sm:$0xf]
      %v346 = vld [vmem:[%s306 + $0x4c] sm:$0xf]
      %v347 = vld [vmem:[%s306 + $0x50] sm:$0xf]
      %v348 = vld [vmem:[%s306 + $0x54] sm:$0xf]
      %v349 = vld [vmem:[%s306 + $0x58] sm:$0xf]
      %v350 = vld [vmem:[%s306 + $0x5c] sm:$0xf]
      %v351 = vld [vmem:[%s306 + $0x60] sm:$0xf]
      %v352 = vld [vmem:[%s306 + $0x64] sm:$0xf]
      %v353 = vld [vmem:[%s306 + $0x68] sm:$0xf]
      %v354 = vld [vmem:[%s306 + $0x6c] sm:$0xf]
      %v355 = vld [vmem:[%s306 + $0x70] sm:$0xf]
      %v356 = vld [vmem:[%s306 + $0x74] sm:$0xf]
      %v357 = vld [vmem:[%s306 + $0x78] sm:$0xf]
      %v358 = vld [vmem:[%s306 + $0x7c] sm:$0xf]
      %v359 = vld [vmem:[%s312] sm:$0xf]
      %v360 = vld [vmem:[%s312 + $0x4] sm:$0xf]
      %v361 = vld [vmem:[%s312 + $0x8] sm:$0xf]
      %v362 = vld [vmem:[%s312 + $0xc] sm:$0xf]
      %v363 = vld [vmem:[%s312 + $0x10] sm:$0xf]
      %v364 = vld [vmem:[%s312 + $0x14] sm:$0xf]
      %v365 = vld [vmem:[%s312 + $0x18] sm:$0xf]
      %v366 = vld [vmem:[%s312 + $0x1c] sm:$0xf]
      %v367 = vld [vmem:[%s312 + $0x20] sm:$0xf]
      %v368 = vld [vmem:[%s312 + $0x24] sm:$0xf]
      %v369 = vld [vmem:[%s312 + $0x28] sm:$0xf]
      %v370 = vld [vmem:[%s312 + $0x2c] sm:$0xf]
      %v371 = vld [vmem:[%s312 + $0x30] sm:$0xf]
      %v372 = vld [vmem:[%s312 + $0x34] sm:$0xf]
      %v373 = vld [vmem:[%s312 + $0x38] sm:$0xf]
      %v374 = vld [vmem:[%s312 + $0x3c] sm:$0xf]
      %v375 = vld [vmem:[%s312 + $0x40] sm:$0xf]
      %v376 = vld [vmem:[%s312 + $0x44] sm:$0xf]
      %v377 = vld [vmem:[%s312 + $0x48] sm:$0xf]
      %v378 = vld [vmem:[%s312 + $0x4c] sm:$0xf]
      %v379 = vld [vmem:[%s312 + $0x50] sm:$0xf]
      %v380 = vld [vmem:[%s312 + $0x54] sm:$0xf]
      %v381 = vld [vmem:[%s312 + $0x58] sm:$0xf]
      %v382 = vld [vmem:[%s312 + $0x5c] sm:$0xf]
      %v383 = vld [vmem:[%s312 + $0x60] sm:$0xf]
      %v384 = vld [vmem:[%s312 + $0x64] sm:$0xf]
      %v385 = vld [vmem:[%s312 + $0x68] sm:$0xf]
      %v386 = vld [vmem:[%s312 + $0x6c] sm:$0xf]
      %v387 = vld [vmem:[%s312 + $0x70] sm:$0xf]
      %v388 = vld [vmem:[%s312 + $0x74] sm:$0xf]
      %v389 = vld [vmem:[%s312 + $0x78] sm:$0xf]
      %v390 = vld [vmem:[%s312 + $0x7c] sm:$0xf]
      %v391 = vadd.bf16 %v327, %v359
      %v392 = vadd.bf16 %v328, %v360
      %v393 = vadd.bf16 %v329, %v361
      %v394 = vadd.bf16 %v330, %v362
      %v395 = vadd.bf16 %v331, %v363
      %v396 = vadd.bf16 %v332, %v364
      %v397 = vadd.bf16 %v333, %v365
      %v398 = vadd.bf16 %v334, %v366
      %v399 = vadd.bf16 %v335, %v367
      %v400 = vadd.bf16 %v336, %v368
      %v401 = vadd.bf16 %v337, %v369
      %v402 = vadd.bf16 %v338, %v370
      %v403 = vadd.bf16 %v339, %v371
      %v404 = vadd.bf16 %v340, %v372
      %v405 = vadd.bf16 %v341, %v373
      %v406 = vadd.bf16 %v342, %v374
      %v407 = vadd.bf16 %v343, %v375
      %v408 = vadd.bf16 %v344, %v376
      %v409 = vadd.bf16 %v345, %v377
      %v410 = vadd.bf16 %v346, %v378
      %v411 = vadd.bf16 %v347, %v379
      %v412 = vadd.bf16 %v348, %v380
      %v413 = vadd.bf16 %v349, %v381
      %v414 = vadd.bf16 %v350, %v382
      %v415 = vadd.bf16 %v351, %v383
      %v416 = vadd.bf16 %v352, %v384
      %v417 = vadd.bf16 %v353, %v385
      %v418 = vadd.bf16 %v354, %v386
      %v419 = vadd.bf16 %v355, %v387
      %v420 = vadd.bf16 %v356, %v388
      %v421 = vadd.bf16 %v357, %v389
      %v422 = vadd.bf16 %v358, %v390
      %v423 = vld [vmem:[%s3] sm:$0xf]
      %v424 = vld [vmem:[%s3 + $0x4] sm:$0xf]
      %v425 = vld [vmem:[%s3 + $0x8] sm:$0xf]
      %v426 = vld [vmem:[%s3 + $0xc] sm:$0xf]
      %v427 = vld [vmem:[%s3 + $0x10] sm:$0xf]
      %v428 = vld [vmem:[%s3 + $0x14] sm:$0xf]
      %v429 = vld [vmem:[%s3 + $0x18] sm:$0xf]
      %v430 = vld [vmem:[%s3 + $0x1c] sm:$0xf]
      %v431 = vld [vmem:[%s3 + $0x20] sm:$0xf]
      %v432 = vld [vmem:[%s3 + $0x24] sm:$0xf]
      %v433 = vld [vmem:[%s3 + $0x28] sm:$0xf]
      %v434 = vld [vmem:[%s3 + $0x2c] sm:$0xf]
      %v435 = vld [vmem:[%s3 + $0x30] sm:$0xf]
      %v436 = vld [vmem:[%s3 + $0x34] sm:$0xf]
      %v437 = vld [vmem:[%s3 + $0x38] sm:$0xf]
      %v438 = vld [vmem:[%s3 + $0x3c] sm:$0xf]
      %v439 = vld [vmem:[%s318] sm:$0xf]
      %v440 = vld [vmem:[%s318 + $0x4] sm:$0xf]
      %v441 = vld [vmem:[%s318 + $0x8] sm:$0xf]
      %v442 = vld [vmem:[%s318 + $0xc] sm:$0xf]
      %v443 = vld [vmem:[%s318 + $0x10] sm:$0xf]
      %v444 = vld [vmem:[%s318 + $0x14] sm:$0xf]
      %v445 = vld [vmem:[%s318 + $0x18] sm:$0xf]
      %v446 = vld [vmem:[%s318 + $0x1c] sm:$0xf]
      %v447 = vld [vmem:[%s318 + $0x20] sm:$0xf]
      %v448 = vld [vmem:[%s318 + $0x24] sm:$0xf]
      %v449 = vld [vmem:[%s318 + $0x28] sm:$0xf]
      %v450 = vld [vmem:[%s318 + $0x2c] sm:$0xf]
      %v451 = vld [vmem:[%s318 + $0x30] sm:$0xf]
      %v452 = vld [vmem:[%s318 + $0x34] sm:$0xf]
      %v453 = vld [vmem:[%s318 + $0x38] sm:$0xf]
      %v454 = vld [vmem:[%s318 + $0x3c] sm:$0xf]
      %v455 = vld [vmem:[%s318 + $0x40] sm:$0xf]
      %v456 = vld [vmem:[%s318 + $0x44] sm:$0xf]
      %v457 = vld [vmem:[%s318 + $0x48] sm:$0xf]
      %v458 = vld [vmem:[%s318 + $0x4c] sm:$0xf]
      %v459 = vld [vmem:[%s318 + $0x50] sm:$0xf]
      %v460 = vld [vmem:[%s318 + $0x54] sm:$0xf]
      %v461 = vld [vmem:[%s318 + $0x58] sm:$0xf]
      %v462 = vld [vmem:[%s318 + $0x5c] sm:$0xf]
      %v463 = vld [vmem:[%s318 + $0x60] sm:$0xf]
      %v464 = vld [vmem:[%s318 + $0x64] sm:$0xf]
      %v465 = vld [vmem:[%s318 + $0x68] sm:$0xf]
      %v466 = vld [vmem:[%s318 + $0x6c] sm:$0xf]
      %v467 = vld [vmem:[%s318 + $0x70] sm:$0xf]
      %v468 = vld [vmem:[%s318 + $0x74] sm:$0xf]
      %v469 = vld [vmem:[%s318 + $0x78] sm:$0xf]
      %v470 = vld [vmem:[%s318 + $0x7c] sm:$0xf]
      %v471 = vld [vmem:[%s4] sm:$0xf]
      %v472 = vld [vmem:[%s4 + $0x4] sm:$0xf]
      %v473 = vld [vmem:[%s4 + $0x8] sm:$0xf]
      %v474 = vld [vmem:[%s4 + $0xc] sm:$0xf]
      %v475 = vld [vmem:[%s4 + $0x10] sm:$0xf]
      %v476 = vld [vmem:[%s4 + $0x14] sm:$0xf]
      %v477 = vld [vmem:[%s4 + $0x18] sm:$0xf]
      %v478 = vld [vmem:[%s4 + $0x1c] sm:$0xf]
      %v479 = vld [vmem:[%s4 + $0x20] sm:$0xf]
      %v480 = vld [vmem:[%s4 + $0x24] sm:$0xf]
      %v481 = vld [vmem:[%s4 + $0x28] sm:$0xf]
      %v482 = vld [vmem:[%s4 + $0x2c] sm:$0xf]
      %v483 = vld [vmem:[%s4 + $0x30] sm:$0xf]
      %v484 = vld [vmem:[%s4 + $0x34] sm:$0xf]
      %v485 = vld [vmem:[%s4 + $0x38] sm:$0xf]
      %v486 = vld [vmem:[%s4 + $0x3c] sm:$0xf]
      %v519 = vunpack.c.l.b16 %v439
      %v520 = vunpack.c.l.b16 %v440
      %v521 = vunpack.c.l.b16 %v441
      %v522 = vunpack.c.l.b16 %v442
      %v523 = vunpack.c.l.b16 %v443
      %v524 = vunpack.c.l.b16 %v444
      %v525 = vunpack.c.l.b16 %v445
      %v526 = vunpack.c.l.b16 %v446
      %v527 = vunpack.c.l.b16 %v447
      %v528 = vunpack.c.l.b16 %v448
      %v529 = vunpack.c.l.b16 %v449
      %v530 = vunpack.c.l.b16 %v450
      %v531 = vunpack.c.l.b16 %v451
      %v532 = vunpack.c.l.b16 %v452
      %v533 = vunpack.c.l.b16 %v453
      %v534 = vunpack.c.l.b16 %v454
      %v535 = vunpack.c.l.b16 %v455
      %v536 = vunpack.c.l.b16 %v456
      %v537 = vunpack.c.l.b16 %v457
      %v538 = vunpack.c.l.b16 %v458
      %v539 = vunpack.c.l.b16 %v459
      %v540 = vunpack.c.l.b16 %v460
      %v541 = vunpack.c.l.b16 %v461
      %v542 = vunpack.c.l.b16 %v462
      %v543 = vunpack.c.l.b16 %v463
      %v544 = vunpack.c.l.b16 %v464
      %v545 = vunpack.c.l.b16 %v465
      %v546 = vunpack.c.l.b16 %v466
      %v547 = vunpack.c.l.b16 %v467
      %v548 = vunpack.c.l.b16 %v468
      %v549 = vunpack.c.l.b16 %v469
      %v550 = vunpack.c.l.b16 %v470
      %v551 = vpack.c.b16 %v520, %v519
      %v552 = vpack.c.b16 %v522, %v521
      %v553 = vpack.c.b16 %v524, %v523
      %v554 = vpack.c.b16 %v526, %v525
      %v555 = vpack.c.b16 %v528, %v527
      %v556 = vpack.c.b16 %v530, %v529
      %v557 = vpack.c.b16 %v532, %v531
      %v558 = vpack.c.b16 %v534, %v533
      %v559 = vpack.c.b16 %v536, %v535
      %v560 = vpack.c.b16 %v538, %v537
      %v561 = vpack.c.b16 %v540, %v539
      %v562 = vpack.c.b16 %v542, %v541
      %v563 = vpack.c.b16 %v544, %v543
      %v564 = vpack.c.b16 %v546, %v545
      %v565 = vpack.c.b16 %v548, %v547
      %v566 = vpack.c.b16 %v550, %v549
      %v599 = vunpack.c.l.b16 %v471
      %v600 = vunpack.c.l.b16 %v472
      %v601 = vunpack.c.l.b16 %v473
      %v602 = vunpack.c.l.b16 %v474
      %v603 = vunpack.c.l.b16 %v475
      %v604 = vunpack.c.l.b16 %v476
      %v605 = vunpack.c.l.b16 %v477
      %v606 = vunpack.c.l.b16 %v478
      %v607 = vunpack.c.l.b16 %v479
      %v608 = vunpack.c.l.b16 %v480
      %v609 = vunpack.c.l.b16 %v481
      %v610 = vunpack.c.l.b16 %v482
      %v611 = vunpack.c.l.b16 %v483
      %v612 = vunpack.c.l.b16 %v484
      %v613 = vunpack.c.l.b16 %v485
      %v614 = vunpack.c.l.b16 %v486
      %v615 = vpack.c.b16 %v600, %v599
      %v616 = vpack.c.b16 %v602, %v601
      %v617 = vpack.c.b16 %v604, %v603
      %v618 = vpack.c.b16 %v606, %v605
      %v619 = vpack.c.b16 %v608, %v607
      %v620 = vpack.c.b16 %v610, %v609
      %v621 = vpack.c.b16 %v612, %v611
      %v622 = vpack.c.b16 %v614, %v613
      %631 = vmatprep.subr.bf16.mxu0 0
      %632 = vmatpush1.bf16.msra.mxu0 %v615
      %633 = vmatprep.subr.bf16.mxu0 0
      %634 = vmatpush1.bf16.msra.mxu0 %v616
      %635 = vmatprep.subr.bf16.mxu0 0
      %636 = vmatpush1.bf16.msra.mxu0 %v617
      %637 = vmatprep.subr.bf16.mxu0 0
      %638 = vmatpush1.bf16.msra.mxu0 %v618
      %639 = vmatprep.subr.bf16.mxu0 0
      %640 = vmatpush1.bf16.msra.mxu0 %v619
      %641 = vmatprep.subr.bf16.mxu0 0
      %642 = vmatpush1.bf16.msra.mxu0 %v620
      %643 = vmatprep.subr.bf16.mxu0 0
      %644 = vmatpush1.bf16.msra.mxu0 %v621
      %645 = vmatprep.subr.bf16.mxu0 0
      %646 = vmatpush1.bf16.msra.mxu0 %v622
      %647 = vmatprep.subr.bf16.mxu0 0
      %648 = vmatpush1.bf16.msra.mxu0 0
      %649 = vmatprep.subr.bf16.mxu0 0
      %650 = vmatpush1.bf16.msra.mxu0 0
      %651 = vmatprep.subr.bf16.mxu0 0
      %652 = vmatpush1.bf16.msra.mxu0 0
      %653 = vmatprep.subr.bf16.mxu0 0
      %654 = vmatpush1.bf16.msra.mxu0 0
      %655 = vmatprep.subr.bf16.mxu0 0
      %656 = vmatpush1.bf16.msra.mxu0 0
      %657 = vmatprep.subr.bf16.mxu0 0
      %658 = vmatpush1.bf16.msra.mxu0 0
      %659 = vmatprep.subr.bf16.mxu0 0
      %660 = vmatpush1.bf16.msra.mxu0 0
      %661 = vmatprep.subr.bf16.mxu0 0
      %662 = vmatpush1.bf16.msra.mxu0 0
      %663 = vmatprep.mubr.bf16.mxu0 0
      %664 = vmatmul.mubr.bf16.gmra.mrb[0].mxu0 %v551
      %v665 = vpop.f32.mrb[0].mxu0
      %v666 = vadd.f32 0.0, %v665
      %v667 = vpop.f32.mrb[0].mxu0
      %v668 = vpop.f32.mrb[0].mxu0
      %v669 = vadd.f32 0.0, %v668
      %v670 = vpop.f32.mrb[0].mxu0
      %671 = vmatprep.mubr.bf16.mxu0 0
      %672 = vmatmul.mubr.bf16.gmra.mrb[0].mxu0 %v552
      %v673 = vpop.f32.mrb[0].mxu0
      %v674 = vadd.f32 0.0, %v673
      %v675 = vpop.f32.mrb[0].mxu0
      %v676 = vpop.f32.mrb[0].mxu0
      %v677 = vadd.f32 0.0, %v676
      %v678 = vpop.f32.mrb[0].mxu0
      %679 = vmatprep.mubr.bf16.mxu0 0
      %680 = vmatmul.mubr.bf16.gmra.mrb[0].mxu0 %v553
      %v681 = vpop.f32.mrb[0].mxu0
      %v682 = vadd.f32 0.0, %v681
      %v683 = vpop.f32.mrb[0].mxu0
      %v684 = vpop.f32.mrb[0].mxu0
      %v685 = vadd.f32 0.0, %v684
      %v686 = vpop.f32.mrb[0].mxu0
      %687 = vmatprep.mubr.bf16.mxu0 0
      %688 = vmatmul.mubr.bf16.gmra.mrb[0].mxu0 %v554
      %v689 = vpop.f32.mrb[0].mxu0
      %v690 = vadd.f32 0.0, %v689
      %v691 = vpop.f32.mrb[0].mxu0
      %v692 = vpop.f32.mrb[0].mxu0
      %v693 = vadd.f32 0.0, %v692
      %v694 = vpop.f32.mrb[0].mxu0
      %695 = vmatprep.mubr.bf16.mxu0 0
      %696 = vmatmul.mubr.bf16.gmra.mrb[0].mxu0 %v555
      %v697 = vpop.f32.mrb[0].mxu0
      %v698 = vadd.f32 0.0, %v697
      %v699 = vpop.f32.mrb[0].mxu0
      %v700 = vpop.f32.mrb[0].mxu0
      %v701 = vadd.f32 0.0, %v700
      %v702 = vpop.f32.mrb[0].mxu0
      %703 = vmatprep.mubr.bf16.mxu0 0
      %704 = vmatmul.mubr.bf16.gmra.mrb[0].mxu0 %v556
      %v705 = vpop.f32.mrb[0].mxu0
      %v706 = vadd.f32 0.0, %v705
      %v707 = vpop.f32.mrb[0].mxu0
      %v708 = vpop.f32.mrb[0].mxu0
      %v709 = vadd.f32 0.0, %v708
      %v710 = vpop.f32.mrb[0].mxu0
      %711 = vmatprep.mubr.bf16.mxu0 0
      %712 = vmatmul.mubr.bf16.gmra.mrb[0].mxu0 %v557
      %v713 = vpop.f32.mrb[0].mxu0
      %v714 = vadd.f32 0.0, %v713
      %v715 = vpop.f32.mrb[0].mxu0
      %v716 = vpop.f32.mrb[0].mxu0
      %v717 = vadd.f32 0.0, %v716
      %v718 = vpop.f32.mrb[0].mxu0
      %719 = vmatprep.mubr.bf16.mxu0 0
      %720 = vmatmul.mubr.bf16.gmra.mrb[0].mxu0 %v558
      %v721 = vpop.f32.mrb[0].mxu0
      %v722 = vadd.f32 0.0, %v721
      %v723 = vpop.f32.mrb[0].mxu0
      %v724 = vpop.f32.mrb[0].mxu0
      %v725 = vadd.f32 0.0, %v724
      %v726 = vpop.f32.mrb[0].mxu0
      %727 = vmatprep.mubr.bf16.mxu0 0
      %728 = vmatmul.mubr.bf16.gmra.mrb[0].mxu0 %v559
      %v729 = vpop.f32.mrb[0].mxu0
      %v730 = vadd.f32 0.0, %v729
      %v731 = vpop.f32.mrb[0].mxu0
      %v732 = vpop.f32.mrb[0].mxu0
      %v733 = vadd.f32 0.0, %v732
      %v734 = vpop.f32.mrb[0].mxu0
      %735 = vmatprep.mubr.bf16.mxu0 0
      %736 = vmatmul.mubr.bf16.gmra.mrb[0].mxu0 %v560
      %v737 = vpop.f32.mrb[0].mxu0
      %v738 = vadd.f32 0.0, %v737
      %v739 = vpop.f32.mrb[0].mxu0
      %v740 = vpop.f32.mrb[0].mxu0
      %v741 = vadd.f32 0.0, %v740
      %v742 = vpop.f32.mrb[0].mxu0
      %743 = vmatprep.mubr.bf16.mxu0 0
      %744 = vmatmul.mubr.bf16.gmra.mrb[0].mxu0 %v561
      %v745 = vpop.f32.mrb[0].mxu0
      %v746 = vadd.f32 0.0, %v745
      %v747 = vpop.f32.mrb[0].mxu0
      %v748 = vpop.f32.mrb[0].mxu0
      %v749 = vadd.f32 0.0, %v748
      %v750 = vpop.f32.mrb[0].mxu0
      %751 = vmatprep.mubr.bf16.mxu0 0
      %752 = vmatmul.mubr.bf16.gmra.mrb[0].mxu0 %v562
      %v753 = vpop.f32.mrb[0].mxu0
      %v754 = vadd.f32 0.0, %v753
      %v755 = vpop.f32.mrb[0].mxu0
      %v756 = vpop.f32.mrb[0].mxu0
      %v757 = vadd.f32 0.0, %v756
      %v758 = vpop.f32.mrb[0].mxu0
      %759 = vmatprep.mubr.bf16.mxu0 0
      %760 = vmatmul.mubr.bf16.gmra.mrb[0].mxu0 %v563
      %v761 = vpop.f32.mrb[0].mxu0
      %v762 = vadd.f32 0.0, %v761
      %v763 = vpop.f32.mrb[0].mxu0
      %v764 = vpop.f32.mrb[0].mxu0
      %v765 = vadd.f32 0.0, %v764
      %v766 = vpop.f32.mrb[0].mxu0
      %767 = vmatprep.mubr.bf16.mxu0 0
      %768 = vmatmul.mubr.bf16.gmra.mrb[0].mxu0 %v564
      %v769 = vpop.f32.mrb[0].mxu0
      %v770 = vadd.f32 0.0, %v769
      %v771 = vpop.f32.mrb[0].mxu0
      %v772 = vpop.f32.mrb[0].mxu0
      %v773 = vadd.f32 0.0, %v772
      %v774 = vpop.f32.mrb[0].mxu0
      %775 = vmatprep.mubr.bf16.mxu0 0
      %776 = vmatmul.mubr.bf16.gmra.mrb[0].mxu0 %v565
      %v777 = vpop.f32.mrb[0].mxu0
      %v778 = vadd.f32 0.0, %v777
      %v779 = vpop.f32.mrb[0].mxu0
      %v780 = vpop.f32.mrb[0].mxu0
      %v781 = vadd.f32 0.0, %v780
      %v782 = vpop.f32.mrb[0].mxu0
      %783 = vmatprep.mubr.bf16.mxu0 0
      %784 = vmatmul.mubr.bf16.gmra.mrb[0].mxu0 %v566
      %v785 = vpop.f32.mrb[0].mxu0
      %v786 = vadd.f32 0.0, %v785
      %v787 = vpop.f32.mrb[0].mxu0
      %v788 = vpop.f32.mrb[0].mxu0
      %v789 = vadd.f32 0.0, %v788
      %v790 = vpop.f32.mrb[0].mxu0
      %791 = vdwg.mxu0
      %v824 = vunpack.c.l.b16 %v391
      %v825 = vunpack.c.l.b16 %v392
      %v826 = vunpack.c.l.b16 %v393
      %v827 = vunpack.c.l.b16 %v394
      %v828 = vunpack.c.l.b16 %v395
      %v829 = vunpack.c.l.b16 %v396
      %v830 = vunpack.c.l.b16 %v397
      %v831 = vunpack.c.l.b16 %v398
      %v832 = vunpack.c.l.b16 %v399
      %v833 = vunpack.c.l.b16 %v400
      %v834 = vunpack.c.l.b16 %v401
      %v835 = vunpack.c.l.b16 %v402
      %v836 = vunpack.c.l.b16 %v403
      %v837 = vunpack.c.l.b16 %v404
      %v838 = vunpack.c.l.b16 %v405
      %v839 = vunpack.c.l.b16 %v406
      %v840 = vunpack.c.l.b16 %v407
      %v841 = vunpack.c.l.b16 %v408
      %v842 = vunpack.c.l.b16 %v409
      %v843 = vunpack.c.l.b16 %v410
      %v844 = vunpack.c.l.b16 %v411
      %v845 = vunpack.c.l.b16 %v412
      %v846 = vunpack.c.l.b16 %v413
      %v847 = vunpack.c.l.b16 %v414
      %v848 = vunpack.c.l.b16 %v415
      %v849 = vunpack.c.l.b16 %v416
      %v850 = vunpack.c.l.b16 %v417
      %v851 = vunpack.c.l.b16 %v418
      %v852 = vunpack.c.l.b16 %v419
      %v853 = vunpack.c.l.b16 %v420
      %v854 = vunpack.c.l.b16 %v421
      %v855 = vunpack.c.l.b16 %v422
      %v856 = vpack.c.b16 %v825, %v824
      %v857 = vpack.c.b16 %v827, %v826
      %v858 = vpack.c.b16 %v829, %v828
      %v859 = vpack.c.b16 %v831, %v830
      %v860 = vpack.c.b16 %v833, %v832
      %v861 = vpack.c.b16 %v835, %v834
      %v862 = vpack.c.b16 %v837, %v836
      %v863 = vpack.c.b16 %v839, %v838
      %v864 = vpack.c.b16 %v841, %v840
      %v865 = vpack.c.b16 %v843, %v842
      %v866 = vpack.c.b16 %v845, %v844
      %v867 = vpack.c.b16 %v847, %v846
      %v868 = vpack.c.b16 %v849, %v848
      %v869 = vpack.c.b16 %v851, %v850
      %v870 = vpack.c.b16 %v853, %v852
      %v871 = vpack.c.b16 %v855, %v854
      %v904 = vunpack.c.l.b16 %v423
      %v905 = vunpack.c.l.b16 %v424
      %v906 = vunpack.c.l.b16 %v425
      %v907 = vunpack.c.l.b16 %v426
      %v908 = vunpack.c.l.b16 %v427
      %v909 = vunpack.c.l.b16 %v428
      %v910 = vunpack.c.l.b16 %v429
      %v911 = vunpack.c.l.b16 %v430
      %v912 = vunpack.c.l.b16 %v431
      %v913 = vunpack.c.l.b16 %v432
      %v914 = vunpack.c.l.b16 %v433
      %v915 = vunpack.c.l.b16 %v434
      %v916 = vunpack.c.l.b16 %v435
      %v917 = vunpack.c.l.b16 %v436
      %v918 = vunpack.c.l.b16 %v437
      %v919 = vunpack.c.l.b16 %v438
      %v920 = vpack.c.b16 %v905, %v904
      %v921 = vpack.c.b16 %v907, %v906
      %v922 = vpack.c.b16 %v909, %v908
      %v923 = vpack.c.b16 %v911, %v910
      %v924 = vpack.c.b16 %v913, %v912
      %v925 = vpack.c.b16 %v915, %v914
      %v926 = vpack.c.b16 %v917, %v916
      %v927 = vpack.c.b16 %v919, %v918
      %936 = vmatprep.subr.bf16.mxu0 0
      %937 = vmatpush1.bf16.msra.mxu0 %v920
      %938 = vmatprep.subr.bf16.mxu0 0
      %939 = vmatpush1.bf16.msra.mxu0 %v921
      %940 = vmatprep.subr.bf16.mxu0 0
      %941 = vmatpush1.bf16.msra.mxu0 %v922
      %942 = vmatprep.subr.bf16.mxu0 0
      %943 = vmatpush1.bf16.msra.mxu0 %v923
      %944 = vmatprep.subr.bf16.mxu0 0
      %945 = vmatpush1.bf16.msra.mxu0 %v924
      %946 = vmatprep.subr.bf16.mxu0 0
      %947 = vmatpush1.bf16.msra.mxu0 %v925
      %948 = vmatprep.subr.bf16.mxu0 0
      %949 = vmatpush1.bf16.msra.mxu0 %v926
      %950 = vmatprep.subr.bf16.mxu0 0
      %951 = vmatpush1.bf16.msra.mxu0 %v927
      %952 = vmatprep.subr.bf16.mxu0 0
      %953 = vmatpush1.bf16.msra.mxu0 0
      %954 = vmatprep.subr.bf16.mxu0 0
      %955 = vmatpush1.bf16.msra.mxu0 0
      %956 = vmatprep.subr.bf16.mxu0 0
      %957 = vmatpush1.bf16.msra.mxu0 0
      %958 = vmatprep.subr.bf16.mxu0 0
      %959 = vmatpush1.bf16.msra.mxu0 0
      %960 = vmatprep.subr.bf16.mxu0 0
      %961 = vmatpush1.bf16.msra.mxu0 0
      %962 = vmatprep.subr.bf16.mxu0 0
      %963 = vmatpush1.bf16.msra.mxu0 0
      %964 = vmatprep.subr.bf16.mxu0 0
      %965 = vmatpush1.bf16.msra.mxu0 0
      %966 = vmatprep.subr.bf16.mxu0 0
      %967 = vmatpush1.bf16.msra.mxu0 0
      %968 = vmatprep.mubr.bf16.mxu0 0
      %969 = vmatmul.mubr.bf16.gmra.mrb[0].mxu0 %v856
      %v970 = vpop.f32.mrb[0].mxu0
      %v971 = vadd.f32 %v666, %v970
      %v972 = vpop.f32.mrb[0].mxu0
      %v973 = vpop.f32.mrb[0].mxu0
      %v974 = vadd.f32 %v669, %v973
      %v975 = vpop.f32.mrb[0].mxu0
      %976 = vmatprep.mubr.bf16.mxu0 0
      %977 = vmatmul.mubr.bf16.gmra.mrb[0].mxu0 %v857
      %v978 = vpop.f32.mrb[0].mxu0
      %v979 = vadd.f32 %v674, %v978
      %v980 = vpop.f32.mrb[0].mxu0
      %v981 = vpop.f32.mrb[0].mxu0
      %v982 = vadd.f32 %v677, %v981
      %v983 = vpop.f32.mrb[0].mxu0
      %984 = vmatprep.mubr.bf16.mxu0 0
      %985 = vmatmul.mubr.bf16.gmra.mrb[0].mxu0 %v858
      %v986 = vpop.f32.mrb[0].mxu0
      %v987 = vadd.f32 %v682, %v986
      %v988 = vpop.f32.mrb[0].mxu0
      %v989 = vpop.f32.mrb[0].mxu0
      %v990 = vadd.f32 %v685, %v989
      %v991 = vpop.f32.mrb[0].mxu0
      %992 = vmatprep.mubr.bf16.mxu0 0
      %993 = vmatmul.mubr.bf16.gmra.mrb[0].mxu0 %v859
      %v994 = vpop.f32.mrb[0].mxu0
      %v995 = vadd.f32 %v690, %v994
      %v996 = vpop.f32.mrb[0].mxu0
      %v997 = vpop.f32.mrb[0].mxu0
      %v998 = vadd.f32 %v693, %v997
      %v999 = vpop.f32.mrb[0].mxu0
      %1000 = vmatprep.mubr.bf16.mxu0 0
      %1001 = vmatmul.mubr.bf16.gmra.mrb[0].mxu0 %v860
      %v1002 = vpop.f32.mrb[0].mxu0
      %v1003 = vadd.f32 %v698, %v1002
      %v1004 = vpop.f32.mrb[0].mxu0
      %v1005 = vpop.f32.mrb[0].mxu0
      %v1006 = vadd.f32 %v701, %v1005
      %v1007 = vpop.f32.mrb[0].mxu0
      %1008 = vmatprep.mubr.bf16.mxu0 0
      %1009 = vmatmul.mubr.bf16.gmra.mrb[0].mxu0 %v861
      %v1010 = vpop.f32.mrb[0].mxu0
      %v1011 = vadd.f32 %v706, %v1010
      %v1012 = vpop.f32.mrb[0].mxu0
      %v1013 = vpop.f32.mrb[0].mxu0
      %v1014 = vadd.f32 %v709, %v1013
      %v1015 = vpop.f32.mrb[0].mxu0
      %1016 = vmatprep.mubr.bf16.mxu0 0
      %1017 = vmatmul.mubr.bf16.gmra.mrb[0].mxu0 %v862
      %v1018 = vpop.f32.mrb[0].mxu0
      %v1019 = vadd.f32 %v714, %v1018
      %v1020 = vpop.f32.mrb[0].mxu0
      %v1021 = vpop.f32.mrb[0].mxu0
      %v1022 = vadd.f32 %v717, %v1021
      %v1023 = vpop.f32.mrb[0].mxu0
      %1024 = vmatprep.mubr.bf16.mxu0 0
      %1025 = vmatmul.mubr.bf16.gmra.mrb[0].mxu0 %v863
      %v1026 = vpop.f32.mrb[0].mxu0
      %v1027 = vadd.f32 %v722, %v1026
      %v1028 = vpop.f32.mrb[0].mxu0
      %v1029 = vpop.f32.mrb[0].mxu0
      %v1030 = vadd.f32 %v725, %v1029
      %v1031 = vpop.f32.mrb[0].mxu0
      %1032 = vmatprep.mubr.bf16.mxu0 0
      %1033 = vmatmul.mubr.bf16.gmra.mrb[0].mxu0 %v864
      %v1034 = vpop.f32.mrb[0].mxu0
      %v1035 = vadd.f32 %v730, %v1034
      %v1036 = vpop.f32.mrb[0].mxu0
      %v1037 = vpop.f32.mrb[0].mxu0
      %v1038 = vadd.f32 %v733, %v1037
      %v1039 = vpop.f32.mrb[0].mxu0
      %1040 = vmatprep.mubr.bf16.mxu0 0
      %1041 = vmatmul.mubr.bf16.gmra.mrb[0].mxu0 %v865
      %v1042 = vpop.f32.mrb[0].mxu0
      %v1043 = vadd.f32 %v738, %v1042
      %v1044 = vpop.f32.mrb[0].mxu0
      %v1045 = vpop.f32.mrb[0].mxu0
      %v1046 = vadd.f32 %v741, %v1045
      %v1047 = vpop.f32.mrb[0].mxu0
      %1048 = vmatprep.mubr.bf16.mxu0 0
      %1049 = vmatmul.mubr.bf16.gmra.mrb[0].mxu0 %v866
      %v1050 = vpop.f32.mrb[0].mxu0
      %v1051 = vadd.f32 %v746, %v1050
      %v1052 = vpop.f32.mrb[0].mxu0
      %v1053 = vpop.f32.mrb[0].mxu0
      %v1054 = vadd.f32 %v749, %v1053
      %v1055 = vpop.f32.mrb[0].mxu0
      %1056 = vmatprep.mubr.bf16.mxu0 0
      %1057 = vmatmul.mubr.bf16.gmra.mrb[0].mxu0 %v867
      %v1058 = vpop.f32.mrb[0].mxu0
      %v1059 = vadd.f32 %v754, %v1058
      %v1060 = vpop.f32.mrb[0].mxu0
      %v1061 = vpop.f32.mrb[0].mxu0
      %v1062 = vadd.f32 %v757, %v1061
      %v1063 = vpop.f32.mrb[0].mxu0
      %1064 = vmatprep.mubr.bf16.mxu0 0
      %1065 = vmatmul.mubr.bf16.gmra.mrb[0].mxu0 %v868
      %v1066 = vpop.f32.mrb[0].mxu0
      %v1067 = vadd.f32 %v762, %v1066
      %v1068 = vpop.f32.mrb[0].mxu0
      %v1069 = vpop.f32.mrb[0].mxu0
      %v1070 = vadd.f32 %v765, %v1069
      %v1071 = vpop.f32.mrb[0].mxu0
      %1072 = vmatprep.mubr.bf16.mxu0 0
      %1073 = vmatmul.mubr.bf16.gmra.mrb[0].mxu0 %v869
      %v1074 = vpop.f32.mrb[0].mxu0
      %v1075 = vadd.f32 %v770, %v1074
      %v1076 = vpop.f32.mrb[0].mxu0
      %v1077 = vpop.f32.mrb[0].mxu0
      %v1078 = vadd.f32 %v773, %v1077
      %v1079 = vpop.f32.mrb[0].mxu0
      %1080 = vmatprep.mubr.bf16.mxu0 0
      %1081 = vmatmul.mubr.bf16.gmra.mrb[0].mxu0 %v870
      %v1082 = vpop.f32.mrb[0].mxu0
      %v1083 = vadd.f32 %v778, %v1082
      %v1084 = vpop.f32.mrb[0].mxu0
      %v1085 = vpop.f32.mrb[0].mxu0
      %v1086 = vadd.f32 %v781, %v1085
      %v1087 = vpop.f32.mrb[0].mxu0
      %1088 = vmatprep.mubr.bf16.mxu0 0
      %1089 = vmatmul.mubr.bf16.gmra.mrb[0].mxu0 %v871
      %v1090 = vpop.f32.mrb[0].mxu0
      %v1091 = vadd.f32 %v786, %v1090
      %v1092 = vpop.f32.mrb[0].mxu0
      %v1093 = vpop.f32.mrb[0].mxu0
      %v1094 = vadd.f32 %v789, %v1093
      %v1095 = vpop.f32.mrb[0].mxu0
      %1096 = vdwg.mxu0
      %v1097 = vld [vmem:[%s5] sm:$0x1]
      %v1099 = vlaneseq
      %v1100 = vshrl.u32 %v1099, 7
      %v1101 = vsub.s32 0, %v1100
      %v1102 = vrot.slane %v1097, %v1101
      %v1104 = vmul.f32 %v971, %v1102
      %v1105 = vmul.f32 %v974, %v1102
      %v1106 = vmul.f32 %v979, %v1102
      %v1107 = vmul.f32 %v982, %v1102
      %v1108 = vmul.f32 %v987, %v1102
      %v1109 = vmul.f32 %v990, %v1102
      %v1110 = vmul.f32 %v995, %v1102
      %v1111 = vmul.f32 %v998, %v1102
      %v1112 = vmul.f32 %v1003, %v1102
      %v1113 = vmul.f32 %v1006, %v1102
      %v1114 = vmul.f32 %v1011, %v1102
      %v1115 = vmul.f32 %v1014, %v1102
      %v1116 = vmul.f32 %v1019, %v1102
      %v1117 = vmul.f32 %v1022, %v1102
      %v1118 = vmul.f32 %v1027, %v1102
      %v1119 = vmul.f32 %v1030, %v1102
      %v1120 = vmul.f32 %v1035, %v1102
      %v1121 = vmul.f32 %v1038, %v1102
      %v1122 = vmul.f32 %v1043, %v1102
      %v1123 = vmul.f32 %v1046, %v1102
      %v1124 = vmul.f32 %v1051, %v1102
      %v1125 = vmul.f32 %v1054, %v1102
      %v1126 = vmul.f32 %v1059, %v1102
      %v1127 = vmul.f32 %v1062, %v1102
      %v1128 = vmul.f32 %v1067, %v1102
      %v1129 = vmul.f32 %v1070, %v1102
      %v1130 = vmul.f32 %v1075, %v1102
      %v1131 = vmul.f32 %v1078, %v1102
      %v1132 = vmul.f32 %v1083, %v1102
      %v1133 = vmul.f32 %v1086, %v1102
      %v1134 = vmul.f32 %v1091, %v1102
      %v1135 = vmul.f32 %v1094, %v1102
      %v1136 = vld [vmem:[%s6] sm:$0x1]
      %v1138 = vlaneseq
      %v1139 = vshrl.u32 %v1138, 7
      %v1140 = vsub.s32 0, %v1139
      %v1141 = vrot.slane %v1136, %v1140
      %v1143 = vadd.f32 %v1104, %v1141
      %v1144 = vadd.f32 %v1105, %v1141
      %v1145 = vadd.f32 %v1106, %v1141
      %v1146 = vadd.f32 %v1107, %v1141
      %v1147 = vadd.f32 %v1108, %v1141
      %v1148 = vadd.f32 %v1109, %v1141
      %v1149 = vadd.f32 %v1110, %v1141
      %v1150 = vadd.f32 %v1111, %v1141
      %v1151 = vadd.f32 %v1112, %v1141
      %v1152 = vadd.f32 %v1113, %v1141
      %v1153 = vadd.f32 %v1114, %v1141
      %v1154 = vadd.f32 %v1115, %v1141
      %v1155 = vadd.f32 %v1116, %v1141
      %v1156 = vadd.f32 %v1117, %v1141
      %v1157 = vadd.f32 %v1118, %v1141
      %v1158 = vadd.f32 %v1119, %v1141
      %v1159 = vadd.f32 %v1120, %v1141
      %v1160 = vadd.f32 %v1121, %v1141
      %v1161 = vadd.f32 %v1122, %v1141
      %v1162 = vadd.f32 %v1123, %v1141
      %v1163 = vadd.f32 %v1124, %v1141
      %v1164 = vadd.f32 %v1125, %v1141
      %v1165 = vadd.f32 %v1126, %v1141
      %v1166 = vadd.f32 %v1127, %v1141
      %v1167 = vadd.f32 %v1128, %v1141
      %v1168 = vadd.f32 %v1129, %v1141
      %v1169 = vadd.f32 %v1130, %v1141
      %v1170 = vadd.f32 %v1131, %v1141
      %v1171 = vadd.f32 %v1132, %v1141
      %v1172 = vadd.f32 %v1133, %v1141
      %v1173 = vadd.f32 %v1134, %v1141
      %v1174 = vadd.f32 %v1135, %v1141
      %v1175 = vsub.f32 0.0, %v1143
      %v1176 = vsub.f32 0.0, %v1144
      %v1177 = vsub.f32 0.0, %v1145
      %v1178 = vsub.f32 0.0, %v1146
      %v1179 = vsub.f32 0.0, %v1147
      %v1180 = vsub.f32 0.0, %v1148
      %v1181 = vsub.f32 0.0, %v1149
      %v1182 = vsub.f32 0.0, %v1150
      %v1183 = vsub.f32 0.0, %v1151
      %v1184 = vsub.f32 0.0, %v1152
      %v1185 = vsub.f32 0.0, %v1153
      %v1186 = vsub.f32 0.0, %v1154
      %v1187 = vsub.f32 0.0, %v1155
      %v1188 = vsub.f32 0.0, %v1156
      %v1189 = vsub.f32 0.0, %v1157
      %v1190 = vsub.f32 0.0, %v1158
      %v1191 = vsub.f32 0.0, %v1159
      %v1192 = vsub.f32 0.0, %v1160
      %v1193 = vsub.f32 0.0, %v1161
      %v1194 = vsub.f32 0.0, %v1162
      %v1195 = vsub.f32 0.0, %v1163
      %v1196 = vsub.f32 0.0, %v1164
      %v1197 = vsub.f32 0.0, %v1165
      %v1198 = vsub.f32 0.0, %v1166
      %v1199 = vsub.f32 0.0, %v1167
      %v1200 = vsub.f32 0.0, %v1168
      %v1201 = vsub.f32 0.0, %v1169
      %v1202 = vsub.f32 0.0, %v1170
      %v1203 = vsub.f32 0.0, %v1171
      %v1204 = vsub.f32 0.0, %v1172
      %v1205 = vsub.f32 0.0, %v1173
      %v1206 = vsub.f32 0.0, %v1174
      %v1207 = vmul.f32 %v1175, 1.442695
      %v1208 = vpow.pop %v1207
      %v1209 = vmul.f32 %v1176, 1.442695
      %v1210 = vpow.pop %v1209
      %v1211 = vmul.f32 %v1177, 1.442695
      %v1212 = vpow.pop %v1211
      %v1213 = vmul.f32 %v1178, 1.442695
      %v1214 = vpow.pop %v1213
      %v1215 = vmul.f32 %v1179, 1.442695
      %v1216 = vpow.pop %v1215
      %v1217 = vmul.f32 %v1180, 1.442695
      %v1218 = vpow.pop %v1217
      %v1219 = vmul.f32 %v1181, 1.442695
      %v1220 = vpow.pop %v1219
      %v1221 = vmul.f32 %v1182, 1.442695
      %v1222 = vpow.pop %v1221
      %v1223 = vmul.f32 %v1183, 1.442695
      %v1224 = vpow.pop %v1223
      %v1225 = vmul.f32 %v1184, 1.442695
      %v1226 = vpow.pop %v1225
      %v1227 = vmul.f32 %v1185, 1.442695
      %v1228 = vpow.pop %v1227
      %v1229 = vmul.f32 %v1186, 1.442695
      %v1230 = vpow.pop %v1229
      %v1231 = vmul.f32 %v1187, 1.442695
      %v1232 = vpow.pop %v1231
      %v1233 = vmul.f32 %v1188, 1.442695
      %v1234 = vpow.pop %v1233
      %v1235 = vmul.f32 %v1189, 1.442695
      %v1236 = vpow.pop %v1235
      %v1237 = vmul.f32 %v1190, 1.442695
      %v1238 = vpow.pop %v1237
      %v1239 = vmul.f32 %v1191, 1.442695
      %v1240 = vpow.pop %v1239
      %v1241 = vmul.f32 %v1192, 1.442695
      %v1242 = vpow.pop %v1241
      %v1243 = vmul.f32 %v1193, 1.442695
      %v1244 = vpow.pop %v1243
      %v1245 = vmul.f32 %v1194, 1.442695
      %v1246 = vpow.pop %v1245
      %v1247 = vmul.f32 %v1195, 1.442695
      %v1248 = vpow.pop %v1247
      %v1249 = vmul.f32 %v1196, 1.442695
      %v1250 = vpow.pop %v1249
      %v1251 = vmul.f32 %v1197, 1.442695
      %v1252 = vpow.pop %v1251
      %v1253 = vmul.f32 %v1198, 1.442695
      %v1254 = vpow.pop %v1253
      %v1255 = vmul.f32 %v1199, 1.442695
      %v1256 = vpow.pop %v1255
      %v1257 = vmul.f32 %v1200, 1.442695
      %v1258 = vpow.pop %v1257
      %v1259 = vmul.f32 %v1201, 1.442695
      %v1260 = vpow.pop %v1259
      %v1261 = vmul.f32 %v1202, 1.442695
      %v1262 = vpow.pop %v1261
      %v1263 = vmul.f32 %v1203, 1.442695
      %v1264 = vpow.pop %v1263
      %v1265 = vmul.f32 %v1204, 1.442695
      %v1266 = vpow.pop %v1265
      %v1267 = vmul.f32 %v1205, 1.442695
      %v1268 = vpow.pop %v1267
      %v1269 = vmul.f32 %v1206, 1.442695
      %v1270 = vpow.pop %v1269
      %v1271 = vadd.f32 %v1208, 1.0
      %v1272 = vadd.f32 %v1210, 1.0
      %v1273 = vadd.f32 %v1212, 1.0
      %v1274 = vadd.f32 %v1214, 1.0
      %v1275 = vadd.f32 %v1216, 1.0
      %v1276 = vadd.f32 %v1218, 1.0
      %v1277 = vadd.f32 %v1220, 1.0
      %v1278 = vadd.f32 %v1222, 1.0
      %v1279 = vadd.f32 %v1224, 1.0
      %v1280 = vadd.f32 %v1226, 1.0
      %v1281 = vadd.f32 %v1228, 1.0
      %v1282 = vadd.f32 %v1230, 1.0
      %v1283 = vadd.f32 %v1232, 1.0
      %v1284 = vadd.f32 %v1234, 1.0
      %v1285 = vadd.f32 %v1236, 1.0
      %v1286 = vadd.f32 %v1238, 1.0
      %v1287 = vadd.f32 %v1240, 1.0
      %v1288 = vadd.f32 %v1242, 1.0
      %v1289 = vadd.f32 %v1244, 1.0
      %v1290 = vadd.f32 %v1246, 1.0
      %v1291 = vadd.f32 %v1248, 1.0
      %v1292 = vadd.f32 %v1250, 1.0
      %v1293 = vadd.f32 %v1252, 1.0
      %v1294 = vadd.f32 %v1254, 1.0
      %v1295 = vadd.f32 %v1256, 1.0
      %v1296 = vadd.f32 %v1258, 1.0
      %v1297 = vadd.f32 %v1260, 1.0
      %v1298 = vadd.f32 %v1262, 1.0
      %v1299 = vadd.f32 %v1264, 1.0
      %v1300 = vadd.f32 %v1266, 1.0
      %v1301 = vadd.f32 %v1268, 1.0
      %v1302 = vadd.f32 %v1270, 1.0
      %v1303 = vrcp.pop %v1271
      %v1304 = vrcp.pop %v1272
      %v1305 = vrcp.pop %v1273
      %v1306 = vrcp.pop %v1274
      %v1307 = vrcp.pop %v1275
      %v1308 = vrcp.pop %v1276
      %v1309 = vrcp.pop %v1277
      %v1310 = vrcp.pop %v1278
      %v1311 = vrcp.pop %v1279
      %v1312 = vrcp.pop %v1280
      %v1313 = vrcp.pop %v1281
      %v1314 = vrcp.pop %v1282
      %v1315 = vrcp.pop %v1283
      %v1316 = vrcp.pop %v1284
      %v1317 = vrcp.pop %v1285
      %v1318 = vrcp.pop %v1286
      %v1319 = vrcp.pop %v1287
      %v1320 = vrcp.pop %v1288
      %v1321 = vrcp.pop %v1289
      %v1322 = vrcp.pop %v1290
      %v1323 = vrcp.pop %v1291
      %v1324 = vrcp.pop %v1292
      %v1325 = vrcp.pop %v1293
      %v1326 = vrcp.pop %v1294
      %v1327 = vrcp.pop %v1295
      %v1328 = vrcp.pop %v1296
      %v1329 = vrcp.pop %v1297
      %v1330 = vrcp.pop %v1298
      %v1331 = vrcp.pop %v1299
      %v1332 = vrcp.pop %v1300
      %v1333 = vrcp.pop %v1301
      %v1334 = vrcp.pop %v1302
      %v1335 = vmul.f32 %v1143, %v1303
      %v1336 = vmul.f32 %v1144, %v1304
      %v1337 = vmul.f32 %v1145, %v1305
      %v1338 = vmul.f32 %v1146, %v1306
      %v1339 = vmul.f32 %v1147, %v1307
      %v1340 = vmul.f32 %v1148, %v1308
      %v1341 = vmul.f32 %v1149, %v1309
      %v1342 = vmul.f32 %v1150, %v1310
      %v1343 = vmul.f32 %v1151, %v1311
      %v1344 = vmul.f32 %v1152, %v1312
      %v1345 = vmul.f32 %v1153, %v1313
      %v1346 = vmul.f32 %v1154, %v1314
      %v1347 = vmul.f32 %v1155, %v1315
      %v1348 = vmul.f32 %v1156, %v1316
      %v1349 = vmul.f32 %v1157, %v1317
      %v1350 = vmul.f32 %v1158, %v1318
      %v1351 = vmul.f32 %v1159, %v1319
      %v1352 = vmul.f32 %v1160, %v1320
      %v1353 = vmul.f32 %v1161, %v1321
      %v1354 = vmul.f32 %v1162, %v1322
      %v1355 = vmul.f32 %v1163, %v1323
      %v1356 = vmul.f32 %v1164, %v1324
      %v1357 = vmul.f32 %v1165, %v1325
      %v1358 = vmul.f32 %v1166, %v1326
      %v1359 = vmul.f32 %v1167, %v1327
      %v1360 = vmul.f32 %v1168, %v1328
      %v1361 = vmul.f32 %v1169, %v1329
      %v1362 = vmul.f32 %v1170, %v1330
      %v1363 = vmul.f32 %v1171, %v1331
      %v1364 = vmul.f32 %v1172, %v1332
      %v1365 = vmul.f32 %v1173, %v1333
      %v1366 = vmul.f32 %v1174, %v1334
      %v1367 = vpack.c.bf16 %v1336, %v1335
      %v1368 = vpack.c.bf16 %v1338, %v1337
      %v1369 = vpack.c.bf16 %v1340, %v1339
      %v1370 = vpack.c.bf16 %v1342, %v1341
      %v1371 = vpack.c.bf16 %v1344, %v1343
      %v1372 = vpack.c.bf16 %v1346, %v1345
      %v1373 = vpack.c.bf16 %v1348, %v1347
      %v1374 = vpack.c.bf16 %v1350, %v1349
      %v1375 = vpack.c.bf16 %v1352, %v1351
      %v1376 = vpack.c.bf16 %v1354, %v1353
      %v1377 = vpack.c.bf16 %v1356, %v1355
      %v1378 = vpack.c.bf16 %v1358, %v1357
      %v1379 = vpack.c.bf16 %v1360, %v1359
      %v1380 = vpack.c.bf16 %v1362, %v1361
      %v1381 = vpack.c.bf16 %v1364, %v1363
      %v1382 = vpack.c.bf16 %v1366, %v1365
      %v1399 = vunpack.c.l.b16 %v1367
      %v1400 = vunpack.c.h.b16 %v1367
      %v1401 = vunpack.c.l.b16 %v1368
      %v1402 = vunpack.c.h.b16 %v1368
      %v1403 = vunpack.c.l.b16 %v1369
      %v1404 = vunpack.c.h.b16 %v1369
      %v1405 = vunpack.c.l.b16 %v1370
      %v1406 = vunpack.c.h.b16 %v1370
      %v1407 = vunpack.c.l.b16 %v1371
      %v1408 = vunpack.c.h.b16 %v1371
      %v1409 = vunpack.c.l.b16 %v1372
      %v1410 = vunpack.c.h.b16 %v1372
      %v1411 = vunpack.c.l.b16 %v1373
      %v1412 = vunpack.c.h.b16 %v1373
      %v1413 = vunpack.c.l.b16 %v1374
      %v1414 = vunpack.c.h.b16 %v1374
      %v1415 = vunpack.c.l.b16 %v1375
      %v1416 = vunpack.c.h.b16 %v1375
      %v1417 = vunpack.c.l.b16 %v1376
      %v1418 = vunpack.c.h.b16 %v1376
      %v1419 = vunpack.c.l.b16 %v1377
      %v1420 = vunpack.c.h.b16 %v1377
      %v1421 = vunpack.c.l.b16 %v1378
      %v1422 = vunpack.c.h.b16 %v1378
      %v1423 = vunpack.c.l.b16 %v1379
      %v1424 = vunpack.c.h.b16 %v1379
      %v1425 = vunpack.c.l.b16 %v1380
      %v1426 = vunpack.c.h.b16 %v1380
      %v1427 = vunpack.c.l.b16 %v1381
      %v1428 = vunpack.c.h.b16 %v1381
      %v1429 = vunpack.c.l.b16 %v1382
      %v1430 = vunpack.c.h.b16 %v1382
      %v1431 = vpack.c.b16 %v1399, %v1399
      %v1432 = vpack.c.b16 %v1400, %v1400
      %v1433 = vpack.c.b16 %v1401, %v1401
      %v1434 = vpack.c.b16 %v1402, %v1402
      %v1435 = vpack.c.b16 %v1403, %v1403
      %v1436 = vpack.c.b16 %v1404, %v1404
      %v1437 = vpack.c.b16 %v1405, %v1405
      %v1438 = vpack.c.b16 %v1406, %v1406
      %v1439 = vpack.c.b16 %v1407, %v1407
      %v1440 = vpack.c.b16 %v1408, %v1408
      %v1441 = vpack.c.b16 %v1409, %v1409
      %v1442 = vpack.c.b16 %v1410, %v1410
      %v1443 = vpack.c.b16 %v1411, %v1411
      %v1444 = vpack.c.b16 %v1412, %v1412
      %v1445 = vpack.c.b16 %v1413, %v1413
      %v1446 = vpack.c.b16 %v1414, %v1414
      %v1447 = vpack.c.b16 %v1415, %v1415
      %v1448 = vpack.c.b16 %v1416, %v1416
      %v1449 = vpack.c.b16 %v1417, %v1417
      %v1450 = vpack.c.b16 %v1418, %v1418
      %v1451 = vpack.c.b16 %v1419, %v1419
      %v1452 = vpack.c.b16 %v1420, %v1420
      %v1453 = vpack.c.b16 %v1421, %v1421
      %v1454 = vpack.c.b16 %v1422, %v1422
      %v1455 = vpack.c.b16 %v1423, %v1423
      %v1456 = vpack.c.b16 %v1424, %v1424
      %v1457 = vpack.c.b16 %v1425, %v1425
      %v1458 = vpack.c.b16 %v1426, %v1426
      %v1459 = vpack.c.b16 %v1427, %v1427
      %v1460 = vpack.c.b16 %v1428, %v1428
      %v1461 = vpack.c.b16 %v1429, %v1429
      %v1462 = vpack.c.b16 %v1430, %v1430
      %1495 = vst [vmem:[%s324] sm:$0xf] %v1431
      %1496 = vst [vmem:[%s324 + $0x4] sm:$0xf] %v1432
      %1497 = vst [vmem:[%s324 + $0x8] sm:$0xf] %v1433
      %1498 = vst [vmem:[%s324 + $0xc] sm:$0xf] %v1434
      %1499 = vst [vmem:[%s324 + $0x10] sm:$0xf] %v1435
      %1500 = vst [vmem:[%s324 + $0x14] sm:$0xf] %v1436
      %1501 = vst [vmem:[%s324 + $0x18] sm:$0xf] %v1437
      %1502 = vst [vmem:[%s324 + $0x1c] sm:$0xf] %v1438
      %1503 = vst [vmem:[%s324 + $0x20] sm:$0xf] %v1439
      %1504 = vst [vmem:[%s324 + $0x24] sm:$0xf] %v1440
      %1505 = vst [vmem:[%s324 + $0x28] sm:$0xf] %v1441
      %1506 = vst [vmem:[%s324 + $0x2c] sm:$0xf] %v1442
      %1507 = vst [vmem:[%s324 + $0x30] sm:$0xf] %v1443
      %1508 = vst [vmem:[%s324 + $0x34] sm:$0xf] %v1444
      %1509 = vst [vmem:[%s324 + $0x38] sm:$0xf] %v1445
      %1510 = vst [vmem:[%s324 + $0x3c] sm:$0xf] %v1446
      %1511 = vst [vmem:[%s324 + $0x40] sm:$0xf] %v1447
      %1512 = vst [vmem:[%s324 + $0x44] sm:$0xf] %v1448
      %1513 = vst [vmem:[%s324 + $0x48] sm:$0xf] %v1449
      %1514 = vst [vmem:[%s324 + $0x4c] sm:$0xf] %v1450
      %1515 = vst [vmem:[%s324 + $0x50] sm:$0xf] %v1451
      %1516 = vst [vmem:[%s324 + $0x54] sm:$0xf] %v1452
      %1517 = vst [vmem:[%s324 + $0x58] sm:$0xf] %v1453
      %1518 = vst [vmem:[%s324 + $0x5c] sm:$0xf] %v1454
      %1519 = vst [vmem:[%s324 + $0x60] sm:$0xf] %v1455
      %1520 = vst [vmem:[%s324 + $0x64] sm:$0xf] %v1456
      %1521 = vst [vmem:[%s324 + $0x68] sm:$0xf] %v1457
      %1522 = vst [vmem:[%s324 + $0x6c] sm:$0xf] %v1458
      %1523 = vst [vmem:[%s324 + $0x70] sm:$0xf] %v1459
      %1524 = vst [vmem:[%s324 + $0x74] sm:$0xf] %v1460
      %1525 = vst [vmem:[%s324 + $0x78] sm:$0xf] %v1461
      %1526 = vst [vmem:[%s324 + $0x7c] sm:$0xf] %v1462
      %s1527 = smul.u32 32, %s18
      %p1528 = scmp.lt.s32.totalorder %s1527, 63
      %s1529 = scalar_select %p1528, %s1527, 63
      %s1530 = smul.addr %s1529, 4
      %s1531 = scalar_lea.vmem %s7, %s1530
      // Predicated region
      $region49: #{csp_layer_forward.9} parent=47 // pred_check
        %p1532 = pneg %p198
      $region50: #{csp_layer_forward.9} parent=47 // pred_check_branch
        %1534 = sbr.rel (%p1532) target = $region52
      $region51: #{csp_layer_forward.9} parent=47 // pred_region
        %s1535 = smul.u32 32, %s18
      $region52: #{csp_layer_forward.9} parent=47 // pred_fallthru
        _
    $region48: #{csp_layer_forward.9} parent=5 // pred_fallthru
      _
    %p1536 = scmp.le.s32.totalorder 2, %s13
    // Predicated region
    $region53: #{csp_layer_forward.9} parent=5 // pred_check
      %p1537 = pneg %p1536
    $region54: #{csp_layer_forward.9} parent=5 // pred_check_branch
      %1539 = sbr.rel (%p1537) target = $region56
    $region55: #{csp_layer_forward.9} parent=5 // pred_region
      %s1540 = ssub.s32 %s13, 2
      // Predicated region
      $region57: #{csp_layer_forward.9} parent=55 // pred_check
        %p1541 = pneg %p204
      $region58: #{csp_layer_forward.9} parent=55 // pred_check_branch
        %1543 = sbr.rel (%p1541) target = $region60
      $region59: #{csp_layer_forward.9} parent=55 // pred_region
        %s1544 = smul.u32 32, %s19
        %p1545 = scmp.lt.s32.totalorder %s1544, 63
        %s1546 = scalar_select %p1545, %s1544, 63
        %s1547 = smul.addr %s1546, 4
        %s1548 = scalar_lea.vmem %s7, %s1547
      $region60: #{csp_layer_forward.9} parent=55 // pred_fallthru
        _
    $region56: #{csp_layer_forward.9} parent=5 // pred_fallthru
      _
  $region6: #{csp_layer_forward.9} parent=0 // loop_footer
    %s17 = sadd.s32 1, %s13
  $region7: #{csp_layer_forward.9} parent=0 // loop_footer_branch
    %12 = sbr.rel target = $region3
  $region8: #{csp_layer_forward.9} parent=0 // loop_exit
    _

// kernel: csp_layer_forward.8
$region0: #{csp_layer_forward.8}
  #allocation0 [shape = 'u32[]', space=smem, size = 0x4, offset = 0x4, fixed_abs, tag = 'smem constant byte address 0x4 - core index']
  #allocation1 [shape = 'u32[144,128]{1,0:T(1,128)}', space=vmem, size = 0x12000, scoped, tag = 'internal scratch']
  #allocation2 [shape = 'bf16[2,440,128]{2,1,0:T(8,128)(2,1)}', space=vmem, size = 0x37000, scoped, tag = 'scratch operand']
  #allocation3 [shape = 'bf16[384,1152]{1,0:T(16,128)(2,1)}', space=vmem, size = 0xd8000, scoped, tag = 'scratch operand']
  #allocation4 [shape = 's32[2]{0}', space=sflag, size = 0x8, scoped, tag = 'scratch operand']
  #allocation5 [shape = 's32[]', space=sflag, size = 0x4, offset = 0, fixed_abs, tag = 'sflag constant byte address 0x0 - dummy sync flag']
  #allocation6 [shape = 's32[]', space=sflag, size = 0x4, offset = 0, fixed_abs, tag = 'sflag constant byte address 0x0 - dummy sync flag']
  %s0 = inlined_call_operand.vmem [shape: bf16[864,128], index: 0, kind: input, shape index: {}]
  %s1 = inlined_call_operand.vmem [shape: bf16[1152,128], index: 1, kind: input, shape index: {}]
  %s2 = inlined_call_operand.vmem [shape: f32[1,128], index: 2, kind: input, shape index: {}]
  %s3 = inlined_call_operand.vmem [shape: f32[1,128], index: 3, kind: input, shape index: {}]
  %s4 = inlined_call_operand.vmem [shape: bf16[768,128], index: 4, kind: output, shape index: {}]
  %s5 = sld [smem:[#allocation0]]
  $region121: #{csp_layer_forward.8} parent=0
    _
  %s7 = ssub.s32 1, %s5
  %s8 = scalar_select 0, %s7, %s5
  loop: start=0, step=1, limit=4
  $region2: #{csp_layer_forward.8} parent=0 // loop_pre_header
    _
  $region3: #{csp_layer_forward.8} parent=0 // loop_header
    %s10 = sphi 0, %s14
    %p11 = scmp.ge.s32.totalorder %s10, 4
    %s17 = sphi 0, %s29
    %s18 = sphi 0, %s25
    %s19 = sphi 0, %s17
    %s20 = sphi 0, %s18
    %s21 = sphi 0, %s19
    %s22 = sphi 0, %s20
    %s30 = sphi 0, %s30
    %s32 = sphi 0, %s30
    %s33 = sphi 0, %s32
    %s47 = sphi 0, %s33
    %s51 = sphi 0, %s51
    %s53 = sphi 0, %s51
    %s54 = sphi 0, %s53
    %s68 = sphi 0, %s54
    %s72 = sphi 0, %s72
    %s74 = sphi 0, %s72
    %s75 = sphi 0, %s74
    %s89 = sphi 0, %s75
    %s97 = sphi 0, %s99
    %s100 = sphi 0, %s97
    %s101 = sphi 0, %s100
    %s117 = sphi 0, %s101
  $region4: #{csp_layer_forward.8} parent=0 // loop_header_branch
    %13 = sbr.rel (%p11) target = $region8
  $region5: #{csp_layer_forward.8} parent=0 // loop_body
    %s15 = ssub.s32 %s10, 1
    %s16 = ssub.s32 %s10, 2
    %s23 = sadd.s32 1, %s18
    %p24 = scmp.ge.s32.totalorder %s23, 1
    %s25 = scalar_select %p24, 0, %s23
    %s26 = sadd.s32 1, %s17
    %s27 = scalar_select %p24, %s26, %s17
    %p28 = scmp.ge.s32.totalorder %s27, 2
    %s29 = scalar_select %p28, 0, %s27
    %s31 = sadd.s32 %s30, 1
    %p34 = scmp.eq.s32.totalorder %s10, 1
    %p35 = scmp.ne.s32.totalorder %s30, %s32
    %p36 = scmp.eq.s32.totalorder %s10, 0
    %p37 = por %p35, %p36
    %p38 = scmp.ne.s32.totalorder %s30, %s32
    %p39 = scmp.eq.s32.totalorder %s15, 1
    %p40 = por %p38, %p39
    %p41 = scmp.ne.s32.totalorder %s32, %s33
    %p42 = scmp.eq.s32.totalorder %s15, 0
    %p43 = por %p41, %p42
    %p44 = scmp.ne.s32.totalorder %s32, %s33
    %p45 = scmp.eq.s32.totalorder %s16, 1
    %p46 = por %p44, %p45
    %p48 = scmp.ne.s32.totalorder %s33, %s47
    %p49 = scmp.eq.s32.totalorder %s16, 0
    %p50 = por %p48, %p49
    %s52 = sadd.s32 %s51, 1
    %p55 = scmp.eq.s32.totalorder %s10, 1
    %p56 = scmp.ne.s32.totalorder %s51, %s53
    %p57 = scmp.eq.s32.totalorder %s10, 0
    %p58 = por %p56, %p57
    %p59 = scmp.ne.s32.totalorder %s51, %s53
    %p60 = scmp.eq.s32.totalorder %s15, 1
    %p61 = por %p59, %p60
    %p62 = scmp.ne.s32.totalorder %s53, %s54
    %p63 = scmp.eq.s32.totalorder %s15, 0
    %p64 = por %p62, %p63
    %p65 = scmp.ne.s32.totalorder %s53, %s54
    %p66 = scmp.eq.s32.totalorder %s16, 1
    %p67 = por %p65, %p66
    %p69 = scmp.ne.s32.totalorder %s54, %s68
    %p70 = scmp.eq.s32.totalorder %s16, 0
    %p71 = por %p69, %p70
    %s73 = sadd.s32 %s72, 1
    %p76 = scmp.eq.s32.totalorder %s10, 1
    %p77 = scmp.ne.s32.totalorder %s72, %s74
    %p78 = scmp.eq.s32.totalorder %s10, 0
    %p79 = por %p77, %p78
    %p80 = scmp.ne.s32.totalorder %s72, %s74
    %p81 = scmp.eq.s32.totalorder %s15, 1
    %p82 = por %p80, %p81
    %p83 = scmp.ne.s32.totalorder %s74, %s75
    %p84 = scmp.eq.s32.totalorder %s15, 0
    %p85 = por %p83, %p84
    %p86 = scmp.ne.s32.totalorder %s74, %s75
    %p87 = scmp.eq.s32.totalorder %s16, 1
    %p88 = por %p86, %p87
    %p90 = scmp.ne.s32.totalorder %s75, %s89
    %p91 = scmp.eq.s32.totalorder %s16, 0
    %p92 = por %p90, %p91
    %s93 = sadd.s32 %s17, %s18
    %s94 = sadd.s32 %s29, %s25
    %s95 = ssub.s32 %s93, %s94
    %p96 = scmp.eq.s32.totalorder %s95, 0
    %s98 = sadd.s32 %s97, 1
    %s99 = scalar_select %p96, %s97, %s98
    %p102 = pneg %p96
    %p103 = scmp.eq.s32.totalorder %s10, 1
    %p104 = por %p102, %p103
    %p105 = scmp.ne.s32.totalorder %s97, %s100
    %p106 = scmp.eq.s32.totalorder %s10, 0
    %p107 = por %p105, %p106
    %p108 = scmp.ne.s32.totalorder %s97, %s100
    %p109 = scmp.eq.s32.totalorder %s15, 1
    %p110 = por %p108, %p109
    %p111 = scmp.ne.s32.totalorder %s100, %s101
    %p112 = scmp.eq.s32.totalorder %s15, 0
    %p113 = por %p111, %p112
    %p114 = scmp.ne.s32.totalorder %s100, %s101
    %p115 = scmp.eq.s32.totalorder %s16, 1
    %p116 = por %p114, %p115
    %p118 = scmp.ne.s32.totalorder %s101, %s117
    %p119 = scmp.eq.s32.totalorder %s16, 0
    %p120 = por %p118, %p119
    %p121 = scmp.le.s32.totalorder 1, %s10
    %p122 = scmp.lt.s32.totalorder %s10, 3
    %p123 = pnand %p121, %p122
    %p124 = pneg %p123
    // Predicated region
    $region9: #{csp_layer_forward.8} parent=5 // pred_check
      _
    $region10: #{csp_layer_forward.8} parent=5 // pred_check_branch
      %126 = sbr.rel (%p123) target = $region12
    $region11: #{csp_layer_forward.8} parent=5 // pred_region
      %s127 = ssub.s32 %s10, 1
      // Predicated region
      $region13: #{csp_layer_forward.8} parent=11 // pred_check
        %p128 = pneg %p43
      $region14: #{csp_layer_forward.8} parent=11 // pred_check_branch
        %130 = sbr.rel (%p128) target = $region16
      $region15: #{csp_layer_forward.8} parent=11 // pred_region
        _
      $region16: #{csp_layer_forward.8} parent=11 // pred_fallthru
        _
      // Predicated region
      $region17: #{csp_layer_forward.8} parent=11 // pred_check
        %p131 = pneg %p64
      $region18: #{csp_layer_forward.8} parent=11 // pred_check_branch
        %133 = sbr.rel (%p131) target = $region20
      $region19: #{csp_layer_forward.8} parent=11 // pred_region
        _
      $region20: #{csp_layer_forward.8} parent=11 // pred_fallthru
        _
      // Predicated region
      $region21: #{csp_layer_forward.8} parent=11 // pred_check
        %p134 = pneg %p85
      $region22: #{csp_layer_forward.8} parent=11 // pred_check_branch
        %136 = sbr.rel (%p134) target = $region24
      $region23: #{csp_layer_forward.8} parent=11 // pred_region
        _
      $region24: #{csp_layer_forward.8} parent=11 // pred_fallthru
        _
    $region12: #{csp_layer_forward.8} parent=5 // pred_fallthru
      _
    %p137 = scmp.lt.s32.totalorder %s10, 2
    // Predicated region
    $region25: #{csp_layer_forward.8} parent=5 // pred_check
      %p138 = pneg %p137
    $region26: #{csp_layer_forward.8} parent=5 // pred_check_branch
      %140 = sbr.rel (%p138) target = $region28
    $region27: #{csp_layer_forward.8} parent=5 // pred_region
      _
    $region28: #{csp_layer_forward.8} parent=5 // pred_fallthru
      _
    %p141 = scmp.le.s32.totalorder 1, %s10
    %p142 = scmp.lt.s32.totalorder %s10, 3
    %p143 = pnand %p141, %p142
    %p144 = pneg %p143
    // Predicated region
    $region29: #{csp_layer_forward.8} parent=5 // pred_check
      _
    $region30: #{csp_layer_forward.8} parent=5 // pred_check_branch
      %146 = sbr.rel (%p143) target = $region32
    $region31: #{csp_layer_forward.8} parent=5 // pred_region
      %s147 = ssub.s32 %s10, 1
      %p148 = pneg %p43
      %p149 = pneg %p40
      %p150 = pneg %p64
      %p151 = pneg %p61
      %p152 = pneg %p85
      %p153 = pneg %p82
      %p154 = pneg %p113
      %p155 = pneg %p110
      %s156 = sadd.s32 %s19, %s20
      %s157 = smul.u32 48, %s156
      %p158 = scmp.lt.s32.totalorder %s157, 95
      %s159 = scalar_select %p158, %s157, 95
      %s160 = smul.addr %s159, 4
      %s161 = scalar_lea.vmem %s4, %s160
      %s162 = sadd.s32 %s19, %s20
      %s163 = smul.u32 48, %s162
      %p164 = scmp.lt.s32.totalorder %s163, 95
      %s165 = scalar_select %p164, %s163, 95
      %s166 = smul.addr %s165, 4
      %s167 = scalar_lea.vmem %s4, %s166
      %s168 = sadd.s32 %s19, %s20
      %s169 = smul.u32 48, %s168
      %p171 = scmp.lt.s32.totalorder %s20, 0
      %s172 = ssub.s32 0, %s20
      %s173 = scalar_select %p171, %s172, %s20
      %s174 = sand.u32 %s173, 1
      %s175 = ssub.s32 0, %s174
      %s176 = scalar_select %p171, %s175, %s174
      %p177 = scmp.ne.s32.totalorder %s176, 0
      %p178 = scmp.lt.s32.totalorder %s176, 0
      %p179 = pnand %p178, %p177
      %p180 = pneg %p179
      %s181 = sadd.s32 %s176, 2
      %s182 = scalar_select %p180, %s181, %s176
      %p183 = scmp.eq.s32.totalorder %s20, 0
      // Predicated region
      $region33: #{csp_layer_forward.8} parent=31 // pred_check
        %p184 = pneg %p183
      $region34: #{csp_layer_forward.8} parent=31 // pred_check_branch
        %186 = sbr.rel (%p184) target = $region36
      $region35: #{csp_layer_forward.8} parent=31 // pred_region
        %187 = vst [vmem:[#allocation2 + $0xd8] sm:$0xf] 0
        %188 = vst [vmem:[#allocation2 + $0x1b4] sm:$0xf] 0
        %s189 = smul.u32 %s19, 432
        %s190 = sshra.s32 %s189, 3
        %s191 = sand.u32 %s189, 7
        %s192 = smul.addr %s190, 4
        %s193 = scalar_lea.vmem %s0, %s192
        %p195 = scmp.lt.u32.totalorder 216, 8
        %p196 = pneg %p195
        // Predicated region
        $region37: #{csp_layer_forward.8} parent=35 // pred_check
          _
        $region38: #{csp_layer_forward.8} parent=35 // pred_check_branch
          %198 = sbr.rel (%p195) target = $region40
        $region39: #{csp_layer_forward.8} parent=35 // pred_region
          %s213 = sand.u32 216, 7
          %p214 = scmp.eq.s32.totalorder %s213, 0
          // Predicated region
          $region52: #{csp_layer_forward.8} parent=39 // pred_check
            %p215 = pneg %p214
          $region53: #{csp_layer_forward.8} parent=39 // pred_check_branch
            %217 = sbr.rel (%p215) target = $region55
          $region54: #{csp_layer_forward.8} parent=39 // pred_region
            loop: start=0, step=1, limit=1
            $region56: #{csp_layer_forward.8} parent=54 // loop_pre_header
              _
            $region57: #{csp_layer_forward.8} parent=54 // loop_header
              %s219 = sphi 0, %s223
              %p220 = scmp.ge.s32.totalorder %s219, 1
              %s224 = sphi %s193, %s193
              %s225 = sphi [#allocation2], [#allocation2]
            $region58: #{csp_layer_forward.8} parent=54 // loop_header_branch
              %222 = sbr.rel (%p220) target = $region62
            $region59: #{csp_layer_forward.8} parent=54 // loop_body
              %v226 = vld [vmem:[%s224] sm:$0xff]
              %227 = vst [vmem:[%s225] sm:$0xff] %v226
              %v228 = vld [vmem:[%s224 + $0x8] sm:$0xff]
              %229 = vst [vmem:[%s225 + $0x8] sm:$0xff] %v228
              %v230 = vld [vmem:[%s224 + $0x10] sm:$0xff]
              %231 = vst [vmem:[%s225 + $0x10] sm:$0xff] %v230
              %v232 = vld [vmem:[%s224 + $0x18] sm:$0xff]
              %233 = vst [vmem:[%s225 + $0x18] sm:$0xff] %v232
              %v234 = vld [vmem:[%s224 + $0x20] sm:$0xff]
              %235 = vst [vmem:[%s225 + $0x20] sm:$0xff] %v234
              %v236 = vld [vmem:[%s224 + $0x28] sm:$0xff]
              %237 = vst [vmem:[%s225 + $0x28] sm:$0xff] %v236
              %v238 = vld [vmem:[%s224 + $0x30] sm:$0xff]
              %239 = vst [vmem:[%s225 + $0x30] sm:$0xff] %v238
              %v240 = vld [vmem:[%s224 + $0x38] sm:$0xff]
              %241 = vst [vmem:[%s225 + $0x38] sm:$0xff] %v240
              %v242 = vld [vmem:[%s224 + $0x40] sm:$0xff]
              %243 = vst [vmem:[%s225 + $0x40] sm:$0xff] %v242
              %v244 = vld [vmem:[%s224 + $0x48] sm:$0xff]
              %245 = vst [vmem:[%s225 + $0x48] sm:$0xff] %v244
              %v246 = vld [vmem:[%s224 + $0x50] sm:$0xff]
              %247 = vst [vmem:[%s225 + $0x50] sm:$0xff] %v246
              %v248 = vld [vmem:[%s224 + $0x58] sm:$0xff]
              %249 = vst [vmem:[%s225 + $0x58] sm:$0xff] %v248
              %v250 = vld [vmem:[%s224 + $0x60] sm:$0xff]
              %251 = vst [vmem:[%s225 + $0x60] sm:$0xff] %v250
              %v252 = vld [vmem:[%s224 + $0x68] sm:$0xff]
              %253 = vst [vmem:[%s225 + $0x68] sm:$0xff] %v252
              %v254 = vld [vmem:[%s224 + $0x70] sm:$0xff]
              %255 = vst [vmem:[%s225 + $0x70] sm:$0xff] %v254
              %v256 = vld [vmem:[%s224 + $0x78] sm:$0xff]
              %257 = vst [vmem:[%s225 + $0x78] sm:$0xff] %v256
              %v258 = vld [vmem:[%s224 + $0x80] sm:$0xff]
              %259 = vst [vmem:[%s225 + $0x80] sm:$0xff] %v258
              %v260 = vld [vmem:[%s224 + $0x88] sm:$0xff]
              %261 = vst [vmem:[%s225 + $0x88] sm:$0xff] %v260
              %v262 = vld [vmem:[%s224 + $0x90] sm:$0xff]
              %263 = vst [vmem:[%s225 + $0x90] sm:$0xff] %v262
              %v264 = vld [vmem:[%s224 + $0x98] sm:$0xff]
              %265 = vst [vmem:[%s225 + $0x98] sm:$0xff] %v264
              %v266 = vld [vmem:[%s224 + $0xa0] sm:$0xff]
              %267 = vst [vmem:[%s225 + $0xa0] sm:$0xff] %v266
              %v268 = vld [vmem:[%s224 + $0xa8] sm:$0xff]
              %269 = vst [vmem:[%s225 + $0xa8] sm:$0xff] %v268
              %v270 = vld [vmem:[%s224 + $0xb0] sm:$0xff]
              %271 = vst [vmem:[%s225 + $0xb0] sm:$0xff] %v270
              %v272 = vld [vmem:[%s224 + $0xb8] sm:$0xff]
              %273 = vst [vmem:[%s225 + $0xb8] sm:$0xff] %v272
              %v274 = vld [vmem:[%s224 + $0xc0] sm:$0xff]
              %275 = vst [vmem:[%s225 + $0xc0] sm:$0xff] %v274
              %v276 = vld [vmem:[%s224 + $0xc8] sm:$0xff]
              %277 = vst [vmem:[%s225 + $0xc8] sm:$0xff] %v276
              %v278 = vld [vmem:[%s224 + $0xd0] sm:$0xff]
              %279 = vst [vmem:[%s225 + $0xd0] sm:$0xff] %v278
            $region60: #{csp_layer_forward.8} parent=54 // loop_footer
              %s223 = sadd.s32 1, %s219
            $region61: #{csp_layer_forward.8} parent=54 // loop_footer_branch
              %218 = sbr.rel target = $region57
            $region62: #{csp_layer_forward.8} parent=54 // loop_exit
              _
          $region55: #{csp_layer_forward.8} parent=39 // pred_fallthru
            _
          %p280 = pneg %p214
          // Predicated region
          $region63: #{csp_layer_forward.8} parent=39 // pred_check
            _
          $region64: #{csp_layer_forward.8} parent=39 // pred_check_branch
            %282 = sbr.rel (%p214) target = $region66
          $region65: #{csp_layer_forward.8} parent=39 // pred_region
            %s283 = sand.u32 216, 7
          $region66: #{csp_layer_forward.8} parent=39 // pred_fallthru
            _
        $region40: #{csp_layer_forward.8} parent=35 // pred_fallthru
          _
        // Predicated region
        $region41: #{csp_layer_forward.8} parent=35 // pred_check
          %p199 = pneg %p195
        $region42: #{csp_layer_forward.8} parent=35 // pred_check_branch
          %201 = sbr.rel (%p199) target = $region44
        $region43: #{csp_layer_forward.8} parent=35 // pred_region
          %s202 = sshllo.u32 0, 216
          loop: start=0, step=1, limit=1
          $region45: #{csp_layer_forward.8} parent=43 // loop_pre_header
            _
          $region46: #{csp_layer_forward.8} parent=43 // loop_header
            %s204 = sphi 0, %s208
            %p205 = scmp.ge.s32.totalorder %s204, 1
            %s209 = sphi %s193, %s193
            %s210 = sphi [#allocation2], [#allocation2]
          $region47: #{csp_layer_forward.8} parent=43 // loop_header_branch
            %207 = sbr.rel (%p205) target = $region51
          $region48: #{csp_layer_forward.8} parent=43 // loop_body
            %v211 = vld [vmem:[%s209] sm:%s202]
            %212 = vst [vmem:[%s210] sm:%s202] %v211
          $region49: #{csp_layer_forward.8} parent=43 // loop_footer
            %s208 = sadd.s32 1, %s204
          $region50: #{csp_layer_forward.8} parent=43 // loop_footer_branch
            %203 = sbr.rel target = $region46
          $region51: #{csp_layer_forward.8} parent=43 // loop_exit
            _
        $region44: #{csp_layer_forward.8} parent=35 // pred_fallthru
          _
        // Predicated region
        $region67: #{csp_layer_forward.8} parent=35 // pred_check
          _
        $region68: #{csp_layer_forward.8} parent=35 // pred_check_branch
          %286 = sbr.rel (0) target = $region70
        $region69: #{csp_layer_forward.8} parent=35 // pred_region
          %287 = vsyncadd [#allocation4], 3456
        $region70: #{csp_layer_forward.8} parent=35 // pred_fallthru
          _
      $region36: #{csp_layer_forward.8} parent=31 // pred_fallthru
        _
      %s288 = sadd.s32 %s20, 1
      %p289 = scmp.lt.s32.totalorder %s288, 1
      // Predicated region
      $region71: #{csp_layer_forward.8} parent=31 // pred_check
        %p290 = pneg %p289
      $region72: #{csp_layer_forward.8} parent=31 // pred_check_branch
        %292 = sbr.rel (%p290) target = $region74
      $region73: #{csp_layer_forward.8} parent=31 // pred_region
        %s293 = ssub.s32 1, %s182
        %s294 = smul.u32 %s19, 18
        %s295 = smul.u32 %s288, 16
        %s296 = sadd.s32 %s294, %s295
        %s297 = smul.u32 %s296, 24
        %s298 = sshra.s32 %s297, 3
        %s299 = sand.u32 %s297, 7
        %s300 = smul.addr %s298, 4
        %s301 = scalar_lea.vmem %s0, %s300
        %s302 = smul.u32 %s293, 55
        %s303 = smul.addr %s302, 4
        %s304 = scalar_lea.vmem [#allocation2], %s303
        %s305 = scalar_lea.sflag [#allocation4], %s293
        %p307 = scmp.lt.u32.totalorder 216, 8
        %p308 = pneg %p307
        // Predicated region
        $region75: #{csp_layer_forward.8} parent=73 // pred_check
          _
        $region76: #{csp_layer_forward.8} parent=73 // pred_check_branch
          %310 = sbr.rel (%p307) target = $region78
        $region77: #{csp_layer_forward.8} parent=73 // pred_region
          %s325 = sand.u32 216, 7
          %p326 = scmp.eq.s32.totalorder %s325, 0
          // Predicated region
          $region90: #{csp_layer_forward.8} parent=77 // pred_check
            %p327 = pneg %p326
          $region91: #{csp_layer_forward.8} parent=77 // pred_check_branch
            %329 = sbr.rel (%p327) target = $region93
          $region92: #{csp_layer_forward.8} parent=77 // pred_region
            loop: start=0, step=1, limit=1
            $region94: #{csp_layer_forward.8} parent=92 // loop_pre_header
              _
            $region95: #{csp_layer_forward.8} parent=92 // loop_header
              %s331 = sphi 0, %s335
              %p332 = scmp.ge.s32.totalorder %s331, 1
              %s336 = sphi %s301, %s301
              %s337 = sphi %s304, %s304
            $region96: #{csp_layer_forward.8} parent=92 // loop_header_branch
              %334 = sbr.rel (%p332) target = $region100
            $region97: #{csp_layer_forward.8} parent=92 // loop_body
              %v338 = vld [vmem:[%s336] sm:$0xff]
              %339 = vst [vmem:[%s337] sm:$0xff] %v338
              %v340 = vld [vmem:[%s336 + $0x8] sm:$0xff]
              %341 = vst [vmem:[%s337 + $0x8] sm:$0xff] %v340
              %v342 = vld [vmem:[%s336 + $0x10] sm:$0xff]
              %343 = vst [vmem:[%s337 + $0x10] sm:$0xff] %v342
              %v344 = vld [vmem:[%s336 + $0x18] sm:$0xff]
              %345 = vst [vmem:[%s337 + $0x18] sm:$0xff] %v344
              %v346 = vld [vmem:[%s336 + $0x20] sm:$0xff]
              %347 = vst [vmem:[%s337 + $0x20] sm:$0xff] %v346
              %v348 = vld [vmem:[%s336 + $0x28] sm:$0xff]
              %349 = vst [vmem:[%s337 + $0x28] sm:$0xff] %v348
              %v350 = vld [vmem:[%s336 + $0x30] sm:$0xff]
              %351 = vst [vmem:[%s337 + $0x30] sm:$0xff] %v350
              %v352 = vld [vmem:[%s336 + $0x38] sm:$0xff]
              %353 = vst [vmem:[%s337 + $0x38] sm:$0xff] %v352
              %v354 = vld [vmem:[%s336 + $0x40] sm:$0xff]
              %355 = vst [vmem:[%s337 + $0x40] sm:$0xff] %v354
              %v356 = vld [vmem:[%s336 + $0x48] sm:$0xff]
              %357 = vst [vmem:[%s337 + $0x48] sm:$0xff] %v356
              %v358 = vld [vmem:[%s336 + $0x50] sm:$0xff]
              %359 = vst [vmem:[%s337 + $0x50] sm:$0xff] %v358
              %v360 = vld [vmem:[%s336 + $0x58] sm:$0xff]
              %361 = vst [vmem:[%s337 + $0x58] sm:$0xff] %v360
              %v362 = vld [vmem:[%s336 + $0x60] sm:$0xff]
              %363 = vst [vmem:[%s337 + $0x60] sm:$0xff] %v362
              %v364 = vld [vmem:[%s336 + $0x68] sm:$0xff]
              %365 = vst [vmem:[%s337 + $0x68] sm:$0xff] %v364
              %v366 = vld [vmem:[%s336 + $0x70] sm:$0xff]
              %367 = vst [vmem:[%s337 + $0x70] sm:$0xff] %v366
              %v368 = vld [vmem:[%s336 + $0x78] sm:$0xff]
              %369 = vst [vmem:[%s337 + $0x78] sm:$0xff] %v368
              %v370 = vld [vmem:[%s336 + $0x80] sm:$0xff]
              %371 = vst [vmem:[%s337 + $0x80] sm:$0xff] %v370
              %v372 = vld [vmem:[%s336 + $0x88] sm:$0xff]
              %373 = vst [vmem:[%s337 + $0x88] sm:$0xff] %v372
              %v374 = vld [vmem:[%s336 + $0x90] sm:$0xff]
              %375 = vst [vmem:[%s337 + $0x90] sm:$0xff] %v374
              %v376 = vld [vmem:[%s336 + $0x98] sm:$0xff]
              %377 = vst [vmem:[%s337 + $0x98] sm:$0xff] %v376
              %v378 = vld [vmem:[%s336 + $0xa0] sm:$0xff]
              %379 = vst [vmem:[%s337 + $0xa0] sm:$0xff] %v378
              %v380 = vld [vmem:[%s336 + $0xa8] sm:$0xff]
              %381 = vst [vmem:[%s337 + $0xa8] sm:$0xff] %v380
              %v382 = vld [vmem:[%s336 + $0xb0] sm:$0xff]
              %383 = vst [vmem:[%s337 + $0xb0] sm:$0xff] %v382
              %v384 = vld [vmem:[%s336 + $0xb8] sm:$0xff]
              %385 = vst [vmem:[%s337 + $0xb8] sm:$0xff] %v384
              %v386 = vld [vmem:[%s336 + $0xc0] sm:$0xff]
              %387 = vst [vmem:[%s337 + $0xc0] sm:$0xff] %v386
              %v388 = vld [vmem:[%s336 + $0xc8] sm:$0xff]
              %389 = vst [vmem:[%s337 + $0xc8] sm:$0xff] %v388
              %v390 = vld [vmem:[%s336 + $0xd0] sm:$0xff]
              %391 = vst [vmem:[%s337 + $0xd0] sm:$0xff] %v390
            $region98: #{csp_layer_forward.8} parent=92 // loop_footer
              %s335 = sadd.s32 1, %s331
            $region99: #{csp_layer_forward.8} parent=92 // loop_footer_branch
              %330 = sbr.rel target = $region95
            $region100: #{csp_layer_forward.8} parent=92 // loop_exit
              _
          $region93: #{csp_layer_forward.8} parent=77 // pred_fallthru
            _
          %p392 = pneg %p326
          // Predicated region
          $region101: #{csp_layer_forward.8} parent=77 // pred_check
            _
          $region102: #{csp_layer_forward.8} parent=77 // pred_check_branch
            %394 = sbr.rel (%p326) target = $region104
          $region103: #{csp_layer_forward.8} parent=77 // pred_region
            %s395 = sand.u32 216, 7
          $region104: #{csp_layer_forward.8} parent=77 // pred_fallthru
            _
        $region78: #{csp_layer_forward.8} parent=73 // pred_fallthru
          _
        // Predicated region
        $region79: #{csp_layer_forward.8} parent=73 // pred_check
          %p311 = pneg %p307
        $region80: #{csp_layer_forward.8} parent=73 // pred_check_branch
          %313 = sbr.rel (%p311) target = $region82
        $region81: #{csp_layer_forward.8} parent=73 // pred_region
          %s314 = sshllo.u32 0, 216
          loop: start=0, step=1, limit=1
          $region83: #{csp_layer_forward.8} parent=81 // loop_pre_header
            _
          $region84: #{csp_layer_forward.8} parent=81 // loop_header
            %s316 = sphi 0, %s320
            %p317 = scmp.ge.s32.totalorder %s316, 1
            %s321 = sphi %s301, %s301
            %s322 = sphi %s304, %s304
          $region85: #{csp_layer_forward.8} parent=81 // loop_header_branch
            %319 = sbr.rel (%p317) target = $region89
          $region86: #{csp_layer_forward.8} parent=81 // loop_body
            %v323 = vld [vmem:[%s321] sm:%s314]
            %324 = vst [vmem:[%s322] sm:%s314] %v323
          $region87: #{csp_layer_forward.8} parent=81 // loop_footer
            %s320 = sadd.s32 1, %s316
          $region88: #{csp_layer_forward.8} parent=81 // loop_footer_branch
            %315 = sbr.rel target = $region84
          $region89: #{csp_layer_forward.8} parent=81 // loop_exit
            _
        $region82: #{csp_layer_forward.8} parent=73 // pred_fallthru
          _
        // Predicated region
        $region105: #{csp_layer_forward.8} parent=73 // pred_check
          _
        $region106: #{csp_layer_forward.8} parent=73 // pred_check_branch
          %398 = sbr.rel (0) target = $region108
        $region107: #{csp_layer_forward.8} parent=73 // pred_region
          %399 = vsyncadd %s305, 3456
        $region108: #{csp_layer_forward.8} parent=73 // pred_fallthru
          _
      $region74: #{csp_layer_forward.8} parent=31 // pred_fallthru
        _
      %s400 = smul.u32 %s182, 55
      %s401 = smul.addr %s400, 4
      %s402 = scalar_lea.vmem [#allocation2], %s401
      %s403 = scalar_lea.sflag [#allocation4], %s182
      %s404 = smul.u32 4, 54
      %s405 = smul.u32 %s404, 1
      %s406 = sshll.u32 %s405, 4
      %407 = dma.done %s403, %s406
      %v408 = vld [vmem:[%s402] sm:$0xf]
      %v409 = vld [vmem:[%s402 + $0x4] sm:$0xf]
      %v410 = vld [vmem:[%s402 + $0x8] sm:$0xf]
      %v411 = vld [vmem:[%s402 + $0xc] sm:$0xf]
      %v412 = vld [vmem:[%s402 + $0x10] sm:$0xf]
      %v413 = vld [vmem:[%s402 + $0x14] sm:$0xf]
      %v414 = vld [vmem:[%s402 + $0x18] sm:$0xf]
      %v415 = vld [vmem:[%s402 + $0x1c] sm:$0xf]
      %v416 = vld [vmem:[%s402 + $0x20] sm:$0xf]
      %v417 = vld [vmem:[%s402 + $0x24] sm:$0xf]
      %v418 = vld [vmem:[%s402 + $0x28] sm:$0xf]
      %v419 = vld [vmem:[%s402 + $0x2c] sm:$0xf]
      %v420 = vld [vmem:[%s402 + $0x30] sm:$0xf]
      %v421 = vld [vmem:[%s402 + $0x34] sm:$0xf]
      %v422 = vld [vmem:[%s402 + $0x38] sm:$0xf]
      %v423 = vld [vmem:[%s402 + $0x3c] sm:$0xf]
      %v424 = vld [vmem:[%s402 + $0x40] sm:$0xf]
      %v425 = vld [vmem:[%s402 + $0x44] sm:$0xf]
      %v426 = vld [vmem:[%s402 + $0x48] sm:$0xf]
      %v427 = vld [vmem:[%s402 + $0x4c] sm:$0xf]
      %v428 = vld [vmem:[%s402 + $0x50] sm:$0xf]
      %v429 = vld [vmem:[%s402 + $0x54] sm:$0xf]
      %v430 = vld [vmem:[%s402 + $0x58] sm:$0xf]
      %v431 = vld [vmem:[%s402 + $0x5c] sm:$0xf]
      %v432 = vld [vmem:[%s402 + $0x60] sm:$0xf]
      %v433 = vld [vmem:[%s402 + $0x64] sm:$0xf]
      %v434 = vld [vmem:[%s402 + $0x68] sm:$0xf]
      %v435 = vld [vmem:[%s402 + $0x6c] sm:$0xf]
      %v436 = vld [vmem:[%s402 + $0x70] sm:$0xf]
      %v437 = vld [vmem:[%s402 + $0x74] sm:$0xf]
      %v438 = vld [vmem:[%s402 + $0x78] sm:$0xf]
      %v439 = vld [vmem:[%s402 + $0x7c] sm:$0xf]
      %v440 = vld [vmem:[%s402 + $0x80] sm:$0xf]
      %v441 = vld [vmem:[%s402 + $0x84] sm:$0xf]
      %v442 = vld [vmem:[%s402 + $0x88] sm:$0xf]
      %v443 = vld [vmem:[%s402 + $0x8c] sm:$0xf]
      %v444 = vld [vmem:[%s402 + $0x90] sm:$0xf]
      %v445 = vld [vmem:[%s402 + $0x94] sm:$0xf]
      %v446 = vld [vmem:[%s402 + $0x98] sm:$0xf]
      %v447 = vld [vmem:[%s402 + $0x9c] sm:$0xf]
      %v448 = vld [vmem:[%s402 + $0xa0] sm:$0xf]
      %v449 = vld [vmem:[%s402 + $0xa4] sm:$0xf]
      %v450 = vld [vmem:[%s402 + $0xa8] sm:$0xf]
      %v451 = vld [vmem:[%s402 + $0xac] sm:$0xf]
      %v452 = vld [vmem:[%s402 + $0xb0] sm:$0xf]
      %v453 = vld [vmem:[%s402 + $0xb4] sm:$0xf]
      %v454 = vld [vmem:[%s402 + $0xb8] sm:$0xf]
      %v455 = vld [vmem:[%s402 + $0xbc] sm:$0xf]
      %v504 = vunpack.c.l.b16 %v408
      %v505 = vunpack.c.l.b16 %v409
      %v506 = vunpack.c.l.b16 %v410
      %v507 = vunpack.c.l.b16 %v411
      %v508 = vunpack.c.l.b16 %v412
      %v509 = vunpack.c.l.b16 %v413
      %v510 = vunpack.c.l.b16 %v414
      %v511 = vunpack.c.l.b16 %v415
      %v512 = vunpack.c.l.b16 %v416
      %v513 = vunpack.c.l.b16 %v417
      %v514 = vunpack.c.l.b16 %v418
      %v515 = vunpack.c.l.b16 %v419
      %v516 = vunpack.c.l.b16 %v420
      %v517 = vunpack.c.l.b16 %v421
      %v518 = vunpack.c.l.b16 %v422
      %v519 = vunpack.c.l.b16 %v423
      %v520 = vunpack.c.l.b16 %v424
      %v521 = vunpack.c.l.b16 %v425
      %v522 = vunpack.c.l.b16 %v426
      %v523 = vunpack.c.l.b16 %v427
      %v524 = vunpack.c.l.b16 %v428
      %v525 = vunpack.c.l.b16 %v429
      %v526 = vunpack.c.l.b16 %v430
      %v527 = vunpack.c.l.b16 %v431
      %v528 = vunpack.c.l.b16 %v432
      %v529 = vunpack.c.l.b16 %v433
      %v530 = vunpack.c.l.b16 %v434
      %v531 = vunpack.c.l.b16 %v435
      %v532 = vunpack.c.l.b16 %v436
      %v533 = vunpack.c.l.b16 %v437
      %v534 = vunpack.c.l.b16 %v438
      %v535 = vunpack.c.l.b16 %v439
      %v536 = vunpack.c.l.b16 %v440
      %v537 = vunpack.c.l.b16 %v441
      %v538 = vunpack.c.l.b16 %v442
      %v539 = vunpack.c.l.b16 %v443
      %v540 = vunpack.c.l.b16 %v444
      %v541 = vunpack.c.l.b16 %v445
      %v542 = vunpack.c.l.b16 %v446
      %v543 = vunpack.c.l.b16 %v447
      %v544 = vunpack.c.l.b16 %v448
      %v545 = vunpack.c.l.b16 %v449
      %v546 = vunpack.c.l.b16 %v450
      %v547 = vunpack.c.l.b16 %v451
      %v548 = vunpack.c.l.b16 %v452
      %v549 = vunpack.c.l.b16 %v453
      %v550 = vunpack.c.l.b16 %v454
      %v551 = vunpack.c.l.b16 %v455
      %v552 = vpack.c.b16 %v505, %v504
      %v553 = vpack.c.b16 %v507, %v506
      %v554 = vpack.c.b16 %v509, %v508
      %v555 = vpack.c.b16 %v511, %v510
      %v556 = vpack.c.b16 %v513, %v512
      %v557 = vpack.c.b16 %v515, %v514
      %v558 = vpack.c.b16 %v517, %v516
      %v559 = vpack.c.b16 %v519, %v518
      %v560 = vpack.c.b16 %v521, %v520
      %v561 = vpack.c.b16 %v523, %v522
      %v562 = vpack.c.b16 %v525, %v524
      %v563 = vpack.c.b16 %v527, %v526
      %v564 = vpack.c.b16 %v529, %v528
      %v565 = vpack.c.b16 %v531, %v530
      %v566 = vpack.c.b16 %v533, %v532
      %v567 = vpack.c.b16 %v535, %v534
      %v568 = vpack.c.b16 %v537, %v536
      %v569 = vpack.c.b16 %v539, %v538
      %v570 = vpack.c.b16 %v541, %v540
      %v571 = vpack.c.b16 %v543, %v542
      %v572 = vpack.c.b16 %v545, %v544
      %v573 = vpack.c.b16 %v547, %v546
      %v574 = vpack.c.b16 %v549, %v548
      %v575 = vpack.c.b16 %v551, %v550
      %600 = vst [vmem:[#allocation3] sm:$0xff] %v552
      %601 = vst [vmem:[#allocation3 + $0x48] sm:$0xff] %v553
      %602 = vst [vmem:[#allocation3 + $0x90] sm:$0xff] %v554
      %603 = vst [vmem:[#allocation3 + $0xd8] sm:$0xff] %v555
      %604 = vst [vmem:[#allocation3 + $0x120] sm:$0xff] %v556
      %605 = vst [vmem:[#allocation3 + $0x168] sm:$0xff] %v557
      %606 = vst [vmem:[#allocation3 + $0x1b0] sm:$0xff] %v558
      %607 = vst [vmem:[#allocation3 + $0x1f8] sm:$0xff] %v559
      %608 = vst [vmem:[#allocation3 + $0x240] sm:$0xff] %v560
      %609 = vst [vmem:[#allocation3 + $0x288] sm:$0xff] %v561
      %610 = vst [vmem:[#allocation3 + $0x2d0] sm:$0xff] %v562
      %611 = vst [vmem:[#allocation3 + $0x318] sm:$0xff] %v563
      %612 = vst [vmem:[#allocation3 + $0x360] sm:$0xff] %v564
      %613 = vst [vmem:[#allocation3 + $0x3a8] sm:$0xff] %v565
      %614 = vst [vmem:[#allocation3 + $0x3f0] sm:$0xff] %v566
      %615 = vst [vmem:[#allocation3 + $0x438] sm:$0xff] %v567
      %616 = vst [vmem:[#allocation3 + $0x480] sm:$0xff] %v568
      %617 = vst [vmem:[#allocation3 + $0x4c8] sm:$0xff] %v569
      %618 = vst [vmem:[#allocation3 + $0x510] sm:$0xff] %v570
      %619 = vst [vmem:[#allocation3 + $0x558] sm:$0xff] %v571
      %620 = vst [vmem:[#allocation3 + $0x5a0] sm:$0xff] %v572
      %621 = vst [vmem:[#allocation3 + $0x5e8] sm:$0xff] %v573
      %622 = vst [vmem:[#allocation3 + $0x630] sm:$0xff] %v574
      %623 = vst [vmem:[#allocation3 + $0x678] sm:$0xff] %v575
      %v624 = vld [vmem:[%s402] sm:$0xf]
      %v625 = vld [vmem:[%s402 + $0x4] sm:$0xf]
      %v626 = vld [vmem:[%s402 + $0x8] sm:$0xf]
      %v627 = vld [vmem:[%s402 + $0xc] sm:$0xf]
      %v628 = vld [vmem:[%s402 + $0x10] sm:$0xf]
      %v629 = vld [vmem:[%s402 + $0x14] sm:$0xf]
      %v630 = vld [vmem:[%s402 + $0x18] sm:$0xf]
      %v631 = vld [vmem:[%s402 + $0x1c] sm:$0xf]
      %v632 = vld [vmem:[%s402 + $0x20] sm:$0xf]
      %v633 = vld [vmem:[%s402 + $0x24] sm:$0xf]
      %v634 = vld [vmem:[%s402 + $0x28] sm:$0xf]
      %v635 = vld [vmem:[%s402 + $0x2c] sm:$0xf]
      %v636 = vld [vmem:[%s402 + $0x30] sm:$0xf]
      %v637 = vld [vmem:[%s402 + $0x34] sm:$0xf]
      %v638 = vld [vmem:[%s402 + $0x38] sm:$0xf]
      %v639 = vld [vmem:[%s402 + $0x3c] sm:$0xf]
      %v640 = vld [vmem:[%s402 + $0x40] sm:$0xf]
      %v641 = vld [vmem:[%s402 + $0x44] sm:$0xf]
      %v642 = vld [vmem:[%s402 + $0x48] sm:$0xf]
      %v643 = vld [vmem:[%s402 + $0x4c] sm:$0xf]
      %v644 = vld [vmem:[%s402 + $0x50] sm:$0xf]
      %v645 = vld [vmem:[%s402 + $0x54] sm:$0xf]
      %v646 = vld [vmem:[%s402 + $0x58] sm:$0xf]
      %v647 = vld [vmem:[%s402 + $0x5c] sm:$0xf]
      %v648 = vld [vmem:[%s402 + $0x60] sm:$0xf]
      %v649 = vld [vmem:[%s402 + $0x64] sm:$0xf]
      %v650 = vld [vmem:[%s402 + $0x68] sm:$0xf]
      %v651 = vld [vmem:[%s402 + $0x6c] sm:$0xf]
      %v652 = vld [vmem:[%s402 + $0x70] sm:$0xf]
      %v653 = vld [vmem:[%s402 + $0x74] sm:$0xf]
      %v654 = vld [vmem:[%s402 + $0x78] sm:$0xf]
      %v655 = vld [vmem:[%s402 + $0x7c] sm:$0xf]
      %v656 = vld [vmem:[%s402 + $0x80] sm:$0xf]
      %v657 = vld [vmem:[%s402 + $0x84] sm:$0xf]
      %v658 = vld [vmem:[%s402 + $0x88] sm:$0xf]
      %v659 = vld [vmem:[%s402 + $0x8c] sm:$0xf]
      %v660 = vld [vmem:[%s402 + $0x90] sm:$0xf]
      %v661 = vld [vmem:[%s402 + $0x94] sm:$0xf]
      %v662 = vld [vmem:[%s402 + $0x98] sm:$0xf]
      %v663 = vld [vmem:[%s402 + $0x9c] sm:$0xf]
      %v664 = vld [vmem:[%s402 + $0xa0] sm:$0xf]
      %v665 = vld [vmem:[%s402 + $0xa4] sm:$0xf]
      %v666 = vld [vmem:[%s402 + $0xa8] sm:$0xf]
      %v667 = vld [vmem:[%s402 + $0xac] sm:$0xf]
      %v668 = vld [vmem:[%s402 + $0xb0] sm:$0xf]
      %v669 = vld [vmem:[%s402 + $0xb4] sm:$0xf]
      %v670 = vld [vmem:[%s402 + $0xb8] sm:$0xf]
      %v671 = vld [vmem:[%s402 + $0xbc] sm:$0xf]
      %v672 = vld [vmem:[%s402 + $0xc0] sm:$0x1]
      %v722 = vunpack.c.l.b16 %v624
      %v723 = vunpack.c.l.b16 %v625
      %v724 = vunpack.c.l.b16 %v626
      %v725 = vunpack.c.l.b16 %v627
      %v726 = vunpack.c.l.b16 %v628
      %v727 = vunpack.c.l.b16 %v629
      %v728 = vunpack.c.l.b16 %v630
      %v729 = vunpack.c.l.b16 %v631
      %v730 = vunpack.c.l.b16 %v632
      %v731 = vunpack.c.l.b16 %v633
      %v732 = vunpack.c.l.b16 %v634
      %v733 = vunpack.c.l.b16 %v635
      %v734 = vunpack.c.l.b16 %v636
      %v735 = vunpack.c.l.b16 %v637
      %v736 = vunpack.c.l.b16 %v638
      %v737 = vunpack.c.l.b16 %v639
      %v738 = vunpack.c.l.b16 %v640
      %v739 = vunpack.c.l.b16 %v641
      %v740 = vunpack.c.l.b16 %v642
      %v741 = vunpack.c.l.b16 %v643
      %v742 = vunpack.c.l.b16 %v644
      %v743 = vunpack.c.l.b16 %v645
      %v744 = vunpack.c.l.b16 %v646
      %v745 = vunpack.c.l.b16 %v647
      %v746 = vunpack.c.l.b16 %v648
      %v747 = vunpack.c.l.b16 %v649
      %v748 = vunpack.c.l.b16 %v650
      %v749 = vunpack.c.l.b16 %v651
      %v750 = vunpack.c.l.b16 %v652
      %v751 = vunpack.c.l.b16 %v653
      %v752 = vunpack.c.l.b16 %v654
      %v753 = vunpack.c.l.b16 %v655
      %v754 = vunpack.c.l.b16 %v656
      %v755 = vunpack.c.l.b16 %v657
      %v756 = vunpack.c.l.b16 %v658
      %v757 = vunpack.c.l.b16 %v659
      %v758 = vunpack.c.l.b16 %v660
      %v759 = vunpack.c.l.b16 %v661
      %v760 = vunpack.c.l.b16 %v662
      %v761 = vunpack.c.l.b16 %v663
      %v762 = vunpack.c.l.b16 %v664
      %v763 = vunpack.c.l.b16 %v665
      %v764 = vunpack.c.l.b16 %v666
      %v765 = vunpack.c.l.b16 %v667
      %v766 = vunpack.c.l.b16 %v668
      %v767 = vunpack.c.l.b16 %v669
      %v768 = vunpack.c.l.b16 %v670
      %v769 = vunpack.c.l.b16 %v671
      %v770 = vunpack.c.l.b16 %v672
      %v771 = vpack.c.b16 %v723, %v722
      %v772 = vpack.c.b16 %v725, %v724
      %v773 = vpack.c.b16 %v727, %v726
      %v774 = vpack.c.b16 %v729, %v728
      %v775 = vpack.c.b16 %v731, %v730
      %v776 = vpack.c.b16 %v733, %v732
      %v777 = vpack.c.b16 %v735, %v734
      %v778 = vpack.c.b16 %v737, %v736
      %v779 = vpack.c.b16 %v739, %v738
      %v780 = vpack.c.b16 %v741, %v740
      %v781 = vpack.c.b16 %v743, %v742
      %v782 = vpack.c.b16 %v745, %v744
      %v783 = vpack.c.b16 %v747, %v746
      %v784 = vpack.c.b16 %v749, %v748
      %v785 = vpack.c.b16 %v751, %v750
      %v786 = vpack.c.b16 %v753, %v752
      %v787 = vpack.c.b16 %v755, %v754
      %v788 = vpack.c.b16 %v757, %v756
      %v789 = vpack.c.b16 %v759, %v758
      %v790 = vpack.c.b16 %v761, %v760
      %v791 = vpack.c.b16 %v763, %v762
      %v792 = vpack.c.b16 %v765, %v764
      %v793 = vpack.c.b16 %v767, %v766
      %v794 = vpack.c.b16 %v769, %v768
      %v795 = vpack.c.b16 %v770, %v770
      %vm796 = vsmask.f32 7424
      %v798 = vshrl.u32 %v771, 16
      %v800 = vshll.u32 %v771, 16
      %v802 = vrot.slane %v800, 1
      %v803 = vor.u32 %v798, %v802
      %v805 = vshll.u32 %v772, 16
      %v807 = vrot.slane %v805, 1
      %v808 = vsel %vm796, %v803, %v807
      %v809 = vshrl.u32 %v772, 16
      %v811 = vor.u32 %v809, %v807
      %v813 = vshll.u32 %v773, 16
      %v815 = vrot.slane %v813, 1
      %v816 = vsel %vm796, %v811, %v815
      %v817 = vshrl.u32 %v773, 16
      %v819 = vor.u32 %v817, %v815
      %v821 = vshll.u32 %v774, 16
      %v823 = vrot.slane %v821, 1
      %v824 = vsel %vm796, %v819, %v823
      %v825 = vshrl.u32 %v774, 16
      %v827 = vor.u32 %v825, %v823
      %v829 = vshll.u32 %v775, 16
      %v831 = vrot.slane %v829, 1
      %v832 = vsel %vm796, %v827, %v831
      %v833 = vshrl.u32 %v775, 16
      %v835 = vor.u32 %v833, %v831
      %v837 = vshll.u32 %v776, 16
      %v839 = vrot.slane %v837, 1
      %v840 = vsel %vm796, %v835, %v839
      %v841 = vshrl.u32 %v776, 16
      %v843 = vor.u32 %v841, %v839
      %v845 = vshll.u32 %v777, 16
      %v847 = vrot.slane %v845, 1
      %v848 = vsel %vm796, %v843, %v847
      %v849 = vshrl.u32 %v777, 16
      %v851 = vor.u32 %v849, %v847
      %v853 = vshll.u32 %v778, 16
      %v855 = vrot.slane %v853, 1
      %v856 = vsel %vm796, %v851, %v855
      %v857 = vshrl.u32 %v778, 16
      %v859 = vor.u32 %v857, %v855
      %v861 = vshll.u32 %v779, 16
      %v863 = vrot.slane %v861, 1
      %v864 = vsel %vm796, %v859, %v863
      %v865 = vshrl.u32 %v779, 16
      %v867 = vor.u32 %v865, %v863
      %v869 = vshll.u32 %v780, 16
      %v871 = vrot.slane %v869, 1
      %v872 = vsel %vm796, %v867, %v871
      %v873 = vshrl.u32 %v780, 16
      %v875 = vor.u32 %v873, %v871
      %v877 = vshll.u32 %v781, 16
      %v879 = vrot.slane %v877, 1
      %v880 = vsel %vm796, %v875, %v879
      %v881 = vshrl.u32 %v781, 16
      %v883 = vor.u32 %v881, %v879
      %v885 = vshll.u32 %v782, 16
      %v887 = vrot.slane %v885, 1
      %v888 = vsel %vm796, %v883, %v887
      %v889 = vshrl.u32 %v782, 16
      %v891 = vor.u32 %v889, %v887
      %v893 = vshll.u32 %v783, 16
      %v895 = vrot.slane %v893, 1
      %v896 = vsel %vm796, %v891, %v895
      %v897 = vshrl.u32 %v783, 16
      %v899 = vor.u32 %v897, %v895
      %v901 = vshll.u32 %v784, 16
      %v903 = vrot.slane %v901, 1
      %v904 = vsel %vm796, %v899, %v903
      %v905 = vshrl.u32 %v784, 16
      %v907 = vor.u32 %v905, %v903
      %v909 = vshll.u32 %v785, 16
      %v911 = vrot.slane %v909, 1
      %v912 = vsel %vm796, %v907, %v911
      %v913 = vshrl.u32 %v785, 16
      %v915 = vor.u32 %v913, %v911
      %v917 = vshll.u32 %v786, 16
      %v919 = vrot.slane %v917, 1
      %v920 = vsel %vm796, %v915, %v919
      %v921 = vshrl.u32 %v786, 16
      %v923 = vor.u32 %v921, %v919
      %v925 = vshll.u32 %v787, 16
      %v927 = vrot.slane %v925, 1
      %v928 = vsel %vm796, %v923, %v927
      %v929 = vshrl.u32 %v787, 16
      %v931 = vor.u32 %v929, %v927
      %v933 = vshll.u32 %v788, 16
      %v935 = vrot.slane %v933, 1
      %v936 = vsel %vm796, %v931, %v935
      %v937 = vshrl.u32 %v788, 16
      %v939 = vor.u32 %v937, %v935
      %v941 = vshll.u32 %v789, 16
      %v943 = vrot.slane %v941, 1
      %v944 = vsel %vm796, %v939, %v943
      %v945 = vshrl.u32 %v789, 16
      %v947 = vor.u32 %v945, %v943
      %v949 = vshll.u32 %v790, 16
      %v951 = vrot.slane %v949, 1
      %v952 = vsel %vm796, %v947, %v951
      %v953 = vshrl.u32 %v790, 16
      %v955 = vor.u32 %v953, %v951
      %v957 = vshll.u32 %v791, 16
      %v959 = vrot.slane %v957, 1
      %v960 = vsel %vm796, %v955, %v959
      %v961 = vshrl.u32 %v791, 16
      %v963 = vor.u32 %v961, %v959
      %v965 = vshll.u32 %v792, 16
      %v967 = vrot.slane %v965, 1
      %v968 = vsel %vm796, %v963, %v967
      %v969 = vshrl.u32 %v792, 16
      %v971 = vor.u32 %v969, %v967
      %v973 = vshll.u32 %v793, 16
      %v975 = vrot.slane %v973, 1
      %v976 = vsel %vm796, %v971, %v975
      %v977 = vshrl.u32 %v793, 16
      %v979 = vor.u32 %v977, %v975
      %v981 = vshll.u32 %v794, 16
      %v983 = vrot.slane %v981, 1
      %v984 = vsel %vm796, %v979, %v983
      %v985 = vshrl.u32 %v794, 16
      %v987 = vor.u32 %v985, %v983
      %v989 = vshll.u32 %v795, 16
      %v991 = vrot.slane %v989, 1
      %v992 = vsel %vm796, %v987, %v991
      %1017 = vst [vmem:[#allocation3 + $0x8] sm:$0xff] %v808
      %1018 = vst [vmem:[#allocation3 + $0x50] sm:$0xff] %v816
      %1019 = vst [vmem:[#allocation3 + $0x98] sm:$0xff] %v824
      %1020 = vst [vmem:[#allocation3 + $0xe0] sm:$0xff] %v832
      %1021 = vst [vmem:[#allocation3 + $0x128] sm:$0xff] %v840
      %1022 = vst [vmem:[#allocation3 + $0x170] sm:$0xff] %v848
      %1023 = vst [vmem:[#allocation3 + $0x1b8] sm:$0xff] %v856
      %1024 = vst [vmem:[#allocation3 + $0x200] sm:$0xff] %v864
      %1025 = vst [vmem:[#allocation3 + $0x248] sm:$0xff] %v872
      %1026 = vst [vmem:[#allocation3 + $0x290] sm:$0xff] %v880
      %1027 = vst [vmem:[#allocation3 + $0x2d8] sm:$0xff] %v888
      %1028 = vst [vmem:[#allocation3 + $0x320] sm:$0xff] %v896
      %1029 = vst [vmem:[#allocation3 + $0x368] sm:$0xff] %v904
      %1030 = vst [vmem:[#allocation3 + $0x3b0] sm:$0xff] %v912
      %1031 = vst [vmem:[#allocation3 + $0x3f8] sm:$0xff] %v920
      %1032 = vst [vmem:[#allocation3 + $0x440] sm:$0xff] %v928
      %1033 = vst [vmem:[#allocation3 + $0x488] sm:$0xff] %v936
      %1034 = vst [vmem:[#allocation3 + $0x4d0] sm:$0xff] %v944
      %1035 = vst [vmem:[#allocation3 + $0x518] sm:$0xff] %v952
      %1036 = vst [vmem:[#allocation3 + $0x560] sm:$0xff] %v960
      %1037 = vst [vmem:[#allocation3 + $0x5a8] sm:$0xff] %v968
      %1038 = vst [vmem:[#allocation3 + $0x5f0] sm:$0xff] %v976
      %1039 = vst [vmem:[#allocation3 + $0x638] sm:$0xff] %v984
      %1040 = vst [vmem:[#allocation3 + $0x680] sm:$0xff] %v992
      %v1041 = vld [vmem:[%s402] sm:$0xe]
      %v1042 = vld [vmem:[%s402 + $0x4] sm:$0xf]
      %v1043 = vld [vmem:[%s402 + $0x8] sm:$0xf]
      %v1044 = vld [vmem:[%s402 + $0xc] sm:$0xf]
      %v1045 = vld [vmem:[%s402 + $0x10] sm:$0xf]
      %v1046 = vld [vmem:[%s402 + $0x14] sm:$0xf]
      %v1047 = vld [vmem:[%s402 + $0x18] sm:$0xf]
      %v1048 = vld [vmem:[%s402 + $0x1c] sm:$0xf]
      %v1049 = vld [vmem:[%s402 + $0x20] sm:$0xf]
      %v1050 = vld [vmem:[%s402 + $0x24] sm:$0xf]
      %v1051 = vld [vmem:[%s402 + $0x28] sm:$0xf]
      %v1052 = vld [vmem:[%s402 + $0x2c] sm:$0xf]
      %v1053 = vld [vmem:[%s402 + $0x30] sm:$0xf]
      %v1054 = vld [vmem:[%s402 + $0x34] sm:$0xf]
      %v1055 = vld [vmem:[%s402 + $0x38] sm:$0xf]
      %v1056 = vld [vmem:[%s402 + $0x3c] sm:$0xf]
      %v1057 = vld [vmem:[%s402 + $0x40] sm:$0xf]
      %v1058 = vld [vmem:[%s402 + $0x44] sm:$0xf]
      %v1059 = vld [vmem:[%s402 + $0x48] sm:$0xf]
      %v1060 = vld [vmem:[%s402 + $0x4c] sm:$0xf]
      %v1061 = vld [vmem:[%s402 + $0x50] sm:$0xf]
      %v1062 = vld [vmem:[%s402 + $0x54] sm:$0xf]
      %v1063 = vld [vmem:[%s402 + $0x58] sm:$0xf]
      %v1064 = vld [vmem:[%s402 + $0x5c] sm:$0xf]
      %v1065 = vld [vmem:[%s402 + $0x60] sm:$0xf]
      %v1066 = vld [vmem:[%s402 + $0x64] sm:$0xf]
      %v1067 = vld [vmem:[%s402 + $0x68] sm:$0xf]
      %v1068 = vld [vmem:[%s402 + $0x6c] sm:$0xf]
      %v1069 = vld [vmem:[%s402 + $0x70] sm:$0xf]
      %v1070 = vld [vmem:[%s402 + $0x74] sm:$0xf]
      %v1071 = vld [vmem:[%s402 + $0x78] sm:$0xf]
      %v1072 = vld [vmem:[%s402 + $0x7c] sm:$0xf]
      %v1073 = vld [vmem:[%s402 + $0x80] sm:$0xf]
      %v1074 = vld [vmem:[%s402 + $0x84] sm:$0xf]
      %v1075 = vld [vmem:[%s402 + $0x88] sm:$0xf]
      %v1076 = vld [vmem:[%s402 + $0x8c] sm:$0xf]
      %v1077 = vld [vmem:[%s402 + $0x90] sm:$0xf]
      %v1078 = vld [vmem:[%s402 + $0x94] sm:$0xf]
      %v1079 = vld [vmem:[%s402 + $0x98] sm:$0xf]
      %v1080 = vld [vmem:[%s402 + $0x9c] sm:$0xf]
      %v1081 = vld [vmem:[%s402 + $0xa0] sm:$0xf]
      %v1082 = vld [vmem:[%s402 + $0xa4] sm:$0xf]
      %v1083 = vld [vmem:[%s402 + $0xa8] sm:$0xf]
      %v1084 = vld [vmem:[%s402 + $0xac] sm:$0xf]
      %v1085 = vld [vmem:[%s402 + $0xb0] sm:$0xf]
      %v1086 = vld [vmem:[%s402 + $0xb4] sm:$0xf]
      %v1087 = vld [vmem:[%s402 + $0xb8] sm:$0xf]
      %v1088 = vld [vmem:[%s402 + $0xbc] sm:$0xf]
      %v1089 = vld [vmem:[%s402 + $0xc0] sm:$0x1]
      %v1139 = vunpack.c.l.b16 %v1041
      %v1140 = vunpack.c.l.b16 %v1042
      %v1141 = vunpack.c.l.b16 %v1043
      %v1142 = vunpack.c.l.b16 %v1044
      %v1143 = vunpack.c.l.b16 %v1045
      %v1144 = vunpack.c.l.b16 %v1046
      %v1145 = vunpack.c.l.b16 %v1047
      %v1146 = vunpack.c.l.b16 %v1048
      %v1147 = vunpack.c.l.b16 %v1049
      %v1148 = vunpack.c.l.b16 %v1050
      %v1149 = vunpack.c.l.b16 %v1051
      %v1150 = vunpack.c.l.b16 %v1052
      %v1151 = vunpack.c.l.b16 %v1053
      %v1152 = vunpack.c.l.b16 %v1054
      %v1153 = vunpack.c.l.b16 %v1055
      %v1154 = vunpack.c.l.b16 %v1056
      %v1155 = vunpack.c.l.b16 %v1057
      %v1156 = vunpack.c.l.b16 %v1058
      %v1157 = vunpack.c.l.b16 %v1059
      %v1158 = vunpack.c.l.b16 %v1060
      %v1159 = vunpack.c.l.b16 %v1061
      %v1160 = vunpack.c.l.b16 %v1062
      %v1161 = vunpack.c.l.b16 %v1063
      %v1162 = vunpack.c.l.b16 %v1064
      %v1163 = vunpack.c.l.b16 %v1065
      %v1164 = vunpack.c.l.b16 %v1066
      %v1165 = vunpack.c.l.b16 %v1067
      %v1166 = vunpack.c.l.b16 %v1068
      %v1167 = vunpack.c.l.b16 %v1069
      %v1168 = vunpack.c.l.b16 %v1070
      %v1169 = vunpack.c.l.b16 %v1071
      %v1170 = vunpack.c.l.b16 %v1072
      %v1171 = vunpack.c.l.b16 %v1073
      %v1172 = vunpack.c.l.b16 %v1074
      %v1173 = vunpack.c.l.b16 %v1075
      %v1174 = vunpack.c.l.b16 %v1076
      %v1175 = vunpack.c.l.b16 %v1077
      %v1176 = vunpack.c.l.b16 %v1078
      %v1177 = vunpack.c.l.b16 %v1079
      %v1178 = vunpack.c.l.b16 %v1080
      %v1179 = vunpack.c.l.b16 %v1081
      %v1180 = vunpack.c.l.b16 %v1082
      %v1181 = vunpack.c.l.b16 %v1083
      %v1182 = vunpack.c.l.b16 %v1084
      %v1183 = vunpack.c.l.b16 %v1085
      %v1184 = vunpack.c.l.b16 %v1086
      %v1185 = vunpack.c.l.b16 %v1087
      %v1186 = vunpack.c.l.b16 %v1088
      %v1187 = vunpack.c.l.b16 %v1089
      %v1188 = vpack.c.b16 %v1140, %v1139
      %v1189 = vpack.c.b16 %v1142, %v1141
      %v1190 = vpack.c.b16 %v1144, %v1143
      %v1191 = vpack.c.b16 %v1146, %v1145
      %v1192 = vpack.c.b16 %v1148, %v1147
      %v1193 = vpack.c.b16 %v1150, %v1149
      %v1194 = vpack.c.b16 %v1152, %v1151
      %v1195 = vpack.c.b16 %v1154, %v1153
      %v1196 = vpack.c.b16 %v1156, %v1155
      %v1197 = vpack.c.b16 %v1158, %v1157
      %v1198 = vpack.c.b16 %v1160, %v1159
      %v1199 = vpack.c.b16 %v1162, %v1161
      %v1200 = vpack.c.b16 %v1164, %v1163
      %v1201 = vpack.c.b16 %v1166, %v1165
      %v1202 = vpack.c.b16 %v1168, %v1167
      %v1203 = vpack.c.b16 %v1170, %v1169
      %v1204 = vpack.c.b16 %v1172, %v1171
      %v1205 = vpack.c.b16 %v1174, %v1173
      %v1206 = vpack.c.b16 %v1176, %v1175
      %v1207 = vpack.c.b16 %v1178, %v1177
      %v1208 = vpack.c.b16 %v1180, %v1179
      %v1209 = vpack.c.b16 %v1182, %v1181
      %v1210 = vpack.c.b16 %v1184, %v1183
      %v1211 = vpack.c.b16 %v1186, %v1185
      %v1212 = vpack.c.b16 %v1187, %v1187
      %vm1213 = vcmask 1046528
      %v1214 = vrot.slane %v1188, 1
      %v1215 = vrot.slane %v1189, 1
      %v1216 = vsel %vm1213, %v1214, %v1215
      %v1217 = vrot.slane %v1190, 1
      %v1218 = vsel %vm1213, %v1215, %v1217
      %v1219 = vrot.slane %v1191, 1
      %v1220 = vsel %vm1213, %v1217, %v1219
      %v1221 = vrot.slane %v1192, 1
      %v1222 = vsel %vm1213, %v1219, %v1221
      %v1223 = vrot.slane %v1193, 1
      %v1224 = vsel %vm1213, %v1221, %v1223
      %v1225 = vrot.slane %v1194, 1
      %v1226 = vsel %vm1213, %v1223, %v1225
      %v1227 = vrot.slane %v1195, 1
      %v1228 = vsel %vm1213, %v1225, %v1227
      %v1229 = vrot.slane %v1196, 1
      %v1230 = vsel %vm1213, %v1227, %v1229
      %v1231 = vrot.slane %v1197, 1
      %v1232 = vsel %vm1213, %v1229, %v1231
      %v1233 = vrot.slane %v1198, 1
      %v1234 = vsel %vm1213, %v1231, %v1233
      %v1235 = vrot.slane %v1199, 1
      %v1236 = vsel %vm1213, %v1233, %v1235
      %v1237 = vrot.slane %v1200, 1
      %v1238 = vsel %vm1213, %v1235, %v1237
      %v1239 = vrot.slane %v1201, 1
      %v1240 = vsel %vm1213, %v1237, %v1239
      %v1241 = vrot.slane %v1202, 1
      %v1242 = vsel %vm1213, %v1239, %v1241
      %v1243 = vrot.slane %v1203, 1
      %v1244 = vsel %vm1213, %v1241, %v1243
      %v1245 = vrot.slane %v1204, 1
      %v1246 = vsel %vm1213, %v1243, %v1245
      %v1247 = vrot.slane %v1205, 1
      %v1248 = vsel %vm1213, %v1245, %v1247
      %v1249 = vrot.slane %v1206, 1
      %v1250 = vsel %vm1213, %v1247, %v1249
      %v1251 = vrot.slane %v1207, 1
      %v1252 = vsel %vm1213, %v1249, %v1251
      %v1253 = vrot.slane %v1208, 1
      %v1254 = vsel %vm1213, %v1251, %v1253
      %v1255 = vrot.slane %v1209, 1
      %v1256 = vsel %vm1213, %v1253, %v1255
      %v1257 = vrot.slane %v1210, 1
      %v1258 = vsel %vm1213, %v1255, %v1257
      %v1259 = vrot.slane %v1211, 1
      %v1260 = vsel %vm1213, %v1257, %v1259
      %v1261 = vrot.slane %v1212, 1
      %v1262 = vsel %vm1213, %v1259, %v1261
      %1287 = vst [vmem:[#allocation3 + $0x10] sm:$0xff] %v1216
      %1288 = vst [vmem:[#allocation3 + $0x58] sm:$0xff] %v1218
      %1289 = vst [vmem:[#allocation3 + $0xa0] sm:$0xff] %v1220
      %1290 = vst [vmem:[#allocation3 + $0xe8] sm:$0xff] %v1222
      %1291 = vst [vmem:[#allocation3 + $0x130] sm:$0xff] %v1224
      %1292 = vst [vmem:[#allocation3 + $0x178] sm:$0xff] %v1226
      %1293 = vst [vmem:[#allocation3 + $0x1c0] sm:$0xff] %v1228
      %1294 = vst [vmem:[#allocation3 + $0x208] sm:$0xff] %v1230
      %1295 = vst [vmem:[#allocation3 + $0x250] sm:$0xff] %v1232
      %1296 = vst [vmem:[#allocation3 + $0x298] sm:$0xff] %v1234
      %1297 = vst [vmem:[#allocation3 + $0x2e0] sm:$0xff] %v1236
      %1298 = vst [vmem:[#allocation3 + $0x328] sm:$0xff] %v1238
      %1299 = vst [vmem:[#allocation3 + $0x370] sm:$0xff] %v1240
      %1300 = vst [vmem:[#allocation3 + $0x3b8] sm:$0xff] %v1242
      %1301 = vst [vmem:[#allocation3 + $0x400] sm:$0xff] %v1244
      %1302 = vst [vmem:[#allocation3 + $0x448] sm:$0xff] %v1246
      %1303 = vst [vmem:[#allocation3 + $0x490] sm:$0xff] %v1248
      %1304 = vst [vmem:[#allocation3 + $0x4d8] sm:$0xff] %v1250
      %1305 = vst [vmem:[#allocation3 + $0x520] sm:$0xff] %v1252
      %1306 = vst [vmem:[#allocation3 + $0x568] sm:$0xff] %v1254
      %1307 = vst [vmem:[#allocation3 + $0x5b0] sm:$0xff] %v1256
      %1308 = vst [vmem:[#allocation3 + $0x5f8] sm:$0xff] %v1258
      %1309 = vst [vmem:[#allocation3 + $0x640] sm:$0xff] %v1260
      %1310 = vst [vmem:[#allocation3 + $0x688] sm:$0xff] %v1262
      %v1311 = vld [vmem:[%s402 + $0xc] sm:$0xf]
      %v1312 = vld [vmem:[%s402 + $0x10] sm:$0xf]
      %v1313 = vld [vmem:[%s402 + $0x14] sm:$0xf]
      %v1314 = vld [vmem:[%s402 + $0x18] sm:$0xf]
      %v1315 = vld [vmem:[%s402 + $0x1c] sm:$0xf]
      %v1316 = vld [vmem:[%s402 + $0x20] sm:$0xf]
      %v1317 = vld [vmem:[%s402 + $0x24] sm:$0xf]
      %v1318 = vld [vmem:[%s402 + $0x28] sm:$0xf]
      %v1319 = vld [vmem:[%s402 + $0x2c] sm:$0xf]
      %v1320 = vld [vmem:[%s402 + $0x30] sm:$0xf]
      %v1321 = vld [vmem:[%s402 + $0x34] sm:$0xf]
      %v1322 = vld [vmem:[%s402 + $0x38] sm:$0xf]
      %v1323 = vld [vmem:[%s402 + $0x3c] sm:$0xf]
      %v1324 = vld [vmem:[%s402 + $0x40] sm:$0xf]
      %v1325 = vld [vmem:[%s402 + $0x44] sm:$0xf]
      %v1326 = vld [vmem:[%s402 + $0x48] sm:$0xf]
      %v1327 = vld [vmem:[%s402 + $0x4c] sm:$0xf]
      %v1328 = vld [vmem:[%s402 + $0x50] sm:$0xf]
      %v1329 = vld [vmem:[%s402 + $0x54] sm:$0xf]
      %v1330 = vld [vmem:[%s402 + $0x58] sm:$0xf]
      %v1331 = vld [vmem:[%s402 + $0x5c] sm:$0xf]
      %v1332 = vld [vmem:[%s402 + $0x60] sm:$0xf]
      %v1333 = vld [vmem:[%s402 + $0x64] sm:$0xf]
      %v1334 = vld [vmem:[%s402 + $0x68] sm:$0xf]
      %v1335 = vld [vmem:[%s402 + $0x6c] sm:$0xf]
      %v1336 = vld [vmem:[%s402 + $0x70] sm:$0xf]
      %v1337 = vld [vmem:[%s402 + $0x74] sm:$0xf]
      %v1338 = vld [vmem:[%s402 + $0x78] sm:$0xf]
      %v1339 = vld [vmem:[%s402 + $0x7c] sm:$0xf]
      %v1340 = vld [vmem:[%s402 + $0x80] sm:$0xf]
      %v1341 = vld [vmem:[%s402 + $0x84] sm:$0xf]
      %v1342 = vld [vmem:[%s402 + $0x88] sm:$0xf]
      %v1343 = vld [vmem:[%s402 + $0x8c] sm:$0xf]
      %v1344 = vld [vmem:[%s402 + $0x90] sm:$0xf]
      %v1345 = vld [vmem:[%s402 + $0x94] sm:$0xf]
      %v1346 = vld [vmem:[%s402 + $0x98] sm:$0xf]
      %v1347 = vld [vmem:[%s402 + $0x9c] sm:$0xf]
      %v1348 = vld [vmem:[%s402 + $0xa0] sm:$0xf]
      %v1349 = vld [vmem:[%s402 + $0xa4] sm:$0xf]
      %v1350 = vld [vmem:[%s402 + $0xa8] sm:$0xf]
      %v1351 = vld [vmem:[%s402 + $0xac] sm:$0xf]
      %v1352 = vld [vmem:[%s402 + $0xb0] sm:$0xf]
      %v1353 = vld [vmem:[%s402 + $0xb4] sm:$0xf]
      %v1354 = vld [vmem:[%s402 + $0xb8] sm:$0xf]
      %v1355 = vld [vmem:[%s402 + $0xbc] sm:$0xf]
      %v1356 = vld [vmem:[%s402 + $0xc0] sm:$0xf]
      %v1357 = vld [vmem:[%s402 + $0xc4] sm:$0xf]
      %v1358 = vld [vmem:[%s402 + $0xc8] sm:$0xf]
      %v1407 = vunpack.c.l.b16 %v1311
      %v1408 = vunpack.c.l.b16 %v1312
      %v1409 = vunpack.c.l.b16 %v1313
      %v1410 = vunpack.c.l.b16 %v1314
      %v1411 = vunpack.c.l.b16 %v1315
      %v1412 = vunpack.c.l.b16 %v1316
      %v1413 = vunpack.c.l.b16 %v1317
      %v1414 = vunpack.c.l.b16 %v1318
      %v1415 = vunpack.c.l.b16 %v1319
      %v1416 = vunpack.c.l.b16 %v1320
      %v1417 = vunpack.c.l.b16 %v1321
      %v1418 = vunpack.c.l.b16 %v1322
      %v1419 = vunpack.c.l.b16 %v1323
      %v1420 = vunpack.c.l.b16 %v1324
      %v1421 = vunpack.c.l.b16 %v1325
      %v1422 = vunpack.c.l.b16 %v1326
      %v1423 = vunpack.c.l.b16 %v1327
      %v1424 = vunpack.c.l.b16 %v1328
      %v1425 = vunpack.c.l.b16 %v1329
      %v1426 = vunpack.c.l.b16 %v1330
      %v1427 = vunpack.c.l.b16 %v1331
      %v1428 = vunpack.c.l.b16 %v1332
      %v1429 = vunpack.c.l.b16 %v1333
      %v1430 = vunpack.c.l.b16 %v1334
      %v1431 = vunpack.c.l.b16 %v1335
      %v1432 = vunpack.c.l.b16 %v1336
      %v1433 = vunpack.c.l.b16 %v1337
      %v1434 = vunpack.c.l.b16 %v1338
      %v1435 = vunpack.c.l.b16 %v1339
      %v1436 = vunpack.c.l.b16 %v1340
      %v1437 = vunpack.c.l.b16 %v1341
      %v1438 = vunpack.c.l.b16 %v1342
      %v1439 = vunpack.c.l.b16 %v1343
      %v1440 = vunpack.c.l.b16 %v1344
      %v1441 = vunpack.c.l.b16 %v1345
      %v1442 = vunpack.c.l.b16 %v1346
      %v1443 = vunpack.c.l.b16 %v1347
      %v1444 = vunpack.c.l.b16 %v1348
      %v1445 = vunpack.c.l.b16 %v1349
      %v1446 = vunpack.c.l.b16 %v1350
      %v1447 = vunpack.c.l.b16 %v1351
      %v1448 = vunpack.c.l.b16 %v1352
      %v1449 = vunpack.c.l.b16 %v1353
      %v1450 = vunpack.c.l.b16 %v1354
      %v1451 = vunpack.c.l.b16 %v1355
      %v1452 = vunpack.c.l.b16 %v1356
      %v1453 = vunpack.c.l.b16 %v1357
      %v1454 = vunpack.c.l.b16 %v1358
      %v1455 = vpack.c.b16 %v1408, %v1407
      %v1456 = vpack.c.b16 %v1410, %v1409
      %v1457 = vpack.c.b16 %v1412, %v1411
      %v1458 = vpack.c.b16 %v1414, %v1413
      %v1459 = vpack.c.b16 %v1416, %v1415
      %v1460 = vpack.c.b16 %v1418, %v1417
      %v1461 = vpack.c.b16 %v1420, %v1419
      %v1462 = vpack.c.b16 %v1422, %v1421
      %v1463 = vpack.c.b16 %v1424, %v1423
      %v1464 = vpack.c.b16 %v1426, %v1425
      %v1465 = vpack.c.b16 %v1428, %v1427
      %v1466 = vpack.c.b16 %v1430, %v1429
      %v1467 = vpack.c.b16 %v1432, %v1431
      %v1468 = vpack.c.b16 %v1434, %v1433
      %v1469 = vpack.c.b16 %v1436, %v1435
      %v1470 = vpack.c.b16 %v1438, %v1437
      %v1471 = vpack.c.b16 %v1440, %v1439
      %v1472 = vpack.c.b16 %v1442, %v1441
      %v1473 = vpack.c.b16 %v1444, %v1443
      %v1474 = vpack.c.b16 %v1446, %v1445
      %v1475 = vpack.c.b16 %v1448, %v1447
      %v1476 = vpack.c.b16 %v1450, %v1449
      %v1477 = vpack.c.b16 %v1452, %v1451
      %v1478 = vpack.c.b16 %v1454, %v1453
      %1503 = vst [vmem:[#allocation3 + $0x18] sm:$0xff] %v1455
      %1504 = vst [vmem:[#allocation3 + $0x60] sm:$0xff] %v1456
      %1505 = vst [vmem:[#allocation3 + $0xa8] sm:$0xff] %v1457
      %1506 = vst [vmem:[#allocation3 + $0xf0] sm:$0xff] %v1458
      %1507 = vst [vmem:[#allocation3 + $0x138] sm:$0xff] %v1459
      %1508 = vst [vmem:[#allocation3 + $0x180] sm:$0xff] %v1460
      %1509 = vst [vmem:[#allocation3 + $0x1c8] sm:$0xff] %v1461
      %1510 = vst [vmem:[#allocation3 + $0x210] sm:$0xff] %v1462
      %1511 = vst [vmem:[#allocation3 + $0x258] sm:$0xff] %v1463
      %1512 = vst [vmem:[#allocation3 + $0x2a0] sm:$0xff] %v1464
      %1513 = vst [vmem:[#allocation3 + $0x2e8] sm:$0xff] %v1465
      %1514 = vst [vmem:[#allocation3 + $0x330] sm:$0xff] %v1466
      %1515 = vst [vmem:[#allocation3 + $0x378] sm:$0xff] %v1467
      %1516 = vst [vmem:[#allocation3 + $0x3c0] sm:$0xff] %v1468
      %1517 = vst [vmem:[#allocation3 + $0x408] sm:$0xff] %v1469
      %1518 = vst [vmem:[#allocation3 + $0x450] sm:$0xff] %v1470
      %1519 = vst [vmem:[#allocation3 + $0x498] sm:$0xff] %v1471
      %1520 = vst [vmem:[#allocation3 + $0x4e0] sm:$0xff] %v1472
      %1521 = vst [vmem:[#allocation3 + $0x528] sm:$0xff] %v1473
      %1522 = vst [vmem:[#allocation3 + $0x570] sm:$0xff] %v1474
      %1523 = vst [vmem:[#allocation3 + $0x5b8] sm:$0xff] %v1475
      %1524 = vst [vmem:[#allocation3 + $0x600] sm:$0xff] %v1476
      %1525 = vst [vmem:[#allocation3 + $0x648] sm:$0xff] %v1477
      %1526 = vst [vmem:[#allocation3 + $0x690] sm:$0xff] %v1478
      %v1527 = vld [vmem:[%s402 + $0xc] sm:$0xf]
      %v1528 = vld [vmem:[%s402 + $0x10] sm:$0xf]
      %v1529 = vld [vmem:[%s402 + $0x14] sm:$0xf]
      %v1530 = vld [vmem:[%s402 + $0x18] sm:$0xf]
      %v1531 = vld [vmem:[%s402 + $0x1c] sm:$0xf]
      %v1532 = vld [vmem:[%s402 + $0x20] sm:$0xf]
      %v1533 = vld [vmem:[%s402 + $0x24] sm:$0xf]
      %v1534 = vld [vmem:[%s402 + $0x28] sm:$0xf]
      %v1535 = vld [vmem:[%s402 + $0x2c] sm:$0xf]
      %v1536 = vld [vmem:[%s402 + $0x30] sm:$0xf]
      %v1537 = vld [vmem:[%s402 + $0x34] sm:$0xf]
      %v1538 = vld [vmem:[%s402 + $0x38] sm:$0xf]
      %v1539 = vld [vmem:[%s402 + $0x3c] sm:$0xf]
      %v1540 = vld [vmem:[%s402 + $0x40] sm:$0xf]
      %v1541 = vld [vmem:[%s402 + $0x44] sm:$0xf]
      %v1542 = vld [vmem:[%s402 + $0x48] sm:$0xf]
      %v1543 = vld [vmem:[%s402 + $0x4c] sm:$0xf]
      %v1544 = vld [vmem:[%s402 + $0x50] sm:$0xf]
      %v1545 = vld [vmem:[%s402 + $0x54] sm:$0xf]
      %v1546 = vld [vmem:[%s402 + $0x58] sm:$0xf]
      %v1547 = vld [vmem:[%s402 + $0x5c] sm:$0xf]
      %v1548 = vld [vmem:[%s402 + $0x60] sm:$0xf]
      %v1549 = vld [vmem:[%s402 + $0x64] sm:$0xf]
      %v1550 = vld [vmem:[%s402 + $0x68] sm:$0xf]
      %v1551 = vld [vmem:[%s402 + $0x6c] sm:$0xf]
      %v1552 = vld [vmem:[%s402 + $0x70] sm:$0xf]
      %v1553 = vld [vmem:[%s402 + $0x74] sm:$0xf]
      %v1554 = vld [vmem:[%s402 + $0x78] sm:$0xf]
      %v1555 = vld [vmem:[%s402 + $0x7c] sm:$0xf]
      %v1556 = vld [vmem:[%s402 + $0x80] sm:$0xf]
      %v1557 = vld [vmem:[%s402 + $0x84] sm:$0xf]
      %v1558 = vld [vmem:[%s402 + $0x88] sm:$0xf]
      %v1559 = vld [vmem:[%s402 + $0x8c] sm:$0xf]
      %v1560 = vld [vmem:[%s402 + $0x90] sm:$0xf]
      %v1561 = vld [vmem:[%s402 + $0x94] sm:$0xf]
      %v1562 = vld [vmem:[%s402 + $0x98] sm:$0xf]
      %v1563 = vld [vmem:[%s402 + $0x9c] sm:$0xf]
      %v1564 = vld [vmem:[%s402 + $0xa0] sm:$0xf]
      %v1565 = vld [vmem:[%s402 + $0xa4] sm:$0xf]
      %v1566 = vld [vmem:[%s402 + $0xa8] sm:$0xf]
      %v1567 = vld [vmem:[%s402 + $0xac] sm:$0xf]
      %v1568 = vld [vmem:[%s402 + $0xb0] sm:$0xf]
      %v1569 = vld [vmem:[%s402 + $0xb4] sm:$0xf]
      %v1570 = vld [vmem:[%s402 + $0xb8] sm:$0xf]
      %v1571 = vld [vmem:[%s402 + $0xbc] sm:$0xf]
      %v1572 = vld [vmem:[%s402 + $0xc0] sm:$0xf]
      %v1573 = vld [vmem:[%s402 + $0xc4] sm:$0xf]
      %v1574 = vld [vmem:[%s402 + $0xc8] sm:$0xf]
      %v1575 = vld [vmem:[%s402 + $0xcc] sm:$0x1]
      %v1625 = vunpack.c.l.b16 %v1527
      %v1626 = vunpack.c.l.b16 %v1528
      %v1627 = vunpack.c.l.b16 %v1529
      %v1628 = vunpack.c.l.b16 %v1530
      %v1629 = vunpack.c.l.b16 %v1531
      %v1630 = vunpack.c.l.b16 %v1532
      %v1631 = vunpack.c.l.b16 %v1533
      %v1632 = vunpack.c.l.b16 %v1534
      %v1633 = vunpack.c.l.b16 %v1535
      %v1634 = vunpack.c.l.b16 %v1536
      %v1635 = vunpack.c.l.b16 %v1537
      %v1636 = vunpack.c.l.b16 %v1538
      %v1637 = vunpack.c.l.b16 %v1539
      %v1638 = vunpack.c.l.b16 %v1540
      %v1639 = vunpack.c.l.b16 %v1541
      %v1640 = vunpack.c.l.b16 %v1542
      %v1641 = vunpack.c.l.b16 %v1543
      %v1642 = vunpack.c.l.b16 %v1544
      %v1643 = vunpack.c.l.b16 %v1545
      %v1644 = vunpack.c.l.b16 %v1546
      %v1645 = vunpack.c.l.b16 %v1547
      %v1646 = vunpack.c.l.b16 %v1548
      %v1647 = vunpack.c.l.b16 %v1549
      %v1648 = vunpack.c.l.b16 %v1550
      %v1649 = vunpack.c.l.b16 %v1551
      %v1650 = vunpack.c.l.b16 %v1552
      %v1651 = vunpack.c.l.b16 %v1553
      %v1652 = vunpack.c.l.b16 %v1554
      %v1653 = vunpack.c.l.b16 %v1555
      %v1654 = vunpack.c.l.b16 %v1556
      %v1655 = vunpack.c.l.b16 %v1557
      %v1656 = vunpack.c.l.b16 %v1558
      %v1657 = vunpack.c.l.b16 %v1559
      %v1658 = vunpack.c.l.b16 %v1560
      %v1659 = vunpack.c.l.b16 %v1561
      %v1660 = vunpack.c.l.b16 %v1562
      %v1661 = vunpack.c.l.b16 %v1563
      %v1662 = vunpack.c.l.b16 %v1564
      %v1663 = vunpack.c.l.b16 %v1565
      %v1664 = vunpack.c.l.b16 %v1566
      %v1665 = vunpack.c.l.b16 %v1567
      %v1666 = vunpack.c.l.b16 %v1568
      %v1667 = vunpack.c.l.b16 %v1569
      %v1668 = vunpack.c.l.b16 %v1570
      %v1669 = vunpack.c.l.b16 %v1571
      %v1670 = vunpack.c.l.b16 %v1572
      %v1671 = vunpack.c.l.b16 %v1573
      %v1672 = vunpack.c.l.b16 %v1574
      %v1673 = vunpack.c.l.b16 %v1575
      %v1674 = vpack.c.b16 %v1626, %v1625
      %v1675 = vpack.c.b16 %v1628, %v1627
      %v1676 = vpack.c.b16 %v1630, %v1629
      %v1677 = vpack.c.b16 %v1632, %v1631
      %v1678 = vpack.c.b16 %v1634, %v1633
      %v1679 = vpack.c.b16 %v1636, %v1635
      %v1680 = vpack.c.b16 %v1638, %v1637
      %v1681 = vpack.c.b16 %v1640, %v1639
      %v1682 = vpack.c.b16 %v1642, %v1641
      %v1683 = vpack.c.b16 %v1644, %v1643
      %v1684 = vpack.c.b16 %v1646, %v1645
      %v1685 = vpack.c.b16 %v1648, %v1647
      %v1686 = vpack.c.b16 %v1650, %v1649
      %v1687 = vpack.c.b16 %v1652, %v1651
      %v1688 = vpack.c.b16 %v1654, %v1653
      %v1689 = vpack.c.b16 %v1656, %v1655
      %v1690 = vpack.c.b16 %v1658, %v1657
      %v1691 = vpack.c.b16 %v1660, %v1659
      %v1692 = vpack.c.b16 %v1662, %v1661
      %v1693 = vpack.c.b16 %v1664, %v1663
      %v1694 = vpack.c.b16 %v1666, %v1665
      %v1695 = vpack.c.b16 %v1668, %v1667
      %v1696 = vpack.c.b16 %v1670, %v1669
      %v1697 = vpack.c.b16 %v1672, %v1671
      %v1698 = vpack.c.b16 %v1673, %v1673
      %v1700 = vshrl.u32 %v1674, 16
      %v1702 = vshll.u32 %v1674, 16
      %v1704 = vrot.slane %v1702, 1
      %v1705 = vor.u32 %v1700, %v1704
      %v1707 = vshll.u32 %v1675, 16
      %v1709 = vrot.slane %v1707, 1
      %v1710 = vsel %vm796, %v1705, %v1709
      %v1711 = vshrl.u32 %v1675, 16
      %v1713 = vor.u32 %v1711, %v1709
      %v1715 = vshll.u32 %v1676, 16
      %v1717 = vrot.slane %v1715, 1
      %v1718 = vsel %vm796, %v1713, %v1717
      %v1719 = vshrl.u32 %v1676, 16
      %v1721 = vor.u32 %v1719, %v1717
      %v1723 = vshll.u32 %v1677, 16
      %v1725 = vrot.slane %v1723, 1
      %v1726 = vsel %vm796, %v1721, %v1725
      %v1727 = vshrl.u32 %v1677, 16
      %v1729 = vor.u32 %v1727, %v1725
      %v1731 = vshll.u32 %v1678, 16
      %v1733 = vrot.slane %v1731, 1
      %v1734 = vsel %vm796, %v1729, %v1733
      %v1735 = vshrl.u32 %v1678, 16
      %v1737 = vor.u32 %v1735, %v1733
      %v1739 = vshll.u32 %v1679, 16
      %v1741 = vrot.slane %v1739, 1
      %v1742 = vsel %vm796, %v1737, %v1741
      %v1743 = vshrl.u32 %v1679, 16
      %v1745 = vor.u32 %v1743, %v1741
      %v1747 = vshll.u32 %v1680, 16
      %v1749 = vrot.slane %v1747, 1
      %v1750 = vsel %vm796, %v1745, %v1749
      %v1751 = vshrl.u32 %v1680, 16
      %v1753 = vor.u32 %v1751, %v1749
      %v1755 = vshll.u32 %v1681, 16
      %v1757 = vrot.slane %v1755, 1
      %v1758 = vsel %vm796, %v1753, %v1757
      %v1759 = vshrl.u32 %v1681, 16
      %v1761 = vor.u32 %v1759, %v1757
      %v1763 = vshll.u32 %v1682, 16
      %v1765 = vrot.slane %v1763, 1
      %v1766 = vsel %vm796, %v1761, %v1765
      %v1767 = vshrl.u32 %v1682, 16
      %v1769 = vor.u32 %v1767, %v1765
      %v1771 = vshll.u32 %v1683, 16
      %v1773 = vrot.slane %v1771, 1
      %v1774 = vsel %vm796, %v1769, %v1773
      %v1775 = vshrl.u32 %v1683, 16
      %v1777 = vor.u32 %v1775, %v1773
      %v1779 = vshll.u32 %v1684, 16
      %v1781 = vrot.slane %v1779, 1
      %v1782 = vsel %vm796, %v1777, %v1781
      %v1783 = vshrl.u32 %v1684, 16
      %v1785 = vor.u32 %v1783, %v1781
      %v1787 = vshll.u32 %v1685, 16
      %v1789 = vrot.slane %v1787, 1
      %v1790 = vsel %vm796, %v1785, %v1789
      %v1791 = vshrl.u32 %v1685, 16
      %v1793 = vor.u32 %v1791, %v1789
      %v1795 = vshll.u32 %v1686, 16
      %v1797 = vrot.slane %v1795, 1
      %v1798 = vsel %vm796, %v1793, %v1797
      %v1799 = vshrl.u32 %v1686, 16
      %v1801 = vor.u32 %v1799, %v1797
      %v1803 = vshll.u32 %v1687, 16
      %v1805 = vrot.slane %v1803, 1
      %v1806 = vsel %vm796, %v1801, %v1805
      %v1807 = vshrl.u32 %v1687, 16
      %v1809 = vor.u32 %v1807, %v1805
      %v1811 = vshll.u32 %v1688, 16
      %v1813 = vrot.slane %v1811, 1
      %v1814 = vsel %vm796, %v1809, %v1813
      %v1815 = vshrl.u32 %v1688, 16
      %v1817 = vor.u32 %v1815, %v1813
      %v1819 = vshll.u32 %v1689, 16
      %v1821 = vrot.slane %v1819, 1
      %v1822 = vsel %vm796, %v1817, %v1821
      %v1823 = vshrl.u32 %v1689, 16
      %v1825 = vor.u32 %v1823, %v1821
      %v1827 = vshll.u32 %v1690, 16
      %v1829 = vrot.slane %v1827, 1
      %v1830 = vsel %vm796, %v1825, %v1829
      %v1831 = vshrl.u32 %v1690, 16
      %v1833 = vor.u32 %v1831, %v1829
      %v1835 = vshll.u32 %v1691, 16
      %v1837 = vrot.slane %v1835, 1
      %v1838 = vsel %vm796, %v1833, %v1837
      %v1839 = vshrl.u32 %v1691, 16
      %v1841 = vor.u32 %v1839, %v1837
      %v1843 = vshll.u32 %v1692, 16
      %v1845 = vrot.slane %v1843, 1
      %v1846 = vsel %vm796, %v1841, %v1845
      %v1847 = vshrl.u32 %v1692, 16
      %v1849 = vor.u32 %v1847, %v1845
      %v1851 = vshll.u32 %v1693, 16
      %v1853 = vrot.slane %v1851, 1
      %v1854 = vsel %vm796, %v1849, %v1853
      %v1855 = vshrl.u32 %v1693, 16
      %v1857 = vor.u32 %v1855, %v1853
      %v1859 = vshll.u32 %v1694, 16
      %v1861 = vrot.slane %v1859, 1
      %v1862 = vsel %vm796, %v1857, %v1861
      %v1863 = vshrl.u32 %v1694, 16
      %v1865 = vor.u32 %v1863, %v1861
      %v1867 = vshll.u32 %v1695, 16
      %v1869 = vrot.slane %v1867, 1
      %v1870 = vsel %vm796, %v1865, %v1869
      %v1871 = vshrl.u32 %v1695, 16
      %v1873 = vor.u32 %v1871, %v1869
      %v1875 = vshll.u32 %v1696, 16
      %v1877 = vrot.slane %v1875, 1
      %v1878 = vsel %vm796, %v1873, %v1877
      %v1879 = vshrl.u32 %v1696, 16
      %v1881 = vor.u32 %v1879, %v1877
      %v1883 = vshll.u32 %v1697, 16
      %v1885 = vrot.slane %v1883, 1
      %v1886 = vsel %vm796, %v1881, %v1885
      %v1887 = vshrl.u32 %v1697, 16
      %v1889 = vor.u32 %v1887, %v1885
      %v1891 = vshll.u32 %v1698, 16
      %v1893 = vrot.slane %v1891, 1
      %v1894 = vsel %vm796, %v1889, %v1893
      %1919 = vst [vmem:[#allocation3 + $0x20] sm:$0xff] %v1710
      %1920 = vst [vmem:[#allocation3 + $0x68] sm:$0xff] %v1718
      %1921 = vst [vmem:[#allocation3 + $0xb0] sm:$0xff] %v1726
      %1922 = vst [vmem:[#allocation3 + $0xf8] sm:$0xff] %v1734
      %1923 = vst [vmem:[#allocation3 + $0x140] sm:$0xff] %v1742
      %1924 = vst [vmem:[#allocation3 + $0x188] sm:$0xff] %v1750
      %1925 = vst [vmem:[#allocation3 + $0x1d0] sm:$0xff] %v1758
      %1926 = vst [vmem:[#allocation3 + $0x218] sm:$0xff] %v1766
      %1927 = vst [vmem:[#allocation3 + $0x260] sm:$0xff] %v1774
      %1928 = vst [vmem:[#allocation3 + $0x2a8] sm:$0xff] %v1782
      %1929 = vst [vmem:[#allocation3 + $0x2f0] sm:$0xff] %v1790
      %1930 = vst [vmem:[#allocation3 + $0x338] sm:$0xff] %v1798
      %1931 = vst [vmem:[#allocation3 + $0x380] sm:$0xff] %v1806
      %1932 = vst [vmem:[#allocation3 + $0x3c8] sm:$0xff] %v1814
      %1933 = vst [vmem:[#allocation3 + $0x410] sm:$0xff] %v1822
      %1934 = vst [vmem:[#allocation3 + $0x458] sm:$0xff] %v1830
      %1935 = vst [vmem:[#allocation3 + $0x4a0] sm:$0xff] %v1838
      %1936 = vst [vmem:[#allocation3 + $0x4e8] sm:$0xff] %v1846
      %1937 = vst [vmem:[#allocation3 + $0x530] sm:$0xff] %v1854
      %1938 = vst [vmem:[#allocation3 + $0x578] sm:$0xff] %v1862
      %1939 = vst [vmem:[#allocation3 + $0x5c0] sm:$0xff] %v1870
      %1940 = vst [vmem:[#allocation3 + $0x608] sm:$0xff] %v1878
      %1941 = vst [vmem:[#allocation3 + $0x650] sm:$0xff] %v1886
      %1942 = vst [vmem:[#allocation3 + $0x698] sm:$0xff] %v1894
      %v1943 = vld [vmem:[%s402 + $0xc] sm:$0xe]
      %v1944 = vld [vmem:[%s402 + $0x10] sm:$0xf]
      %v1945 = vld [vmem:[%s402 + $0x14] sm:$0xf]
      %v1946 = vld [vmem:[%s402 + $0x18] sm:$0xf]
      %v1947 = vld [vmem:[%s402 + $0x1c] sm:$0xf]
      %v1948 = vld [vmem:[%s402 + $0x20] sm:$0xf]
      %v1949 = vld [vmem:[%s402 + $0x24] sm:$0xf]
      %v1950 = vld [vmem:[%s402 + $0x28] sm:$0xf]
      %v1951 = vld [vmem:[%s402 + $0x2c] sm:$0xf]
      %v1952 = vld [vmem:[%s402 + $0x30] sm:$0xf]
      %v1953 = vld [vmem:[%s402 + $0x34] sm:$0xf]
      %v1954 = vld [vmem:[%s402 + $0x38] sm:$0xf]
      %v1955 = vld [vmem:[%s402 + $0x3c] sm:$0xf]
      %v1956 = vld [vmem:[%s402 + $0x40] sm:$0xf]
      %v1957 = vld [vmem:[%s402 + $0x44] sm:$0xf]
      %v1958 = vld [vmem:[%s402 + $0x48] sm:$0xf]
      %v1959 = vld [vmem:[%s402 + $0x4c] sm:$0xf]
      %v1960 = vld [vmem:[%s402 + $0x50] sm:$0xf]
      %v1961 = vld [vmem:[%s402 + $0x54] sm:$0xf]
      %v1962 = vld [vmem:[%s402 + $0x58] sm:$0xf]
      %v1963 = vld [vmem:[%s402 + $0x5c] sm:$0xf]
      %v1964 = vld [vmem:[%s402 + $0x60] sm:$0xf]
      %v1965 = vld [vmem:[%s402 + $0x64] sm:$0xf]
      %v1966 = vld [vmem:[%s402 + $0x68] sm:$0xf]
      %v1967 = vld [vmem:[%s402 + $0x6c] sm:$0xf]
      %v1968 = vld [vmem:[%s402 + $0x70] sm:$0xf]
      %v1969 = vld [vmem:[%s402 + $0x74] sm:$0xf]
      %v1970 = vld [vmem:[%s402 + $0x78] sm:$0xf]
      %v1971 = vld [vmem:[%s402 + $0x7c] sm:$0xf]
      %v1972 = vld [vmem:[%s402 + $0x80] sm:$0xf]
      %v1973 = vld [vmem:[%s402 + $0x84] sm:$0xf]
      %v1974 = vld [vmem:[%s402 + $0x88] sm:$0xf]
      %v1975 = vld [vmem:[%s402 + $0x8c] sm:$0xf]
      %v1976 = vld [vmem:[%s402 + $0x90] sm:$0xf]
      %v1977 = vld [vmem:[%s402 + $0x94] sm:$0xf]
      %v1978 = vld [vmem:[%s402 + $0x98] sm:$0xf]
      %v1979 = vld [vmem:[%s402 + $0x9c] sm:$0xf]
      %v1980 = vld [vmem:[%s402 + $0xa0] sm:$0xf]
      %v1981 = vld [vmem:[%s402 + $0xa4] sm:$0xf]
      %v1982 = vld [vmem:[%s402 + $0xa8] sm:$0xf]
      %v1983 = vld [vmem:[%s402 + $0xac] sm:$0xf]
      %v1984 = vld [vmem:[%s402 + $0xb0] sm:$0xf]
      %v1985 = vld [vmem:[%s402 + $0xb4] sm:$0xf]
      %v1986 = vld [vmem:[%s402 + $0xb8] sm:$0xf]
      %v1987 = vld [vmem:[%s402 + $0xbc] sm:$0xf]
      %v1988 = vld [vmem:[%s402 + $0xc0] sm:$0xf]
      %v1989 = vld [vmem:[%s402 + $0xc4] sm:$0xf]
      %v1990 = vld [vmem:[%s402 + $0xc8] sm:$0xf]
      %v1991 = vld [vmem:[%s402 + $0xcc] sm:$0x1]
      %v2041 = vunpack.c.l.b16 %v1943
      %v2042 = vunpack.c.l.b16 %v1944
      %v2043 = vunpack.c.l.b16 %v1945
      %v2044 = vunpack.c.l.b16 %v1946
      %v2045 = vunpack.c.l.b16 %v1947
      %v2046 = vunpack.c.l.b16 %v1948
      %v2047 = vunpack.c.l.b16 %v1949
      %v2048 = vunpack.c.l.b16 %v1950
      %v2049 = vunpack.c.l.b16 %v1951
      %v2050 = vunpack.c.l.b16 %v1952
      %v2051 = vunpack.c.l.b16 %v1953
      %v2052 = vunpack.c.l.b16 %v1954
      %v2053 = vunpack.c.l.b16 %v1955
      %v2054 = vunpack.c.l.b16 %v1956
      %v2055 = vunpack.c.l.b16 %v1957
      %v2056 = vunpack.c.l.b16 %v1958
      %v2057 = vunpack.c.l.b16 %v1959
      %v2058 = vunpack.c.l.b16 %v1960
      %v2059 = vunpack.c.l.b16 %v1961
      %v2060 = vunpack.c.l.b16 %v1962
      %v2061 = vunpack.c.l.b16 %v1963
      %v2062 = vunpack.c.l.b16 %v1964
      %v2063 = vunpack.c.l.b16 %v1965
      %v2064 = vunpack.c.l.b16 %v1966
      %v2065 = vunpack.c.l.b16 %v1967
      %v2066 = vunpack.c.l.b16 %v1968
      %v2067 = vunpack.c.l.b16 %v1969
      %v2068 = vunpack.c.l.b16 %v1970
      %v2069 = vunpack.c.l.b16 %v1971
      %v2070 = vunpack.c.l.b16 %v1972
      %v2071 = vunpack.c.l.b16 %v1973
      %v2072 = vunpack.c.l.b16 %v1974
      %v2073 = vunpack.c.l.b16 %v1975
      %v2074 = vunpack.c.l.b16 %v1976
      %v2075 = vunpack.c.l.b16 %v1977
      %v2076 = vunpack.c.l.b16 %v1978
      %v2077 = vunpack.c.l.b16 %v1979
      %v2078 = vunpack.c.l.b16 %v1980
      %v2079 = vunpack.c.l.b16 %v1981
      %v2080 = vunpack.c.l.b16 %v1982
      %v2081 = vunpack.c.l.b16 %v1983
      %v2082 = vunpack.c.l.b16 %v1984
      %v2083 = vunpack.c.l.b16 %v1985
      %v2084 = vunpack.c.l.b16 %v1986
      %v2085 = vunpack.c.l.b16 %v1987
      %v2086 = vunpack.c.l.b16 %v1988
      %v2087 = vunpack.c.l.b16 %v1989
      %v2088 = vunpack.c.l.b16 %v1990
      %v2089 = vunpack.c.l.b16 %v1991
      %v2090 = vpack.c.b16 %v2042, %v2041
      %v2091 = vpack.c.b16 %v2044, %v2043
      %v2092 = vpack.c.b16 %v2046, %v2045
      %v2093 = vpack.c.b16 %v2048, %v2047
      %v2094 = vpack.c.b16 %v2050, %v2049
      %v2095 = vpack.c.b16 %v2052, %v2051
      %v2096 = vpack.c.b16 %v2054, %v2053
      %v2097 = vpack.c.b16 %v2056, %v2055
      %v2098 = vpack.c.b16 %v2058, %v2057
      %v2099 = vpack.c.b16 %v2060, %v2059
      %v2100 = vpack.c.b16 %v2062, %v2061
      %v2101 = vpack.c.b16 %v2064, %v2063
      %v2102 = vpack.c.b16 %v2066, %v2065
      %v2103 = vpack.c.b16 %v2068, %v2067
      %v2104 = vpack.c.b16 %v2070, %v2069
      %v2105 = vpack.c.b16 %v2072, %v2071
      %v2106 = vpack.c.b16 %v2074, %v2073
      %v2107 = vpack.c.b16 %v2076, %v2075
      %v2108 = vpack.c.b16 %v2078, %v2077
      %v2109 = vpack.c.b16 %v2080, %v2079
      %v2110 = vpack.c.b16 %v2082, %v2081
      %v2111 = vpack.c.b16 %v2084, %v2083
      %v2112 = vpack.c.b16 %v2086, %v2085
      %v2113 = vpack.c.b16 %v2088, %v2087
      %v2114 = vpack.c.b16 %v2089, %v2089
      %v2115 = vrot.slane %v2090, 1
      %v2116 = vrot.slane %v2091, 1
      %v2117 = vsel %vm1213, %v2115, %v2116
      %v2118 = vrot.slane %v2092, 1
      %v2119 = vsel %vm1213, %v2116, %v2118
      %v2120 = vrot.slane %v2093, 1
      %v2121 = vsel %vm1213, %v2118, %v2120
      %v2122 = vrot.slane %v2094, 1
      %v2123 = vsel %vm1213, %v2120, %v2122
      %v2124 = vrot.slane %v2095, 1
      %v2125 = vsel %vm1213, %v2122, %v2124
      %v2126 = vrot.slane %v2096, 1
      %v2127 = vsel %vm1213, %v2124, %v2126
      %v2128 = vrot.slane %v2097, 1
      %v2129 = vsel %vm1213, %v2126, %v2128
      %v2130 = vrot.slane %v2098, 1
      %v2131 = vsel %vm1213, %v2128, %v2130
      %v2132 = vrot.slane %v2099, 1
      %v2133 = vsel %vm1213, %v2130, %v2132
      %v2134 = vrot.slane %v2100, 1
      %v2135 = vsel %vm1213, %v2132, %v2134
      %v2136 = vrot.slane %v2101, 1
      %v2137 = vsel %vm1213, %v2134, %v2136
      %v2138 = vrot.slane %v2102, 1
      %v2139 = vsel %vm1213, %v2136, %v2138
      %v2140 = vrot.slane %v2103, 1
      %v2141 = vsel %vm1213, %v2138, %v2140
      %v2142 = vrot.slane %v2104, 1
      %v2143 = vsel %vm1213, %v2140, %v2142
      %v2144 = vrot.slane %v2105, 1
      %v2145 = vsel %vm1213, %v2142, %v2144
      %v2146 = vrot.slane %v2106, 1
      %v2147 = vsel %vm1213, %v2144, %v2146
      %v2148 = vrot.slane %v2107, 1
      %v2149 = vsel %vm1213, %v2146, %v2148
      %v2150 = vrot.slane %v2108, 1
      %v2151 = vsel %vm1213, %v2148, %v2150
      %v2152 = vrot.slane %v2109, 1
      %v2153 = vsel %vm1213, %v2150, %v2152
      %v2154 = vrot.slane %v2110, 1
      %v2155 = vsel %vm1213, %v2152, %v2154
      %v2156 = vrot.slane %v2111, 1
      %v2157 = vsel %vm1213, %v2154, %v2156
      %v2158 = vrot.slane %v2112, 1
      %v2159 = vsel %vm1213, %v2156, %v2158
      %v2160 = vrot.slane %v2113, 1
      %v2161 = vsel %vm1213, %v2158, %v2160
      %v2162 = vrot.slane %v2114, 1
      %v2163 = vsel %vm1213, %v2160, %v2162
      %2188 = vst [vmem:[#allocation3 + $0x28] sm:$0xff] %v2117
      %2189 = vst [vmem:[#allocation3 + $0x70] sm:$0xff] %v2119
      %2190 = vst [vmem:[#allocation3 + $0xb8] sm:$0xff] %v2121
      %2191 = vst [vmem:[#allocation3 + $0x100] sm:$0xff] %v2123
      %2192 = vst [vmem:[#allocation3 + $0x148] sm:$0xff] %v2125
      %2193 = vst [vmem:[#allocation3 + $0x190] sm:$0xff] %v2127
      %2194 = vst [vmem:[#allocation3 + $0x1d8] sm:$0xff] %v2129
      %2195 = vst [vmem:[#allocation3 + $0x220] sm:$0xff] %v2131
      %2196 = vst [vmem:[#allocation3 + $0x268] sm:$0xff] %v2133
      %2197 = vst [vmem:[#allocation3 + $0x2b0] sm:$0xff] %v2135
      %2198 = vst [vmem:[#allocation3 + $0x2f8] sm:$0xff] %v2137
      %2199 = vst [vmem:[#allocation3 + $0x340] sm:$0xff] %v2139
      %2200 = vst [vmem:[#allocation3 + $0x388] sm:$0xff] %v2141
      %2201 = vst [vmem:[#allocation3 + $0x3d0] sm:$0xff] %v2143
      %2202 = vst [vmem:[#allocation3 + $0x418] sm:$0xff] %v2145
      %2203 = vst [vmem:[#allocation3 + $0x460] sm:$0xff] %v2147
      %2204 = vst [vmem:[#allocation3 + $0x4a8] sm:$0xff] %v2149
      %2205 = vst [vmem:[#allocation3 + $0x4f0] sm:$0xff] %v2151
      %2206 = vst [vmem:[#allocation3 + $0x538] sm:$0xff] %v2153
      %2207 = vst [vmem:[#allocation3 + $0x580] sm:$0xff] %v2155
      %2208 = vst [vmem:[#allocation3 + $0x5c8] sm:$0xff] %v2157
      %2209 = vst [vmem:[#allocation3 + $0x610] sm:$0xff] %v2159
      %2210 = vst [vmem:[#allocation3 + $0x658] sm:$0xff] %v2161
      %2211 = vst [vmem:[#allocation3 + $0x6a0] sm:$0xff] %v2163
      %v2212 = vld [vmem:[%s402 + $0x18] sm:$0xf]
      %v2213 = vld [vmem:[%s402 + $0x1c] sm:$0xf]
      %v2214 = vld [vmem:[%s402 + $0x20] sm:$0xf]
      %v2215 = vld [vmem:[%s402 + $0x24] sm:$0xf]
      %v2216 = vld [vmem:[%s402 + $0x28] sm:$0xf]
      %v2217 = vld [vmem:[%s402 + $0x2c] sm:$0xf]
      %v2218 = vld [vmem:[%s402 + $0x30] sm:$0xf]
      %v2219 = vld [vmem:[%s402 + $0x34] sm:$0xf]
      %v2220 = vld [vmem:[%s402 + $0x38] sm:$0xf]
      %v2221 = vld [vmem:[%s402 + $0x3c] sm:$0xf]
      %v2222 = vld [vmem:[%s402 + $0x40] sm:$0xf]
      %v2223 = vld [vmem:[%s402 + $0x44] sm:$0xf]
      %v2224 = vld [vmem:[%s402 + $0x48] sm:$0xf]
      %v2225 = vld [vmem:[%s402 + $0x4c] sm:$0xf]
      %v2226 = vld [vmem:[%s402 + $0x50] sm:$0xf]
      %v2227 = vld [vmem:[%s402 + $0x54] sm:$0xf]
      %v2228 = vld [vmem:[%s402 + $0x58] sm:$0xf]
      %v2229 = vld [vmem:[%s402 + $0x5c] sm:$0xf]
      %v2230 = vld [vmem:[%s402 + $0x60] sm:$0xf]
      %v2231 = vld [vmem:[%s402 + $0x64] sm:$0xf]
      %v2232 = vld [vmem:[%s402 + $0x68] sm:$0xf]
      %v2233 = vld [vmem:[%s402 + $0x6c] sm:$0xf]
      %v2234 = vld [vmem:[%s402 + $0x70] sm:$0xf]
      %v2235 = vld [vmem:[%s402 + $0x74] sm:$0xf]
      %v2236 = vld [vmem:[%s402 + $0x78] sm:$0xf]
      %v2237 = vld [vmem:[%s402 + $0x7c] sm:$0xf]
      %v2238 = vld [vmem:[%s402 + $0x80] sm:$0xf]
      %v2239 = vld [vmem:[%s402 + $0x84] sm:$0xf]
      %v2240 = vld [vmem:[%s402 + $0x88] sm:$0xf]
      %v2241 = vld [vmem:[%s402 + $0x8c] sm:$0xf]
      %v2242 = vld [vmem:[%s402 + $0x90] sm:$0xf]
      %v2243 = vld [vmem:[%s402 + $0x94] sm:$0xf]
      %v2244 = vld [vmem:[%s402 + $0x98] sm:$0xf]
      %v2245 = vld [vmem:[%s402 + $0x9c] sm:$0xf]
      %v2246 = vld [vmem:[%s402 + $0xa0] sm:$0xf]
      %v2247 = vld [vmem:[%s402 + $0xa4] sm:$0xf]
      %v2248 = vld [vmem:[%s402 + $0xa8] sm:$0xf]
      %v2249 = vld [vmem:[%s402 + $0xac] sm:$0xf]
      %v2250 = vld [vmem:[%s402 + $0xb0] sm:$0xf]
      %v2251 = vld [vmem:[%s402 + $0xb4] sm:$0xf]
      %v2252 = vld [vmem:[%s402 + $0xb8] sm:$0xf]
      %v2253 = vld [vmem:[%s402 + $0xbc] sm:$0xf]
      %v2254 = vld [vmem:[%s402 + $0xc0] sm:$0xf]
      %v2255 = vld [vmem:[%s402 + $0xc4] sm:$0xf]
      %v2256 = vld [vmem:[%s402 + $0xc8] sm:$0xf]
      %v2257 = vld [vmem:[%s402 + $0xcc] sm:$0xf]
      %v2258 = vld [vmem:[%s402 + $0xd0] sm:$0xf]
      %v2259 = vld [vmem:[%s402 + $0xd4] sm:$0xf]
      %v2308 = vunpack.c.l.b16 %v2212
      %v2309 = vunpack.c.l.b16 %v2213
      %v2310 = vunpack.c.l.b16 %v2214
      %v2311 = vunpack.c.l.b16 %v2215
      %v2312 = vunpack.c.l.b16 %v2216
      %v2313 = vunpack.c.l.b16 %v2217
      %v2314 = vunpack.c.l.b16 %v2218
      %v2315 = vunpack.c.l.b16 %v2219
      %v2316 = vunpack.c.l.b16 %v2220
      %v2317 = vunpack.c.l.b16 %v2221
      %v2318 = vunpack.c.l.b16 %v2222
      %v2319 = vunpack.c.l.b16 %v2223
      %v2320 = vunpack.c.l.b16 %v2224
      %v2321 = vunpack.c.l.b16 %v2225
      %v2322 = vunpack.c.l.b16 %v2226
      %v2323 = vunpack.c.l.b16 %v2227
      %v2324 = vunpack.c.l.b16 %v2228
      %v2325 = vunpack.c.l.b16 %v2229
      %v2326 = vunpack.c.l.b16 %v2230
      %v2327 = vunpack.c.l.b16 %v2231
      %v2328 = vunpack.c.l.b16 %v2232
      %v2329 = vunpack.c.l.b16 %v2233
      %v2330 = vunpack.c.l.b16 %v2234
      %v2331 = vunpack.c.l.b16 %v2235
      %v2332 = vunpack.c.l.b16 %v2236
      %v2333 = vunpack.c.l.b16 %v2237
      %v2334 = vunpack.c.l.b16 %v2238
      %v2335 = vunpack.c.l.b16 %v2239
      %v2336 = vunpack.c.l.b16 %v2240
      %v2337 = vunpack.c.l.b16 %v2241
      %v2338 = vunpack.c.l.b16 %v2242
      %v2339 = vunpack.c.l.b16 %v2243
      %v2340 = vunpack.c.l.b16 %v2244
      %v2341 = vunpack.c.l.b16 %v2245
      %v2342 = vunpack.c.l.b16 %v2246
      %v2343 = vunpack.c.l.b16 %v2247
      %v2344 = vunpack.c.l.b16 %v2248
      %v2345 = vunpack.c.l.b16 %v2249
      %v2346 = vunpack.c.l.b16 %v2250
      %v2347 = vunpack.c.l.b16 %v2251
      %v2348 = vunpack.c.l.b16 %v2252
      %v2349 = vunpack.c.l.b16 %v2253
      %v2350 = vunpack.c.l.b16 %v2254
      %v2351 = vunpack.c.l.b16 %v2255
      %v2352 = vunpack.c.l.b16 %v2256
      %v2353 = vunpack.c.l.b16 %v2257
      %v2354 = vunpack.c.l.b16 %v2258
      %v2355 = vunpack.c.l.b16 %v2259
      %v2356 = vpack.c.b16 %v2309, %v2308
      %v2357 = vpack.c.b16 %v2311, %v2310
      %v2358 = vpack.c.b16 %v2313, %v2312
      %v2359 = vpack.c.b16 %v2315, %v2314
      %v2360 = vpack.c.b16 %v2317, %v2316
      %v2361 = vpack.c.b16 %v2319, %v2318
      %v2362 = vpack.c.b16 %v2321, %v2320
      %v2363 = vpack.c.b16 %v2323, %v2322
      %v2364 = vpack.c.b16 %v2325, %v2324
      %v2365 = vpack.c.b16 %v2327, %v2326
      %v2366 = vpack.c.b16 %v2329, %v2328
      %v2367 = vpack.c.b16 %v2331, %v2330
      %v2368 = vpack.c.b16 %v2333, %v2332
      %v2369 = vpack.c.b16 %v2335, %v2334
      %v2370 = vpack.c.b16 %v2337, %v2336
      %v2371 = vpack.c.b16 %v2339, %v2338
      %v2372 = vpack.c.b16 %v2341, %v2340
      %v2373 = vpack.c.b16 %v2343, %v2342
      %v2374 = vpack.c.b16 %v2345, %v2344
      %v2375 = vpack.c.b16 %v2347, %v2346
      %v2376 = vpack.c.b16 %v2349, %v2348
      %v2377 = vpack.c.b16 %v2351, %v2350
      %v2378 = vpack.c.b16 %v2353, %v2352
      %v2379 = vpack.c.b16 %v2355, %v2354
      %2404 = vst [vmem:[#allocation3 + $0x30] sm:$0xff] %v2356
      %2405 = vst [vmem:[#allocation3 + $0x78] sm:$0xff] %v2357
      %2406 = vst [vmem:[#allocation3 + $0xc0] sm:$0xff] %v2358
      %2407 = vst [vmem:[#allocation3 + $0x108] sm:$0xff] %v2359
      %2408 = vst [vmem:[#allocation3 + $0x150] sm:$0xff] %v2360
      %2409 = vst [vmem:[#allocation3 + $0x198] sm:$0xff] %v2361
      %2410 = vst [vmem:[#allocation3 + $0x1e0] sm:$0xff] %v2362
      %2411 = vst [vmem:[#allocation3 + $0x228] sm:$0xff] %v2363
      %2412 = vst [vmem:[#allocation3 + $0x270] sm:$0xff] %v2364
      %2413 = vst [vmem:[#allocation3 + $0x2b8] sm:$0xff] %v2365
      %2414 = vst [vmem:[#allocation3 + $0x300] sm:$0xff] %v2366
      %2415 = vst [vmem:[#allocation3 + $0x348] sm:$0xff] %v2367
      %2416 = vst [vmem:[#allocation3 + $0x390] sm:$0xff] %v2368
      %2417 = vst [vmem:[#allocation3 + $0x3d8] sm:$0xff] %v2369
      %2418 = vst [vmem:[#allocation3 + $0x420] sm:$0xff] %v2370
      %2419 = vst [vmem:[#allocation3 + $0x468] sm:$0xff] %v2371
      %2420 = vst [vmem:[#allocation3 + $0x4b0] sm:$0xff] %v2372
      %2421 = vst [vmem:[#allocation3 + $0x4f8] sm:$0xff] %v2373
      %2422 = vst [vmem:[#allocation3 + $0x540] sm:$0xff] %v2374
      %2423 = vst [vmem:[#allocation3 + $0x588] sm:$0xff] %v2375
      %2424 = vst [vmem:[#allocation3 + $0x5d0] sm:$0xff] %v2376
      %2425 = vst [vmem:[#allocation3 + $0x618] sm:$0xff] %v2377
      %2426 = vst [vmem:[#allocation3 + $0x660] sm:$0xff] %v2378
      %2427 = vst [vmem:[#allocation3 + $0x6a8] sm:$0xff] %v2379
      %v2428 = vld [vmem:[%s402 + $0x18] sm:$0xf]
      %v2429 = vld [vmem:[%s402 + $0x1c] sm:$0xf]
      %v2430 = vld [vmem:[%s402 + $0x20] sm:$0xf]
      %v2431 = vld [vmem:[%s402 + $0x24] sm:$0xf]
      %v2432 = vld [vmem:[%s402 + $0x28] sm:$0xf]
      %v2433 = vld [vmem:[%s402 + $0x2c] sm:$0xf]
      %v2434 = vld [vmem:[%s402 + $0x30] sm:$0xf]
      %v2435 = vld [vmem:[%s402 + $0x34] sm:$0xf]
      %v2436 = vld [vmem:[%s402 + $0x38] sm:$0xf]
      %v2437 = vld [vmem:[%s402 + $0x3c] sm:$0xf]
      %v2438 = vld [vmem:[%s402 + $0x40] sm:$0xf]
      %v2439 = vld [vmem:[%s402 + $0x44] sm:$0xf]
      %v2440 = vld [vmem:[%s402 + $0x48] sm:$0xf]
      %v2441 = vld [vmem:[%s402 + $0x4c] sm:$0xf]
      %v2442 = vld [vmem:[%s402 + $0x50] sm:$0xf]
      %v2443 = vld [vmem:[%s402 + $0x54] sm:$0xf]
      %v2444 = vld [vmem:[%s402 + $0x58] sm:$0xf]
      %v2445 = vld [vmem:[%s402 + $0x5c] sm:$0xf]
      %v2446 = vld [vmem:[%s402 + $0x60] sm:$0xf]
      %v2447 = vld [vmem:[%s402 + $0x64] sm:$0xf]
      %v2448 = vld [vmem:[%s402 + $0x68] sm:$0xf]
      %v2449 = vld [vmem:[%s402 + $0x6c] sm:$0xf]
      %v2450 = vld [vmem:[%s402 + $0x70] sm:$0xf]
      %v2451 = vld [vmem:[%s402 + $0x74] sm:$0xf]
      %v2452 = vld [vmem:[%s402 + $0x78] sm:$0xf]
      %v2453 = vld [vmem:[%s402 + $0x7c] sm:$0xf]
      %v2454 = vld [vmem:[%s402 + $0x80] sm:$0xf]
      %v2455 = vld [vmem:[%s402 + $0x84] sm:$0xf]
      %v2456 = vld [vmem:[%s402 + $0x88] sm:$0xf]
      %v2457 = vld [vmem:[%s402 + $0x8c] sm:$0xf]
      %v2458 = vld [vmem:[%s402 + $0x90] sm:$0xf]
      %v2459 = vld [vmem:[%s402 + $0x94] sm:$0xf]
      %v2460 = vld [vmem:[%s402 + $0x98] sm:$0xf]
      %v2461 = vld [vmem:[%s402 + $0x9c] sm:$0xf]
      %v2462 = vld [vmem:[%s402 + $0xa0] sm:$0xf]
      %v2463 = vld [vmem:[%s402 + $0xa4] sm:$0xf]
      %v2464 = vld [vmem:[%s402 + $0xa8] sm:$0xf]
      %v2465 = vld [vmem:[%s402 + $0xac] sm:$0xf]
      %v2466 = vld [vmem:[%s402 + $0xb0] sm:$0xf]
      %v2467 = vld [vmem:[%s402 + $0xb4] sm:$0xf]
      %v2468 = vld [vmem:[%s402 + $0xb8] sm:$0xf]
      %v2469 = vld [vmem:[%s402 + $0xbc] sm:$0xf]
      %v2470 = vld [vmem:[%s402 + $0xc0] sm:$0xf]
      %v2471 = vld [vmem:[%s402 + $0xc4] sm:$0xf]
      %v2472 = vld [vmem:[%s402 + $0xc8] sm:$0xf]
      %v2473 = vld [vmem:[%s402 + $0xcc] sm:$0xf]
      %v2474 = vld [vmem:[%s402 + $0xd0] sm:$0xf]
      %v2475 = vld [vmem:[%s402 + $0xd4] sm:$0xf]
      %v2476 = vld [vmem:[%s402 + $0xd8] sm:$0x1]
      %v2526 = vunpack.c.l.b16 %v2428
      %v2527 = vunpack.c.l.b16 %v2429
      %v2528 = vunpack.c.l.b16 %v2430
      %v2529 = vunpack.c.l.b16 %v2431
      %v2530 = vunpack.c.l.b16 %v2432
      %v2531 = vunpack.c.l.b16 %v2433
      %v2532 = vunpack.c.l.b16 %v2434
      %v2533 = vunpack.c.l.b16 %v2435
      %v2534 = vunpack.c.l.b16 %v2436
      %v2535 = vunpack.c.l.b16 %v2437
      %v2536 = vunpack.c.l.b16 %v2438
      %v2537 = vunpack.c.l.b16 %v2439
      %v2538 = vunpack.c.l.b16 %v2440
      %v2539 = vunpack.c.l.b16 %v2441
      %v2540 = vunpack.c.l.b16 %v2442
      %v2541 = vunpack.c.l.b16 %v2443
      %v2542 = vunpack.c.l.b16 %v2444
      %v2543 = vunpack.c.l.b16 %v2445
      %v2544 = vunpack.c.l.b16 %v2446
      %v2545 = vunpack.c.l.b16 %v2447
      %v2546 = vunpack.c.l.b16 %v2448
      %v2547 = vunpack.c.l.b16 %v2449
      %v2548 = vunpack.c.l.b16 %v2450
      %v2549 = vunpack.c.l.b16 %v2451
      %v2550 = vunpack.c.l.b16 %v2452
      %v2551 = vunpack.c.l.b16 %v2453
      %v2552 = vunpack.c.l.b16 %v2454
      %v2553 = vunpack.c.l.b16 %v2455
      %v2554 = vunpack.c.l.b16 %v2456
      %v2555 = vunpack.c.l.b16 %v2457
      %v2556 = vunpack.c.l.b16 %v2458
      %v2557 = vunpack.c.l.b16 %v2459
      %v2558 = vunpack.c.l.b16 %v2460
      %v2559 = vunpack.c.l.b16 %v2461
      %v2560 = vunpack.c.l.b16 %v2462
      %v2561 = vunpack.c.l.b16 %v2463
      %v2562 = vunpack.c.l.b16 %v2464
      %v2563 = vunpack.c.l.b16 %v2465
      %v2564 = vunpack.c.l.b16 %v2466
      %v2565 = vunpack.c.l.b16 %v2467
      %v2566 = vunpack.c.l.b16 %v2468
      %v2567 = vunpack.c.l.b16 %v2469
      %v2568 = vunpack.c.l.b16 %v2470
      %v2569 = vunpack.c.l.b16 %v2471
      %v2570 = vunpack.c.l.b16 %v2472
      %v2571 = vunpack.c.l.b16 %v2473
      %v2572 = vunpack.c.l.b16 %v2474
      %v2573 = vunpack.c.l.b16 %v2475
      %v2574 = vunpack.c.l.b16 %v2476
      %v2575 = vpack.c.b16 %v2527, %v2526
      %v2576 = vpack.c.b16 %v2529, %v2528
      %v2577 = vpack.c.b16 %v2531, %v2530
      %v2578 = vpack.c.b16 %v2533, %v2532
      %v2579 = vpack.c.b16 %v2535, %v2534
      %v2580 = vpack.c.b16 %v2537, %v2536
      %v2581 = vpack.c.b16 %v2539, %v2538
      %v2582 = vpack.c.b16 %v2541, %v2540
      %v2583 = vpack.c.b16 %v2543, %v2542
      %v2584 = vpack.c.b16 %v2545, %v2544
      %v2585 = vpack.c.b16 %v2547, %v2546
      %v2586 = vpack.c.b16 %v2549, %v2548
      %v2587 = vpack.c.b16 %v2551, %v2550
      %v2588 = vpack.c.b16 %v2553, %v2552
      %v2589 = vpack.c.b16 %v2555, %v2554
      %v2590 = vpack.c.b16 %v2557, %v2556
      %v2591 = vpack.c.b16 %v2559, %v2558
      %v2592 = vpack.c.b16 %v2561, %v2560
      %v2593 = vpack.c.b16 %v2563, %v2562
      %v2594 = vpack.c.b16 %v2565, %v2564
      %v2595 = vpack.c.b16 %v2567, %v2566
      %v2596 = vpack.c.b16 %v2569, %v2568
      %v2597 = vpack.c.b16 %v2571, %v2570
      %v2598 = vpack.c.b16 %v2573, %v2572
      %v2599 = vpack.c.b16 %v2574, %v2574
      %v2601 = vshrl.u32 %v2575, 16
      %v2603 = vshll.u32 %v2575, 16
      %v2605 = vrot.slane %v2603, 1
      %v2606 = vor.u32 %v2601, %v2605
      %v2608 = vshll.u32 %v2576, 16
      %v2610 = vrot.slane %v2608, 1
      %v2611 = vsel %vm796, %v2606, %v2610
      %v2612 = vshrl.u32 %v2576, 16
      %v2614 = vor.u32 %v2612, %v2610
      %v2616 = vshll.u32 %v2577, 16
      %v2618 = vrot.slane %v2616, 1
      %v2619 = vsel %vm796, %v2614, %v2618
      %v2620 = vshrl.u32 %v2577, 16
      %v2622 = vor.u32 %v2620, %v2618
      %v2624 = vshll.u32 %v2578, 16
      %v2626 = vrot.slane %v2624, 1
      %v2627 = vsel %vm796, %v2622, %v2626
      %v2628 = vshrl.u32 %v2578, 16
      %v2630 = vor.u32 %v2628, %v2626
      %v2632 = vshll.u32 %v2579, 16
      %v2634 = vrot.slane %v2632, 1
      %v2635 = vsel %vm796, %v2630, %v2634
      %v2636 = vshrl.u32 %v2579, 16
      %v2638 = vor.u32 %v2636, %v2634
      %v2640 = vshll.u32 %v2580, 16
      %v2642 = vrot.slane %v2640, 1
      %v2643 = vsel %vm796, %v2638, %v2642
      %v2644 = vshrl.u32 %v2580, 16
      %v2646 = vor.u32 %v2644, %v2642
      %v2648 = vshll.u32 %v2581, 16
      %v2650 = vrot.slane %v2648, 1
      %v2651 = vsel %vm796, %v2646, %v2650
      %v2652 = vshrl.u32 %v2581, 16
      %v2654 = vor.u32 %v2652, %v2650
      %v2656 = vshll.u32 %v2582, 16
      %v2658 = vrot.slane %v2656, 1
      %v2659 = vsel %vm796, %v2654, %v2658
      %v2660 = vshrl.u32 %v2582, 16
      %v2662 = vor.u32 %v2660, %v2658
      %v2664 = vshll.u32 %v2583, 16
      %v2666 = vrot.slane %v2664, 1
      %v2667 = vsel %vm796, %v2662, %v2666
      %v2668 = vshrl.u32 %v2583, 16
      %v2670 = vor.u32 %v2668, %v2666
      %v2672 = vshll.u32 %v2584, 16
      %v2674 = vrot.slane %v2672, 1
      %v2675 = vsel %vm796, %v2670, %v2674
      %v2676 = vshrl.u32 %v2584, 16
      %v2678 = vor.u32 %v2676, %v2674
      %v2680 = vshll.u32 %v2585, 16
      %v2682 = vrot.slane %v2680, 1
      %v2683 = vsel %vm796, %v2678, %v2682
      %v2684 = vshrl.u32 %v2585, 16
      %v2686 = vor.u32 %v2684, %v2682
      %v2688 = vshll.u32 %v2586, 16
      %v2690 = vrot.slane %v2688, 1
      %v2691 = vsel %vm796, %v2686, %v2690
      %v2692 = vshrl.u32 %v2586, 16
      %v2694 = vor.u32 %v2692, %v2690
      %v2696 = vshll.u32 %v2587, 16
      %v2698 = vrot.slane %v2696, 1
      %v2699 = vsel %vm796, %v2694, %v2698
      %v2700 = vshrl.u32 %v2587, 16
      %v2702 = vor.u32 %v2700, %v2698
      %v2704 = vshll.u32 %v2588, 16
      %v2706 = vrot.slane %v2704, 1
      %v2707 = vsel %vm796, %v2702, %v2706
      %v2708 = vshrl.u32 %v2588, 16
      %v2710 = vor.u32 %v2708, %v2706
      %v2712 = vshll.u32 %v2589, 16
      %v2714 = vrot.slane %v2712, 1
      %v2715 = vsel %vm796, %v2710, %v2714
      %v2716 = vshrl.u32 %v2589, 16
      %v2718 = vor.u32 %v2716, %v2714
      %v2720 = vshll.u32 %v2590, 16
      %v2722 = vrot.slane %v2720, 1
      %v2723 = vsel %vm796, %v2718, %v2722
      %v2724 = vshrl.u32 %v2590, 16
      %v2726 = vor.u32 %v2724, %v2722
      %v2728 = vshll.u32 %v2591, 16
      %v2730 = vrot.slane %v2728, 1
      %v2731 = vsel %vm796, %v2726, %v2730
      %v2732 = vshrl.u32 %v2591, 16
      %v2734 = vor.u32 %v2732, %v2730
      %v2736 = vshll.u32 %v2592, 16
      %v2738 = vrot.slane %v2736, 1
      %v2739 = vsel %vm796, %v2734, %v2738
      %v2740 = vshrl.u32 %v2592, 16
      %v2742 = vor.u32 %v2740, %v2738
      %v2744 = vshll.u32 %v2593, 16
      %v2746 = vrot.slane %v2744, 1
      %v2747 = vsel %vm796, %v2742, %v2746
      %v2748 = vshrl.u32 %v2593, 16
      %v2750 = vor.u32 %v2748, %v2746
      %v2752 = vshll.u32 %v2594, 16
      %v2754 = vrot.slane %v2752, 1
      %v2755 = vsel %vm796, %v2750, %v2754
      %v2756 = vshrl.u32 %v2594, 16
      %v2758 = vor.u32 %v2756, %v2754
      %v2760 = vshll.u32 %v2595, 16
      %v2762 = vrot.slane %v2760, 1
      %v2763 = vsel %vm796, %v2758, %v2762
      %v2764 = vshrl.u32 %v2595, 16
      %v2766 = vor.u32 %v2764, %v2762
      %v2768 = vshll.u32 %v2596, 16
      %v2770 = vrot.slane %v2768, 1
      %v2771 = vsel %vm796, %v2766, %v2770
      %v2772 = vshrl.u32 %v2596, 16
      %v2774 = vor.u32 %v2772, %v2770
      %v2776 = vshll.u32 %v2597, 16
      %v2778 = vrot.slane %v2776, 1
      %v2779 = vsel %vm796, %v2774, %v2778
      %v2780 = vshrl.u32 %v2597, 16
      %v2782 = vor.u32 %v2780, %v2778
      %v2784 = vshll.u32 %v2598, 16
      %v2786 = vrot.slane %v2784, 1
      %v2787 = vsel %vm796, %v2782, %v2786
      %v2788 = vshrl.u32 %v2598, 16
      %v2790 = vor.u32 %v2788, %v2786
      %v2792 = vshll.u32 %v2599, 16
      %v2794 = vrot.slane %v2792, 1
      %v2795 = vsel %vm796, %v2790, %v2794
      %2820 = vst [vmem:[#allocation3 + $0x38] sm:$0xff] %v2611
      %2821 = vst [vmem:[#allocation3 + $0x80] sm:$0xff] %v2619
      %2822 = vst [vmem:[#allocation3 + $0xc8] sm:$0xff] %v2627
      %2823 = vst [vmem:[#allocation3 + $0x110] sm:$0xff] %v2635
      %2824 = vst [vmem:[#allocation3 + $0x158] sm:$0xff] %v2643
      %2825 = vst [vmem:[#allocation3 + $0x1a0] sm:$0xff] %v2651
      %2826 = vst [vmem:[#allocation3 + $0x1e8] sm:$0xff] %v2659
      %2827 = vst [vmem:[#allocation3 + $0x230] sm:$0xff] %v2667
      %2828 = vst [vmem:[#allocation3 + $0x278] sm:$0xff] %v2675
      %2829 = vst [vmem:[#allocation3 + $0x2c0] sm:$0xff] %v2683
      %2830 = vst [vmem:[#allocation3 + $0x308] sm:$0xff] %v2691
      %2831 = vst [vmem:[#allocation3 + $0x350] sm:$0xff] %v2699
      %2832 = vst [vmem:[#allocation3 + $0x398] sm:$0xff] %v2707
      %2833 = vst [vmem:[#allocation3 + $0x3e0] sm:$0xff] %v2715
      %2834 = vst [vmem:[#allocation3 + $0x428] sm:$0xff] %v2723
      %2835 = vst [vmem:[#allocation3 + $0x470] sm:$0xff] %v2731
      %2836 = vst [vmem:[#allocation3 + $0x4b8] sm:$0xff] %v2739
      %2837 = vst [vmem:[#allocation3 + $0x500] sm:$0xff] %v2747
      %2838 = vst [vmem:[#allocation3 + $0x548] sm:$0xff] %v2755
      %2839 = vst [vmem:[#allocation3 + $0x590] sm:$0xff] %v2763
      %2840 = vst [vmem:[#allocation3 + $0x5d8] sm:$0xff] %v2771
      %2841 = vst [vmem:[#allocation3 + $0x620] sm:$0xff] %v2779
      %2842 = vst [vmem:[#allocation3 + $0x668] sm:$0xff] %v2787
      %2843 = vst [vmem:[#allocation3 + $0x6b0] sm:$0xff] %v2795
      %v2844 = vld [vmem:[%s402 + $0x18] sm:$0xe]
      %v2845 = vld [vmem:[%s402 + $0x1c] sm:$0xf]
      %v2846 = vld [vmem:[%s402 + $0x20] sm:$0xf]
      %v2847 = vld [vmem:[%s402 + $0x24] sm:$0xf]
      %v2848 = vld [vmem:[%s402 + $0x28] sm:$0xf]
      %v2849 = vld [vmem:[%s402 + $0x2c] sm:$0xf]
      %v2850 = vld [vmem:[%s402 + $0x30] sm:$0xf]
      %v2851 = vld [vmem:[%s402 + $0x34] sm:$0xf]
      %v2852 = vld [vmem:[%s402 + $0x38] sm:$0xf]
      %v2853 = vld [vmem:[%s402 + $0x3c] sm:$0xf]
      %v2854 = vld [vmem:[%s402 + $0x40] sm:$0xf]
      %v2855 = vld [vmem:[%s402 + $0x44] sm:$0xf]
      %v2856 = vld [vmem:[%s402 + $0x48] sm:$0xf]
      %v2857 = vld [vmem:[%s402 + $0x4c] sm:$0xf]
      %v2858 = vld [vmem:[%s402 + $0x50] sm:$0xf]
      %v2859 = vld [vmem:[%s402 + $0x54] sm:$0xf]
      %v2860 = vld [vmem:[%s402 + $0x58] sm:$0xf]
      %v2861 = vld [vmem:[%s402 + $0x5c] sm:$0xf]
      %v2862 = vld [vmem:[%s402 + $0x60] sm:$0xf]
      %v2863 = vld [vmem:[%s402 + $0x64] sm:$0xf]
      %v2864 = vld [vmem:[%s402 + $0x68] sm:$0xf]
      %v2865 = vld [vmem:[%s402 + $0x6c] sm:$0xf]
      %v2866 = vld [vmem:[%s402 + $0x70] sm:$0xf]
      %v2867 = vld [vmem:[%s402 + $0x74] sm:$0xf]
      %v2868 = vld [vmem:[%s402 + $0x78] sm:$0xf]
      %v2869 = vld [vmem:[%s402 + $0x7c] sm:$0xf]
      %v2870 = vld [vmem:[%s402 + $0x80] sm:$0xf]
      %v2871 = vld [vmem:[%s402 + $0x84] sm:$0xf]
      %v2872 = vld [vmem:[%s402 + $0x88] sm:$0xf]
      %v2873 = vld [vmem:[%s402 + $0x8c] sm:$0xf]
      %v2874 = vld [vmem:[%s402 + $0x90] sm:$0xf]
      %v2875 = vld [vmem:[%s402 + $0x94] sm:$0xf]
      %v2876 = vld [vmem:[%s402 + $0x98] sm:$0xf]
      %v2877 = vld [vmem:[%s402 + $0x9c] sm:$0xf]
      %v2878 = vld [vmem:[%s402 + $0xa0] sm:$0xf]
      %v2879 = vld [vmem:[%s402 + $0xa4] sm:$0xf]
      %v2880 = vld [vmem:[%s402 + $0xa8] sm:$0xf]
      %v2881 = vld [vmem:[%s402 + $0xac] sm:$0xf]
      %v2882 = vld [vmem:[%s402 + $0xb0] sm:$0xf]
      %v2883 = vld [vmem:[%s402 + $0xb4] sm:$0xf]
      %v2884 = vld [vmem:[%s402 + $0xb8] sm:$0xf]
      %v2885 = vld [vmem:[%s402 + $0xbc] sm:$0xf]
      %v2886 = vld [vmem:[%s402 + $0xc0] sm:$0xf]
      %v2887 = vld [vmem:[%s402 + $0xc4] sm:$0xf]
      %v2888 = vld [vmem:[%s402 + $0xc8] sm:$0xf]
      %v2889 = vld [vmem:[%s402 + $0xcc] sm:$0xf]
      %v2890 = vld [vmem:[%s402 + $0xd0] sm:$0xf]
      %v2891 = vld [vmem:[%s402 + $0xd4] sm:$0xf]
      %v2892 = vld [vmem:[%s402 + $0xd8] sm:$0x1]
      %v2942 = vunpack.c.l.b16 %v2844
      %v2943 = vunpack.c.l.b16 %v2845
      %v2944 = vunpack.c.l.b16 %v2846
      %v2945 = vunpack.c.l.b16 %v2847
      %v2946 = vunpack.c.l.b16 %v2848
      %v2947 = vunpack.c.l.b16 %v2849
      %v2948 = vunpack.c.l.b16 %v2850
      %v2949 = vunpack.c.l.b16 %v2851
      %v2950 = vunpack.c.l.b16 %v2852
      %v2951 = vunpack.c.l.b16 %v2853
      %v2952 = vunpack.c.l.b16 %v2854
      %v2953 = vunpack.c.l.b16 %v2855
      %v2954 = vunpack.c.l.b16 %v2856
      %v2955 = vunpack.c.l.b16 %v2857
      %v2956 = vunpack.c.l.b16 %v2858
      %v2957 = vunpack.c.l.b16 %v2859
      %v2958 = vunpack.c.l.b16 %v2860
      %v2959 = vunpack.c.l.b16 %v2861
      %v2960 = vunpack.c.l.b16 %v2862
      %v2961 = vunpack.c.l.b16 %v2863
      %v2962 = vunpack.c.l.b16 %v2864
      %v2963 = vunpack.c.l.b16 %v2865
      %v2964 = vunpack.c.l.b16 %v2866
      %v2965 = vunpack.c.l.b16 %v2867
      %v2966 = vunpack.c.l.b16 %v2868
      %v2967 = vunpack.c.l.b16 %v2869
      %v2968 = vunpack.c.l.b16 %v2870
      %v2969 = vunpack.c.l.b16 %v2871
      %v2970 = vunpack.c.l.b16 %v2872
      %v2971 = vunpack.c.l.b16 %v2873
      %v2972 = vunpack.c.l.b16 %v2874
      %v2973 = vunpack.c.l.b16 %v2875
      %v2974 = vunpack.c.l.b16 %v2876
      %v2975 = vunpack.c.l.b16 %v2877
      %v2976 = vunpack.c.l.b16 %v2878
      %v2977 = vunpack.c.l.b16 %v2879
      %v2978 = vunpack.c.l.b16 %v2880
      %v2979 = vunpack.c.l.b16 %v2881
      %v2980 = vunpack.c.l.b16 %v2882
      %v2981 = vunpack.c.l.b16 %v2883
      %v2982 = vunpack.c.l.b16 %v2884
      %v2983 = vunpack.c.l.b16 %v2885
      %v2984 = vunpack.c.l.b16 %v2886
      %v2985 = vunpack.c.l.b16 %v2887
      %v2986 = vunpack.c.l.b16 %v2888
      %v2987 = vunpack.c.l.b16 %v2889
      %v2988 = vunpack.c.l.b16 %v2890
      %v2989 = vunpack.c.l.b16 %v2891
      %v2990 = vunpack.c.l.b16 %v2892
      %v2991 = vpack.c.b16 %v2943, %v2942
      %v2992 = vpack.c.b16 %v2945, %v2944
      %v2993 = vpack.c.b16 %v2947, %v2946
      %v2994 = vpack.c.b16 %v2949, %v2948
      %v2995 = vpack.c.b16 %v2951, %v2950
      %v2996 = vpack.c.b16 %v2953, %v2952
      %v2997 = vpack.c.b16 %v2955, %v2954
      %v2998 = vpack.c.b16 %v2957, %v2956
      %v2999 = vpack.c.b16 %v2959, %v2958
      %v3000 = vpack.c.b16 %v2961, %v2960
      %v3001 = vpack.c.b16 %v2963, %v2962
      %v3002 = vpack.c.b16 %v2965, %v2964
      %v3003 = vpack.c.b16 %v2967, %v2966
      %v3004 = vpack.c.b16 %v2969, %v2968
      %v3005 = vpack.c.b16 %v2971, %v2970
      %v3006 = vpack.c.b16 %v2973, %v2972
      %v3007 = vpack.c.b16 %v2975, %v2974
      %v3008 = vpack.c.b16 %v2977, %v2976
      %v3009 = vpack.c.b16 %v2979, %v2978
      %v3010 = vpack.c.b16 %v2981, %v2980
      %v3011 = vpack.c.b16 %v2983, %v2982
      %v3012 = vpack.c.b16 %v2985, %v2984
      %v3013 = vpack.c.b16 %v2987, %v2986
      %v3014 = vpack.c.b16 %v2989, %v2988
      %v3015 = vpack.c.b16 %v2990, %v2990
      %v3016 = vrot.slane %v2991, 1
      %v3017 = vrot.slane %v2992, 1
      %v3018 = vsel %vm1213, %v3016, %v3017
      %v3019 = vrot.slane %v2993, 1
      %v3020 = vsel %vm1213, %v3017, %v3019
      %v3021 = vrot.slane %v2994, 1
      %v3022 = vsel %vm1213, %v3019, %v3021
      %v3023 = vrot.slane %v2995, 1
      %v3024 = vsel %vm1213, %v3021, %v3023
      %v3025 = vrot.slane %v2996, 1
      %v3026 = vsel %vm1213, %v3023, %v3025
      %v3027 = vrot.slane %v2997, 1
      %v3028 = vsel %vm1213, %v3025, %v3027
      %v3029 = vrot.slane %v2998, 1
      %v3030 = vsel %vm1213, %v3027, %v3029
      %v3031 = vrot.slane %v2999, 1
      %v3032 = vsel %vm1213, %v3029, %v3031
      %v3033 = vrot.slane %v3000, 1
      %v3034 = vsel %vm1213, %v3031, %v3033
      %v3035 = vrot.slane %v3001, 1
      %v3036 = vsel %vm1213, %v3033, %v3035
      %v3037 = vrot.slane %v3002, 1
      %v3038 = vsel %vm1213, %v3035, %v3037
      %v3039 = vrot.slane %v3003, 1
      %v3040 = vsel %vm1213, %v3037, %v3039
      %v3041 = vrot.slane %v3004, 1
      %v3042 = vsel %vm1213, %v3039, %v3041
      %v3043 = vrot.slane %v3005, 1
      %v3044 = vsel %vm1213, %v3041, %v3043
      %v3045 = vrot.slane %v3006, 1
      %v3046 = vsel %vm1213, %v3043, %v3045
      %v3047 = vrot.slane %v3007, 1
      %v3048 = vsel %vm1213, %v3045, %v3047
      %v3049 = vrot.slane %v3008, 1
      %v3050 = vsel %vm1213, %v3047, %v3049
      %v3051 = vrot.slane %v3009, 1
      %v3052 = vsel %vm1213, %v3049, %v3051
      %v3053 = vrot.slane %v3010, 1
      %v3054 = vsel %vm1213, %v3051, %v3053
      %v3055 = vrot.slane %v3011, 1
      %v3056 = vsel %vm1213, %v3053, %v3055
      %v3057 = vrot.slane %v3012, 1
      %v3058 = vsel %vm1213, %v3055, %v3057
      %v3059 = vrot.slane %v3013, 1
      %v3060 = vsel %vm1213, %v3057, %v3059
      %v3061 = vrot.slane %v3014, 1
      %v3062 = vsel %vm1213, %v3059, %v3061
      %v3063 = vrot.slane %v3015, 1
      %v3064 = vsel %vm1213, %v3061, %v3063
      %3089 = vst [vmem:[#allocation3 + $0x40] sm:$0xff] %v3018
      %3090 = vst [vmem:[#allocation3 + $0x88] sm:$0xff] %v3020
      %3091 = vst [vmem:[#allocation3 + $0xd0] sm:$0xff] %v3022
      %3092 = vst [vmem:[#allocation3 + $0x118] sm:$0xff] %v3024
      %3093 = vst [vmem:[#allocation3 + $0x160] sm:$0xff] %v3026
      %3094 = vst [vmem:[#allocation3 + $0x1a8] sm:$0xff] %v3028
      %3095 = vst [vmem:[#allocation3 + $0x1f0] sm:$0xff] %v3030
      %3096 = vst [vmem:[#allocation3 + $0x238] sm:$0xff] %v3032
      %3097 = vst [vmem:[#allocation3 + $0x280] sm:$0xff] %v3034
      %3098 = vst [vmem:[#allocation3 + $0x2c8] sm:$0xff] %v3036
      %3099 = vst [vmem:[#allocation3 + $0x310] sm:$0xff] %v3038
      %3100 = vst [vmem:[#allocation3 + $0x358] sm:$0xff] %v3040
      %3101 = vst [vmem:[#allocation3 + $0x3a0] sm:$0xff] %v3042
      %3102 = vst [vmem:[#allocation3 + $0x3e8] sm:$0xff] %v3044
      %3103 = vst [vmem:[#allocation3 + $0x430] sm:$0xff] %v3046
      %3104 = vst [vmem:[#allocation3 + $0x478] sm:$0xff] %v3048
      %3105 = vst [vmem:[#allocation3 + $0x4c0] sm:$0xff] %v3050
      %3106 = vst [vmem:[#allocation3 + $0x508] sm:$0xff] %v3052
      %3107 = vst [vmem:[#allocation3 + $0x550] sm:$0xff] %v3054
      %3108 = vst [vmem:[#allocation3 + $0x598] sm:$0xff] %v3056
      %3109 = vst [vmem:[#allocation3 + $0x5e0] sm:$0xff] %v3058
      %3110 = vst [vmem:[#allocation3 + $0x628] sm:$0xff] %v3060
      %3111 = vst [vmem:[#allocation3 + $0x670] sm:$0xff] %v3062
      %3112 = vst [vmem:[#allocation3 + $0x6b8] sm:$0xff] %v3064
      %v3113 = vld [vmem:[#allocation3] sm:$0xff]
      %v3114 = vld [vmem:[#allocation3 + $0x8] sm:$0xff]
      %v3115 = vld [vmem:[#allocation3 + $0x10] sm:$0xff]
      %v3116 = vld [vmem:[#allocation3 + $0x18] sm:$0xff]
      %v3117 = vld [vmem:[#allocation3 + $0x20] sm:$0xff]
      %v3118 = vld [vmem:[#allocation3 + $0x28] sm:$0xff]
      %v3119 = vld [vmem:[#allocation3 + $0x30] sm:$0xff]
      %v3120 = vld [vmem:[#allocation3 + $0x38] sm:$0xff]
      %v3121 = vld [vmem:[#allocation3 + $0x40] sm:$0xff]
      %v3122 = vld [vmem:[#allocation3 + $0x48] sm:$0xff]
      %v3123 = vld [vmem:[#allocation3 + $0x50] sm:$0xff]
      %v3124 = vld [vmem:[#allocation3 + $0x58] sm:$0xff]
      %v3125 = vld [vmem:[#allocation3 + $0x60] sm:$0xff]
      %v3126 = vld [vmem:[#allocation3 + $0x68] sm:$0xff]
      %v3127 = vld [vmem:[#allocation3 + $0x70] sm:$0xff]
      %v3128 = vld [vmem:[#allocation3 + $0x78] sm:$0xff]
      %v3129 = vld [vmem:[#allocation3 + $0x80] sm:$0xff]
      %v3130 = vld [vmem:[#allocation3 + $0x88] sm:$0xff]
      %v3131 = vld [vmem:[#allocation3 + $0x90] sm:$0xff]
      %v3132 = vld [vmem:[#allocation3 + $0x98] sm:$0xff]
      %v3133 = vld [vmem:[#allocation3 + $0xa0] sm:$0xff]
      %v3134 = vld [vmem:[#allocation3 + $0xa8] sm:$0xff]
      %v3135 = vld [vmem:[#allocation3 + $0xb0] sm:$0xff]
      %v3136 = vld [vmem:[#allocation3 + $0xb8] sm:$0xff]
      %v3137 = vld [vmem:[#allocation3 + $0xc0] sm:$0xff]
      %v3138 = vld [vmem:[#allocation3 + $0xc8] sm:$0xff]
      %v3139 = vld [vmem:[#allocation3 + $0xd0] sm:$0xff]
      %v3140 = vld [vmem:[#allocation3 + $0xd8] sm:$0xff]
      %v3141 = vld [vmem:[#allocation3 + $0xe0] sm:$0xff]
      %v3142 = vld [vmem:[#allocation3 + $0xe8] sm:$0xff]
      %v3143 = vld [vmem:[#allocation3 + $0xf0] sm:$0xff]
      %v3144 = vld [vmem:[#allocation3 + $0xf8] sm:$0xff]
      %v3145 = vld [vmem:[#allocation3 + $0x100] sm:$0xff]
      %v3146 = vld [vmem:[#allocation3 + $0x108] sm:$0xff]
      %v3147 = vld [vmem:[#allocation3 + $0x110] sm:$0xff]
      %v3148 = vld [vmem:[#allocation3 + $0x118] sm:$0xff]
      %v3149 = vld [vmem:[#allocation3 + $0x120] sm:$0xff]
      %v3150 = vld [vmem:[#allocation3 + $0x128] sm:$0xff]
      %v3151 = vld [vmem:[#allocation3 + $0x130] sm:$0xff]
      %v3152 = vld [vmem:[#allocation3 + $0x138] sm:$0xff]
      %v3153 = vld [vmem:[#allocation3 + $0x140] sm:$0xff]
      %v3154 = vld [vmem:[#allocation3 + $0x148] sm:$0xff]
      %v3155 = vld [vmem:[#allocation3 + $0x150] sm:$0xff]
      %v3156 = vld [vmem:[#allocation3 + $0x158] sm:$0xff]
      %v3157 = vld [vmem:[#allocation3 + $0x160] sm:$0xff]
      %v3158 = vld [vmem:[#allocation3 + $0x168] sm:$0xff]
      %v3159 = vld [vmem:[#allocation3 + $0x170] sm:$0xff]
      %v3160 = vld [vmem:[#allocation3 + $0x178] sm:$0xff]
      %v3161 = vld [vmem:[#allocation3 + $0x180] sm:$0xff]
      %v3162 = vld [vmem:[#allocation3 + $0x188] sm:$0xff]
      %v3163 = vld [vmem:[#allocation3 + $0x190] sm:$0xff]
      %v3164 = vld [vmem:[#allocation3 + $0x198] sm:$0xff]
      %v3165 = vld [vmem:[#allocation3 + $0x1a0] sm:$0xff]
      %v3166 = vld [vmem:[#allocation3 + $0x1a8] sm:$0xff]
      %v3167 = vld [vmem:[#allocation3 + $0x1b0] sm:$0xff]
      %v3168 = vld [vmem:[#allocation3 + $0x1b8] sm:$0xff]
      %v3169 = vld [vmem:[#allocation3 + $0x1c0] sm:$0xff]
      %v3170 = vld [vmem:[#allocation3 + $0x1c8] sm:$0xff]
      %v3171 = vld [vmem:[#allocation3 + $0x1d0] sm:$0xff]
      %v3172 = vld [vmem:[#allocation3 + $0x1d8] sm:$0xff]
      %v3173 = vld [vmem:[#allocation3 + $0x1e0] sm:$0xff]
      %v3174 = vld [vmem:[#allocation3 + $0x1e8] sm:$0xff]
      %v3175 = vld [vmem:[#allocation3 + $0x1f0] sm:$0xff]
      %v3176 = vld [vmem:[#allocation3 + $0x1f8] sm:$0xff]
      %v3177 = vld [vmem:[#allocation3 + $0x200] sm:$0xff]
      %v3178 = vld [vmem:[#allocation3 + $0x208] sm:$0xff]
      %v3179 = vld [vmem:[#allocation3 + $0x210] sm:$0xff]
      %v3180 = vld [vmem:[#allocation3 + $0x218] sm:$0xff]
      %v3181 = vld [vmem:[#allocation3 + $0x220] sm:$0xff]
      %v3182 = vld [vmem:[#allocation3 + $0x228] sm:$0xff]
      %v3183 = vld [vmem:[#allocation3 + $0x230] sm:$0xff]
      %v3184 = vld [vmem:[#allocation3 + $0x238] sm:$0xff]
      %v3185 = vld [vmem:[#allocation3 + $0x240] sm:$0xff]
      %v3186 = vld [vmem:[#allocation3 + $0x248] sm:$0xff]
      %v3187 = vld [vmem:[#allocation3 + $0x250] sm:$0xff]
      %v3188 = vld [vmem:[#allocation3 + $0x258] sm:$0xff]
      %v3189 = vld [vmem:[#allocation3 + $0x260] sm:$0xff]
      %v3190 = vld [vmem:[#allocation3 + $0x268] sm:$0xff]
      %v3191 = vld [vmem:[#allocation3 + $0x270] sm:$0xff]
      %v3192 = vld [vmem:[#allocation3 + $0x278] sm:$0xff]
      %v3193 = vld [vmem:[#allocation3 + $0x280] sm:$0xff]
      %v3194 = vld [vmem:[#allocation3 + $0x288] sm:$0xff]
      %v3195 = vld [vmem:[#allocation3 + $0x290] sm:$0xff]
      %v3196 = vld [vmem:[#allocation3 + $0x298] sm:$0xff]
      %v3197 = vld [vmem:[#allocation3 + $0x2a0] sm:$0xff]
      %v3198 = vld [vmem:[#allocation3 + $0x2a8] sm:$0xff]
      %v3199 = vld [vmem:[#allocation3 + $0x2b0] sm:$0xff]
      %v3200 = vld [vmem:[#allocation3 + $0x2b8] sm:$0xff]
      %v3201 = vld [vmem:[#allocation3 + $0x2c0] sm:$0xff]
      %v3202 = vld [vmem:[#allocation3 + $0x2c8] sm:$0xff]
      %v3203 = vld [vmem:[#allocation3 + $0x2d0] sm:$0xff]
      %v3204 = vld [vmem:[#allocation3 + $0x2d8] sm:$0xff]
      %v3205 = vld [vmem:[#allocation3 + $0x2e0] sm:$0xff]
      %v3206 = vld [vmem:[#allocation3 + $0x2e8] sm:$0xff]
      %v3207 = vld [vmem:[#allocation3 + $0x2f0] sm:$0xff]
      %v3208 = vld [vmem:[#allocation3 + $0x2f8] sm:$0xff]
      %v3209 = vld [vmem:[#allocation3 + $0x300] sm:$0xff]
      %v3210 = vld [vmem:[#allocation3 + $0x308] sm:$0xff]
      %v3211 = vld [vmem:[#allocation3 + $0x310] sm:$0xff]
      %v3212 = vld [vmem:[#allocation3 + $0x318] sm:$0xff]
      %v3213 = vld [vmem:[#allocation3 + $0x320] sm:$0xff]
      %v3214 = vld [vmem:[#allocation3 + $0x328] sm:$0xff]
      %v3215 = vld [vmem:[#allocation3 + $0x330] sm:$0xff]
      %v3216 = vld [vmem:[#allocation3 + $0x338] sm:$0xff]
      %v3217 = vld [vmem:[#allocation3 + $0x340] sm:$0xff]
      %v3218 = vld [vmem:[#allocation3 + $0x348] sm:$0xff]
      %v3219 = vld [vmem:[#allocation3 + $0x350] sm:$0xff]
      %v3220 = vld [vmem:[#allocation3 + $0x358] sm:$0xff]
      %v3221 = vld [vmem:[#allocation3 + $0x360] sm:$0xff]
      %v3222 = vld [vmem:[#allocation3 + $0x368] sm:$0xff]
      %v3223 = vld [vmem:[#allocation3 + $0x370] sm:$0xff]
      %v3224 = vld [vmem:[#allocation3 + $0x378] sm:$0xff]
      %v3225 = vld [vmem:[#allocation3 + $0x380] sm:$0xff]
      %v3226 = vld [vmem:[#allocation3 + $0x388] sm:$0xff]
      %v3227 = vld [vmem:[#allocation3 + $0x390] sm:$0xff]
      %v3228 = vld [vmem:[#allocation3 + $0x398] sm:$0xff]
      %v3229 = vld [vmem:[#allocation3 + $0x3a0] sm:$0xff]
      %v3230 = vld [vmem:[#allocation3 + $0x3a8] sm:$0xff]
      %v3231 = vld [vmem:[#allocation3 + $0x3b0] sm:$0xff]
      %v3232 = vld [vmem:[#allocation3 + $0x3b8] sm:$0xff]
      %v3233 = vld [vmem:[#allocation3 + $0x3c0] sm:$0xff]
      %v3234 = vld [vmem:[#allocation3 + $0x3c8] sm:$0xff]
      %v3235 = vld [vmem:[#allocation3 + $0x3d0] sm:$0xff]
      %v3236 = vld [vmem:[#allocation3 + $0x3d8] sm:$0xff]
      %v3237 = vld [vmem:[#allocation3 + $0x3e0] sm:$0xff]
      %v3238 = vld [vmem:[#allocation3 + $0x3e8] sm:$0xff]
      %v3239 = vld [vmem:[#allocation3 + $0x3f0] sm:$0xff]
      %v3240 = vld [vmem:[#allocation3 + $0x3f8] sm:$0xff]
      %v3241 = vld [vmem:[#allocation3 + $0x400] sm:$0xff]
      %v3242 = vld [vmem:[#allocation3 + $0x408] sm:$0xff]
      %v3243 = vld [vmem:[#allocation3 + $0x410] sm:$0xff]
      %v3244 = vld [vmem:[#allocation3 + $0x418] sm:$0xff]
      %v3245 = vld [vmem:[#allocation3 + $0x420] sm:$0xff]
      %v3246 = vld [vmem:[#allocation3 + $0x428] sm:$0xff]
      %v3247 = vld [vmem:[#allocation3 + $0x430] sm:$0xff]
      %v3248 = vld [vmem:[#allocation3 + $0x438] sm:$0xff]
      %v3249 = vld [vmem:[#allocation3 + $0x440] sm:$0xff]
      %v3250 = vld [vmem:[#allocation3 + $0x448] sm:$0xff]
      %v3251 = vld [vmem:[#allocation3 + $0x450] sm:$0xff]
      %v3252 = vld [vmem:[#allocation3 + $0x458] sm:$0xff]
      %v3253 = vld [vmem:[#allocation3 + $0x460] sm:$0xff]
      %v3254 = vld [vmem:[#allocation3 + $0x468] sm:$0xff]
      %v3255 = vld [vmem:[#allocation3 + $0x470] sm:$0xff]
      %v3256 = vld [vmem:[#allocation3 + $0x478] sm:$0xff]
      %v3257 = vld [vmem:[#allocation3 + $0x480] sm:$0xff]
      %v3258 = vld [vmem:[#allocation3 + $0x488] sm:$0xff]
      %v3259 = vld [vmem:[#allocation3 + $0x490] sm:$0xff]
      %v3260 = vld [vmem:[#allocation3 + $0x498] sm:$0xff]
      %v3261 = vld [vmem:[#allocation3 + $0x4a0] sm:$0xff]
      %v3262 = vld [vmem:[#allocation3 + $0x4a8] sm:$0xff]
      %v3263 = vld [vmem:[#allocation3 + $0x4b0] sm:$0xff]
      %v3264 = vld [vmem:[#allocation3 + $0x4b8] sm:$0xff]
      %v3265 = vld [vmem:[#allocation3 + $0x4c0] sm:$0xff]
      %v3266 = vld [vmem:[#allocation3 + $0x4c8] sm:$0xff]
      %v3267 = vld [vmem:[#allocation3 + $0x4d0] sm:$0xff]
      %v3268 = vld [vmem:[#allocation3 + $0x4d8] sm:$0xff]
      %v3269 = vld [vmem:[#allocation3 + $0x4e0] sm:$0xff]
      %v3270 = vld [vmem:[#allocation3 + $0x4e8] sm:$0xff]
      %v3271 = vld [vmem:[#allocation3 + $0x4f0] sm:$0xff]
      %v3272 = vld [vmem:[#allocation3 + $0x4f8] sm:$0xff]
      %v3273 = vld [vmem:[#allocation3 + $0x500] sm:$0xff]
      %v3274 = vld [vmem:[#allocation3 + $0x508] sm:$0xff]
      %v3275 = vld [vmem:[#allocation3 + $0x510] sm:$0xff]
      %v3276 = vld [vmem:[#allocation3 + $0x518] sm:$0xff]
      %v3277 = vld [vmem:[#allocation3 + $0x520] sm:$0xff]
      %v3278 = vld [vmem:[#allocation3 + $0x528] sm:$0xff]
      %v3279 = vld [vmem:[#allocation3 + $0x530] sm:$0xff]
      %v3280 = vld [vmem:[#allocation3 + $0x538] sm:$0xff]
      %v3281 = vld [vmem:[#allocation3 + $0x540] sm:$0xff]
      %v3282 = vld [vmem:[#allocation3 + $0x548] sm:$0xff]
      %v3283 = vld [vmem:[#allocation3 + $0x550] sm:$0xff]
      %v3284 = vld [vmem:[#allocation3 + $0x558] sm:$0xff]
      %v3285 = vld [vmem:[#allocation3 + $0x560] sm:$0xff]
      %v3286 = vld [vmem:[#allocation3 + $0x568] sm:$0xff]
      %v3287 = vld [vmem:[#allocation3 + $0x570] sm:$0xff]
      %v3288 = vld [vmem:[#allocation3 + $0x578] sm:$0xff]
      %v3289 = vld [vmem:[#allocation3 + $0x580] sm:$0xff]
      %v3290 = vld [vmem:[#allocation3 + $0x588] sm:$0xff]
      %v3291 = vld [vmem:[#allocation3 + $0x590] sm:$0xff]
      %v3292 = vld [vmem:[#allocation3 + $0x598] sm:$0xff]
      %v3293 = vld [vmem:[#allocation3 + $0x5a0] sm:$0xff]
      %v3294 = vld [vmem:[#allocation3 + $0x5a8] sm:$0xff]
      %v3295 = vld [vmem:[#allocation3 + $0x5b0] sm:$0xff]
      %v3296 = vld [vmem:[#allocation3 + $0x5b8] sm:$0xff]
      %v3297 = vld [vmem:[#allocation3 + $0x5c0] sm:$0xff]
      %v3298 = vld [vmem:[#allocation3 + $0x5c8] sm:$0xff]
      %v3299 = vld [vmem:[#allocation3 + $0x5d0] sm:$0xff]
      %v3300 = vld [vmem:[#allocation3 + $0x5d8] sm:$0xff]
      %v3301 = vld [vmem:[#allocation3 + $0x5e0] sm:$0xff]
      %v3302 = vld [vmem:[#allocation3 + $0x5e8] sm:$0xff]
      %v3303 = vld [vmem:[#allocation3 + $0x5f0] sm:$0xff]
      %v3304 = vld [vmem:[#allocation3 + $0x5f8] sm:$0xff]
      %v3305 = vld [vmem:[#allocation3 + $0x600] sm:$0xff]
      %v3306 = vld [vmem:[#allocation3 + $0x608] sm:$0xff]
      %v3307 = vld [vmem:[#allocation3 + $0x610] sm:$0xff]
      %v3308 = vld [vmem:[#allocation3 + $0x618] sm:$0xff]
      %v3309 = vld [vmem:[#allocation3 + $0x620] sm:$0xff]
      %v3310 = vld [vmem:[#allocation3 + $0x628] sm:$0xff]
      %v3311 = vld [vmem:[#allocation3 + $0x630] sm:$0xff]
      %v3312 = vld [vmem:[#allocation3 + $0x638] sm:$0xff]
      %v3313 = vld [vmem:[#allocation3 + $0x640] sm:$0xff]
      %v3314 = vld [vmem:[#allocation3 + $0x648] sm:$0xff]
      %v3315 = vld [vmem:[#allocation3 + $0x650] sm:$0xff]
      %v3316 = vld [vmem:[#allocation3 + $0x658] sm:$0xff]
      %v3317 = vld [vmem:[#allocation3 + $0x660] sm:$0xff]
      %v3318 = vld [vmem:[#allocation3 + $0x668] sm:$0xff]
      %v3319 = vld [vmem:[#allocation3 + $0x670] sm:$0xff]
      %v3320 = vld [vmem:[#allocation3 + $0x678] sm:$0xff]
      %v3321 = vld [vmem:[#allocation3 + $0x680] sm:$0xff]
      %v3322 = vld [vmem:[#allocation3 + $0x688] sm:$0xff]
      %v3323 = vld [vmem:[#allocation3 + $0x690] sm:$0xff]
      %v3324 = vld [vmem:[#allocation3 + $0x698] sm:$0xff]
      %v3325 = vld [vmem:[#allocation3 + $0x6a0] sm:$0xff]
      %v3326 = vld [vmem:[#allocation3 + $0x6a8] sm:$0xff]
      %v3327 = vld [vmem:[#allocation3 + $0x6b0] sm:$0xff]
      %v3328 = vld [vmem:[#allocation3 + $0x6b8] sm:$0xff]
      %v3329 = vld [vmem:[%s1] sm:$0xf]
      %v3330 = vld [vmem:[%s1 + $0x4] sm:$0xf]
      %v3331 = vld [vmem:[%s1 + $0x8] sm:$0xf]
      %v3332 = vld [vmem:[%s1 + $0xc] sm:$0xf]
      %v3333 = vld [vmem:[%s1 + $0x10] sm:$0xf]
      %v3334 = vld [vmem:[%s1 + $0x14] sm:$0xf]
      %v3335 = vld [vmem:[%s1 + $0x18] sm:$0xf]
      %v3336 = vld [vmem:[%s1 + $0x1c] sm:$0xf]
      %v3337 = vld [vmem:[%s1 + $0x20] sm:$0xf]
      %v3338 = vld [vmem:[%s1 + $0x24] sm:$0xf]
      %v3339 = vld [vmem:[%s1 + $0x28] sm:$0xf]
      %v3340 = vld [vmem:[%s1 + $0x2c] sm:$0xf]
      %v3341 = vld [vmem:[%s1 + $0x30] sm:$0xf]
      %v3342 = vld [vmem:[%s1 + $0x34] sm:$0xf]
      %v3343 = vld [vmem:[%s1 + $0x38] sm:$0xf]
      %v3344 = vld [vmem:[%s1 + $0x3c] sm:$0xf]
      %v3345 = vld [vmem:[%s1 + $0x40] sm:$0xf]
      %v3346 = vld [vmem:[%s1 + $0x44] sm:$0xf]
      %v3347 = vld [vmem:[%s1 + $0x48] sm:$0xf]
      %v3348 = vld [vmem:[%s1 + $0x4c] sm:$0xf]
      %v3349 = vld [vmem:[%s1 + $0x50] sm:$0xf]
      %v3350 = vld [vmem:[%s1 + $0x54] sm:$0xf]
      %v3351 = vld [vmem:[%s1 + $0x58] sm:$0xf]
      %v3352 = vld [vmem:[%s1 + $0x5c] sm:$0xf]
      %v3353 = vld [vmem:[%s1 + $0x60] sm:$0xf]
      %v3354 = vld [vmem:[%s1 + $0x64] sm:$0xf]
      %v3355 = vld [vmem:[%s1 + $0x68] sm:$0xf]
      %v3356 = vld [vmem:[%s1 + $0x6c] sm:$0xf]
      %v3357 = vld [vmem:[%s1 + $0x70] sm:$0xf]
      %v3358 = vld [vmem:[%s1 + $0x74] sm:$0xf]
      %v3359 = vld [vmem:[%s1 + $0x78] sm:$0xf]
      %v3360 = vld [vmem:[%s1 + $0x7c] sm:$0xf]
      %v3361 = vld [vmem:[%s1 + $0x80] sm:$0xf]
      %v3362 = vld [vmem:[%s1 + $0x84] sm:$0xf]
      %v3363 = vld [vmem:[%s1 + $0x88] sm:$0xf]
      %v3364 = vld [vmem:[%s1 + $0x8c] sm:$0xf]
      %v3365 = vld [vmem:[%s1 + $0x90] sm:$0xf]
      %v3366 = vld [vmem:[%s1 + $0x94] sm:$0xf]
      %v3367 = vld [vmem:[%s1 + $0x98] sm:$0xf]
      %v3368 = vld [vmem:[%s1 + $0x9c] sm:$0xf]
      %v3369 = vld [vmem:[%s1 + $0xa0] sm:$0xf]
      %v3370 = vld [vmem:[%s1 + $0xa4] sm:$0xf]
      %v3371 = vld [vmem:[%s1 + $0xa8] sm:$0xf]
      %v3372 = vld [vmem:[%s1 + $0xac] sm:$0xf]
      %v3373 = vld [vmem:[%s1 + $0xb0] sm:$0xf]
      %v3374 = vld [vmem:[%s1 + $0xb4] sm:$0xf]
      %v3375 = vld [vmem:[%s1 + $0xb8] sm:$0xf]
      %v3376 = vld [vmem:[%s1 + $0xbc] sm:$0xf]
      %v3377 = vld [vmem:[%s1 + $0xc0] sm:$0xf]
      %v3378 = vld [vmem:[%s1 + $0xc4] sm:$0xf]
      %v3379 = vld [vmem:[%s1 + $0xc8] sm:$0xf]
      %v3380 = vld [vmem:[%s1 + $0xcc] sm:$0xf]
      %v3381 = vld [vmem:[%s1 + $0xd0] sm:$0xf]
      %v3382 = vld [vmem:[%s1 + $0xd4] sm:$0xf]
      %v3383 = vld [vmem:[%s1 + $0xd8] sm:$0xf]
      %v3384 = vld [vmem:[%s1 + $0xdc] sm:$0xf]
      %v3385 = vld [vmem:[%s1 + $0xe0] sm:$0xf]
      %v3386 = vld [vmem:[%s1 + $0xe4] sm:$0xf]
      %v3387 = vld [vmem:[%s1 + $0xe8] sm:$0xf]
      %v3388 = vld [vmem:[%s1 + $0xec] sm:$0xf]
      %v3389 = vld [vmem:[%s1 + $0xf0] sm:$0xf]
      %v3390 = vld [vmem:[%s1 + $0xf4] sm:$0xf]
      %v3391 = vld [vmem:[%s1 + $0xf8] sm:$0xf]
      %v3392 = vld [vmem:[%s1 + $0xfc] sm:$0xf]
      %v3393 = vld [vmem:[%s1 + $0x100] sm:$0xf]
      %v3394 = vld [vmem:[%s1 + $0x104] sm:$0xf]
      %v3395 = vld [vmem:[%s1 + $0x108] sm:$0xf]
      %v3396 = vld [vmem:[%s1 + $0x10c] sm:$0xf]
      %v3397 = vld [vmem:[%s1 + $0x110] sm:$0xf]
      %v3398 = vld [vmem:[%s1 + $0x114] sm:$0xf]
      %v3399 = vld [vmem:[%s1 + $0x118] sm:$0xf]
      %v3400 = vld [vmem:[%s1 + $0x11c] sm:$0xf]
      %v3401 = vld [vmem:[%s1 + $0x120] sm:$0xf]
      %v3402 = vld [vmem:[%s1 + $0x124] sm:$0xf]
      %v3403 = vld [vmem:[%s1 + $0x128] sm:$0xf]
      %v3404 = vld [vmem:[%s1 + $0x12c] sm:$0xf]
      %v3405 = vld [vmem:[%s1 + $0x130] sm:$0xf]
      %v3406 = vld [vmem:[%s1 + $0x134] sm:$0xf]
      %v3407 = vld [vmem:[%s1 + $0x138] sm:$0xf]
      %v3408 = vld [vmem:[%s1 + $0x13c] sm:$0xf]
      %v3409 = vld [vmem:[%s1 + $0x140] sm:$0xf]
      %v3410 = vld [vmem:[%s1 + $0x144] sm:$0xf]
      %v3411 = vld [vmem:[%s1 + $0x148] sm:$0xf]
      %v3412 = vld [vmem:[%s1 + $0x14c] sm:$0xf]
      %v3413 = vld [vmem:[%s1 + $0x150] sm:$0xf]
      %v3414 = vld [vmem:[%s1 + $0x154] sm:$0xf]
      %v3415 = vld [vmem:[%s1 + $0x158] sm:$0xf]
      %v3416 = vld [vmem:[%s1 + $0x15c] sm:$0xf]
      %v3417 = vld [vmem:[%s1 + $0x160] sm:$0xf]
      %v3418 = vld [vmem:[%s1 + $0x164] sm:$0xf]
      %v3419 = vld [vmem:[%s1 + $0x168] sm:$0xf]
      %v3420 = vld [vmem:[%s1 + $0x16c] sm:$0xf]
      %v3421 = vld [vmem:[%s1 + $0x170] sm:$0xf]
      %v3422 = vld [vmem:[%s1 + $0x174] sm:$0xf]
      %v3423 = vld [vmem:[%s1 + $0x178] sm:$0xf]
      %v3424 = vld [vmem:[%s1 + $0x17c] sm:$0xf]
      %v3425 = vld [vmem:[%s1 + $0x180] sm:$0xf]
      %v3426 = vld [vmem:[%s1 + $0x184] sm:$0xf]
      %v3427 = vld [vmem:[%s1 + $0x188] sm:$0xf]
      %v3428 = vld [vmem:[%s1 + $0x18c] sm:$0xf]
      %v3429 = vld [vmem:[%s1 + $0x190] sm:$0xf]
      %v3430 = vld [vmem:[%s1 + $0x194] sm:$0xf]
      %v3431 = vld [vmem:[%s1 + $0x198] sm:$0xf]
      %v3432 = vld [vmem:[%s1 + $0x19c] sm:$0xf]
      %v3433 = vld [vmem:[%s1 + $0x1a0] sm:$0xf]
      %v3434 = vld [vmem:[%s1 + $0x1a4] sm:$0xf]
      %v3435 = vld [vmem:[%s1 + $0x1a8] sm:$0xf]
      %v3436 = vld [vmem:[%s1 + $0x1ac] sm:$0xf]
      %v3437 = vld [vmem:[%s1 + $0x1b0] sm:$0xf]
      %v3438 = vld [vmem:[%s1 + $0x1b4] sm:$0xf]
      %v3439 = vld [vmem:[%s1 + $0x1b8] sm:$0xf]
      %v3440 = vld [vmem:[%s1 + $0x1bc] sm:$0xf]
      %v3441 = vld [vmem:[%s1 + $0x1c0] sm:$0xf]
      %v3442 = vld [vmem:[%s1 + $0x1c4] sm:$0xf]
      %v3443 = vld [vmem:[%s1 + $0x1c8] sm:$0xf]
      %v3444 = vld [vmem:[%s1 + $0x1cc] sm:$0xf]
      %v3445 = vld [vmem:[%s1 + $0x1d0] sm:$0xf]
      %v3446 = vld [vmem:[%s1 + $0x1d4] sm:$0xf]
      %v3447 = vld [vmem:[%s1 + $0x1d8] sm:$0xf]
      %v3448 = vld [vmem:[%s1 + $0x1dc] sm:$0xf]
      %v3449 = vld [vmem:[%s1 + $0x1e0] sm:$0xf]
      %v3450 = vld [vmem:[%s1 + $0x1e4] sm:$0xf]
      %v3451 = vld [vmem:[%s1 + $0x1e8] sm:$0xf]
      %v3452 = vld [vmem:[%s1 + $0x1ec] sm:$0xf]
      %v3453 = vld [vmem:[%s1 + $0x1f0] sm:$0xf]
      %v3454 = vld [vmem:[%s1 + $0x1f4] sm:$0xf]
      %v3455 = vld [vmem:[%s1 + $0x1f8] sm:$0xf]
      %v3456 = vld [vmem:[%s1 + $0x1fc] sm:$0xf]
      %v3457 = vld [vmem:[%s1 + $0x200] sm:$0xf]
      %v3458 = vld [vmem:[%s1 + $0x204] sm:$0xf]
      %v3459 = vld [vmem:[%s1 + $0x208] sm:$0xf]
      %v3460 = vld [vmem:[%s1 + $0x20c] sm:$0xf]
      %v3461 = vld [vmem:[%s1 + $0x210] sm:$0xf]
      %v3462 = vld [vmem:[%s1 + $0x214] sm:$0xf]
      %v3463 = vld [vmem:[%s1 + $0x218] sm:$0xf]
      %v3464 = vld [vmem:[%s1 + $0x21c] sm:$0xf]
      %v3465 = vld [vmem:[%s1 + $0x220] sm:$0xf]
      %v3466 = vld [vmem:[%s1 + $0x224] sm:$0xf]
      %v3467 = vld [vmem:[%s1 + $0x228] sm:$0xf]
      %v3468 = vld [vmem:[%s1 + $0x22c] sm:$0xf]
      %v3469 = vld [vmem:[%s1 + $0x230] sm:$0xf]
      %v3470 = vld [vmem:[%s1 + $0x234] sm:$0xf]
      %v3471 = vld [vmem:[%s1 + $0x238] sm:$0xf]
      %v3472 = vld [vmem:[%s1 + $0x23c] sm:$0xf]
      %v3617 = vunpack.c.l.b16 %v3329
      %v3618 = vunpack.c.l.b16 %v3330
      %v3619 = vunpack.c.l.b16 %v3331
      %v3620 = vunpack.c.l.b16 %v3332
      %v3621 = vunpack.c.l.b16 %v3333
      %v3622 = vunpack.c.l.b16 %v3334
      %v3623 = vunpack.c.l.b16 %v3335
      %v3624 = vunpack.c.l.b16 %v3336
      %v3625 = vunpack.c.l.b16 %v3337
      %v3626 = vunpack.c.l.b16 %v3338
      %v3627 = vunpack.c.l.b16 %v3339
      %v3628 = vunpack.c.l.b16 %v3340
      %v3629 = vunpack.c.l.b16 %v3341
      %v3630 = vunpack.c.l.b16 %v3342
      %v3631 = vunpack.c.l.b16 %v3343
      %v3632 = vunpack.c.l.b16 %v3344
      %v3633 = vunpack.c.l.b16 %v3345
      %v3634 = vunpack.c.l.b16 %v3346
      %v3635 = vunpack.c.l.b16 %v3347
      %v3636 = vunpack.c.l.b16 %v3348
      %v3637 = vunpack.c.l.b16 %v3349
      %v3638 = vunpack.c.l.b16 %v3350
      %v3639 = vunpack.c.l.b16 %v3351
      %v3640 = vunpack.c.l.b16 %v3352
      %v3641 = vunpack.c.l.b16 %v3353
      %v3642 = vunpack.c.l.b16 %v3354
      %v3643 = vunpack.c.l.b16 %v3355
      %v3644 = vunpack.c.l.b16 %v3356
      %v3645 = vunpack.c.l.b16 %v3357
      %v3646 = vunpack.c.l.b16 %v3358
      %v3647 = vunpack.c.l.b16 %v3359
      %v3648 = vunpack.c.l.b16 %v3360
      %v3649 = vunpack.c.l.b16 %v3361
      %v3650 = vunpack.c.l.b16 %v3362
      %v3651 = vunpack.c.l.b16 %v3363
      %v3652 = vunpack.c.l.b16 %v3364
      %v3653 = vunpack.c.l.b16 %v3365
      %v3654 = vunpack.c.l.b16 %v3366
      %v3655 = vunpack.c.l.b16 %v3367
      %v3656 = vunpack.c.l.b16 %v3368
      %v3657 = vunpack.c.l.b16 %v3369
      %v3658 = vunpack.c.l.b16 %v3370
      %v3659 = vunpack.c.l.b16 %v3371
      %v3660 = vunpack.c.l.b16 %v3372
      %v3661 = vunpack.c.l.b16 %v3373
      %v3662 = vunpack.c.l.b16 %v3374
      %v3663 = vunpack.c.l.b16 %v3375
      %v3664 = vunpack.c.l.b16 %v3376
      %v3665 = vunpack.c.l.b16 %v3377
      %v3666 = vunpack.c.l.b16 %v3378
      %v3667 = vunpack.c.l.b16 %v3379
      %v3668 = vunpack.c.l.b16 %v3380
      %v3669 = vunpack.c.l.b16 %v3381
      %v3670 = vunpack.c.l.b16 %v3382
      %v3671 = vunpack.c.l.b16 %v3383
      %v3672 = vunpack.c.l.b16 %v3384
      %v3673 = vunpack.c.l.b16 %v3385
      %v3674 = vunpack.c.l.b16 %v3386
      %v3675 = vunpack.c.l.b16 %v3387
      %v3676 = vunpack.c.l.b16 %v3388
      %v3677 = vunpack.c.l.b16 %v3389
      %v3678 = vunpack.c.l.b16 %v3390
      %v3679 = vunpack.c.l.b16 %v3391
      %v3680 = vunpack.c.l.b16 %v3392
      %v3681 = vunpack.c.l.b16 %v3393
      %v3682 = vunpack.c.l.b16 %v3394
      %v3683 = vunpack.c.l.b16 %v3395
      %v3684 = vunpack.c.l.b16 %v3396
      %v3685 = vunpack.c.l.b16 %v3397
      %v3686 = vunpack.c.l.b16 %v3398
      %v3687 = vunpack.c.l.b16 %v3399
      %v3688 = vunpack.c.l.b16 %v3400
      %v3689 = vunpack.c.l.b16 %v3401
      %v3690 = vunpack.c.l.b16 %v3402
      %v3691 = vunpack.c.l.b16 %v3403
      %v3692 = vunpack.c.l.b16 %v3404
      %v3693 = vunpack.c.l.b16 %v3405
      %v3694 = vunpack.c.l.b16 %v3406
      %v3695 = vunpack.c.l.b16 %v3407
      %v3696 = vunpack.c.l.b16 %v3408
      %v3697 = vunpack.c.l.b16 %v3409
      %v3698 = vunpack.c.l.b16 %v3410
      %v3699 = vunpack.c.l.b16 %v3411
      %v3700 = vunpack.c.l.b16 %v3412
      %v3701 = vunpack.c.l.b16 %v3413
      %v3702 = vunpack.c.l.b16 %v3414
      %v3703 = vunpack.c.l.b16 %v3415
      %v3704 = vunpack.c.l.b16 %v3416
      %v3705 = vunpack.c.l.b16 %v3417
      %v3706 = vunpack.c.l.b16 %v3418
      %v3707 = vunpack.c.l.b16 %v3419
      %v3708 = vunpack.c.l.b16 %v3420
      %v3709 = vunpack.c.l.b16 %v3421
      %v3710 = vunpack.c.l.b16 %v3422
      %v3711 = vunpack.c.l.b16 %v3423
      %v3712 = vunpack.c.l.b16 %v3424
      %v3713 = vunpack.c.l.b16 %v3425
      %v3714 = vunpack.c.l.b16 %v3426
      %v3715 = vunpack.c.l.b16 %v3427
      %v3716 = vunpack.c.l.b16 %v3428
      %v3717 = vunpack.c.l.b16 %v3429
      %v3718 = vunpack.c.l.b16 %v3430
      %v3719 = vunpack.c.l.b16 %v3431
      %v3720 = vunpack.c.l.b16 %v3432
      %v3721 = vunpack.c.l.b16 %v3433
      %v3722 = vunpack.c.l.b16 %v3434
      %v3723 = vunpack.c.l.b16 %v3435
      %v3724 = vunpack.c.l.b16 %v3436
      %v3725 = vunpack.c.l.b16 %v3437
      %v3726 = vunpack.c.l.b16 %v3438
      %v3727 = vunpack.c.l.b16 %v3439
      %v3728 = vunpack.c.l.b16 %v3440
      %v3729 = vunpack.c.l.b16 %v3441
      %v3730 = vunpack.c.l.b16 %v3442
      %v3731 = vunpack.c.l.b16 %v3443
      %v3732 = vunpack.c.l.b16 %v3444
      %v3733 = vunpack.c.l.b16 %v3445
      %v3734 = vunpack.c.l.b16 %v3446
      %v3735 = vunpack.c.l.b16 %v3447
      %v3736 = vunpack.c.l.b16 %v3448
      %v3737 = vunpack.c.l.b16 %v3449
      %v3738 = vunpack.c.l.b16 %v3450
      %v3739 = vunpack.c.l.b16 %v3451
      %v3740 = vunpack.c.l.b16 %v3452
      %v3741 = vunpack.c.l.b16 %v3453
      %v3742 = vunpack.c.l.b16 %v3454
      %v3743 = vunpack.c.l.b16 %v3455
      %v3744 = vunpack.c.l.b16 %v3456
      %v3745 = vunpack.c.l.b16 %v3457
      %v3746 = vunpack.c.l.b16 %v3458
      %v3747 = vunpack.c.l.b16 %v3459
      %v3748 = vunpack.c.l.b16 %v3460
      %v3749 = vunpack.c.l.b16 %v3461
      %v3750 = vunpack.c.l.b16 %v3462
      %v3751 = vunpack.c.l.b16 %v3463
      %v3752 = vunpack.c.l.b16 %v3464
      %v3753 = vunpack.c.l.b16 %v3465
      %v3754 = vunpack.c.l.b16 %v3466
      %v3755 = vunpack.c.l.b16 %v3467
      %v3756 = vunpack.c.l.b16 %v3468
      %v3757 = vunpack.c.l.b16 %v3469
      %v3758 = vunpack.c.l.b16 %v3470
      %v3759 = vunpack.c.l.b16 %v3471
      %v3760 = vunpack.c.l.b16 %v3472
      %v3761 = vpack.c.b16 %v3618, %v3617
      %v3762 = vpack.c.b16 %v3620, %v3619
      %v3763 = vpack.c.b16 %v3622, %v3621
      %v3764 = vpack.c.b16 %v3624, %v3623
      %v3765 = vpack.c.b16 %v3626, %v3625
      %v3766 = vpack.c.b16 %v3628, %v3627
      %v3767 = vpack.c.b16 %v3630, %v3629
      %v3768 = vpack.c.b16 %v3632, %v3631
      %v3769 = vpack.c.b16 %v3634, %v3633
      %v3770 = vpack.c.b16 %v3636, %v3635
      %v3771 = vpack.c.b16 %v3638, %v3637
      %v3772 = vpack.c.b16 %v3640, %v3639
      %v3773 = vpack.c.b16 %v3642, %v3641
      %v3774 = vpack.c.b16 %v3644, %v3643
      %v3775 = vpack.c.b16 %v3646, %v3645
      %v3776 = vpack.c.b16 %v3648, %v3647
      %v3777 = vpack.c.b16 %v3650, %v3649
      %v3778 = vpack.c.b16 %v3652, %v3651
      %v3779 = vpack.c.b16 %v3654, %v3653
      %v3780 = vpack.c.b16 %v3656, %v3655
      %v3781 = vpack.c.b16 %v3658, %v3657
      %v3782 = vpack.c.b16 %v3660, %v3659
      %v3783 = vpack.c.b16 %v3662, %v3661
      %v3784 = vpack.c.b16 %v3664, %v3663
      %v3785 = vpack.c.b16 %v3666, %v3665
      %v3786 = vpack.c.b16 %v3668, %v3667
      %v3787 = vpack.c.b16 %v3670, %v3669
      %v3788 = vpack.c.b16 %v3672, %v3671
      %v3789 = vpack.c.b16 %v3674, %v3673
      %v3790 = vpack.c.b16 %v3676, %v3675
      %v3791 = vpack.c.b16 %v3678, %v3677
      %v3792 = vpack.c.b16 %v3680, %v3679
      %v3793 = vpack.c.b16 %v3682, %v3681
      %v3794 = vpack.c.b16 %v3684, %v3683
      %v3795 = vpack.c.b16 %v3686, %v3685
      %v3796 = vpack.c.b16 %v3688, %v3687
      %v3797 = vpack.c.b16 %v3690, %v3689
      %v3798 = vpack.c.b16 %v3692, %v3691
      %v3799 = vpack.c.b16 %v3694, %v3693
      %v3800 = vpack.c.b16 %v3696, %v3695
      %v3801 = vpack.c.b16 %v3698, %v3697
      %v3802 = vpack.c.b16 %v3700, %v3699
      %v3803 = vpack.c.b16 %v3702, %v3701
      %v3804 = vpack.c.b16 %v3704, %v3703
      %v3805 = vpack.c.b16 %v3706, %v3705
      %v3806 = vpack.c.b16 %v3708, %v3707
      %v3807 = vpack.c.b16 %v3710, %v3709
      %v3808 = vpack.c.b16 %v3712, %v3711
      %v3809 = vpack.c.b16 %v3714, %v3713
      %v3810 = vpack.c.b16 %v3716, %v3715
      %v3811 = vpack.c.b16 %v3718, %v3717
      %v3812 = vpack.c.b16 %v3720, %v3719
      %v3813 = vpack.c.b16 %v3722, %v3721
      %v3814 = vpack.c.b16 %v3724, %v3723
      %v3815 = vpack.c.b16 %v3726, %v3725
      %v3816 = vpack.c.b16 %v3728, %v3727
      %v3817 = vpack.c.b16 %v3730, %v3729
      %v3818 = vpack.c.b16 %v3732, %v3731
      %v3819 = vpack.c.b16 %v3734, %v3733
      %v3820 = vpack.c.b16 %v3736, %v3735
      %v3821 = vpack.c.b16 %v3738, %v3737
      %v3822 = vpack.c.b16 %v3740, %v3739
      %v3823 = vpack.c.b16 %v3742, %v3741
      %v3824 = vpack.c.b16 %v3744, %v3743
      %v3825 = vpack.c.b16 %v3746, %v3745
      %v3826 = vpack.c.b16 %v3748, %v3747
      %v3827 = vpack.c.b16 %v3750, %v3749
      %v3828 = vpack.c.b16 %v3752, %v3751
      %v3829 = vpack.c.b16 %v3754, %v3753
      %v3830 = vpack.c.b16 %v3756, %v3755
      %v3831 = vpack.c.b16 %v3758, %v3757
      %v3832 = vpack.c.b16 %v3760, %v3759
      %3905 = vmatprep.subr.bf16.mxu0 0
      %3906 = vmatpush1.bf16.msra.mxu0 %v3761
      %3907 = vmatprep.subr.bf16.mxu0 0
      %3908 = vmatpush1.bf16.msra.mxu0 %v3762
      %3909 = vmatprep.subr.bf16.mxu0 0
      %3910 = vmatpush1.bf16.msra.mxu0 %v3763
      %3911 = vmatprep.subr.bf16.mxu0 0
      %3912 = vmatpush1.bf16.msra.mxu0 %v3764
      %3913 = vmatprep.subr.bf16.mxu0 0
      %3914 = vmatpush1.bf16.msra.mxu0 %v3765
      %3915 = vmatprep.subr.bf16.mxu0 0
      %3916 = vmatpush1.bf16.msra.mxu0 %v3766
      %3917 = vmatprep.subr.bf16.mxu0 0
      %3918 = vmatpush1.bf16.msra.mxu0 %v3767
      %3919 = vmatprep.subr.bf16.mxu0 0
      %3920 = vmatpush1.bf16.msra.mxu0 %v3768
      %3921 = vmatprep.subr.bf16.mxu0 0
      %3922 = vmatpush1.bf16.msra.mxu0 %v3769
      %3923 = vmatprep.subr.bf16.mxu0 0
      %3924 = vmatpush1.bf16.msra.mxu0 %v3770
      %3925 = vmatprep.subr.bf16.mxu0 0
      %3926 = vmatpush1.bf16.msra.mxu0 %v3771
      %3927 = vmatprep.subr.bf16.mxu0 0
      %3928 = vmatpush1.bf16.msra.mxu0 %v3772
      %3929 = vmatprep.subr.bf16.mxu0 0
      %3930 = vmatpush1.bf16.msra.mxu0 %v3773
      %3931 = vmatprep.subr.bf16.mxu0 0
      %3932 = vmatpush1.bf16.msra.mxu0 %v3774
      %3933 = vmatprep.subr.bf16.mxu0 0
      %3934 = vmatpush1.bf16.msra.mxu0 %v3775
      %3935 = vmatprep.subr.bf16.mxu0 0
      %3936 = vmatpush1.bf16.msra.mxu0 %v3776
      %3937 = vmatprep.mubr.bf16.mxu0 %v3114
      %3938 = vmatmul.mubr.bf16.gmra.mrb[0].mxu0 %v3113
      %v3939 = vpop.f32.mrb[0].mxu0
      %v3940 = vadd.f32 0.0, %v3939
      %v3941 = vpop.f32.mrb[0].mxu0
      %v3942 = vpop.f32.mrb[0].mxu0
      %v3943 = vadd.f32 0.0, %v3942
      %v3944 = vpop.f32.mrb[0].mxu0
      %3945 = vmatprep.mubr.bf16.mxu0 %v3123
      %3946 = vmatmul.mubr.bf16.gmra.mrb[0].mxu0 %v3122
      %v3947 = vpop.f32.mrb[0].mxu0
      %v3948 = vadd.f32 0.0, %v3947
      %v3949 = vpop.f32.mrb[0].mxu0
      %v3950 = vpop.f32.mrb[0].mxu0
      %v3951 = vadd.f32 0.0, %v3950
      %v3952 = vpop.f32.mrb[0].mxu0
      %3953 = vmatprep.mubr.bf16.mxu0 %v3132
      %3954 = vmatmul.mubr.bf16.gmra.mrb[0].mxu0 %v3131
      %v3955 = vpop.f32.mrb[0].mxu0
      %v3956 = vadd.f32 0.0, %v3955
      %v3957 = vpop.f32.mrb[0].mxu0
      %v3958 = vpop.f32.mrb[0].mxu0
      %v3959 = vadd.f32 0.0, %v3958
      %v3960 = vpop.f32.mrb[0].mxu0
      %3961 = vmatprep.mubr.bf16.mxu0 %v3141
      %3962 = vmatmul.mubr.bf16.gmra.mrb[0].mxu0 %v3140
      %v3963 = vpop.f32.mrb[0].mxu0
      %v3964 = vadd.f32 0.0, %v3963
      %v3965 = vpop.f32.mrb[0].mxu0
      %v3966 = vpop.f32.mrb[0].mxu0
      %v3967 = vadd.f32 0.0, %v3966
      %v3968 = vpop.f32.mrb[0].mxu0
      %3969 = vmatprep.mubr.bf16.mxu0 %v3150
      %3970 = vmatmul.mubr.bf16.gmra.mrb[0].mxu0 %v3149
      %v3971 = vpop.f32.mrb[0].mxu0
      %v3972 = vadd.f32 0.0, %v3971
      %v3973 = vpop.f32.mrb[0].mxu0
      %v3974 = vpop.f32.mrb[0].mxu0
      %v3975 = vadd.f32 0.0, %v3974
      %v3976 = vpop.f32.mrb[0].mxu0
      %3977 = vmatprep.mubr.bf16.mxu0 %v3159
      %3978 = vmatmul.mubr.bf16.gmra.mrb[0].mxu0 %v3158
      %v3979 = vpop.f32.mrb[0].mxu0
      %v3980 = vadd.f32 0.0, %v3979
      %v3981 = vpop.f32.mrb[0].mxu0
      %v3982 = vpop.f32.mrb[0].mxu0
      %v3983 = vadd.f32 0.0, %v3982
      %v3984 = vpop.f32.mrb[0].mxu0
      %3985 = vmatprep.mubr.bf16.mxu0 %v3168
      %3986 = vmatmul.mubr.bf16.gmra.mrb[0].mxu0 %v3167
      %v3987 = vpop.f32.mrb[0].mxu0
      %v3988 = vadd.f32 0.0, %v3987
      %v3989 = vpop.f32.mrb[0].mxu0
      %v3990 = vpop.f32.mrb[0].mxu0
      %v3991 = vadd.f32 0.0, %v3990
      %v3992 = vpop.f32.mrb[0].mxu0
      %3993 = vmatprep.mubr.bf16.mxu0 %v3177
      %3994 = vmatmul.mubr.bf16.gmra.mrb[0].mxu0 %v3176
      %v3995 = vpop.f32.mrb[0].mxu0
      %v3996 = vadd.f32 0.0, %v3995
      %v3997 = vpop.f32.mrb[0].mxu0
      %v3998 = vpop.f32.mrb[0].mxu0
      %v3999 = vadd.f32 0.0, %v3998
      %v4000 = vpop.f32.mrb[0].mxu0
      %4001 = vmatprep.mubr.bf16.mxu0 %v3186
      %4002 = vmatmul.mubr.bf16.gmra.mrb[0].mxu0 %v3185
      %v4003 = vpop.f32.mrb[0].mxu0
      %v4004 = vadd.f32 0.0, %v4003
      %v4005 = vpop.f32.mrb[0].mxu0
      %v4006 = vpop.f32.mrb[0].mxu0
      %v4007 = vadd.f32 0.0, %v4006
      %v4008 = vpop.f32.mrb[0].mxu0
      %4009 = vmatprep.mubr.bf16.mxu0 %v3195
      %4010 = vmatmul.mubr.bf16.gmra.mrb[0].mxu0 %v3194
      %v4011 = vpop.f32.mrb[0].mxu0
      %v4012 = vadd.f32 0.0, %v4011
      %v4013 = vpop.f32.mrb[0].mxu0
      %v4014 = vpop.f32.mrb[0].mxu0
      %v4015 = vadd.f32 0.0, %v4014
      %v4016 = vpop.f32.mrb[0].mxu0
      %4017 = vmatprep.mubr.bf16.mxu0 %v3204
      %4018 = vmatmul.mubr.bf16.gmra.mrb[0].mxu0 %v3203
      %v4019 = vpop.f32.mrb[0].mxu0
      %v4020 = vadd.f32 0.0, %v4019
      %v4021 = vpop.f32.mrb[0].mxu0
      %v4022 = vpop.f32.mrb[0].mxu0
      %v4023 = vadd.f32 0.0, %v4022
      %v4024 = vpop.f32.mrb[0].mxu0
      %4025 = vmatprep.mubr.bf16.mxu0 %v3213
      %4026 = vmatmul.mubr.bf16.gmra.mrb[0].mxu0 %v3212
      %v4027 = vpop.f32.mrb[0].mxu0
      %v4028 = vadd.f32 0.0, %v4027
      %v4029 = vpop.f32.mrb[0].mxu0
      %v4030 = vpop.f32.mrb[0].mxu0
      %v4031 = vadd.f32 0.0, %v4030
      %v4032 = vpop.f32.mrb[0].mxu0
      %4033 = vmatprep.mubr.bf16.mxu0 %v3222
      %4034 = vmatmul.mubr.bf16.gmra.mrb[0].mxu0 %v3221
      %v4035 = vpop.f32.mrb[0].mxu0
      %v4036 = vadd.f32 0.0, %v4035
      %v4037 = vpop.f32.mrb[0].mxu0
      %v4038 = vpop.f32.mrb[0].mxu0
      %v4039 = vadd.f32 0.0, %v4038
      %v4040 = vpop.f32.mrb[0].mxu0
      %4041 = vmatprep.mubr.bf16.mxu0 %v3231
      %4042 = vmatmul.mubr.bf16.gmra.mrb[0].mxu0 %v3230
      %v4043 = vpop.f32.mrb[0].mxu0
      %v4044 = vadd.f32 0.0, %v4043
      %v4045 = vpop.f32.mrb[0].mxu0
      %v4046 = vpop.f32.mrb[0].mxu0
      %v4047 = vadd.f32 0.0, %v4046
      %v4048 = vpop.f32.mrb[0].mxu0
      %4049 = vmatprep.mubr.bf16.mxu0 %v3240
      %4050 = vmatmul.mubr.bf16.gmra.mrb[0].mxu0 %v3239
      %v4051 = vpop.f32.mrb[0].mxu0
      %v4052 = vadd.f32 0.0, %v4051
      %v4053 = vpop.f32.mrb[0].mxu0
      %v4054 = vpop.f32.mrb[0].mxu0
      %v4055 = vadd.f32 0.0, %v4054
      %v4056 = vpop.f32.mrb[0].mxu0
      %4057 = vmatprep.mubr.bf16.mxu0 %v3249
      %4058 = vmatmul.mubr.bf16.gmra.mrb[0].mxu0 %v3248
      %v4059 = vpop.f32.mrb[0].mxu0
      %v4060 = vadd.f32 0.0, %v4059
      %v4061 = vpop.f32.mrb[0].mxu0
      %v4062 = vpop.f32.mrb[0].mxu0
      %v4063 = vadd.f32 0.0, %v4062
      %v4064 = vpop.f32.mrb[0].mxu0
      %4065 = vmatprep.mubr.bf16.mxu0 %v3258
      %4066 = vmatmul.mubr.bf16.gmra.mrb[0].mxu0 %v3257
      %v4067 = vpop.f32.mrb[0].mxu0
      %v4068 = vadd.f32 0.0, %v4067
      %v4069 = vpop.f32.mrb[0].mxu0
      %v4070 = vpop.f32.mrb[0].mxu0
      %v4071 = vadd.f32 0.0, %v4070
      %v4072 = vpop.f32.mrb[0].mxu0
      %4073 = vmatprep.mubr.bf16.mxu0 %v3267
      %4074 = vmatmul.mubr.bf16.gmra.mrb[0].mxu0 %v3266
      %v4075 = vpop.f32.mrb[0].mxu0
      %v4076 = vadd.f32 0.0, %v4075
      %v4077 = vpop.f32.mrb[0].mxu0
      %v4078 = vpop.f32.mrb[0].mxu0
      %v4079 = vadd.f32 0.0, %v4078
      %v4080 = vpop.f32.mrb[0].mxu0
      %4081 = vmatprep.mubr.bf16.mxu0 %v3276
      %4082 = vmatmul.mubr.bf16.gmra.mrb[0].mxu0 %v3275
      %v4083 = vpop.f32.mrb[0].mxu0
      %v4084 = vadd.f32 0.0, %v4083
      %v4085 = vpop.f32.mrb[0].mxu0
      %v4086 = vpop.f32.mrb[0].mxu0
      %v4087 = vadd.f32 0.0, %v4086
      %v4088 = vpop.f32.mrb[0].mxu0
      %4089 = vmatprep.mubr.bf16.mxu0 %v3285
      %4090 = vmatmul.mubr.bf16.gmra.mrb[0].mxu0 %v3284
      %v4091 = vpop.f32.mrb[0].mxu0
      %v4092 = vadd.f32 0.0, %v4091
      %v4093 = vpop.f32.mrb[0].mxu0
      %v4094 = vpop.f32.mrb[0].mxu0
      %v4095 = vadd.f32 0.0, %v4094
      %v4096 = vpop.f32.mrb[0].mxu0
      %4097 = vmatprep.mubr.bf16.mxu0 %v3294
      %4098 = vmatmul.mubr.bf16.gmra.mrb[0].mxu0 %v3293
      %v4099 = vpop.f32.mrb[0].mxu0
      %v4100 = vadd.f32 0.0, %v4099
      %v4101 = vpop.f32.mrb[0].mxu0
      %v4102 = vpop.f32.mrb[0].mxu0
      %v4103 = vadd.f32 0.0, %v4102
      %v4104 = vpop.f32.mrb[0].mxu0
      %4105 = vmatprep.mubr.bf16.mxu0 %v3303
      %4106 = vmatmul.mubr.bf16.gmra.mrb[0].mxu0 %v3302
      %v4107 = vpop.f32.mrb[0].mxu0
      %v4108 = vadd.f32 0.0, %v4107
      %v4109 = vpop.f32.mrb[0].mxu0
      %v4110 = vpop.f32.mrb[0].mxu0
      %v4111 = vadd.f32 0.0, %v4110
      %v4112 = vpop.f32.mrb[0].mxu0
      %4113 = vmatprep.mubr.bf16.mxu0 %v3312
      %4114 = vmatmul.mubr.bf16.gmra.mrb[0].mxu0 %v3311
      %v4115 = vpop.f32.mrb[0].mxu0
      %v4116 = vadd.f32 0.0, %v4115
      %v4117 = vpop.f32.mrb[0].mxu0
      %v4118 = vpop.f32.mrb[0].mxu0
      %v4119 = vadd.f32 0.0, %v4118
      %v4120 = vpop.f32.mrb[0].mxu0
      %4121 = vmatprep.mubr.bf16.mxu0 %v3321
      %4122 = vmatmul.mubr.bf16.gmra.mrb[0].mxu0 %v3320
      %v4123 = vpop.f32.mrb[0].mxu0
      %v4124 = vadd.f32 0.0, %v4123
      %v4125 = vpop.f32.mrb[0].mxu0
      %v4126 = vpop.f32.mrb[0].mxu0
      %v4127 = vadd.f32 0.0, %v4126
      %v4128 = vpop.f32.mrb[0].mxu0
      %4129 = vdwg.mxu0
      %4130 = vmatprep.subr.bf16.mxu0 0
      %4131 = vmatpush1.bf16.msra.mxu0 %v3777
      %4132 = vmatprep.subr.bf16.mxu0 0
      %4133 = vmatpush1.bf16.msra.mxu0 %v3778
      %4134 = vmatprep.subr.bf16.mxu0 0
      %4135 = vmatpush1.bf16.msra.mxu0 %v3779
      %4136 = vmatprep.subr.bf16.mxu0 0
      %4137 = vmatpush1.bf16.msra.mxu0 %v3780
      %4138 = vmatprep.subr.bf16.mxu0 0
      %4139 = vmatpush1.bf16.msra.mxu0 %v3781
      %4140 = vmatprep.subr.bf16.mxu0 0
      %4141 = vmatpush1.bf16.msra.mxu0 %v3782
      %4142 = vmatprep.subr.bf16.mxu0 0
      %4143 = vmatpush1.bf16.msra.mxu0 %v3783
      %4144 = vmatprep.subr.bf16.mxu0 0
      %4145 = vmatpush1.bf16.msra.mxu0 %v3784
      %4146 = vmatprep.subr.bf16.mxu0 0
      %4147 = vmatpush1.bf16.msra.mxu0 %v3785
      %4148 = vmatprep.subr.bf16.mxu0 0
      %4149 = vmatpush1.bf16.msra.mxu0 %v3786
      %4150 = vmatprep.subr.bf16.mxu0 0
      %4151 = vmatpush1.bf16.msra.mxu0 %v3787
      %4152 = vmatprep.subr.bf16.mxu0 0
      %4153 = vmatpush1.bf16.msra.mxu0 %v3788
      %4154 = vmatprep.subr.bf16.mxu0 0
      %4155 = vmatpush1.bf16.msra.mxu0 %v3789
      %4156 = vmatprep.subr.bf16.mxu0 0
      %4157 = vmatpush1.bf16.msra.mxu0 %v3790
      %4158 = vmatprep.subr.bf16.mxu0 0
      %4159 = vmatpush1.bf16.msra.mxu0 %v3791
      %4160 = vmatprep.subr.bf16.mxu0 0
      %4161 = vmatpush1.bf16.msra.mxu0 %v3792
      %4162 = vmatprep.mubr.bf16.mxu0 %v3116
      %4163 = vmatmul.mubr.bf16.gmra.mrb[0].mxu0 %v3115
      %v4164 = vpop.f32.mrb[0].mxu0
      %v4165 = vadd.f32 %v3940, %v4164
      %v4166 = vpop.f32.mrb[0].mxu0
      %v4167 = vpop.f32.mrb[0].mxu0
      %v4168 = vadd.f32 %v3943, %v4167
      %v4169 = vpop.f32.mrb[0].mxu0
      %4170 = vmatprep.mubr.bf16.mxu0 %v3125
      %4171 = vmatmul.mubr.bf16.gmra.mrb[0].mxu0 %v3124
      %v4172 = vpop.f32.mrb[0].mxu0
      %v4173 = vadd.f32 %v3948, %v4172
      %v4174 = vpop.f32.mrb[0].mxu0
      %v4175 = vpop.f32.mrb[0].mxu0
      %v4176 = vadd.f32 %v3951, %v4175
      %v4177 = vpop.f32.mrb[0].mxu0
      %4178 = vmatprep.mubr.bf16.mxu0 %v3134
      %4179 = vmatmul.mubr.bf16.gmra.mrb[0].mxu0 %v3133
      %v4180 = vpop.f32.mrb[0].mxu0
      %v4181 = vadd.f32 %v3956, %v4180
      %v4182 = vpop.f32.mrb[0].mxu0
      %v4183 = vpop.f32.mrb[0].mxu0
      %v4184 = vadd.f32 %v3959, %v4183
      %v4185 = vpop.f32.mrb[0].mxu0
      %4186 = vmatprep.mubr.bf16.mxu0 %v3143
      %4187 = vmatmul.mubr.bf16.gmra.mrb[0].mxu0 %v3142
      %v4188 = vpop.f32.mrb[0].mxu0
      %v4189 = vadd.f32 %v3964, %v4188
      %v4190 = vpop.f32.mrb[0].mxu0
      %v4191 = vpop.f32.mrb[0].mxu0
      %v4192 = vadd.f32 %v3967, %v4191
      %v4193 = vpop.f32.mrb[0].mxu0
      %4194 = vmatprep.mubr.bf16.mxu0 %v3152
      %4195 = vmatmul.mubr.bf16.gmra.mrb[0].mxu0 %v3151
      %v4196 = vpop.f32.mrb[0].mxu0
      %v4197 = vadd.f32 %v3972, %v4196
      %v4198 = vpop.f32.mrb[0].mxu0
      %v4199 = vpop.f32.mrb[0].mxu0
      %v4200 = vadd.f32 %v3975, %v4199
      %v4201 = vpop.f32.mrb[0].mxu0
      %4202 = vmatprep.mubr.bf16.mxu0 %v3161
      %4203 = vmatmul.mubr.bf16.gmra.mrb[0].mxu0 %v3160
      %v4204 = vpop.f32.mrb[0].mxu0
      %v4205 = vadd.f32 %v3980, %v4204
      %v4206 = vpop.f32.mrb[0].mxu0
      %v4207 = vpop.f32.mrb[0].mxu0
      %v4208 = vadd.f32 %v3983, %v4207
      %v4209 = vpop.f32.mrb[0].mxu0
      %4210 = vmatprep.mubr.bf16.mxu0 %v3170
      %4211 = vmatmul.mubr.bf16.gmra.mrb[0].mxu0 %v3169
      %v4212 = vpop.f32.mrb[0].mxu0
      %v4213 = vadd.f32 %v3988, %v4212
      %v4214 = vpop.f32.mrb[0].mxu0
      %v4215 = vpop.f32.mrb[0].mxu0
      %v4216 = vadd.f32 %v3991, %v4215
      %v4217 = vpop.f32.mrb[0].mxu0
      %4218 = vmatprep.mubr.bf16.mxu0 %v3179
      %4219 = vmatmul.mubr.bf16.gmra.mrb[0].mxu0 %v3178
      %v4220 = vpop.f32.mrb[0].mxu0
      %v4221 = vadd.f32 %v3996, %v4220
      %v4222 = vpop.f32.mrb[0].mxu0
      %v4223 = vpop.f32.mrb[0].mxu0
      %v4224 = vadd.f32 %v3999, %v4223
      %v4225 = vpop.f32.mrb[0].mxu0
      %4226 = vmatprep.mubr.bf16.mxu0 %v3188
      %4227 = vmatmul.mubr.bf16.gmra.mrb[0].mxu0 %v3187
      %v4228 = vpop.f32.mrb[0].mxu0
      %v4229 = vadd.f32 %v4004, %v4228
      %v4230 = vpop.f32.mrb[0].mxu0
      %v4231 = vpop.f32.mrb[0].mxu0
      %v4232 = vadd.f32 %v4007, %v4231
      %v4233 = vpop.f32.mrb[0].mxu0
      %4234 = vmatprep.mubr.bf16.mxu0 %v3197
      %4235 = vmatmul.mubr.bf16.gmra.mrb[0].mxu0 %v3196
      %v4236 = vpop.f32.mrb[0].mxu0
      %v4237 = vadd.f32 %v4012, %v4236
      %v4238 = vpop.f32.mrb[0].mxu0
      %v4239 = vpop.f32.mrb[0].mxu0
      %v4240 = vadd.f32 %v4015, %v4239
      %v4241 = vpop.f32.mrb[0].mxu0
      %4242 = vmatprep.mubr.bf16.mxu0 %v3206
      %4243 = vmatmul.mubr.bf16.gmra.mrb[0].mxu0 %v3205
      %v4244 = vpop.f32.mrb[0].mxu0
      %v4245 = vadd.f32 %v4020, %v4244
      %v4246 = vpop.f32.mrb[0].mxu0
      %v4247 = vpop.f32.mrb[0].mxu0
      %v4248 = vadd.f32 %v4023, %v4247
      %v4249 = vpop.f32.mrb[0].mxu0
      %4250 = vmatprep.mubr.bf16.mxu0 %v3215
      %4251 = vmatmul.mubr.bf16.gmra.mrb[0].mxu0 %v3214
      %v4252 = vpop.f32.mrb[0].mxu0
      %v4253 = vadd.f32 %v4028, %v4252
      %v4254 = vpop.f32.mrb[0].mxu0
      %v4255 = vpop.f32.mrb[0].mxu0
      %v4256 = vadd.f32 %v4031, %v4255
      %v4257 = vpop.f32.mrb[0].mxu0
      %4258 = vmatprep.mubr.bf16.mxu0 %v3224
      %4259 = vmatmul.mubr.bf16.gmra.mrb[0].mxu0 %v3223
      %v4260 = vpop.f32.mrb[0].mxu0
      %v4261 = vadd.f32 %v4036, %v4260
      %v4262 = vpop.f32.mrb[0].mxu0
      %v4263 = vpop.f32.mrb[0].mxu0
      %v4264 = vadd.f32 %v4039, %v4263
      %v4265 = vpop.f32.mrb[0].mxu0
      %4266 = vmatprep.mubr.bf16.mxu0 %v3233
      %4267 = vmatmul.mubr.bf16.gmra.mrb[0].mxu0 %v3232
      %v4268 = vpop.f32.mrb[0].mxu0
      %v4269 = vadd.f32 %v4044, %v4268
      %v4270 = vpop.f32.mrb[0].mxu0
      %v4271 = vpop.f32.mrb[0].mxu0
      %v4272 = vadd.f32 %v4047, %v4271
      %v4273 = vpop.f32.mrb[0].mxu0
      %4274 = vmatprep.mubr.bf16.mxu0 %v3242
      %4275 = vmatmul.mubr.bf16.gmra.mrb[0].mxu0 %v3241
      %v4276 = vpop.f32.mrb[0].mxu0
      %v4277 = vadd.f32 %v4052, %v4276
      %v4278 = vpop.f32.mrb[0].mxu0
      %v4279 = vpop.f32.mrb[0].mxu0
      %v4280 = vadd.f32 %v4055, %v4279
      %v4281 = vpop.f32.mrb[0].mxu0
      %4282 = vmatprep.mubr.bf16.mxu0 %v3251
      %4283 = vmatmul.mubr.bf16.gmra.mrb[0].mxu0 %v3250
      %v4284 = vpop.f32.mrb[0].mxu0
      %v4285 = vadd.f32 %v4060, %v4284
      %v4286 = vpop.f32.mrb[0].mxu0
      %v4287 = vpop.f32.mrb[0].mxu0
      %v4288 = vadd.f32 %v4063, %v4287
      %v4289 = vpop.f32.mrb[0].mxu0
      %4290 = vmatprep.mubr.bf16.mxu0 %v3260
      %4291 = vmatmul.mubr.bf16.gmra.mrb[0].mxu0 %v3259
      %v4292 = vpop.f32.mrb[0].mxu0
      %v4293 = vadd.f32 %v4068, %v4292
      %v4294 = vpop.f32.mrb[0].mxu0
      %v4295 = vpop.f32.mrb[0].mxu0
      %v4296 = vadd.f32 %v4071, %v4295
      %v4297 = vpop.f32.mrb[0].mxu0
      %4298 = vmatprep.mubr.bf16.mxu0 %v3269
      %4299 = vmatmul.mubr.bf16.gmra.mrb[0].mxu0 %v3268
      %v4300 = vpop.f32.mrb[0].mxu0
      %v4301 = vadd.f32 %v4076, %v4300
      %v4302 = vpop.f32.mrb[0].mxu0
      %v4303 = vpop.f32.mrb[0].mxu0
      %v4304 = vadd.f32 %v4079, %v4303
      %v4305 = vpop.f32.mrb[0].mxu0
      %4306 = vmatprep.mubr.bf16.mxu0 %v3278
      %4307 = vmatmul.mubr.bf16.gmra.mrb[0].mxu0 %v3277
      %v4308 = vpop.f32.mrb[0].mxu0
      %v4309 = vadd.f32 %v4084, %v4308
      %v4310 = vpop.f32.mrb[0].mxu0
      %v4311 = vpop.f32.mrb[0].mxu0
      %v4312 = vadd.f32 %v4087, %v4311
      %v4313 = vpop.f32.mrb[0].mxu0
      %4314 = vmatprep.mubr.bf16.mxu0 %v3287
      %4315 = vmatmul.mubr.bf16.gmra.mrb[0].mxu0 %v3286
      %v4316 = vpop.f32.mrb[0].mxu0
      %v4317 = vadd.f32 %v4092, %v4316
      %v4318 = vpop.f32.mrb[0].mxu0
      %v4319 = vpop.f32.mrb[0].mxu0
      %v4320 = vadd.f32 %v4095, %v4319
      %v4321 = vpop.f32.mrb[0].mxu0
      %4322 = vmatprep.mubr.bf16.mxu0 %v3296
      %4323 = vmatmul.mubr.bf16.gmra.mrb[0].mxu0 %v3295
      %v4324 = vpop.f32.mrb[0].mxu0
      %v4325 = vadd.f32 %v4100, %v4324
      %v4326 = vpop.f32.mrb[0].mxu0
      %v4327 = vpop.f32.mrb[0].mxu0
      %v4328 = vadd.f32 %v4103, %v4327
      %v4329 = vpop.f32.mrb[0].mxu0
      %4330 = vmatprep.mubr.bf16.mxu0 %v3305
      %4331 = vmatmul.mubr.bf16.gmra.mrb[0].mxu0 %v3304
      %v4332 = vpop.f32.mrb[0].mxu0
      %v4333 = vadd.f32 %v4108, %v4332
      %v4334 = vpop.f32.mrb[0].mxu0
      %v4335 = vpop.f32.mrb[0].mxu0
      %v4336 = vadd.f32 %v4111, %v4335
      %v4337 = vpop.f32.mrb[0].mxu0
      %4338 = vmatprep.mubr.bf16.mxu0 %v3314
      %4339 = vmatmul.mubr.bf16.gmra.mrb[0].mxu0 %v3313
      %v4340 = vpop.f32.mrb[0].mxu0
      %v4341 = vadd.f32 %v4116, %v4340
      %v4342 = vpop.f32.mrb[0].mxu0
      %v4343 = vpop.f32.mrb[0].mxu0
      %v4344 = vadd.f32 %v4119, %v4343
      %v4345 = vpop.f32.mrb[0].mxu0
      %4346 = vmatprep.mubr.bf16.mxu0 %v3323
      %4347 = vmatmul.mubr.bf16.gmra.mrb[0].mxu0 %v3322
      %v4348 = vpop.f32.mrb[0].mxu0
      %v4349 = vadd.f32 %v4124, %v4348
      %v4350 = vpop.f32.mrb[0].mxu0
      %v4351 = vpop.f32.mrb[0].mxu0
      %v4352 = vadd.f32 %v4127, %v4351
      %v4353 = vpop.f32.mrb[0].mxu0
      %4354 = vdwg.mxu0
      %4355 = vmatprep.subr.bf16.mxu0 0
      %4356 = vmatpush1.bf16.msra.mxu0 %v3793
      %4357 = vmatprep.subr.bf16.mxu0 0
      %4358 = vmatpush1.bf16.msra.mxu0 %v3794
      %4359 = vmatprep.subr.bf16.mxu0 0
      %4360 = vmatpush1.bf16.msra.mxu0 %v3795
      %4361 = vmatprep.subr.bf16.mxu0 0
      %4362 = vmatpush1.bf16.msra.mxu0 %v3796
      %4363 = vmatprep.subr.bf16.mxu0 0
      %4364 = vmatpush1.bf16.msra.mxu0 %v3797
      %4365 = vmatprep.subr.bf16.mxu0 0
      %4366 = vmatpush1.bf16.msra.mxu0 %v3798
      %4367 = vmatprep.subr.bf16.mxu0 0
      %4368 = vmatpush1.bf16.msra.mxu0 %v3799
      %4369 = vmatprep.subr.bf16.mxu0 0
      %4370 = vmatpush1.bf16.msra.mxu0 %v3800
      %4371 = vmatprep.subr.bf16.mxu0 0
      %4372 = vmatpush1.bf16.msra.mxu0 %v3801
      %4373 = vmatprep.subr.bf16.mxu0 0
      %4374 = vmatpush1.bf16.msra.mxu0 %v3802
      %4375 = vmatprep.subr.bf16.mxu0 0
      %4376 = vmatpush1.bf16.msra.mxu0 %v3803
      %4377 = vmatprep.subr.bf16.mxu0 0
      %4378 = vmatpush1.bf16.msra.mxu0 %v3804
      %4379 = vmatprep.subr.bf16.mxu0 0
      %4380 = vmatpush1.bf16.msra.mxu0 %v3805
      %4381 = vmatprep.subr.bf16.mxu0 0
      %4382 = vmatpush1.bf16.msra.mxu0 %v3806
      %4383 = vmatprep.subr.bf16.mxu0 0
      %4384 = vmatpush1.bf16.msra.mxu0 %v3807
      %4385 = vmatprep.subr.bf16.mxu0 0
      %4386 = vmatpush1.bf16.msra.mxu0 %v3808
      %4387 = vmatprep.mubr.bf16.mxu0 %v3118
      %4388 = vmatmul.mubr.bf16.gmra.mrb[0].mxu0 %v3117
      %v4389 = vpop.f32.mrb[0].mxu0
      %v4390 = vadd.f32 %v4165, %v4389
      %v4391 = vpop.f32.mrb[0].mxu0
      %v4392 = vpop.f32.mrb[0].mxu0
      %v4393 = vadd.f32 %v4168, %v4392
      %v4394 = vpop.f32.mrb[0].mxu0
      %4395 = vmatprep.mubr.bf16.mxu0 %v3127
      %4396 = vmatmul.mubr.bf16.gmra.mrb[0].mxu0 %v3126
      %v4397 = vpop.f32.mrb[0].mxu0
      %v4398 = vadd.f32 %v4173, %v4397
      %v4399 = vpop.f32.mrb[0].mxu0
      %v4400 = vpop.f32.mrb[0].mxu0
      %v4401 = vadd.f32 %v4176, %v4400
      %v4402 = vpop.f32.mrb[0].mxu0
      %4403 = vmatprep.mubr.bf16.mxu0 %v3136
      %4404 = vmatmul.mubr.bf16.gmra.mrb[0].mxu0 %v3135
      %v4405 = vpop.f32.mrb[0].mxu0
      %v4406 = vadd.f32 %v4181, %v4405
      %v4407 = vpop.f32.mrb[0].mxu0
      %v4408 = vpop.f32.mrb[0].mxu0
      %v4409 = vadd.f32 %v4184, %v4408
      %v4410 = vpop.f32.mrb[0].mxu0
      %4411 = vmatprep.mubr.bf16.mxu0 %v3145
      %4412 = vmatmul.mubr.bf16.gmra.mrb[0].mxu0 %v3144
      %v4413 = vpop.f32.mrb[0].mxu0
      %v4414 = vadd.f32 %v4189, %v4413
      %v4415 = vpop.f32.mrb[0].mxu0
      %v4416 = vpop.f32.mrb[0].mxu0
      %v4417 = vadd.f32 %v4192, %v4416
      %v4418 = vpop.f32.mrb[0].mxu0
      %4419 = vmatprep.mubr.bf16.mxu0 %v3154
      %4420 = vmatmul.mubr.bf16.gmra.mrb[0].mxu0 %v3153
      %v4421 = vpop.f32.mrb[0].mxu0
      %v4422 = vadd.f32 %v4197, %v4421
      %v4423 = vpop.f32.mrb[0].mxu0
      %v4424 = vpop.f32.mrb[0].mxu0
      %v4425 = vadd.f32 %v4200, %v4424
      %v4426 = vpop.f32.mrb[0].mxu0
      %4427 = vmatprep.mubr.bf16.mxu0 %v3163
      %4428 = vmatmul.mubr.bf16.gmra.mrb[0].mxu0 %v3162
      %v4429 = vpop.f32.mrb[0].mxu0
      %v4430 = vadd.f32 %v4205, %v4429
      %v4431 = vpop.f32.mrb[0].mxu0
      %v4432 = vpop.f32.mrb[0].mxu0
      %v4433 = vadd.f32 %v4208, %v4432
      %v4434 = vpop.f32.mrb[0].mxu0
      %4435 = vmatprep.mubr.bf16.mxu0 %v3172
      %4436 = vmatmul.mubr.bf16.gmra.mrb[0].mxu0 %v3171
      %v4437 = vpop.f32.mrb[0].mxu0
      %v4438 = vadd.f32 %v4213, %v4437
      %v4439 = vpop.f32.mrb[0].mxu0
      %v4440 = vpop.f32.mrb[0].mxu0
      %v4441 = vadd.f32 %v4216, %v4440
      %v4442 = vpop.f32.mrb[0].mxu0
      %4443 = vmatprep.mubr.bf16.mxu0 %v3181
      %4444 = vmatmul.mubr.bf16.gmra.mrb[0].mxu0 %v3180
      %v4445 = vpop.f32.mrb[0].mxu0
      %v4446 = vadd.f32 %v4221, %v4445
      %v4447 = vpop.f32.mrb[0].mxu0
      %v4448 = vpop.f32.mrb[0].mxu0
      %v4449 = vadd.f32 %v4224, %v4448
      %v4450 = vpop.f32.mrb[0].mxu0
      %4451 = vmatprep.mubr.bf16.mxu0 %v3190
      %4452 = vmatmul.mubr.bf16.gmra.mrb[0].mxu0 %v3189
      %v4453 = vpop.f32.mrb[0].mxu0
      %v4454 = vadd.f32 %v4229, %v4453
      %v4455 = vpop.f32.mrb[0].mxu0
      %v4456 = vpop.f32.mrb[0].mxu0
      %v4457 = vadd.f32 %v4232, %v4456
      %v4458 = vpop.f32.mrb[0].mxu0
      %4459 = vmatprep.mubr.bf16.mxu0 %v3199
      %4460 = vmatmul.mubr.bf16.gmra.mrb[0].mxu0 %v3198
      %v4461 = vpop.f32.mrb[0].mxu0
      %v4462 = vadd.f32 %v4237, %v4461
      %v4463 = vpop.f32.mrb[0].mxu0
      %v4464 = vpop.f32.mrb[0].mxu0
      %v4465 = vadd.f32 %v4240, %v4464
      %v4466 = vpop.f32.mrb[0].mxu0
      %4467 = vmatprep.mubr.bf16.mxu0 %v3208
      %4468 = vmatmul.mubr.bf16.gmra.mrb[0].mxu0 %v3207
      %v4469 = vpop.f32.mrb[0].mxu0
      %v4470 = vadd.f32 %v4245, %v4469
      %v4471 = vpop.f32.mrb[0].mxu0
      %v4472 = vpop.f32.mrb[0].mxu0
      %v4473 = vadd.f32 %v4248, %v4472
      %v4474 = vpop.f32.mrb[0].mxu0
      %4475 = vmatprep.mubr.bf16.mxu0 %v3217
      %4476 = vmatmul.mubr.bf16.gmra.mrb[0].mxu0 %v3216
      %v4477 = vpop.f32.mrb[0].mxu0
      %v4478 = vadd.f32 %v4253, %v4477
      %v4479 = vpop.f32.mrb[0].mxu0
      %v4480 = vpop.f32.mrb[0].mxu0
      %v4481 = vadd.f32 %v4256, %v4480
      %v4482 = vpop.f32.mrb[0].mxu0
      %4483 = vmatprep.mubr.bf16.mxu0 %v3226
      %4484 = vmatmul.mubr.bf16.gmra.mrb[0].mxu0 %v3225
      %v4485 = vpop.f32.mrb[0].mxu0
      %v4486 = vadd.f32 %v4261, %v4485
      %v4487 = vpop.f32.mrb[0].mxu0
      %v4488 = vpop.f32.mrb[0].mxu0
      %v4489 = vadd.f32 %v4264, %v4488
      %v4490 = vpop.f32.mrb[0].mxu0
      %4491 = vmatprep.mubr.bf16.mxu0 %v3235
      %4492 = vmatmul.mubr.bf16.gmra.mrb[0].mxu0 %v3234
      %v4493 = vpop.f32.mrb[0].mxu0
      %v4494 = vadd.f32 %v4269, %v4493
      %v4495 = vpop.f32.mrb[0].mxu0
      %v4496 = vpop.f32.mrb[0].mxu0
      %v4497 = vadd.f32 %v4272, %v4496
      %v4498 = vpop.f32.mrb[0].mxu0
      %4499 = vmatprep.mubr.bf16.mxu0 %v3244
      %4500 = vmatmul.mubr.bf16.gmra.mrb[0].mxu0 %v3243
      %v4501 = vpop.f32.mrb[0].mxu0
      %v4502 = vadd.f32 %v4277, %v4501
      %v4503 = vpop.f32.mrb[0].mxu0
      %v4504 = vpop.f32.mrb[0].mxu0
      %v4505 = vadd.f32 %v4280, %v4504
      %v4506 = vpop.f32.mrb[0].mxu0
      %4507 = vmatprep.mubr.bf16.mxu0 %v3253
      %4508 = vmatmul.mubr.bf16.gmra.mrb[0].mxu0 %v3252
      %v4509 = vpop.f32.mrb[0].mxu0
      %v4510 = vadd.f32 %v4285, %v4509
      %v4511 = vpop.f32.mrb[0].mxu0
      %v4512 = vpop.f32.mrb[0].mxu0
      %v4513 = vadd.f32 %v4288, %v4512
      %v4514 = vpop.f32.mrb[0].mxu0
      %4515 = vmatprep.mubr.bf16.mxu0 %v3262
      %4516 = vmatmul.mubr.bf16.gmra.mrb[0].mxu0 %v3261
      %v4517 = vpop.f32.mrb[0].mxu0
      %v4518 = vadd.f32 %v4293, %v4517
      %v4519 = vpop.f32.mrb[0].mxu0
      %v4520 = vpop.f32.mrb[0].mxu0
      %v4521 = vadd.f32 %v4296, %v4520
      %v4522 = vpop.f32.mrb[0].mxu0
      %4523 = vmatprep.mubr.bf16.mxu0 %v3271
      %4524 = vmatmul.mubr.bf16.gmra.mrb[0].mxu0 %v3270
      %v4525 = vpop.f32.mrb[0].mxu0
      %v4526 = vadd.f32 %v4301, %v4525
      %v4527 = vpop.f32.mrb[0].mxu0
      %v4528 = vpop.f32.mrb[0].mxu0
      %v4529 = vadd.f32 %v4304, %v4528
      %v4530 = vpop.f32.mrb[0].mxu0
      %4531 = vmatprep.mubr.bf16.mxu0 %v3280
      %4532 = vmatmul.mubr.bf16.gmra.mrb[0].mxu0 %v3279
      %v4533 = vpop.f32.mrb[0].mxu0
      %v4534 = vadd.f32 %v4309, %v4533
      %v4535 = vpop.f32.mrb[0].mxu0
      %v4536 = vpop.f32.mrb[0].mxu0
      %v4537 = vadd.f32 %v4312, %v4536
      %v4538 = vpop.f32.mrb[0].mxu0
      %4539 = vmatprep.mubr.bf16.mxu0 %v3289
      %4540 = vmatmul.mubr.bf16.gmra.mrb[0].mxu0 %v3288
      %v4541 = vpop.f32.mrb[0].mxu0
      %v4542 = vadd.f32 %v4317, %v4541
      %v4543 = vpop.f32.mrb[0].mxu0
      %v4544 = vpop.f32.mrb[0].mxu0
      %v4545 = vadd.f32 %v4320, %v4544
      %v4546 = vpop.f32.mrb[0].mxu0
      %4547 = vmatprep.mubr.bf16.mxu0 %v3298
      %4548 = vmatmul.mubr.bf16.gmra.mrb[0].mxu0 %v3297
      %v4549 = vpop.f32.mrb[0].mxu0
      %v4550 = vadd.f32 %v4325, %v4549
      %v4551 = vpop.f32.mrb[0].mxu0
      %v4552 = vpop.f32.mrb[0].mxu0
      %v4553 = vadd.f32 %v4328, %v4552
      %v4554 = vpop.f32.mrb[0].mxu0
      %4555 = vmatprep.mubr.bf16.mxu0 %v3307
      %4556 = vmatmul.mubr.bf16.gmra.mrb[0].mxu0 %v3306
      %v4557 = vpop.f32.mrb[0].mxu0
      %v4558 = vadd.f32 %v4333, %v4557
      %v4559 = vpop.f32.mrb[0].mxu0
      %v4560 = vpop.f32.mrb[0].mxu0
      %v4561 = vadd.f32 %v4336, %v4560
      %v4562 = vpop.f32.mrb[0].mxu0
      %4563 = vmatprep.mubr.bf16.mxu0 %v3316
      %4564 = vmatmul.mubr.bf16.gmra.mrb[0].mxu0 %v3315
      %v4565 = vpop.f32.mrb[0].mxu0
      %v4566 = vadd.f32 %v4341, %v4565
      %v4567 = vpop.f32.mrb[0].mxu0
      %v4568 = vpop.f32.mrb[0].mxu0
      %v4569 = vadd.f32 %v4344, %v4568
      %v4570 = vpop.f32.mrb[0].mxu0
      %4571 = vmatprep.mubr.bf16.mxu0 %v3325
      %4572 = vmatmul.mubr.bf16.gmra.mrb[0].mxu0 %v3324
      %v4573 = vpop.f32.mrb[0].mxu0
      %v4574 = vadd.f32 %v4349, %v4573
      %v4575 = vpop.f32.mrb[0].mxu0
      %v4576 = vpop.f32.mrb[0].mxu0
      %v4577 = vadd.f32 %v4352, %v4576
      %v4578 = vpop.f32.mrb[0].mxu0
      %4579 = vdwg.mxu0
      %4580 = vmatprep.subr.bf16.mxu0 0
      %4581 = vmatpush1.bf16.msra.mxu0 %v3809
      %4582 = vmatprep.subr.bf16.mxu0 0
      %4583 = vmatpush1.bf16.msra.mxu0 %v3810
      %4584 = vmatprep.subr.bf16.mxu0 0
      %4585 = vmatpush1.bf16.msra.mxu0 %v3811
      %4586 = vmatprep.subr.bf16.mxu0 0
      %4587 = vmatpush1.bf16.msra.mxu0 %v3812
      %4588 = vmatprep.subr.bf16.mxu0 0
      %4589 = vmatpush1.bf16.msra.mxu0 %v3813
      %4590 = vmatprep.subr.bf16.mxu0 0
      %4591 = vmatpush1.bf16.msra.mxu0 %v3814
      %4592 = vmatprep.subr.bf16.mxu0 0
      %4593 = vmatpush1.bf16.msra.mxu0 %v3815
      %4594 = vmatprep.subr.bf16.mxu0 0
      %4595 = vmatpush1.bf16.msra.mxu0 %v3816
      %4596 = vmatprep.subr.bf16.mxu0 0
      %4597 = vmatpush1.bf16.msra.mxu0 %v3817
      %4598 = vmatprep.subr.bf16.mxu0 0
      %4599 = vmatpush1.bf16.msra.mxu0 %v3818
      %4600 = vmatprep.subr.bf16.mxu0 0
      %4601 = vmatpush1.bf16.msra.mxu0 %v3819
      %4602 = vmatprep.subr.bf16.mxu0 0
      %4603 = vmatpush1.bf16.msra.mxu0 %v3820
      %4604 = vmatprep.subr.bf16.mxu0 0
      %4605 = vmatpush1.bf16.msra.mxu0 %v3821
      %4606 = vmatprep.subr.bf16.mxu0 0
      %4607 = vmatpush1.bf16.msra.mxu0 %v3822
      %4608 = vmatprep.subr.bf16.mxu0 0
      %4609 = vmatpush1.bf16.msra.mxu0 %v3823
      %4610 = vmatprep.subr.bf16.mxu0 0
      %4611 = vmatpush1.bf16.msra.mxu0 %v3824
      %4612 = vmatprep.mubr.bf16.mxu0 %v3120
      %4613 = vmatmul.mubr.bf16.gmra.mrb[0].mxu0 %v3119
      %v4614 = vpop.f32.mrb[0].mxu0
      %v4615 = vadd.f32 %v4390, %v4614
      %v4616 = vpop.f32.mrb[0].mxu0
      %v4617 = vpop.f32.mrb[0].mxu0
      %v4618 = vadd.f32 %v4393, %v4617
      %v4619 = vpop.f32.mrb[0].mxu0
      %4620 = vmatprep.mubr.bf16.mxu0 %v3129
      %4621 = vmatmul.mubr.bf16.gmra.mrb[0].mxu0 %v3128
      %v4622 = vpop.f32.mrb[0].mxu0
      %v4623 = vadd.f32 %v4398, %v4622
      %v4624 = vpop.f32.mrb[0].mxu0
      %v4625 = vpop.f32.mrb[0].mxu0
      %v4626 = vadd.f32 %v4401, %v4625
      %v4627 = vpop.f32.mrb[0].mxu0
      %4628 = vmatprep.mubr.bf16.mxu0 %v3138
      %4629 = vmatmul.mubr.bf16.gmra.mrb[0].mxu0 %v3137
      %v4630 = vpop.f32.mrb[0].mxu0
      %v4631 = vadd.f32 %v4406, %v4630
      %v4632 = vpop.f32.mrb[0].mxu0
      %v4633 = vpop.f32.mrb[0].mxu0
      %v4634 = vadd.f32 %v4409, %v4633
      %v4635 = vpop.f32.mrb[0].mxu0
      %4636 = vmatprep.mubr.bf16.mxu0 %v3147
      %4637 = vmatmul.mubr.bf16.gmra.mrb[0].mxu0 %v3146
      %v4638 = vpop.f32.mrb[0].mxu0
      %v4639 = vadd.f32 %v4414, %v4638
      %v4640 = vpop.f32.mrb[0].mxu0
      %v4641 = vpop.f32.mrb[0].mxu0
      %v4642 = vadd.f32 %v4417, %v4641
      %v4643 = vpop.f32.mrb[0].mxu0
      %4644 = vmatprep.mubr.bf16.mxu0 %v3156
      %4645 = vmatmul.mubr.bf16.gmra.mrb[0].mxu0 %v3155
      %v4646 = vpop.f32.mrb[0].mxu0
      %v4647 = vadd.f32 %v4422, %v4646
      %v4648 = vpop.f32.mrb[0].mxu0
      %v4649 = vpop.f32.mrb[0].mxu0
      %v4650 = vadd.f32 %v4425, %v4649
      %v4651 = vpop.f32.mrb[0].mxu0
      %4652 = vmatprep.mubr.bf16.mxu0 %v3165
      %4653 = vmatmul.mubr.bf16.gmra.mrb[0].mxu0 %v3164
      %v4654 = vpop.f32.mrb[0].mxu0
      %v4655 = vadd.f32 %v4430, %v4654
      %v4656 = vpop.f32.mrb[0].mxu0
      %v4657 = vpop.f32.mrb[0].mxu0
      %v4658 = vadd.f32 %v4433, %v4657
      %v4659 = vpop.f32.mrb[0].mxu0
      %4660 = vmatprep.mubr.bf16.mxu0 %v3174
      %4661 = vmatmul.mubr.bf16.gmra.mrb[0].mxu0 %v3173
      %v4662 = vpop.f32.mrb[0].mxu0
      %v4663 = vadd.f32 %v4438, %v4662
      %v4664 = vpop.f32.mrb[0].mxu0
      %v4665 = vpop.f32.mrb[0].mxu0
      %v4666 = vadd.f32 %v4441, %v4665
      %v4667 = vpop.f32.mrb[0].mxu0
      %4668 = vmatprep.mubr.bf16.mxu0 %v3183
      %4669 = vmatmul.mubr.bf16.gmra.mrb[0].mxu0 %v3182
      %v4670 = vpop.f32.mrb[0].mxu0
      %v4671 = vadd.f32 %v4446, %v4670
      %v4672 = vpop.f32.mrb[0].mxu0
      %v4673 = vpop.f32.mrb[0].mxu0
      %v4674 = vadd.f32 %v4449, %v4673
      %v4675 = vpop.f32.mrb[0].mxu0
      %4676 = vmatprep.mubr.bf16.mxu0 %v3192
      %4677 = vmatmul.mubr.bf16.gmra.mrb[0].mxu0 %v3191
      %v4678 = vpop.f32.mrb[0].mxu0
      %v4679 = vadd.f32 %v4454, %v4678
      %v4680 = vpop.f32.mrb[0].mxu0
      %v4681 = vpop.f32.mrb[0].mxu0
      %v4682 = vadd.f32 %v4457, %v4681
      %v4683 = vpop.f32.mrb[0].mxu0
      %4684 = vmatprep.mubr.bf16.mxu0 %v3201
      %4685 = vmatmul.mubr.bf16.gmra.mrb[0].mxu0 %v3200
      %v4686 = vpop.f32.mrb[0].mxu0
      %v4687 = vadd.f32 %v4462, %v4686
      %v4688 = vpop.f32.mrb[0].mxu0
      %v4689 = vpop.f32.mrb[0].mxu0
      %v4690 = vadd.f32 %v4465, %v4689
      %v4691 = vpop.f32.mrb[0].mxu0
      %4692 = vmatprep.mubr.bf16.mxu0 %v3210
      %4693 = vmatmul.mubr.bf16.gmra.mrb[0].mxu0 %v3209
      %v4694 = vpop.f32.mrb[0].mxu0
      %v4695 = vadd.f32 %v4470, %v4694
      %v4696 = vpop.f32.mrb[0].mxu0
      %v4697 = vpop.f32.mrb[0].mxu0
      %v4698 = vadd.f32 %v4473, %v4697
      %v4699 = vpop.f32.mrb[0].mxu0
      %4700 = vmatprep.mubr.bf16.mxu0 %v3219
      %4701 = vmatmul.mubr.bf16.gmra.mrb[0].mxu0 %v3218
      %v4702 = vpop.f32.mrb[0].mxu0
      %v4703 = vadd.f32 %v4478, %v4702
      %v4704 = vpop.f32.mrb[0].mxu0
      %v4705 = vpop.f32.mrb[0].mxu0
      %v4706 = vadd.f32 %v4481, %v4705
      %v4707 = vpop.f32.mrb[0].mxu0
      %4708 = vmatprep.mubr.bf16.mxu0 %v3228
      %4709 = vmatmul.mubr.bf16.gmra.mrb[0].mxu0 %v3227
      %v4710 = vpop.f32.mrb[0].mxu0
      %v4711 = vadd.f32 %v4486, %v4710
      %v4712 = vpop.f32.mrb[0].mxu0
      %v4713 = vpop.f32.mrb[0].mxu0
      %v4714 = vadd.f32 %v4489, %v4713
      %v4715 = vpop.f32.mrb[0].mxu0
      %4716 = vmatprep.mubr.bf16.mxu0 %v3237
      %4717 = vmatmul.mubr.bf16.gmra.mrb[0].mxu0 %v3236
      %v4718 = vpop.f32.mrb[0].mxu0
      %v4719 = vadd.f32 %v4494, %v4718
      %v4720 = vpop.f32.mrb[0].mxu0
      %v4721 = vpop.f32.mrb[0].mxu0
      %v4722 = vadd.f32 %v4497, %v4721
      %v4723 = vpop.f32.mrb[0].mxu0
      %4724 = vmatprep.mubr.bf16.mxu0 %v3246
      %4725 = vmatmul.mubr.bf16.gmra.mrb[0].mxu0 %v3245
      %v4726 = vpop.f32.mrb[0].mxu0
      %v4727 = vadd.f32 %v4502, %v4726
      %v4728 = vpop.f32.mrb[0].mxu0
      %v4729 = vpop.f32.mrb[0].mxu0
      %v4730 = vadd.f32 %v4505, %v4729
      %v4731 = vpop.f32.mrb[0].mxu0
      %4732 = vmatprep.mubr.bf16.mxu0 %v3255
      %4733 = vmatmul.mubr.bf16.gmra.mrb[0].mxu0 %v3254
      %v4734 = vpop.f32.mrb[0].mxu0
      %v4735 = vadd.f32 %v4510, %v4734
      %v4736 = vpop.f32.mrb[0].mxu0
      %v4737 = vpop.f32.mrb[0].mxu0
      %v4738 = vadd.f32 %v4513, %v4737
      %v4739 = vpop.f32.mrb[0].mxu0
      %4740 = vmatprep.mubr.bf16.mxu0 %v3264
      %4741 = vmatmul.mubr.bf16.gmra.mrb[0].mxu0 %v3263
      %v4742 = vpop.f32.mrb[0].mxu0
      %v4743 = vadd.f32 %v4518, %v4742
      %v4744 = vpop.f32.mrb[0].mxu0
      %v4745 = vpop.f32.mrb[0].mxu0
      %v4746 = vadd.f32 %v4521, %v4745
      %v4747 = vpop.f32.mrb[0].mxu0
      %4748 = vmatprep.mubr.bf16.mxu0 %v3273
      %4749 = vmatmul.mubr.bf16.gmra.mrb[0].mxu0 %v3272
      %v4750 = vpop.f32.mrb[0].mxu0
      %v4751 = vadd.f32 %v4526, %v4750
      %v4752 = vpop.f32.mrb[0].mxu0
      %v4753 = vpop.f32.mrb[0].mxu0
      %v4754 = vadd.f32 %v4529, %v4753
      %v4755 = vpop.f32.mrb[0].mxu0
      %4756 = vmatprep.mubr.bf16.mxu0 %v3282
      %4757 = vmatmul.mubr.bf16.gmra.mrb[0].mxu0 %v3281
      %v4758 = vpop.f32.mrb[0].mxu0
      %v4759 = vadd.f32 %v4534, %v4758
      %v4760 = vpop.f32.mrb[0].mxu0
      %v4761 = vpop.f32.mrb[0].mxu0
      %v4762 = vadd.f32 %v4537, %v4761
      %v4763 = vpop.f32.mrb[0].mxu0
      %4764 = vmatprep.mubr.bf16.mxu0 %v3291
      %4765 = vmatmul.mubr.bf16.gmra.mrb[0].mxu0 %v3290
      %v4766 = vpop.f32.mrb[0].mxu0
      %v4767 = vadd.f32 %v4542, %v4766
      %v4768 = vpop.f32.mrb[0].mxu0
      %v4769 = vpop.f32.mrb[0].mxu0
      %v4770 = vadd.f32 %v4545, %v4769
      %v4771 = vpop.f32.mrb[0].mxu0
      %4772 = vmatprep.mubr.bf16.mxu0 %v3300
      %4773 = vmatmul.mubr.bf16.gmra.mrb[0].mxu0 %v3299
      %v4774 = vpop.f32.mrb[0].mxu0
      %v4775 = vadd.f32 %v4550, %v4774
      %v4776 = vpop.f32.mrb[0].mxu0
      %v4777 = vpop.f32.mrb[0].mxu0
      %v4778 = vadd.f32 %v4553, %v4777
      %v4779 = vpop.f32.mrb[0].mxu0
      %4780 = vmatprep.mubr.bf16.mxu0 %v3309
      %4781 = vmatmul.mubr.bf16.gmra.mrb[0].mxu0 %v3308
      %v4782 = vpop.f32.mrb[0].mxu0
      %v4783 = vadd.f32 %v4558, %v4782
      %v4784 = vpop.f32.mrb[0].mxu0
      %v4785 = vpop.f32.mrb[0].mxu0
      %v4786 = vadd.f32 %v4561, %v4785
      %v4787 = vpop.f32.mrb[0].mxu0
      %4788 = vmatprep.mubr.bf16.mxu0 %v3318
      %4789 = vmatmul.mubr.bf16.gmra.mrb[0].mxu0 %v3317
      %v4790 = vpop.f32.mrb[0].mxu0
      %v4791 = vadd.f32 %v4566, %v4790
      %v4792 = vpop.f32.mrb[0].mxu0
      %v4793 = vpop.f32.mrb[0].mxu0
      %v4794 = vadd.f32 %v4569, %v4793
      %v4795 = vpop.f32.mrb[0].mxu0
      %4796 = vmatprep.mubr.bf16.mxu0 %v3327
      %4797 = vmatmul.mubr.bf16.gmra.mrb[0].mxu0 %v3326
      %v4798 = vpop.f32.mrb[0].mxu0
      %v4799 = vadd.f32 %v4574, %v4798
      %v4800 = vpop.f32.mrb[0].mxu0
      %v4801 = vpop.f32.mrb[0].mxu0
      %v4802 = vadd.f32 %v4577, %v4801
      %v4803 = vpop.f32.mrb[0].mxu0
      %4804 = vdwg.mxu0
      %4805 = vmatprep.subr.bf16.mxu0 0
      %4806 = vmatpush1.bf16.msra.mxu0 %v3825
      %4807 = vmatprep.subr.bf16.mxu0 0
      %4808 = vmatpush1.bf16.msra.mxu0 %v3826
      %4809 = vmatprep.subr.bf16.mxu0 0
      %4810 = vmatpush1.bf16.msra.mxu0 %v3827
      %4811 = vmatprep.subr.bf16.mxu0 0
      %4812 = vmatpush1.bf16.msra.mxu0 %v3828
      %4813 = vmatprep.subr.bf16.mxu0 0
      %4814 = vmatpush1.bf16.msra.mxu0 %v3829
      %4815 = vmatprep.subr.bf16.mxu0 0
      %4816 = vmatpush1.bf16.msra.mxu0 %v3830
      %4817 = vmatprep.subr.bf16.mxu0 0
      %4818 = vmatpush1.bf16.msra.mxu0 %v3831
      %4819 = vmatprep.subr.bf16.mxu0 0
      %4820 = vmatpush1.bf16.msra.mxu0 %v3832
      %4821 = vmatprep.subr.bf16.mxu0 0
      %4822 = vmatpush1.bf16.msra.mxu0 0
      %4823 = vmatprep.subr.bf16.mxu0 0
      %4824 = vmatpush1.bf16.msra.mxu0 0
      %4825 = vmatprep.subr.bf16.mxu0 0
      %4826 = vmatpush1.bf16.msra.mxu0 0
      %4827 = vmatprep.subr.bf16.mxu0 0
      %4828 = vmatpush1.bf16.msra.mxu0 0
      %4829 = vmatprep.subr.bf16.mxu0 0
      %4830 = vmatpush1.bf16.msra.mxu0 0
      %4831 = vmatprep.subr.bf16.mxu0 0
      %4832 = vmatpush1.bf16.msra.mxu0 0
      %4833 = vmatprep.subr.bf16.mxu0 0
      %4834 = vmatpush1.bf16.msra.mxu0 0
      %4835 = vmatprep.subr.bf16.mxu0 0
      %4836 = vmatpush1.bf16.msra.mxu0 0
      %4837 = vmatprep.mubr.bf16.mxu0 0
      %4838 = vmatmul.mubr.bf16.gmra.mrb[0].mxu0 %v3121
      %v4839 = vpop.f32.mrb[0].mxu0
      %v4840 = vadd.f32 %v4615, %v4839
      %v4841 = vpop.f32.mrb[0].mxu0
      %v4842 = vpop.f32.mrb[0].mxu0
      %v4843 = vadd.f32 %v4618, %v4842
      %v4844 = vpop.f32.mrb[0].mxu0
      %4845 = vmatprep.mubr.bf16.mxu0 0
      %4846 = vmatmul.mubr.bf16.gmra.mrb[0].mxu0 %v3130
      %v4847 = vpop.f32.mrb[0].mxu0
      %v4848 = vadd.f32 %v4623, %v4847
      %v4849 = vpop.f32.mrb[0].mxu0
      %v4850 = vpop.f32.mrb[0].mxu0
      %v4851 = vadd.f32 %v4626, %v4850
      %v4852 = vpop.f32.mrb[0].mxu0
      %4853 = vmatprep.mubr.bf16.mxu0 0
      %4854 = vmatmul.mubr.bf16.gmra.mrb[0].mxu0 %v3139
      %v4855 = vpop.f32.mrb[0].mxu0
      %v4856 = vadd.f32 %v4631, %v4855
      %v4857 = vpop.f32.mrb[0].mxu0
      %v4858 = vpop.f32.mrb[0].mxu0
      %v4859 = vadd.f32 %v4634, %v4858
      %v4860 = vpop.f32.mrb[0].mxu0
      %4861 = vmatprep.mubr.bf16.mxu0 0
      %4862 = vmatmul.mubr.bf16.gmra.mrb[0].mxu0 %v3148
      %v4863 = vpop.f32.mrb[0].mxu0
      %v4864 = vadd.f32 %v4639, %v4863
      %v4865 = vpop.f32.mrb[0].mxu0
      %v4866 = vpop.f32.mrb[0].mxu0
      %v4867 = vadd.f32 %v4642, %v4866
      %v4868 = vpop.f32.mrb[0].mxu0
      %4869 = vmatprep.mubr.bf16.mxu0 0
      %4870 = vmatmul.mubr.bf16.gmra.mrb[0].mxu0 %v3157
      %v4871 = vpop.f32.mrb[0].mxu0
      %v4872 = vadd.f32 %v4647, %v4871
      %v4873 = vpop.f32.mrb[0].mxu0
      %v4874 = vpop.f32.mrb[0].mxu0
      %v4875 = vadd.f32 %v4650, %v4874
      %v4876 = vpop.f32.mrb[0].mxu0
      %4877 = vmatprep.mubr.bf16.mxu0 0
      %4878 = vmatmul.mubr.bf16.gmra.mrb[0].mxu0 %v3166
      %v4879 = vpop.f32.mrb[0].mxu0
      %v4880 = vadd.f32 %v4655, %v4879
      %v4881 = vpop.f32.mrb[0].mxu0
      %v4882 = vpop.f32.mrb[0].mxu0
      %v4883 = vadd.f32 %v4658, %v4882
      %v4884 = vpop.f32.mrb[0].mxu0
      %4885 = vmatprep.mubr.bf16.mxu0 0
      %4886 = vmatmul.mubr.bf16.gmra.mrb[0].mxu0 %v3175
      %v4887 = vpop.f32.mrb[0].mxu0
      %v4888 = vadd.f32 %v4663, %v4887
      %v4889 = vpop.f32.mrb[0].mxu0
      %v4890 = vpop.f32.mrb[0].mxu0
      %v4891 = vadd.f32 %v4666, %v4890
      %v4892 = vpop.f32.mrb[0].mxu0
      %4893 = vmatprep.mubr.bf16.mxu0 0
      %4894 = vmatmul.mubr.bf16.gmra.mrb[0].mxu0 %v3184
      %v4895 = vpop.f32.mrb[0].mxu0
      %v4896 = vadd.f32 %v4671, %v4895
      %v4897 = vpop.f32.mrb[0].mxu0
      %v4898 = vpop.f32.mrb[0].mxu0
      %v4899 = vadd.f32 %v4674, %v4898
      %v4900 = vpop.f32.mrb[0].mxu0
      %4901 = vmatprep.mubr.bf16.mxu0 0
      %4902 = vmatmul.mubr.bf16.gmra.mrb[0].mxu0 %v3193
      %v4903 = vpop.f32.mrb[0].mxu0
      %v4904 = vadd.f32 %v4679, %v4903
      %v4905 = vpop.f32.mrb[0].mxu0
      %v4906 = vpop.f32.mrb[0].mxu0
      %v4907 = vadd.f32 %v4682, %v4906
      %v4908 = vpop.f32.mrb[0].mxu0
      %4909 = vmatprep.mubr.bf16.mxu0 0
      %4910 = vmatmul.mubr.bf16.gmra.mrb[0].mxu0 %v3202
      %v4911 = vpop.f32.mrb[0].mxu0
      %v4912 = vadd.f32 %v4687, %v4911
      %v4913 = vpop.f32.mrb[0].mxu0
      %v4914 = vpop.f32.mrb[0].mxu0
      %v4915 = vadd.f32 %v4690, %v4914
      %v4916 = vpop.f32.mrb[0].mxu0
      %4917 = vmatprep.mubr.bf16.mxu0 0
      %4918 = vmatmul.mubr.bf16.gmra.mrb[0].mxu0 %v3211
      %v4919 = vpop.f32.mrb[0].mxu0
      %v4920 = vadd.f32 %v4695, %v4919
      %v4921 = vpop.f32.mrb[0].mxu0
      %v4922 = vpop.f32.mrb[0].mxu0
      %v4923 = vadd.f32 %v4698, %v4922
      %v4924 = vpop.f32.mrb[0].mxu0
      %4925 = vmatprep.mubr.bf16.mxu0 0
      %4926 = vmatmul.mubr.bf16.gmra.mrb[0].mxu0 %v3220
      %v4927 = vpop.f32.mrb[0].mxu0
      %v4928 = vadd.f32 %v4703, %v4927
      %v4929 = vpop.f32.mrb[0].mxu0
      %v4930 = vpop.f32.mrb[0].mxu0
      %v4931 = vadd.f32 %v4706, %v4930
      %v4932 = vpop.f32.mrb[0].mxu0
      %4933 = vmatprep.mubr.bf16.mxu0 0
      %4934 = vmatmul.mubr.bf16.gmra.mrb[0].mxu0 %v3229
      %v4935 = vpop.f32.mrb[0].mxu0
      %v4936 = vadd.f32 %v4711, %v4935
      %v4937 = vpop.f32.mrb[0].mxu0
      %v4938 = vpop.f32.mrb[0].mxu0
      %v4939 = vadd.f32 %v4714, %v4938
      %v4940 = vpop.f32.mrb[0].mxu0
      %4941 = vmatprep.mubr.bf16.mxu0 0
      %4942 = vmatmul.mubr.bf16.gmra.mrb[0].mxu0 %v3238
      %v4943 = vpop.f32.mrb[0].mxu0
      %v4944 = vadd.f32 %v4719, %v4943
      %v4945 = vpop.f32.mrb[0].mxu0
      %v4946 = vpop.f32.mrb[0].mxu0
      %v4947 = vadd.f32 %v4722, %v4946
      %v4948 = vpop.f32.mrb[0].mxu0
      %4949 = vmatprep.mubr.bf16.mxu0 0
      %4950 = vmatmul.mubr.bf16.gmra.mrb[0].mxu0 %v3247
      %v4951 = vpop.f32.mrb[0].mxu0
      %v4952 = vadd.f32 %v4727, %v4951
      %v4953 = vpop.f32.mrb[0].mxu0
      %v4954 = vpop.f32.mrb[0].mxu0
      %v4955 = vadd.f32 %v4730, %v4954
      %v4956 = vpop.f32.mrb[0].mxu0
      %4957 = vmatprep.mubr.bf16.mxu0 0
      %4958 = vmatmul.mubr.bf16.gmra.mrb[0].mxu0 %v3256
      %v4959 = vpop.f32.mrb[0].mxu0
      %v4960 = vadd.f32 %v4735, %v4959
      %v4961 = vpop.f32.mrb[0].mxu0
      %v4962 = vpop.f32.mrb[0].mxu0
      %v4963 = vadd.f32 %v4738, %v4962
      %v4964 = vpop.f32.mrb[0].mxu0
      %4965 = vmatprep.mubr.bf16.mxu0 0
      %4966 = vmatmul.mubr.bf16.gmra.mrb[0].mxu0 %v3265
      %v4967 = vpop.f32.mrb[0].mxu0
      %v4968 = vadd.f32 %v4743, %v4967
      %v4969 = vpop.f32.mrb[0].mxu0
      %v4970 = vpop.f32.mrb[0].mxu0
      %v4971 = vadd.f32 %v4746, %v4970
      %v4972 = vpop.f32.mrb[0].mxu0
      %4973 = vmatprep.mubr.bf16.mxu0 0
      %4974 = vmatmul.mubr.bf16.gmra.mrb[0].mxu0 %v3274
      %v4975 = vpop.f32.mrb[0].mxu0
      %v4976 = vadd.f32 %v4751, %v4975
      %v4977 = vpop.f32.mrb[0].mxu0
      %v4978 = vpop.f32.mrb[0].mxu0
      %v4979 = vadd.f32 %v4754, %v4978
      %v4980 = vpop.f32.mrb[0].mxu0
      %4981 = vmatprep.mubr.bf16.mxu0 0
      %4982 = vmatmul.mubr.bf16.gmra.mrb[0].mxu0 %v3283
      %v4983 = vpop.f32.mrb[0].mxu0
      %v4984 = vadd.f32 %v4759, %v4983
      %v4985 = vpop.f32.mrb[0].mxu0
      %v4986 = vpop.f32.mrb[0].mxu0
      %v4987 = vadd.f32 %v4762, %v4986
      %v4988 = vpop.f32.mrb[0].mxu0
      %4989 = vmatprep.mubr.bf16.mxu0 0
      %4990 = vmatmul.mubr.bf16.gmra.mrb[0].mxu0 %v3292
      %v4991 = vpop.f32.mrb[0].mxu0
      %v4992 = vadd.f32 %v4767, %v4991
      %v4993 = vpop.f32.mrb[0].mxu0
      %v4994 = vpop.f32.mrb[0].mxu0
      %v4995 = vadd.f32 %v4770, %v4994
      %v4996 = vpop.f32.mrb[0].mxu0
      %4997 = vmatprep.mubr.bf16.mxu0 0
      %4998 = vmatmul.mubr.bf16.gmra.mrb[0].mxu0 %v3301
      %v4999 = vpop.f32.mrb[0].mxu0
      %v5000 = vadd.f32 %v4775, %v4999
      %v5001 = vpop.f32.mrb[0].mxu0
      %v5002 = vpop.f32.mrb[0].mxu0
      %v5003 = vadd.f32 %v4778, %v5002
      %v5004 = vpop.f32.mrb[0].mxu0
      %5005 = vmatprep.mubr.bf16.mxu0 0
      %5006 = vmatmul.mubr.bf16.gmra.mrb[0].mxu0 %v3310
      %v5007 = vpop.f32.mrb[0].mxu0
      %v5008 = vadd.f32 %v4783, %v5007
      %v5009 = vpop.f32.mrb[0].mxu0
      %v5010 = vpop.f32.mrb[0].mxu0
      %v5011 = vadd.f32 %v4786, %v5010
      %v5012 = vpop.f32.mrb[0].mxu0
      %5013 = vmatprep.mubr.bf16.mxu0 0
      %5014 = vmatmul.mubr.bf16.gmra.mrb[0].mxu0 %v3319
      %v5015 = vpop.f32.mrb[0].mxu0
      %v5016 = vadd.f32 %v4791, %v5015
      %v5017 = vpop.f32.mrb[0].mxu0
      %v5018 = vpop.f32.mrb[0].mxu0
      %v5019 = vadd.f32 %v4794, %v5018
      %v5020 = vpop.f32.mrb[0].mxu0
      %5021 = vmatprep.mubr.bf16.mxu0 0
      %5022 = vmatmul.mubr.bf16.gmra.mrb[0].mxu0 %v3328
      %v5023 = vpop.f32.mrb[0].mxu0
      %v5024 = vadd.f32 %v4799, %v5023
      %v5025 = vpop.f32.mrb[0].mxu0
      %v5026 = vpop.f32.mrb[0].mxu0
      %v5027 = vadd.f32 %v4802, %v5026
      %v5028 = vpop.f32.mrb[0].mxu0
      %5029 = vdwg.mxu0
      %v5030 = vld [vmem:[%s2] sm:$0x1]
      %v5032 = vlaneseq
      %v5033 = vshrl.u32 %v5032, 7
      %v5034 = vsub.s32 0, %v5033
      %v5035 = vrot.slane %v5030, %v5034
      %v5037 = vmul.f32 %v4840, %v5035
      %v5038 = vmul.f32 %v4843, %v5035
      %v5039 = vmul.f32 %v4848, %v5035
      %v5040 = vmul.f32 %v4851, %v5035
      %v5041 = vmul.f32 %v4856, %v5035
      %v5042 = vmul.f32 %v4859, %v5035
      %v5043 = vmul.f32 %v4864, %v5035
      %v5044 = vmul.f32 %v4867, %v5035
      %v5045 = vmul.f32 %v4872, %v5035
      %v5046 = vmul.f32 %v4875, %v5035
      %v5047 = vmul.f32 %v4880, %v5035
      %v5048 = vmul.f32 %v4883, %v5035
      %v5049 = vmul.f32 %v4888, %v5035
      %v5050 = vmul.f32 %v4891, %v5035
      %v5051 = vmul.f32 %v4896, %v5035
      %v5052 = vmul.f32 %v4899, %v5035
      %v5053 = vmul.f32 %v4904, %v5035
      %v5054 = vmul.f32 %v4907, %v5035
      %v5055 = vmul.f32 %v4912, %v5035
      %v5056 = vmul.f32 %v4915, %v5035
      %v5057 = vmul.f32 %v4920, %v5035
      %v5058 = vmul.f32 %v4923, %v5035
      %v5059 = vmul.f32 %v4928, %v5035
      %v5060 = vmul.f32 %v4931, %v5035
      %v5061 = vmul.f32 %v4936, %v5035
      %v5062 = vmul.f32 %v4939, %v5035
      %v5063 = vmul.f32 %v4944, %v5035
      %v5064 = vmul.f32 %v4947, %v5035
      %v5065 = vmul.f32 %v4952, %v5035
      %v5066 = vmul.f32 %v4955, %v5035
      %v5067 = vmul.f32 %v4960, %v5035
      %v5068 = vmul.f32 %v4963, %v5035
      %v5069 = vmul.f32 %v4968, %v5035
      %v5070 = vmul.f32 %v4971, %v5035
      %v5071 = vmul.f32 %v4976, %v5035
      %v5072 = vmul.f32 %v4979, %v5035
      %v5073 = vmul.f32 %v4984, %v5035
      %v5074 = vmul.f32 %v4987, %v5035
      %v5075 = vmul.f32 %v4992, %v5035
      %v5076 = vmul.f32 %v4995, %v5035
      %v5077 = vmul.f32 %v5000, %v5035
      %v5078 = vmul.f32 %v5003, %v5035
      %v5079 = vmul.f32 %v5008, %v5035
      %v5080 = vmul.f32 %v5011, %v5035
      %v5081 = vmul.f32 %v5016, %v5035
      %v5082 = vmul.f32 %v5019, %v5035
      %v5083 = vmul.f32 %v5024, %v5035
      %v5084 = vmul.f32 %v5027, %v5035
      %v5085 = vld [vmem:[%s3] sm:$0x1]
      %v5087 = vlaneseq
      %v5088 = vshrl.u32 %v5087, 7
      %v5089 = vsub.s32 0, %v5088
      %v5090 = vrot.slane %v5085, %v5089
      %v5092 = vadd.f32 %v5037, %v5090
      %v5093 = vadd.f32 %v5038, %v5090
      %v5094 = vadd.f32 %v5039, %v5090
      %v5095 = vadd.f32 %v5040, %v5090
      %v5096 = vadd.f32 %v5041, %v5090
      %v5097 = vadd.f32 %v5042, %v5090
      %v5098 = vadd.f32 %v5043, %v5090
      %v5099 = vadd.f32 %v5044, %v5090
      %v5100 = vadd.f32 %v5045, %v5090
      %v5101 = vadd.f32 %v5046, %v5090
      %v5102 = vadd.f32 %v5047, %v5090
      %v5103 = vadd.f32 %v5048, %v5090
      %v5104 = vadd.f32 %v5049, %v5090
      %v5105 = vadd.f32 %v5050, %v5090
      %v5106 = vadd.f32 %v5051, %v5090
      %v5107 = vadd.f32 %v5052, %v5090
      %v5108 = vadd.f32 %v5053, %v5090
      %v5109 = vadd.f32 %v5054, %v5090
      %v5110 = vadd.f32 %v5055, %v5090
      %v5111 = vadd.f32 %v5056, %v5090
      %v5112 = vadd.f32 %v5057, %v5090
      %v5113 = vadd.f32 %v5058, %v5090
      %v5114 = vadd.f32 %v5059, %v5090
      %v5115 = vadd.f32 %v5060, %v5090
      %v5116 = vadd.f32 %v5061, %v5090
      %v5117 = vadd.f32 %v5062, %v5090
      %v5118 = vadd.f32 %v5063, %v5090
      %v5119 = vadd.f32 %v5064, %v5090
      %v5120 = vadd.f32 %v5065, %v5090
      %v5121 = vadd.f32 %v5066, %v5090
      %v5122 = vadd.f32 %v5067, %v5090
      %v5123 = vadd.f32 %v5068, %v5090
      %v5124 = vadd.f32 %v5069, %v5090
      %v5125 = vadd.f32 %v5070, %v5090
      %v5126 = vadd.f32 %v5071, %v5090
      %v5127 = vadd.f32 %v5072, %v5090
      %v5128 = vadd.f32 %v5073, %v5090
      %v5129 = vadd.f32 %v5074, %v5090
      %v5130 = vadd.f32 %v5075, %v5090
      %v5131 = vadd.f32 %v5076, %v5090
      %v5132 = vadd.f32 %v5077, %v5090
      %v5133 = vadd.f32 %v5078, %v5090
      %v5134 = vadd.f32 %v5079, %v5090
      %v5135 = vadd.f32 %v5080, %v5090
      %v5136 = vadd.f32 %v5081, %v5090
      %v5137 = vadd.f32 %v5082, %v5090
      %v5138 = vadd.f32 %v5083, %v5090
      %v5139 = vadd.f32 %v5084, %v5090
      %v5140 = vsub.f32 0.0, %v5092
      %v5141 = vsub.f32 0.0, %v5093
      %v5142 = vsub.f32 0.0, %v5094
      %v5143 = vsub.f32 0.0, %v5095
      %v5144 = vsub.f32 0.0, %v5096
      %v5145 = vsub.f32 0.0, %v5097
      %v5146 = vsub.f32 0.0, %v5098
      %v5147 = vsub.f32 0.0, %v5099
      %v5148 = vsub.f32 0.0, %v5100
      %v5149 = vsub.f32 0.0, %v5101
      %v5150 = vsub.f32 0.0, %v5102
      %v5151 = vsub.f32 0.0, %v5103
      %v5152 = vsub.f32 0.0, %v5104
      %v5153 = vsub.f32 0.0, %v5105
      %v5154 = vsub.f32 0.0, %v5106
      %v5155 = vsub.f32 0.0, %v5107
      %v5156 = vsub.f32 0.0, %v5108
      %v5157 = vsub.f32 0.0, %v5109
      %v5158 = vsub.f32 0.0, %v5110
      %v5159 = vsub.f32 0.0, %v5111
      %v5160 = vsub.f32 0.0, %v5112
      %v5161 = vsub.f32 0.0, %v5113
      %v5162 = vsub.f32 0.0, %v5114
      %v5163 = vsub.f32 0.0, %v5115
      %v5164 = vsub.f32 0.0, %v5116
      %v5165 = vsub.f32 0.0, %v5117
      %v5166 = vsub.f32 0.0, %v5118
      %v5167 = vsub.f32 0.0, %v5119
      %v5168 = vsub.f32 0.0, %v5120
      %v5169 = vsub.f32 0.0, %v5121
      %v5170 = vsub.f32 0.0, %v5122
      %v5171 = vsub.f32 0.0, %v5123
      %v5172 = vsub.f32 0.0, %v5124
      %v5173 = vsub.f32 0.0, %v5125
      %v5174 = vsub.f32 0.0, %v5126
      %v5175 = vsub.f32 0.0, %v5127
      %v5176 = vsub.f32 0.0, %v5128
      %v5177 = vsub.f32 0.0, %v5129
      %v5178 = vsub.f32 0.0, %v5130
      %v5179 = vsub.f32 0.0, %v5131
      %v5180 = vsub.f32 0.0, %v5132
      %v5181 = vsub.f32 0.0, %v5133
      %v5182 = vsub.f32 0.0, %v5134
      %v5183 = vsub.f32 0.0, %v5135
      %v5184 = vsub.f32 0.0, %v5136
      %v5185 = vsub.f32 0.0, %v5137
      %v5186 = vsub.f32 0.0, %v5138
      %v5187 = vsub.f32 0.0, %v5139
      %v5188 = vmul.f32 %v5140, 1.442695
      %v5189 = vpow.pop %v5188
      %v5190 = vmul.f32 %v5141, 1.442695
      %v5191 = vpow.pop %v5190
      %v5192 = vmul.f32 %v5142, 1.442695
      %v5193 = vpow.pop %v5192
      %v5194 = vmul.f32 %v5143, 1.442695
      %v5195 = vpow.pop %v5194
      %v5196 = vmul.f32 %v5144, 1.442695
      %v5197 = vpow.pop %v5196
      %v5198 = vmul.f32 %v5145, 1.442695
      %v5199 = vpow.pop %v5198
      %v5200 = vmul.f32 %v5146, 1.442695
      %v5201 = vpow.pop %v5200
      %v5202 = vmul.f32 %v5147, 1.442695
      %v5203 = vpow.pop %v5202
      %v5204 = vmul.f32 %v5148, 1.442695
      %v5205 = vpow.pop %v5204
      %v5206 = vmul.f32 %v5149, 1.442695
      %v5207 = vpow.pop %v5206
      %v5208 = vmul.f32 %v5150, 1.442695
      %v5209 = vpow.pop %v5208
      %v5210 = vmul.f32 %v5151, 1.442695
      %v5211 = vpow.pop %v5210
      %v5212 = vmul.f32 %v5152, 1.442695
      %v5213 = vpow.pop %v5212
      %v5214 = vmul.f32 %v5153, 1.442695
      %v5215 = vpow.pop %v5214
      %v5216 = vmul.f32 %v5154, 1.442695
      %v5217 = vpow.pop %v5216
      %v5218 = vmul.f32 %v5155, 1.442695
      %v5219 = vpow.pop %v5218
      %v5220 = vmul.f32 %v5156, 1.442695
      %v5221 = vpow.pop %v5220
      %v5222 = vmul.f32 %v5157, 1.442695
      %v5223 = vpow.pop %v5222
      %v5224 = vmul.f32 %v5158, 1.442695
      %v5225 = vpow.pop %v5224
      %v5226 = vmul.f32 %v5159, 1.442695
      %v5227 = vpow.pop %v5226
      %v5228 = vmul.f32 %v5160, 1.442695
      %v5229 = vpow.pop %v5228
      %v5230 = vmul.f32 %v5161, 1.442695
      %v5231 = vpow.pop %v5230
      %v5232 = vmul.f32 %v5162, 1.442695
      %v5233 = vpow.pop %v5232
      %v5234 = vmul.f32 %v5163, 1.442695
      %v5235 = vpow.pop %v5234
      %v5236 = vmul.f32 %v5164, 1.442695
      %v5237 = vpow.pop %v5236
      %v5238 = vmul.f32 %v5165, 1.442695
      %v5239 = vpow.pop %v5238
      %v5240 = vmul.f32 %v5166, 1.442695
      %v5241 = vpow.pop %v5240
      %v5242 = vmul.f32 %v5167, 1.442695
      %v5243 = vpow.pop %v5242
      %v5244 = vmul.f32 %v5168, 1.442695
      %v5245 = vpow.pop %v5244
      %v5246 = vmul.f32 %v5169, 1.442695
      %v5247 = vpow.pop %v5246
      %v5248 = vmul.f32 %v5170, 1.442695
      %v5249 = vpow.pop %v5248
      %v5250 = vmul.f32 %v5171, 1.442695
      %v5251 = vpow.pop %v5250
      %v5252 = vmul.f32 %v5172, 1.442695
      %v5253 = vpow.pop %v5252
      %v5254 = vmul.f32 %v5173, 1.442695
      %v5255 = vpow.pop %v5254
      %v5256 = vmul.f32 %v5174, 1.442695
      %v5257 = vpow.pop %v5256
      %v5258 = vmul.f32 %v5175, 1.442695
      %v5259 = vpow.pop %v5258
      %v5260 = vmul.f32 %v5176, 1.442695
      %v5261 = vpow.pop %v5260
      %v5262 = vmul.f32 %v5177, 1.442695
      %v5263 = vpow.pop %v5262
      %v5264 = vmul.f32 %v5178, 1.442695
      %v5265 = vpow.pop %v5264
      %v5266 = vmul.f32 %v5179, 1.442695
      %v5267 = vpow.pop %v5266
      %v5268 = vmul.f32 %v5180, 1.442695
      %v5269 = vpow.pop %v5268
      %v5270 = vmul.f32 %v5181, 1.442695
      %v5271 = vpow.pop %v5270
      %v5272 = vmul.f32 %v5182, 1.442695
      %v5273 = vpow.pop %v5272
      %v5274 = vmul.f32 %v5183, 1.442695
      %v5275 = vpow.pop %v5274
      %v5276 = vmul.f32 %v5184, 1.442695
      %v5277 = vpow.pop %v5276
      %v5278 = vmul.f32 %v5185, 1.442695
      %v5279 = vpow.pop %v5278
      %v5280 = vmul.f32 %v5186, 1.442695
      %v5281 = vpow.pop %v5280
      %v5282 = vmul.f32 %v5187, 1.442695
      %v5283 = vpow.pop %v5282
      %v5284 = vadd.f32 %v5189, 1.0
      %v5285 = vadd.f32 %v5191, 1.0
      %v5286 = vadd.f32 %v5193, 1.0
      %v5287 = vadd.f32 %v5195, 1.0
      %v5288 = vadd.f32 %v5197, 1.0
      %v5289 = vadd.f32 %v5199, 1.0
      %v5290 = vadd.f32 %v5201, 1.0
      %v5291 = vadd.f32 %v5203, 1.0
      %v5292 = vadd.f32 %v5205, 1.0
      %v5293 = vadd.f32 %v5207, 1.0
      %v5294 = vadd.f32 %v5209, 1.0
      %v5295 = vadd.f32 %v5211, 1.0
      %v5296 = vadd.f32 %v5213, 1.0
      %v5297 = vadd.f32 %v5215, 1.0
      %v5298 = vadd.f32 %v5217, 1.0
      %v5299 = vadd.f32 %v5219, 1.0
      %v5300 = vadd.f32 %v5221, 1.0
      %v5301 = vadd.f32 %v5223, 1.0
      %v5302 = vadd.f32 %v5225, 1.0
      %v5303 = vadd.f32 %v5227, 1.0
      %v5304 = vadd.f32 %v5229, 1.0
      %v5305 = vadd.f32 %v5231, 1.0
      %v5306 = vadd.f32 %v5233, 1.0
      %v5307 = vadd.f32 %v5235, 1.0
      %v5308 = vadd.f32 %v5237, 1.0
      %v5309 = vadd.f32 %v5239, 1.0
      %v5310 = vadd.f32 %v5241, 1.0
      %v5311 = vadd.f32 %v5243, 1.0
      %v5312 = vadd.f32 %v5245, 1.0
      %v5313 = vadd.f32 %v5247, 1.0
      %v5314 = vadd.f32 %v5249, 1.0
      %v5315 = vadd.f32 %v5251, 1.0
      %v5316 = vadd.f32 %v5253, 1.0
      %v5317 = vadd.f32 %v5255, 1.0
      %v5318 = vadd.f32 %v5257, 1.0
      %v5319 = vadd.f32 %v5259, 1.0
      %v5320 = vadd.f32 %v5261, 1.0
      %v5321 = vadd.f32 %v5263, 1.0
      %v5322 = vadd.f32 %v5265, 1.0
      %v5323 = vadd.f32 %v5267, 1.0
      %v5324 = vadd.f32 %v5269, 1.0
      %v5325 = vadd.f32 %v5271, 1.0
      %v5326 = vadd.f32 %v5273, 1.0
      %v5327 = vadd.f32 %v5275, 1.0
      %v5328 = vadd.f32 %v5277, 1.0
      %v5329 = vadd.f32 %v5279, 1.0
      %v5330 = vadd.f32 %v5281, 1.0
      %v5331 = vadd.f32 %v5283, 1.0
      %v5332 = vrcp.pop %v5284
      %v5333 = vrcp.pop %v5285
      %v5334 = vrcp.pop %v5286
      %v5335 = vrcp.pop %v5287
      %v5336 = vrcp.pop %v5288
      %v5337 = vrcp.pop %v5289
      %v5338 = vrcp.pop %v5290
      %v5339 = vrcp.pop %v5291
      %v5340 = vrcp.pop %v5292
      %v5341 = vrcp.pop %v5293
      %v5342 = vrcp.pop %v5294
      %v5343 = vrcp.pop %v5295
      %v5344 = vrcp.pop %v5296
      %v5345 = vrcp.pop %v5297
      %v5346 = vrcp.pop %v5298
      %v5347 = vrcp.pop %v5299
      %v5348 = vrcp.pop %v5300
      %v5349 = vrcp.pop %v5301
      %v5350 = vrcp.pop %v5302
      %v5351 = vrcp.pop %v5303
      %v5352 = vrcp.pop %v5304
      %v5353 = vrcp.pop %v5305
      %v5354 = vrcp.pop %v5306
      %v5355 = vrcp.pop %v5307
      %v5356 = vrcp.pop %v5308
      %v5357 = vrcp.pop %v5309
      %v5358 = vrcp.pop %v5310
      %v5359 = vrcp.pop %v5311
      %v5360 = vrcp.pop %v5312
      %v5361 = vrcp.pop %v5313
      %v5362 = vrcp.pop %v5314
      %v5363 = vrcp.pop %v5315
      %v5364 = vrcp.pop %v5316
      %v5365 = vrcp.pop %v5317
      %v5366 = vrcp.pop %v5318
      %v5367 = vrcp.pop %v5319
      %v5368 = vrcp.pop %v5320
      %v5369 = vrcp.pop %v5321
      %v5370 = vrcp.pop %v5322
      %v5371 = vrcp.pop %v5323
      %v5372 = vrcp.pop %v5324
      %v5373 = vrcp.pop %v5325
      %v5374 = vrcp.pop %v5326
      %v5375 = vrcp.pop %v5327
      %v5376 = vrcp.pop %v5328
      %v5377 = vrcp.pop %v5329
      %v5378 = vrcp.pop %v5330
      %v5379 = vrcp.pop %v5331
      %v5380 = vmul.f32 %v5092, %v5332
      %v5381 = vmul.f32 %v5093, %v5333
      %v5382 = vmul.f32 %v5094, %v5334
      %v5383 = vmul.f32 %v5095, %v5335
      %v5384 = vmul.f32 %v5096, %v5336
      %v5385 = vmul.f32 %v5097, %v5337
      %v5386 = vmul.f32 %v5098, %v5338
      %v5387 = vmul.f32 %v5099, %v5339
      %v5388 = vmul.f32 %v5100, %v5340
      %v5389 = vmul.f32 %v5101, %v5341
      %v5390 = vmul.f32 %v5102, %v5342
      %v5391 = vmul.f32 %v5103, %v5343
      %v5392 = vmul.f32 %v5104, %v5344
      %v5393 = vmul.f32 %v5105, %v5345
      %v5394 = vmul.f32 %v5106, %v5346
      %v5395 = vmul.f32 %v5107, %v5347
      %v5396 = vmul.f32 %v5108, %v5348
      %v5397 = vmul.f32 %v5109, %v5349
      %v5398 = vmul.f32 %v5110, %v5350
      %v5399 = vmul.f32 %v5111, %v5351
      %v5400 = vmul.f32 %v5112, %v5352
      %v5401 = vmul.f32 %v5113, %v5353
      %v5402 = vmul.f32 %v5114, %v5354
      %v5403 = vmul.f32 %v5115, %v5355
      %v5404 = vmul.f32 %v5116, %v5356
      %v5405 = vmul.f32 %v5117, %v5357
      %v5406 = vmul.f32 %v5118, %v5358
      %v5407 = vmul.f32 %v5119, %v5359
      %v5408 = vmul.f32 %v5120, %v5360
      %v5409 = vmul.f32 %v5121, %v5361
      %v5410 = vmul.f32 %v5122, %v5362
      %v5411 = vmul.f32 %v5123, %v5363
      %v5412 = vmul.f32 %v5124, %v5364
      %v5413 = vmul.f32 %v5125, %v5365
      %v5414 = vmul.f32 %v5126, %v5366
      %v5415 = vmul.f32 %v5127, %v5367
      %v5416 = vmul.f32 %v5128, %v5368
      %v5417 = vmul.f32 %v5129, %v5369
      %v5418 = vmul.f32 %v5130, %v5370
      %v5419 = vmul.f32 %v5131, %v5371
      %v5420 = vmul.f32 %v5132, %v5372
      %v5421 = vmul.f32 %v5133, %v5373
      %v5422 = vmul.f32 %v5134, %v5374
      %v5423 = vmul.f32 %v5135, %v5375
      %v5424 = vmul.f32 %v5136, %v5376
      %v5425 = vmul.f32 %v5137, %v5377
      %v5426 = vmul.f32 %v5138, %v5378
      %v5427 = vmul.f32 %v5139, %v5379
      %v5428 = vpack.c.bf16 %v5381, %v5380
      %v5429 = vpack.c.bf16 %v5383, %v5382
      %v5430 = vpack.c.bf16 %v5385, %v5384
      %v5431 = vpack.c.bf16 %v5387, %v5386
      %v5432 = vpack.c.bf16 %v5389, %v5388
      %v5433 = vpack.c.bf16 %v5391, %v5390
      %v5434 = vpack.c.bf16 %v5393, %v5392
      %v5435 = vpack.c.bf16 %v5395, %v5394
      %v5436 = vpack.c.bf16 %v5397, %v5396
      %v5437 = vpack.c.bf16 %v5399, %v5398
      %v5438 = vpack.c.bf16 %v5401, %v5400
      %v5439 = vpack.c.bf16 %v5403, %v5402
      %v5440 = vpack.c.bf16 %v5405, %v5404
      %v5441 = vpack.c.bf16 %v5407, %v5406
      %v5442 = vpack.c.bf16 %v5409, %v5408
      %v5443 = vpack.c.bf16 %v5411, %v5410
      %v5444 = vpack.c.bf16 %v5413, %v5412
      %v5445 = vpack.c.bf16 %v5415, %v5414
      %v5446 = vpack.c.bf16 %v5417, %v5416
      %v5447 = vpack.c.bf16 %v5419, %v5418
      %v5448 = vpack.c.bf16 %v5421, %v5420
      %v5449 = vpack.c.bf16 %v5423, %v5422
      %v5450 = vpack.c.bf16 %v5425, %v5424
      %v5451 = vpack.c.bf16 %v5427, %v5426
      %v5476 = vunpack.c.l.b16 %v5428
      %v5477 = vunpack.c.h.b16 %v5428
      %v5478 = vunpack.c.l.b16 %v5429
      %v5479 = vunpack.c.h.b16 %v5429
      %v5480 = vunpack.c.l.b16 %v5430
      %v5481 = vunpack.c.h.b16 %v5430
      %v5482 = vunpack.c.l.b16 %v5431
      %v5483 = vunpack.c.h.b16 %v5431
      %v5484 = vunpack.c.l.b16 %v5432
      %v5485 = vunpack.c.h.b16 %v5432
      %v5486 = vunpack.c.l.b16 %v5433
      %v5487 = vunpack.c.h.b16 %v5433
      %v5488 = vunpack.c.l.b16 %v5434
      %v5489 = vunpack.c.h.b16 %v5434
      %v5490 = vunpack.c.l.b16 %v5435
      %v5491 = vunpack.c.h.b16 %v5435
      %v5492 = vunpack.c.l.b16 %v5436
      %v5493 = vunpack.c.h.b16 %v5436
      %v5494 = vunpack.c.l.b16 %v5437
      %v5495 = vunpack.c.h.b16 %v5437
      %v5496 = vunpack.c.l.b16 %v5438
      %v5497 = vunpack.c.h.b16 %v5438
      %v5498 = vunpack.c.l.b16 %v5439
      %v5499 = vunpack.c.h.b16 %v5439
      %v5500 = vunpack.c.l.b16 %v5440
      %v5501 = vunpack.c.h.b16 %v5440
      %v5502 = vunpack.c.l.b16 %v5441
      %v5503 = vunpack.c.h.b16 %v5441
      %v5504 = vunpack.c.l.b16 %v5442
      %v5505 = vunpack.c.h.b16 %v5442
      %v5506 = vunpack.c.l.b16 %v5443
      %v5507 = vunpack.c.h.b16 %v5443
      %v5508 = vunpack.c.l.b16 %v5444
      %v5509 = vunpack.c.h.b16 %v5444
      %v5510 = vunpack.c.l.b16 %v5445
      %v5511 = vunpack.c.h.b16 %v5445
      %v5512 = vunpack.c.l.b16 %v5446
      %v5513 = vunpack.c.h.b16 %v5446
      %v5514 = vunpack.c.l.b16 %v5447
      %v5515 = vunpack.c.h.b16 %v5447
      %v5516 = vunpack.c.l.b16 %v5448
      %v5517 = vunpack.c.h.b16 %v5448
      %v5518 = vunpack.c.l.b16 %v5449
      %v5519 = vunpack.c.h.b16 %v5449
      %v5520 = vunpack.c.l.b16 %v5450
      %v5521 = vunpack.c.h.b16 %v5450
      %v5522 = vunpack.c.l.b16 %v5451
      %v5523 = vunpack.c.h.b16 %v5451
      %v5524 = vpack.c.b16 %v5476, %v5476
      %v5525 = vpack.c.b16 %v5477, %v5477
      %v5526 = vpack.c.b16 %v5478, %v5478
      %v5527 = vpack.c.b16 %v5479, %v5479
      %v5528 = vpack.c.b16 %v5480, %v5480
      %v5529 = vpack.c.b16 %v5481, %v5481
      %v5530 = vpack.c.b16 %v5482, %v5482
      %v5531 = vpack.c.b16 %v5483, %v5483
      %v5532 = vpack.c.b16 %v5484, %v5484
      %v5533 = vpack.c.b16 %v5485, %v5485
      %v5534 = vpack.c.b16 %v5486, %v5486
      %v5535 = vpack.c.b16 %v5487, %v5487
      %v5536 = vpack.c.b16 %v5488, %v5488
      %v5537 = vpack.c.b16 %v5489, %v5489
      %v5538 = vpack.c.b16 %v5490, %v5490
      %v5539 = vpack.c.b16 %v5491, %v5491
      %v5540 = vpack.c.b16 %v5492, %v5492
      %v5541 = vpack.c.b16 %v5493, %v5493
      %v5542 = vpack.c.b16 %v5494, %v5494
      %v5543 = vpack.c.b16 %v5495, %v5495
      %v5544 = vpack.c.b16 %v5496, %v5496
      %v5545 = vpack.c.b16 %v5497, %v5497
      %v5546 = vpack.c.b16 %v5498, %v5498
      %v5547 = vpack.c.b16 %v5499, %v5499
      %v5548 = vpack.c.b16 %v5500, %v5500
      %v5549 = vpack.c.b16 %v5501, %v5501
      %v5550 = vpack.c.b16 %v5502, %v5502
      %v5551 = vpack.c.b16 %v5503, %v5503
      %v5552 = vpack.c.b16 %v5504, %v5504
      %v5553 = vpack.c.b16 %v5505, %v5505
      %v5554 = vpack.c.b16 %v5506, %v5506
      %v5555 = vpack.c.b16 %v5507, %v5507
      %v5556 = vpack.c.b16 %v5508, %v5508
      %v5557 = vpack.c.b16 %v5509, %v5509
      %v5558 = vpack.c.b16 %v5510, %v5510
      %v5559 = vpack.c.b16 %v5511, %v5511
      %v5560 = vpack.c.b16 %v5512, %v5512
      %v5561 = vpack.c.b16 %v5513, %v5513
      %v5562 = vpack.c.b16 %v5514, %v5514
      %v5563 = vpack.c.b16 %v5515, %v5515
      %v5564 = vpack.c.b16 %v5516, %v5516
      %v5565 = vpack.c.b16 %v5517, %v5517
      %v5566 = vpack.c.b16 %v5518, %v5518
      %v5567 = vpack.c.b16 %v5519, %v5519
      %v5568 = vpack.c.b16 %v5520, %v5520
      %v5569 = vpack.c.b16 %v5521, %v5521
      %v5570 = vpack.c.b16 %v5522, %v5522
      %v5571 = vpack.c.b16 %v5523, %v5523
      %5620 = vst [vmem:[%s167] sm:$0xf] %v5524
      %5621 = vst [vmem:[%s167 + $0x4] sm:$0xf] %v5525
      %5622 = vst [vmem:[%s167 + $0x8] sm:$0xf] %v5526
      %5623 = vst [vmem:[%s167 + $0xc] sm:$0xf] %v5527
      %5624 = vst [vmem:[%s167 + $0x10] sm:$0xf] %v5528
      %5625 = vst [vmem:[%s167 + $0x14] sm:$0xf] %v5529
      %5626 = vst [vmem:[%s167 + $0x18] sm:$0xf] %v5530
      %5627 = vst [vmem:[%s167 + $0x1c] sm:$0xf] %v5531
      %5628 = vst [vmem:[%s167 + $0x20] sm:$0xf] %v5532
      %5629 = vst [vmem:[%s167 + $0x24] sm:$0xf] %v5533
      %5630 = vst [vmem:[%s167 + $0x28] sm:$0xf] %v5534
      %5631 = vst [vmem:[%s167 + $0x2c] sm:$0xf] %v5535
      %5632 = vst [vmem:[%s167 + $0x30] sm:$0xf] %v5536
      %5633 = vst [vmem:[%s167 + $0x34] sm:$0xf] %v5537
      %5634 = vst [vmem:[%s167 + $0x38] sm:$0xf] %v5538
      %5635 = vst [vmem:[%s167 + $0x3c] sm:$0xf] %v5539
      %5636 = vst [vmem:[%s167 + $0x40] sm:$0xf] %v5540
      %5637 = vst [vmem:[%s167 + $0x44] sm:$0xf] %v5541
      %5638 = vst [vmem:[%s167 + $0x48] sm:$0xf] %v5542
      %5639 = vst [vmem:[%s167 + $0x4c] sm:$0xf] %v5543
      %5640 = vst [vmem:[%s167 + $0x50] sm:$0xf] %v5544
      %5641 = vst [vmem:[%s167 + $0x54] sm:$0xf] %v5545
      %5642 = vst [vmem:[%s167 + $0x58] sm:$0xf] %v5546
      %5643 = vst [vmem:[%s167 + $0x5c] sm:$0xf] %v5547
      %5644 = vst [vmem:[%s167 + $0x60] sm:$0xf] %v5548
      %5645 = vst [vmem:[%s167 + $0x64] sm:$0xf] %v5549
      %5646 = vst [vmem:[%s167 + $0x68] sm:$0xf] %v5550
      %5647 = vst [vmem:[%s167 + $0x6c] sm:$0xf] %v5551
      %5648 = vst [vmem:[%s167 + $0x70] sm:$0xf] %v5552
      %5649 = vst [vmem:[%s167 + $0x74] sm:$0xf] %v5553
      %5650 = vst [vmem:[%s167 + $0x78] sm:$0xf] %v5554
      %5651 = vst [vmem:[%s167 + $0x7c] sm:$0xf] %v5555
      %5652 = vst [vmem:[%s167 + $0x80] sm:$0xf] %v5556
      %5653 = vst [vmem:[%s167 + $0x84] sm:$0xf] %v5557
      %5654 = vst [vmem:[%s167 + $0x88] sm:$0xf] %v5558
      %5655 = vst [vmem:[%s167 + $0x8c] sm:$0xf] %v5559
      %5656 = vst [vmem:[%s167 + $0x90] sm:$0xf] %v5560
      %5657 = vst [vmem:[%s167 + $0x94] sm:$0xf] %v5561
      %5658 = vst [vmem:[%s167 + $0x98] sm:$0xf] %v5562
      %5659 = vst [vmem:[%s167 + $0x9c] sm:$0xf] %v5563
      %5660 = vst [vmem:[%s167 + $0xa0] sm:$0xf] %v5564
      %5661 = vst [vmem:[%s167 + $0xa4] sm:$0xf] %v5565
      %5662 = vst [vmem:[%s167 + $0xa8] sm:$0xf] %v5566
      %5663 = vst [vmem:[%s167 + $0xac] sm:$0xf] %v5567
      %5664 = vst [vmem:[%s167 + $0xb0] sm:$0xf] %v5568
      %5665 = vst [vmem:[%s167 + $0xb4] sm:$0xf] %v5569
      %5666 = vst [vmem:[%s167 + $0xb8] sm:$0xf] %v5570
      %5667 = vst [vmem:[%s167 + $0xbc] sm:$0xf] %v5571
      %s5668 = sadd.s32 %s19, %s20
      %s5669 = smul.u32 48, %s5668
      %p5670 = scmp.lt.s32.totalorder %s5669, 95
      %s5671 = scalar_select %p5670, %s5669, 95
      %s5672 = smul.addr %s5671, 4
      %s5673 = scalar_lea.vmem %s4, %s5672
      // Predicated region
      $region109: #{csp_layer_forward.8} parent=31 // pred_check
        %p5674 = pneg %p110
      $region110: #{csp_layer_forward.8} parent=31 // pred_check_branch
        %5676 = sbr.rel (%p5674) target = $region112
      $region111: #{csp_layer_forward.8} parent=31 // pred_region
        %s5677 = sadd.s32 %s19, %s20
        %s5678 = smul.u32 48, %s5677
      $region112: #{csp_layer_forward.8} parent=31 // pred_fallthru
        _
    $region32: #{csp_layer_forward.8} parent=5 // pred_fallthru
      _
    %p5679 = scmp.le.s32.totalorder 2, %s10
    // Predicated region
    $region113: #{csp_layer_forward.8} parent=5 // pred_check
      %p5680 = pneg %p5679
    $region114: #{csp_layer_forward.8} parent=5 // pred_check_branch
      %5682 = sbr.rel (%p5680) target = $region116
    $region115: #{csp_layer_forward.8} parent=5 // pred_region
      %s5683 = ssub.s32 %s10, 2
      // Predicated region
      $region117: #{csp_layer_forward.8} parent=115 // pred_check
        %p5684 = pneg %p116
      $region118: #{csp_layer_forward.8} parent=115 // pred_check_branch
        %5686 = sbr.rel (%p5684) target = $region120
      $region119: #{csp_layer_forward.8} parent=115 // pred_region
        %s5687 = sadd.s32 %s21, %s22
        %s5688 = smul.u32 48, %s5687
        %p5689 = scmp.lt.s32.totalorder %s5688, 95
        %s5690 = scalar_select %p5689, %s5688, 95
        %s5691 = smul.addr %s5690, 4
        %s5692 = scalar_lea.vmem %s4, %s5691
      $region120: #{csp_layer_forward.8} parent=115 // pred_fallthru
        _
    $region116: #{csp_layer_forward.8} parent=5 // pred_fallthru
      _
  $region6: #{csp_layer_forward.8} parent=0 // loop_footer
    %s14 = sadd.s32 1, %s10
  $region7: #{csp_layer_forward.8} parent=0 // loop_footer_branch
    %9 = sbr.rel target = $region3
  $region8: #{csp_layer_forward.8} parent=0 // loop_exit
    _
  %5693 = vsyncmov [#allocation4]
  %s5694 = vpop.sfrf %5693
  %p5695 = scmp.eq.s32.totalorder %s5694, 0
  %p5696 = pneg %p5695
  %5698 = shalt.err (%p5696)
  %s5699 = scalar_lea.sflag [#allocation4], 1
  %5700 = vsyncmov %s5699
  %s5701 = vpop.sfrf %5700
  %p5702 = scmp.eq.s32.totalorder %s5701, 0
  %p5703 = pneg %p5702
  %5705 = shalt.err (%p5703)

</llo_original>
